<compile_context>
chip_gen: v7x
topology: tpu7x:2x2x1
jax: 0.10.0
libtpu: 0.0.40
codegen_flags: <defaults>
</compile_context>

<pallas_src>
import jax
import jax.numpy as jnp
import numpy as np
from jax.experimental import pallas as pl
from jax.experimental.pallas import tpu as pltpu

# ---- problem constants (implied by the nn.Module) ----
Y_DIM = 3436           # dim(y) = 3724 - 32*3*3
C_IN, HW_IN = 192, 7   # M is (B, 192, 7, 7)
C0, C1 = 64, 32        # conv output channels
H0 = HW_IN - 2         # 5  (spatial after first VALID 3x3)
H1 = H0 - 2            # 3  (spatial after second VALID 3x3)
K0 = 9 * C_IN          # 1728  im2col K for conv0
K1 = 9 * C0            # 576   im2col K for conv1
HFLAT = C1 * H1 * H1   # 288   flattened conv output
DH = 512               # hidden width of l0 / l1

# K-chunking of the l0 y-path (pad 3436 -> 3584 = 4 * 896; 896 = 7*128, MXU friendly)
KT = 896
KPAD = 3584
KC = KPAD // KT        # 4 grid steps


# ------------------------------ fused kernel -------------------------------

def _fused_forward_kernel(y_ref, w0y_ref, cols0_ref,
                          w0c_ref, b0c_ref, w1c_ref, b1c_ref,
                          w0h_ref, bl0_ref, wl1_ref, bl1_ref, wl2_ref, bl2_ref,
                          o_ref,
                          acc_ref, hflat_ref, cols1_ref):
    f32 = jnp.float32
    bf16 = jnp.bfloat16
    B = o_ref.shape[0]
    k = pl.program_id(0)

    # ---- first grid step: zero the l0 accumulator and run the whole conv path ----
    @pl.when(k == 0)
    def _():
        acc_ref[...] = jnp.zeros_like(acc_ref)

        # conv0 (192->64, 3x3 VALID): im2col columns were built in the wrapper,
        # so conv0 is a single bf16 MXU matmul + bias + relu.
        h0 = jnp.dot(cols0_ref[...], w0c_ref[...], preferred_element_type=f32)
        h0 = jnp.maximum(h0 + b0c_ref[...], 0.0)                    # (B*25, 64)

        # conv1 (64->32, 3x3 VALID): small in-VMEM im2col + one matmul (no activation)
        for b in range(B):
            for oy in range(H1):
                for dy in range(3):
                    for dx in range(3):
                        t = dy * 3 + dx
                        dst = b * H1 * H1 + oy * H1
                        src = b * H0 * H0 + (oy + dy) * H0 + dx
                        cols1_ref[dst:dst + H1, t * C0:(t + 1) * C0] = h0[src:src + H1, :]
        h1 = jnp.dot(cols1_ref[...].astype(bf16), w1c_ref[...],
                     preferred_element_type=f32)
        h1 = h1 + b1c_ref[...]                                      # (B*9, 32)

        # flatten conv1 output to (B, 288) in (h, w, c) order; w0h rows were
        # pre-permuted at prep time so this matches torch's NCHW view(B, -1).
        for b in range(B):
            for p in range(H1 * H1):
                hflat_ref[b:b + 1, p * C1:(p + 1) * C1] = \
                    h1[b * 9 + p:b * 9 + p + 1, :]

    # ---- every grid step: accumulate one K-chunk of y @ W0y (bf16 MXU, f32 acc) ----
    acc_ref[...] += jnp.dot(y_ref[...].astype(bf16), w0y_ref[...],
                            preferred_element_type=f32)

    # ---- last grid step: +W0h path, l0 bias/relu, l1, l2 ----
    @pl.when(k == pl.num_programs(0) - 1)
    def _():
        a0 = acc_ref[...] + jnp.dot(hflat_ref[...].astype(bf16), w0h_ref[...],
                                    preferred_element_type=f32)
        a0 = jnp.maximum(a0 + bl0_ref[...], 0.0)
        a1 = jnp.maximum(jnp.dot(a0.astype(bf16), wl1_ref[...],
                                 preferred_element_type=f32) + bl1_ref[...], 0.0)
        out = jnp.dot(a1, wl2_ref[...], preferred_element_type=f32) + bl2_ref[...]
        o_ref[...] = out.astype(o_ref.dtype)


def _full_spec(shape):
    r = len(shape)
    return pl.BlockSpec(shape, lambda k, _r=r: (0,) * _r)


def fused_forward(y_pad, cols0, p):
    B = y_pad.shape[0]
    args = (y_pad, p["w0y"], cols0,
            p["w0c"], p["b0c"], p["w1c"], p["b1c"],
            p["w0h"], p["bl0"], p["wl1"], p["bl1"], p["wl2"], p["bl2"])

    in_specs = [
        pl.BlockSpec((B, KT), lambda k: (0, k)),     # y: one K-chunk per grid step
        pl.BlockSpec((KT, DH), lambda k: (k, 0)),    # w0y: one K-chunk per grid step
    ] + [_full_spec(a.shape) for a in args[2:]]       # everything else stays resident

    flops = 2 * (B * H0 * H0 * K0 * C0        # conv0 matmul
                 + B * H1 * H1 * K1 * C1      # conv1 matmul
                 + B * KPAD * DH              # l0 y-path
                 + B * HFLAT * DH             # l0 conv-path
                 + B * DH * DH                # l1
                 + B * DH)                    # l2
    bytes_accessed = sum(int(np.prod(a.shape)) * a.dtype.itemsize for a in args) + B * 4

    return pl.pallas_call(
        _fused_forward_kernel,
        out_shape=jax.ShapeDtypeStruct((B, 1), jnp.float32),
        grid=(KC,),
        in_specs=in_specs,
        out_specs=pl.BlockSpec((B, 1), lambda k: (0, 0)),
        scratch_shapes=[
            pltpu.VMEM((B, DH), jnp.float32),              # l0 y-path accumulator
            pltpu.VMEM((B, HFLAT), jnp.float32),           # flattened conv output
            pltpu.VMEM((B * H1 * H1, K1), jnp.float32),    # conv1 im2col (18, 576)
        ],
        compiler_params=pltpu.CompilerParams(
            dimension_semantics=("arbitrary",),            # reduction over K chunks
            vmem_limit_bytes=32 * 1024 * 1024),
        cost_estimate=pl.CostEstimate(flops=flops, transcendentals=0,
                                      bytes_accessed=bytes_accessed),
    )(*args)


# --------------------- one-time parameter re-layout (no jit) ---------------------

def prepare_params(params):
    """Re-layout PyTorch-format params ONCE, outside the jitted forward."""
    f32 = jnp.float32
    bf16 = jnp.bfloat16
    # conv weights OIHW -> (dy, dx, cin, cout) -> im2col matmul layout, in bf16
    w0c = jnp.transpose(params["c0_w"], (2, 3, 1, 0)).reshape(K0, C0).astype(bf16)
    w1c = jnp.transpose(params["c1_w"], (2, 3, 1, 0)).reshape(K1, C1).astype(bf16)
    # l0 weight (512, 3724) -> (in, out), split into y-part (zero-padded to KPAD rows)
    # and conv-part (rows permuted from torch (c,h,w) flatten order to (h,w,c)).
    l0t = params["l0_w"].T                                               # (3724, 512)
    w0y = jnp.pad(l0t[:Y_DIM, :], ((0, KPAD - Y_DIM), (0, 0))).astype(bf16)
    w0h = (l0t[Y_DIM:, :].reshape(C1, H1 * H1, DH)
           .transpose(1, 0, 2).reshape(HFLAT, DH).astype(bf16))
    return dict(
        w0c=w0c, b0c=params["c0_b"].reshape(1, C0).astype(f32),
        w1c=w1c, b1c=params["c1_b"].reshape(1, C1).astype(f32),
        w0y=w0y, w0h=w0h, bl0=params["l0_b"].reshape(1, DH).astype(f32),
        wl1=params["l1_w"].T.astype(bf16), bl1=params["l1_b"].reshape(1, DH).astype(f32),
        wl2=params["l2_w"].T.astype(f32),  bl2=params["l2_b"].reshape(1, 1).astype(f32),
    )


def _build_cols0(M_nchw):
    """im2col for conv0 (tiny XLA glue in the wrapper): rows = (b, oy, ox),
    cols = (dy, dx, cin) to match w0c's row order."""
    B = M_nchw.shape[0]
    m = jnp.transpose(M_nchw, (0, 2, 3, 1))                 # (B, 7, 7, 192)
    taps = []
    for dy in range(3):
        for dx in range(3):
            taps.append(m[:, dy:dy + H0, dx:dx + H0, :].reshape(B, H0 * H0, C_IN))
    cols0 = jnp.concatenate(taps, axis=-1)                  # (B, 25, 1728)
    return cols0.reshape(B * H0 * H0, K0).astype(jnp.bfloat16)


def global_discriminator_forward(prep, y, M_nchw):
    """y: (B, 3436), M: (B, 192, 7, 7) NCHW (as in PyTorch). Returns (B, 1)."""
    cols0 = _build_cols0(M_nchw)                            # ~170 KB, fused XLA glue
    y_pad = jnp.pad(y, ((0, 0), (0, KPAD - Y_DIM)))         # K pad to 3584 (zeros)
    return fused_forward(y_pad, cols0, prep)


def init_params(key):
    """Deterministic synthetic params in PyTorch layout (conv: OIHW, linear: (out,in))."""
    ks = jax.random.split(key, 10)
    w = lambda k, shape, s: (s * jax.random.normal(k, shape, jnp.float32))
    return dict(
        c0_w=w(ks[0], (64, 192, 3, 3), 0.02), c0_b=w(ks[1], (64,), 0.02),
        c1_w=w(ks[2], (32, 64, 3, 3), 0.02), c1_b=w(ks[3], (32,), 0.02),
        l0_w=w(ks[4], (512, 3724), 0.02),    l0_b=w(ks[5], (512,), 0.02),
        l1_w=w(ks[6], (512, 512), 0.02),     l1_b=w(ks[7], (512,), 0.02),
        l2_w=w(ks[8], (1, 512), 0.02),       l2_b=w(ks[9], (1,), 0.02),
    )


# --------------------------- pure-JAX reference ----------------------------

def reference_forward(params, y, M_nchw):
    dn = jax.lax.conv_dimension_numbers(M_nchw.shape, params["c0_w"].shape,
                                        ("NCHW", "OIHW", "NCHW"))
    h = jax.lax.conv_general_dilated(M_nchw, params["c0_w"], (1, 1), "VALID",
                                     dimension_numbers=dn)
    h = jax.nn.relu(h + params["c0_b"][None, :, None, None])
    dn = jax.lax.conv_dimension_numbers(h.shape, params["c1_w"].shape,
                                        ("NCHW", "OIHW", "NCHW"))
    h = jax.lax.conv_general_dilated(h, params["c1_w"], (1, 1), "VALID",
                                     dimension_numbers=dn)
    h = h + params["c1_b"][None, :, None, None]
    h = h.reshape(y.shape[0], -1)
    h = jnp.concatenate([y, h], axis=1)
    h = jax.nn.relu(h @ params["l0_w"].T + params["l0_b"])
    h = jax.nn.relu(h @ params["l1_w"].T + params["l1_b"])
    return h @ params["l2_w"].T + params["l2_b"]


# ---------------------------------- main -----------------------------------

if __name__ == "__main__":
    key = jax.random.PRNGKey(0)
    k_params, k_y, k_m = jax.random.split(key, 3)

    params = init_params(k_params)
    prep = prepare_params(params)          # one-time re-layout, outside jit

    B = 2
    y = jax.random.normal(k_y, (B, Y_DIM), jnp.float32)
    M = jax.random.normal(k_m, (B, C_IN, HW_IN, HW_IN), jnp.float32)

    fwd = jax.jit(global_discriminator_forward)
    out = jax.block_until_ready(fwd(prep, y, M))
    assert out.shape == (B, 1) and out.dtype == jnp.float32

    ref = jax.block_until_ready(reference_forward(params, y, M))
    np.testing.assert_allclose(np.asarray(out), np.asarray(ref), rtol=2e-2, atol=2e-2)

    print("KERNEL_OK")
</pallas_src>

<mosaic_0001>
module attributes {stable_mosaic.version = 11 : i64} {
  func.func @_fused_forward_kernel(%arg0: i32, %arg1: memref<2x896xf32, #tpu.memory_space<vmem>>, %arg2: memref<896x512xbf16, #tpu.memory_space<vmem>>, %arg3: memref<50x1728xbf16, #tpu.memory_space<vmem>>, %arg4: memref<1728x64xbf16, #tpu.memory_space<vmem>>, %arg5: memref<1x64xf32, #tpu.memory_space<vmem>>, %arg6: memref<576x32xbf16, #tpu.memory_space<vmem>>, %arg7: memref<1x32xf32, #tpu.memory_space<vmem>>, %arg8: memref<288x512xbf16, #tpu.memory_space<vmem>>, %arg9: memref<1x512xf32, #tpu.memory_space<vmem>>, %arg10: memref<512x512xbf16, #tpu.memory_space<vmem>>, %arg11: memref<1x512xf32, #tpu.memory_space<vmem>>, %arg12: memref<512x1xf32, #tpu.memory_space<vmem>>, %arg13: memref<1x1xf32, #tpu.memory_space<vmem>>, %arg14: memref<2x1xf32, #tpu.memory_space<vmem>>, %arg15: memref<2x512xf32, #tpu.memory_space<vmem>>, %arg16: memref<2x288xf32, #tpu.memory_space<vmem>>, %arg17: memref<18x576xf32, #tpu.memory_space<vmem>>) attributes {dimension_semantics = [#tpu.dimension_semantics<arbitrary>], iteration_bounds = array<i64: 4>, scalar_prefetch = 0 : i64, scratch_operands = 3 : i64, tpu.core_type = #tpu.core_type<tc>, window_params = [{transform_indices = @transform_0, window_bounds = array<i64: 2, 896>}, {transform_indices = @transform_1, window_bounds = array<i64: 896, 512>}, {pipeline_mode = #tpu.pipeline_mode<synchronous>, transform_indices = @transform_2, window_bounds = array<i64: 50, 1728>}, {pipeline_mode = #tpu.pipeline_mode<synchronous>, transform_indices = @transform_3, window_bounds = array<i64: 1728, 64>}, {pipeline_mode = #tpu.pipeline_mode<synchronous>, transform_indices = @transform_4, window_bounds = array<i64: 1, 64>}, {pipeline_mode = #tpu.pipeline_mode<synchronous>, transform_indices = @transform_5, window_bounds = array<i64: 576, 32>}, {pipeline_mode = #tpu.pipeline_mode<synchronous>, transform_indices = @transform_6, window_bounds = array<i64: 1, 32>}, {pipeline_mode = #tpu.pipeline_mode<synchronous>, transform_indices = @transform_7, window_bounds = array<i64: 288, 512>}, {pipeline_mode = #tpu.pipeline_mode<synchronous>, transform_indices = @transform_8, window_bounds = array<i64: 1, 512>}, {pipeline_mode = #tpu.pipeline_mode<synchronous>, transform_indices = @transform_9, window_bounds = array<i64: 512, 512>}, {pipeline_mode = #tpu.pipeline_mode<synchronous>, transform_indices = @transform_10, window_bounds = array<i64: 1, 512>}, {pipeline_mode = #tpu.pipeline_mode<synchronous>, transform_indices = @transform_11, window_bounds = array<i64: 512, 1>}, {pipeline_mode = #tpu.pipeline_mode<synchronous>, transform_indices = @transform_12, window_bounds = array<i64: 1, 1>}, {pipeline_mode = #tpu.pipeline_mode<synchronous>, transform_indices = @transform_13, window_bounds = array<i64: 2, 1>}]} {
    %c0_i32 = arith.constant 0 : i32
    %0 = arith.cmpi eq, %arg0, %c0_i32 : i32
    %1 = arith.extui %0 : i1 to i32
    %c0_i32_0 = arith.constant 0 : i32
    %2 = arith.cmpi ne, %1, %c0_i32_0 : i32
    scf.if %2 {
      %cst_9 = arith.constant 0.000000e+00 : f32
      %13 = vector.broadcast %cst_9 : f32 to vector<2x512xf32>
      %c0_10 = arith.constant 0 : index
      %c0_11 = arith.constant 0 : index
      %14 = vector.load %arg15[%c0_10, %c0_11] : memref<2x512xf32, #tpu.memory_space<vmem>>, vector<2x512xf32>
      tpu.vector_store %arg15[%c0_10, %c0_11], %13 {strides = array<i32>} : memref<2x512xf32, #tpu.memory_space<vmem>>, vector<2x512xf32>,
      %c0_12 = arith.constant 0 : index
      %c0_13 = arith.constant 0 : index
      %15 = vector.load %arg3[%c0_12, %c0_13] : memref<50x1728xbf16, #tpu.memory_space<vmem>>, vector<50x1728xbf16>
      %c0_14 = arith.constant 0 : index
      %c0_15 = arith.constant 0 : index
      %16 = vector.load %arg4[%c0_14, %c0_15] : memref<1728x64xbf16, #tpu.memory_space<vmem>>, vector<1728x64xbf16>
      %cst_16 = arith.constant dense<0.000000e+00> : vector<50x64xf32>
      %17 = tpu.matmul %15, %16, %cst_16 {dimension_numbers = #tpu.dot_dimension_numbers<[1], [0], [0], [1], [0, 0, 1, 1], [], []>} : vector<50x1728xbf16>, vector<1728x64xbf16>, vector<50x64xf32> -> vector<50x64xf32>
      %c0_17 = arith.constant 0 : index
      %c0_18 = arith.constant 0 : index
      %18 = vector.load %arg5[%c0_17, %c0_18] : memref<1x64xf32, #tpu.memory_space<vmem>>, vector<1x64xf32>
      %19 = vector.broadcast %18 : vector<1x64xf32> to vector<50x64xf32>
      %20 = arith.addf %17, %19 : vector<50x64xf32>
      %cst_19 = arith.constant 0.000000e+00 : f32
      %21 = vector.broadcast %cst_19 : f32 to vector<50x64xf32>
      %22 = arith.maximumf %20, %21 : vector<50x64xf32>
      %23 = vector.extract_strided_slice %22 {offsets = [0, 0], sizes = [3, 64], strides = [1, 1]} : vector<50x64xf32> to vector<3x64xf32>
      %c0_20 = arith.constant 0 : index
      %c0_21 = arith.constant 0 : index
      %24 = vector.load %arg17[%c0_20, %c0_21] : memref<18x576xf32, #tpu.memory_space<vmem>>, vector<3x64xf32>
      tpu.vector_store %arg17[%c0_20, %c0_21], %23 {strides = array<i32>} : memref<18x576xf32, #tpu.memory_space<vmem>>, vector<3x64xf32>,
      %25 = vector.extract_strided_slice %22 {offsets = [1, 0], sizes = [3, 64], strides = [1, 1]} : vector<50x64xf32> to vector<3x64xf32>
      %c0_22 = arith.constant 0 : index
      %c64 = arith.constant 64 : index
      %26 = vector.load %arg17[%c0_22, %c64] : memref<18x576xf32, #tpu.memory_space<vmem>>, vector<3x64xf32>
      tpu.vector_store %arg17[%c0_22, %c64], %25 {strides = array<i32>} : memref<18x576xf32, #tpu.memory_space<vmem>>, vector<3x64xf32>,
      %27 = vector.extract_strided_slice %22 {offsets = [2, 0], sizes = [3, 64], strides = [1, 1]} : vector<50x64xf32> to vector<3x64xf32>
      %c0_23 = arith.constant 0 : index
      %c128 = arith.constant 128 : index
      %28 = vector.load %arg17[%c0_23, %c128] : memref<18x576xf32, #tpu.memory_space<vmem>>, vector<3x64xf32>
      tpu.vector_store %arg17[%c0_23, %c128], %27 {strides = array<i32>} : memref<18x576xf32, #tpu.memory_space<vmem>>, vector<3x64xf32>,
      %29 = vector.extract_strided_slice %22 {offsets = [5, 0], sizes = [3, 64], strides = [1, 1]} : vector<50x64xf32> to vector<3x64xf32>
      %c0_24 = arith.constant 0 : index
      %c192 = arith.constant 192 : index
      %30 = vector.load %arg17[%c0_24, %c192] : memref<18x576xf32, #tpu.memory_space<vmem>>, vector<3x64xf32>
      tpu.vector_store %arg17[%c0_24, %c192], %29 {strides = array<i32>} : memref<18x576xf32, #tpu.memory_space<vmem>>, vector<3x64xf32>,
      %31 = vector.extract_strided_slice %22 {offsets = [6, 0], sizes = [3, 64], strides = [1, 1]} : vector<50x64xf32> to vector<3x64xf32>
      %c0_25 = arith.constant 0 : index
      %c256 = arith.constant 256 : index
      %32 = vector.load %arg17[%c0_25, %c256] : memref<18x576xf32, #tpu.memory_space<vmem>>, vector<3x64xf32>
      tpu.vector_store %arg17[%c0_25, %c256], %31 {strides = array<i32>} : memref<18x576xf32, #tpu.memory_space<vmem>>, vector<3x64xf32>,
      %33 = vector.extract_strided_slice %22 {offsets = [7, 0], sizes = [3, 64], strides = [1, 1]} : vector<50x64xf32> to vector<3x64xf32>
      %c0_26 = arith.constant 0 : index
      %c320 = arith.constant 320 : index
      %34 = vector.load %arg17[%c0_26, %c320] : memref<18x576xf32, #tpu.memory_space<vmem>>, vector<3x64xf32>
      tpu.vector_store %arg17[%c0_26, %c320], %33 {strides = array<i32>} : memref<18x576xf32, #tpu.memory_space<vmem>>, vector<3x64xf32>,
      %35 = vector.extract_strided_slice %22 {offsets = [10, 0], sizes = [3, 64], strides = [1, 1]} : vector<50x64xf32> to vector<3x64xf32>
      %c0_27 = arith.constant 0 : index
      %c384 = arith.constant 384 : index
      %36 = vector.load %arg17[%c0_27, %c384] : memref<18x576xf32, #tpu.memory_space<vmem>>, vector<3x64xf32>
      tpu.vector_store %arg17[%c0_27, %c384], %35 {strides = array<i32>} : memref<18x576xf32, #tpu.memory_space<vmem>>, vector<3x64xf32>,
      %37 = vector.extract_strided_slice %22 {offsets = [11, 0], sizes = [3, 64], strides = [1, 1]} : vector<50x64xf32> to vector<3x64xf32>
      %c0_28 = arith.constant 0 : index
      %c448 = arith.constant 448 : index
      %38 = vector.load %arg17[%c0_28, %c448] : memref<18x576xf32, #tpu.memory_space<vmem>>, vector<3x64xf32>
      tpu.vector_store %arg17[%c0_28, %c448], %37 {strides = array<i32>} : memref<18x576xf32, #tpu.memory_space<vmem>>, vector<3x64xf32>,
      %39 = vector.extract_strided_slice %22 {offsets = [12, 0], sizes = [3, 64], strides = [1, 1]} : vector<50x64xf32> to vector<3x64xf32>
      %c0_29 = arith.constant 0 : index
      %c512 = arith.constant 512 : index
      %40 = vector.load %arg17[%c0_29, %c512] : memref<18x576xf32, #tpu.memory_space<vmem>>, vector<3x64xf32>
      tpu.vector_store %arg17[%c0_29, %c512], %39 {strides = array<i32>} : memref<18x576xf32, #tpu.memory_space<vmem>>, vector<3x64xf32>,
      %41 = vector.extract_strided_slice %22 {offsets = [5, 0], sizes = [3, 64], strides = [1, 1]} : vector<50x64xf32> to vector<3x64xf32>
      %c3 = arith.constant 3 : index
      %c0_30 = arith.constant 0 : index
      %42 = vector.load %arg17[%c3, %c0_30] : memref<18x576xf32, #tpu.memory_space<vmem>>, vector<3x64xf32>
      tpu.vector_store %arg17[%c3, %c0_30], %41 {strides = array<i32>} : memref<18x576xf32, #tpu.memory_space<vmem>>, vector<3x64xf32>,
      %43 = vector.extract_strided_slice %22 {offsets = [6, 0], sizes = [3, 64], strides = [1, 1]} : vector<50x64xf32> to vector<3x64xf32>
      %c3_31 = arith.constant 3 : index
      %c64_32 = arith.constant 64 : index
      %44 = vector.load %arg17[%c3_31, %c64_32] : memref<18x576xf32, #tpu.memory_space<vmem>>, vector<3x64xf32>
      tpu.vector_store %arg17[%c3_31, %c64_32], %43 {strides = array<i32>} : memref<18x576xf32, #tpu.memory_space<vmem>>, vector<3x64xf32>,
      %45 = vector.extract_strided_slice %22 {offsets = [7, 0], sizes = [3, 64], strides = [1, 1]} : vector<50x64xf32> to vector<3x64xf32>
      %c3_33 = arith.constant 3 : index
      %c128_34 = arith.constant 128 : index
      %46 = vector.load %arg17[%c3_33, %c128_34] : memref<18x576xf32, #tpu.memory_space<vmem>>, vector<3x64xf32>
      tpu.vector_store %arg17[%c3_33, %c128_34], %45 {strides = array<i32>} : memref<18x576xf32, #tpu.memory_space<vmem>>, vector<3x64xf32>,
      %47 = vector.extract_strided_slice %22 {offsets = [10, 0], sizes = [3, 64], strides = [1, 1]} : vector<50x64xf32> to vector<3x64xf32>
      %c3_35 = arith.constant 3 : index
      %c192_36 = arith.constant 192 : index
      %48 = vector.load %arg17[%c3_35, %c192_36] : memref<18x576xf32, #tpu.memory_space<vmem>>, vector<3x64xf32>
      tpu.vector_store %arg17[%c3_35, %c192_36], %47 {strides = array<i32>} : memref<18x576xf32, #tpu.memory_space<vmem>>, vector<3x64xf32>,
      %49 = vector.extract_strided_slice %22 {offsets = [11, 0], sizes = [3, 64], strides = [1, 1]} : vector<50x64xf32> to vector<3x64xf32>
      %c3_37 = arith.constant 3 : index
      %c256_38 = arith.constant 256 : index
      %50 = vector.load %arg17[%c3_37, %c256_38] : memref<18x576xf32, #tpu.memory_space<vmem>>, vector<3x64xf32>
      tpu.vector_store %arg17[%c3_37, %c256_38], %49 {strides = array<i32>} : memref<18x576xf32, #tpu.memory_space<vmem>>, vector<3x64xf32>,
      %51 = vector.extract_strided_slice %22 {offsets = [12, 0], sizes = [3, 64], strides = [1, 1]} : vector<50x64xf32> to vector<3x64xf32>
      %c3_39 = arith.constant 3 : index
      %c320_40 = arith.constant 320 : index
      %52 = vector.load %arg17[%c3_39, %c320_40] : memref<18x576xf32, #tpu.memory_space<vmem>>, vector<3x64xf32>
      tpu.vector_store %arg17[%c3_39, %c320_40], %51 {strides = array<i32>} : memref<18x576xf32, #tpu.memory_space<vmem>>, vector<3x64xf32>,
      %53 = vector.extract_strided_slice %22 {offsets = [15, 0], sizes = [3, 64], strides = [1, 1]} : vector<50x64xf32> to vector<3x64xf32>
      %c3_41 = arith.constant 3 : index
      %c384_42 = arith.constant 384 : index
      %54 = vector.load %arg17[%c3_41, %c384_42] : memref<18x576xf32, #tpu.memory_space<vmem>>, vector<3x64xf32>
      tpu.vector_store %arg17[%c3_41, %c384_42], %53 {strides = array<i32>} : memref<18x576xf32, #tpu.memory_space<vmem>>, vector<3x64xf32>,
      %55 = vector.extract_strided_slice %22 {offsets = [16, 0], sizes = [3, 64], strides = [1, 1]} : vector<50x64xf32> to vector<3x64xf32>
      %c3_43 = arith.constant 3 : index
      %c448_44 = arith.constant 448 : index
      %56 = vector.load %arg17[%c3_43, %c448_44] : memref<18x576xf32, #tpu.memory_space<vmem>>, vector<3x64xf32>
      tpu.vector_store %arg17[%c3_43, %c448_44], %55 {strides = array<i32>} : memref<18x576xf32, #tpu.memory_space<vmem>>, vector<3x64xf32>,
      %57 = vector.extract_strided_slice %22 {offsets = [17, 0], sizes = [3, 64], strides = [1, 1]} : vector<50x64xf32> to vector<3x64xf32>
      %c3_45 = arith.constant 3 : index
      %c512_46 = arith.constant 512 : index
      %58 = vector.load %arg17[%c3_45, %c512_46] : memref<18x576xf32, #tpu.memory_space<vmem>>, vector<3x64xf32>
      tpu.vector_store %arg17[%c3_45, %c512_46], %57 {strides = array<i32>} : memref<18x576xf32, #tpu.memory_space<vmem>>, vector<3x64xf32>,
      %59 = vector.extract_strided_slice %22 {offsets = [10, 0], sizes = [3, 64], strides = [1, 1]} : vector<50x64xf32> to vector<3x64xf32>
      %c6 = arith.constant 6 : index
      %c0_47 = arith.constant 0 : index
      %60 = vector.load %arg17[%c6, %c0_47] : memref<18x576xf32, #tpu.memory_space<vmem>>, vector<3x64xf32>
      tpu.vector_store %arg17[%c6, %c0_47], %59 {strides = array<i32>} : memref<18x576xf32, #tpu.memory_space<vmem>>, vector<3x64xf32>,
      %61 = vector.extract_strided_slice %22 {offsets = [11, 0], sizes = [3, 64], strides = [1, 1]} : vector<50x64xf32> to vector<3x64xf32>
      %c6_48 = arith.constant 6 : index
      %c64_49 = arith.constant 64 : index
      %62 = vector.load %arg17[%c6_48, %c64_49] : memref<18x576xf32, #tpu.memory_space<vmem>>, vector<3x64xf32>
      tpu.vector_store %arg17[%c6_48, %c64_49], %61 {strides = array<i32>} : memref<18x576xf32, #tpu.memory_space<vmem>>, vector<3x64xf32>,
      %63 = vector.extract_strided_slice %22 {offsets = [12, 0], sizes = [3, 64], strides = [1, 1]} : vector<50x64xf32> to vector<3x64xf32>
      %c6_50 = arith.constant 6 : index
      %c128_51 = arith.constant 128 : index
      %64 = vector.load %arg17[%c6_50, %c128_51] : memref<18x576xf32, #tpu.memory_space<vmem>>, vector<3x64xf32>
      tpu.vector_store %arg17[%c6_50, %c128_51], %63 {strides = array<i32>} : memref<18x576xf32, #tpu.memory_space<vmem>>, vector<3x64xf32>,
      %65 = vector.extract_strided_slice %22 {offsets = [15, 0], sizes = [3, 64], strides = [1, 1]} : vector<50x64xf32> to vector<3x64xf32>
      %c6_52 = arith.constant 6 : index
      %c192_53 = arith.constant 192 : index
      %66 = vector.load %arg17[%c6_52, %c192_53] : memref<18x576xf32, #tpu.memory_space<vmem>>, vector<3x64xf32>
      tpu.vector_store %arg17[%c6_52, %c192_53], %65 {strides = array<i32>} : memref<18x576xf32, #tpu.memory_space<vmem>>, vector<3x64xf32>,
      %67 = vector.extract_strided_slice %22 {offsets = [16, 0], sizes = [3, 64], strides = [1, 1]} : vector<50x64xf32> to vector<3x64xf32>
      %c6_54 = arith.constant 6 : index
      %c256_55 = arith.constant 256 : index
      %68 = vector.load %arg17[%c6_54, %c256_55] : memref<18x576xf32, #tpu.memory_space<vmem>>, vector<3x64xf32>
      tpu.vector_store %arg17[%c6_54, %c256_55], %67 {strides = array<i32>} : memref<18x576xf32, #tpu.memory_space<vmem>>, vector<3x64xf32>,
      %69 = vector.extract_strided_slice %22 {offsets = [17, 0], sizes = [3, 64], strides = [1, 1]} : vector<50x64xf32> to vector<3x64xf32>
      %c6_56 = arith.constant 6 : index
      %c320_57 = arith.constant 320 : index
      %70 = vector.load %arg17[%c6_56, %c320_57] : memref<18x576xf32, #tpu.memory_space<vmem>>, vector<3x64xf32>
      tpu.vector_store %arg17[%c6_56, %c320_57], %69 {strides = array<i32>} : memref<18x576xf32, #tpu.memory_space<vmem>>, vector<3x64xf32>,
      %71 = vector.extract_strided_slice %22 {offsets = [20, 0], sizes = [3, 64], strides = [1, 1]} : vector<50x64xf32> to vector<3x64xf32>
      %c6_58 = arith.constant 6 : index
      %c384_59 = arith.constant 384 : index
      %72 = vector.load %arg17[%c6_58, %c384_59] : memref<18x576xf32, #tpu.memory_space<vmem>>, vector<3x64xf32>
      tpu.vector_store %arg17[%c6_58, %c384_59], %71 {strides = array<i32>} : memref<18x576xf32, #tpu.memory_space<vmem>>, vector<3x64xf32>,
      %73 = vector.extract_strided_slice %22 {offsets = [21, 0], sizes = [3, 64], strides = [1, 1]} : vector<50x64xf32> to vector<3x64xf32>
      %c6_60 = arith.constant 6 : index
      %c448_61 = arith.constant 448 : index
      %74 = vector.load %arg17[%c6_60, %c448_61] : memref<18x576xf32, #tpu.memory_space<vmem>>, vector<3x64xf32>
      tpu.vector_store %arg17[%c6_60, %c448_61], %73 {strides = array<i32>} : memref<18x576xf32, #tpu.memory_space<vmem>>, vector<3x64xf32>,
      %75 = vector.extract_strided_slice %22 {offsets = [22, 0], sizes = [3, 64], strides = [1, 1]} : vector<50x64xf32> to vector<3x64xf32>
      %c6_62 = arith.constant 6 : index
      %c512_63 = arith.constant 512 : index
      %76 = vector.load %arg17[%c6_62, %c512_63] : memref<18x576xf32, #tpu.memory_space<vmem>>, vector<3x64xf32>
      tpu.vector_store %arg17[%c6_62, %c512_63], %75 {strides = array<i32>} : memref<18x576xf32, #tpu.memory_space<vmem>>, vector<3x64xf32>,
      %77 = vector.extract_strided_slice %22 {offsets = [25, 0], sizes = [3, 64], strides = [1, 1]} : vector<50x64xf32> to vector<3x64xf32>
      %c9 = arith.constant 9 : index
      %c0_64 = arith.constant 0 : index
      %78 = vector.load %arg17[%c9, %c0_64] : memref<18x576xf32, #tpu.memory_space<vmem>>, vector<3x64xf32>
      tpu.vector_store %arg17[%c9, %c0_64], %77 {strides = array<i32>} : memref<18x576xf32, #tpu.memory_space<vmem>>, vector<3x64xf32>,
      %79 = vector.extract_strided_slice %22 {offsets = [26, 0], sizes = [3, 64], strides = [1, 1]} : vector<50x64xf32> to vector<3x64xf32>
      %c9_65 = arith.constant 9 : index
      %c64_66 = arith.constant 64 : index
      %80 = vector.load %arg17[%c9_65, %c64_66] : memref<18x576xf32, #tpu.memory_space<vmem>>, vector<3x64xf32>
      tpu.vector_store %arg17[%c9_65, %c64_66], %79 {strides = array<i32>} : memref<18x576xf32, #tpu.memory_space<vmem>>, vector<3x64xf32>,
      %81 = vector.extract_strided_slice %22 {offsets = [27, 0], sizes = [3, 64], strides = [1, 1]} : vector<50x64xf32> to vector<3x64xf32>
      %c9_67 = arith.constant 9 : index
      %c128_68 = arith.constant 128 : index
      %82 = vector.load %arg17[%c9_67, %c128_68] : memref<18x576xf32, #tpu.memory_space<vmem>>, vector<3x64xf32>
      tpu.vector_store %arg17[%c9_67, %c128_68], %81 {strides = array<i32>} : memref<18x576xf32, #tpu.memory_space<vmem>>, vector<3x64xf32>,
      %83 = vector.extract_strided_slice %22 {offsets = [30, 0], sizes = [3, 64], strides = [1, 1]} : vector<50x64xf32> to vector<3x64xf32>
      %c9_69 = arith.constant 9 : index
      %c192_70 = arith.constant 192 : index
      %84 = vector.load %arg17[%c9_69, %c192_70] : memref<18x576xf32, #tpu.memory_space<vmem>>, vector<3x64xf32>
      tpu.vector_store %arg17[%c9_69, %c192_70], %83 {strides = array<i32>} : memref<18x576xf32, #tpu.memory_space<vmem>>, vector<3x64xf32>,
      %85 = vector.extract_strided_slice %22 {offsets = [31, 0], sizes = [3, 64], strides = [1, 1]} : vector<50x64xf32> to vector<3x64xf32>
      %c9_71 = arith.constant 9 : index
      %c256_72 = arith.constant 256 : index
      %86 = vector.load %arg17[%c9_71, %c256_72] : memref<18x576xf32, #tpu.memory_space<vmem>>, vector<3x64xf32>
      tpu.vector_store %arg17[%c9_71, %c256_72], %85 {strides = array<i32>} : memref<18x576xf32, #tpu.memory_space<vmem>>, vector<3x64xf32>,
      %87 = vector.extract_strided_slice %22 {offsets = [32, 0], sizes = [3, 64], strides = [1, 1]} : vector<50x64xf32> to vector<3x64xf32>
      %c9_73 = arith.constant 9 : index
      %c320_74 = arith.constant 320 : index
      %88 = vector.load %arg17[%c9_73, %c320_74] : memref<18x576xf32, #tpu.memory_space<vmem>>, vector<3x64xf32>
      tpu.vector_store %arg17[%c9_73, %c320_74], %87 {strides = array<i32>} : memref<18x576xf32, #tpu.memory_space<vmem>>, vector<3x64xf32>,
      %89 = vector.extract_strided_slice %22 {offsets = [35, 0], sizes = [3, 64], strides = [1, 1]} : vector<50x64xf32> to vector<3x64xf32>
      %c9_75 = arith.constant 9 : index
      %c384_76 = arith.constant 384 : index
      %90 = vector.load %arg17[%c9_75, %c384_76] : memref<18x576xf32, #tpu.memory_space<vmem>>, vector<3x64xf32>
      tpu.vector_store %arg17[%c9_75, %c384_76], %89 {strides = array<i32>} : memref<18x576xf32, #tpu.memory_space<vmem>>, vector<3x64xf32>,
      %91 = vector.extract_strided_slice %22 {offsets = [36, 0], sizes = [3, 64], strides = [1, 1]} : vector<50x64xf32> to vector<3x64xf32>
      %c9_77 = arith.constant 9 : index
      %c448_78 = arith.constant 448 : index
      %92 = vector.load %arg17[%c9_77, %c448_78] : memref<18x576xf32, #tpu.memory_space<vmem>>, vector<3x64xf32>
      tpu.vector_store %arg17[%c9_77, %c448_78], %91 {strides = array<i32>} : memref<18x576xf32, #tpu.memory_space<vmem>>, vector<3x64xf32>,
      %93 = vector.extract_strided_slice %22 {offsets = [37, 0], sizes = [3, 64], strides = [1, 1]} : vector<50x64xf32> to vector<3x64xf32>
      %c9_79 = arith.constant 9 : index
      %c512_80 = arith.constant 512 : index
      %94 = vector.load %arg17[%c9_79, %c512_80] : memref<18x576xf32, #tpu.memory_space<vmem>>, vector<3x64xf32>
      tpu.vector_store %arg17[%c9_79, %c512_80], %93 {strides = array<i32>} : memref<18x576xf32, #tpu.memory_space<vmem>>, vector<3x64xf32>,
      %95 = vector.extract_strided_slice %22 {offsets = [30, 0], sizes = [3, 64], strides = [1, 1]} : vector<50x64xf32> to vector<3x64xf32>
      %c12 = arith.constant 12 : index
      %c0_81 = arith.constant 0 : index
      %96 = vector.load %arg17[%c12, %c0_81] : memref<18x576xf32, #tpu.memory_space<vmem>>, vector<3x64xf32>
      tpu.vector_store %arg17[%c12, %c0_81], %95 {strides = array<i32>} : memref<18x576xf32, #tpu.memory_space<vmem>>, vector<3x64xf32>,
      %97 = vector.extract_strided_slice %22 {offsets = [31, 0], sizes = [3, 64], strides = [1, 1]} : vector<50x64xf32> to vector<3x64xf32>
      %c12_82 = arith.constant 12 : index
      %c64_83 = arith.constant 64 : index
      %98 = vector.load %arg17[%c12_82, %c64_83] : memref<18x576xf32, #tpu.memory_space<vmem>>, vector<3x64xf32>
      tpu.vector_store %arg17[%c12_82, %c64_83], %97 {strides = array<i32>} : memref<18x576xf32, #tpu.memory_space<vmem>>, vector<3x64xf32>,
      %99 = vector.extract_strided_slice %22 {offsets = [32, 0], sizes = [3, 64], strides = [1, 1]} : vector<50x64xf32> to vector<3x64xf32>
      %c12_84 = arith.constant 12 : index
      %c128_85 = arith.constant 128 : index
      %100 = vector.load %arg17[%c12_84, %c128_85] : memref<18x576xf32, #tpu.memory_space<vmem>>, vector<3x64xf32>
      tpu.vector_store %arg17[%c12_84, %c128_85], %99 {strides = array<i32>} : memref<18x576xf32, #tpu.memory_space<vmem>>, vector<3x64xf32>,
      %101 = vector.extract_strided_slice %22 {offsets = [35, 0], sizes = [3, 64], strides = [1, 1]} : vector<50x64xf32> to vector<3x64xf32>
      %c12_86 = arith.constant 12 : index
      %c192_87 = arith.constant 192 : index
      %102 = vector.load %arg17[%c12_86, %c192_87] : memref<18x576xf32, #tpu.memory_space<vmem>>, vector<3x64xf32>
      tpu.vector_store %arg17[%c12_86, %c192_87], %101 {strides = array<i32>} : memref<18x576xf32, #tpu.memory_space<vmem>>, vector<3x64xf32>,
      %103 = vector.extract_strided_slice %22 {offsets = [36, 0], sizes = [3, 64], strides = [1, 1]} : vector<50x64xf32> to vector<3x64xf32>
      %c12_88 = arith.constant 12 : index
      %c256_89 = arith.constant 256 : index
      %104 = vector.load %arg17[%c12_88, %c256_89] : memref<18x576xf32, #tpu.memory_space<vmem>>, vector<3x64xf32>
      tpu.vector_store %arg17[%c12_88, %c256_89], %103 {strides = array<i32>} : memref<18x576xf32, #tpu.memory_space<vmem>>, vector<3x64xf32>,
      %105 = vector.extract_strided_slice %22 {offsets = [37, 0], sizes = [3, 64], strides = [1, 1]} : vector<50x64xf32> to vector<3x64xf32>
      %c12_90 = arith.constant 12 : index
      %c320_91 = arith.constant 320 : index
      %106 = vector.load %arg17[%c12_90, %c320_91] : memref<18x576xf32, #tpu.memory_space<vmem>>, vector<3x64xf32>
      tpu.vector_store %arg17[%c12_90, %c320_91], %105 {strides = array<i32>} : memref<18x576xf32, #tpu.memory_space<vmem>>, vector<3x64xf32>,
      %107 = vector.extract_strided_slice %22 {offsets = [40, 0], sizes = [3, 64], strides = [1, 1]} : vector<50x64xf32> to vector<3x64xf32>
      %c12_92 = arith.constant 12 : index
      %c384_93 = arith.constant 384 : index
      %108 = vector.load %arg17[%c12_92, %c384_93] : memref<18x576xf32, #tpu.memory_space<vmem>>, vector<3x64xf32>
      tpu.vector_store %arg17[%c12_92, %c384_93], %107 {strides = array<i32>} : memref<18x576xf32, #tpu.memory_space<vmem>>, vector<3x64xf32>,
      %109 = vector.extract_strided_slice %22 {offsets = [41, 0], sizes = [3, 64], strides = [1, 1]} : vector<50x64xf32> to vector<3x64xf32>
      %c12_94 = arith.constant 12 : index
      %c448_95 = arith.constant 448 : index
      %110 = vector.load %arg17[%c12_94, %c448_95] : memref<18x576xf32, #tpu.memory_space<vmem>>, vector<3x64xf32>
      tpu.vector_store %arg17[%c12_94, %c448_95], %109 {strides = array<i32>} : memref<18x576xf32, #tpu.memory_space<vmem>>, vector<3x64xf32>,
      %111 = vector.extract_strided_slice %22 {offsets = [42, 0], sizes = [3, 64], strides = [1, 1]} : vector<50x64xf32> to vector<3x64xf32>
      %c12_96 = arith.constant 12 : index
      %c512_97 = arith.constant 512 : index
      %112 = vector.load %arg17[%c12_96, %c512_97] : memref<18x576xf32, #tpu.memory_space<vmem>>, vector<3x64xf32>
      tpu.vector_store %arg17[%c12_96, %c512_97], %111 {strides = array<i32>} : memref<18x576xf32, #tpu.memory_space<vmem>>, vector<3x64xf32>,
      %113 = vector.extract_strided_slice %22 {offsets = [35, 0], sizes = [3, 64], strides = [1, 1]} : vector<50x64xf32> to vector<3x64xf32>
      %c15 = arith.constant 15 : index
      %c0_98 = arith.constant 0 : index
      %114 = vector.load %arg17[%c15, %c0_98] : memref<18x576xf32, #tpu.memory_space<vmem>>, vector<3x64xf32>
      tpu.vector_store %arg17[%c15, %c0_98], %113 {strides = array<i32>} : memref<18x576xf32, #tpu.memory_space<vmem>>, vector<3x64xf32>,
      %115 = vector.extract_strided_slice %22 {offsets = [36, 0], sizes = [3, 64], strides = [1, 1]} : vector<50x64xf32> to vector<3x64xf32>
      %c15_99 = arith.constant 15 : index
      %c64_100 = arith.constant 64 : index
      %116 = vector.load %arg17[%c15_99, %c64_100] : memref<18x576xf32, #tpu.memory_space<vmem>>, vector<3x64xf32>
      tpu.vector_store %arg17[%c15_99, %c64_100], %115 {strides = array<i32>} : memref<18x576xf32, #tpu.memory_space<vmem>>, vector<3x64xf32>,
      %117 = vector.extract_strided_slice %22 {offsets = [37, 0], sizes = [3, 64], strides = [1, 1]} : vector<50x64xf32> to vector<3x64xf32>
      %c15_101 = arith.constant 15 : index
      %c128_102 = arith.constant 128 : index
      %118 = vector.load %arg17[%c15_101, %c128_102] : memref<18x576xf32, #tpu.memory_space<vmem>>, vector<3x64xf32>
      tpu.vector_store %arg17[%c15_101, %c128_102], %117 {strides = array<i32>} : memref<18x576xf32, #tpu.memory_space<vmem>>, vector<3x64xf32>,
      %119 = vector.extract_strided_slice %22 {offsets = [40, 0], sizes = [3, 64], strides = [1, 1]} : vector<50x64xf32> to vector<3x64xf32>
      %c15_103 = arith.constant 15 : index
      %c192_104 = arith.constant 192 : index
      %120 = vector.load %arg17[%c15_103, %c192_104] : memref<18x576xf32, #tpu.memory_space<vmem>>, vector<3x64xf32>
      tpu.vector_store %arg17[%c15_103, %c192_104], %119 {strides = array<i32>} : memref<18x576xf32, #tpu.memory_space<vmem>>, vector<3x64xf32>,
      %121 = vector.extract_strided_slice %22 {offsets = [41, 0], sizes = [3, 64], strides = [1, 1]} : vector<50x64xf32> to vector<3x64xf32>
      %c15_105 = arith.constant 15 : index
      %c256_106 = arith.constant 256 : index
      %122 = vector.load %arg17[%c15_105, %c256_106] : memref<18x576xf32, #tpu.memory_space<vmem>>, vector<3x64xf32>
      tpu.vector_store %arg17[%c15_105, %c256_106], %121 {strides = array<i32>} : memref<18x576xf32, #tpu.memory_space<vmem>>, vector<3x64xf32>,
      %123 = vector.extract_strided_slice %22 {offsets = [42, 0], sizes = [3, 64], strides = [1, 1]} : vector<50x64xf32> to vector<3x64xf32>
      %c15_107 = arith.constant 15 : index
      %c320_108 = arith.constant 320 : index
      %124 = vector.load %arg17[%c15_107, %c320_108] : memref<18x576xf32, #tpu.memory_space<vmem>>, vector<3x64xf32>
      tpu.vector_store %arg17[%c15_107, %c320_108], %123 {strides = array<i32>} : memref<18x576xf32, #tpu.memory_space<vmem>>, vector<3x64xf32>,
      %125 = vector.extract_strided_slice %22 {offsets = [45, 0], sizes = [3, 64], strides = [1, 1]} : vector<50x64xf32> to vector<3x64xf32>
      %c15_109 = arith.constant 15 : index
      %c384_110 = arith.constant 384 : index
      %126 = vector.load %arg17[%c15_109, %c384_110] : memref<18x576xf32, #tpu.memory_space<vmem>>, vector<3x64xf32>
      tpu.vector_store %arg17[%c15_109, %c384_110], %125 {strides = array<i32>} : memref<18x576xf32, #tpu.memory_space<vmem>>, vector<3x64xf32>,
      %127 = vector.extract_strided_slice %22 {offsets = [46, 0], sizes = [3, 64], strides = [1, 1]} : vector<50x64xf32> to vector<3x64xf32>
      %c15_111 = arith.constant 15 : index
      %c448_112 = arith.constant 448 : index
      %128 = vector.load %arg17[%c15_111, %c448_112] : memref<18x576xf32, #tpu.memory_space<vmem>>, vector<3x64xf32>
      tpu.vector_store %arg17[%c15_111, %c448_112], %127 {strides = array<i32>} : memref<18x576xf32, #tpu.memory_space<vmem>>, vector<3x64xf32>,
      %129 = vector.extract_strided_slice %22 {offsets = [47, 0], sizes = [3, 64], strides = [1, 1]} : vector<50x64xf32> to vector<3x64xf32>
      %c15_113 = arith.constant 15 : index
      %c512_114 = arith.constant 512 : index
      %130 = vector.load %arg17[%c15_113, %c512_114] : memref<18x576xf32, #tpu.memory_space<vmem>>, vector<3x64xf32>
      tpu.vector_store %arg17[%c15_113, %c512_114], %129 {strides = array<i32>} : memref<18x576xf32, #tpu.memory_space<vmem>>, vector<3x64xf32>,
      %c0_115 = arith.constant 0 : index
      %c0_116 = arith.constant 0 : index
      %131 = vector.load %arg17[%c0_115, %c0_116] : memref<18x576xf32, #tpu.memory_space<vmem>>, vector<18x576xf32>
      %132 = arith.truncf %131 : vector<18x576xf32> to vector<18x576xbf16>
      %c0_117 = arith.constant 0 : index
      %c0_118 = arith.constant 0 : index
      %133 = vector.load %arg6[%c0_117, %c0_118] : memref<576x32xbf16, #tpu.memory_space<vmem>>, vector<576x32xbf16>
      %cst_119 = arith.constant dense<0.000000e+00> : vector<18x32xf32>
      %134 = tpu.matmul %132, %133, %cst_119 {dimension_numbers = #tpu.dot_dimension_numbers<[1], [0], [0], [1], [0, 0, 1, 1], [], []>} : vector<18x576xbf16>, vector<576x32xbf16>, vector<18x32xf32> -> vector<18x32xf32>
      %c0_120 = arith.constant 0 : index
      %c0_121 = arith.constant 0 : index
      %135 = vector.load %arg7[%c0_120, %c0_121] : memref<1x32xf32, #tpu.memory_space<vmem>>, vector<1x32xf32>
      %136 = vector.broadcast %135 : vector<1x32xf32> to vector<18x32xf32>
      %137 = arith.addf %134, %136 : vector<18x32xf32>
      %138 = vector.extract_strided_slice %137 {offsets = [0, 0], sizes = [1, 32], strides = [1, 1]} : vector<18x32xf32> to vector<1x32xf32>
      %c0_122 = arith.constant 0 : index
      %c0_123 = arith.constant 0 : index
      %139 = vector.load %arg16[%c0_122, %c0_123] : memref<2x288xf32, #tpu.memory_space<vmem>>, vector<1x32xf32>
      tpu.vector_store %arg16[%c0_122, %c0_123], %138 {strides = array<i32>} : memref<2x288xf32, #tpu.memory_space<vmem>>, vector<1x32xf32>,
      %140 = vector.extract_strided_slice %137 {offsets = [1, 0], sizes = [1, 32], strides = [1, 1]} : vector<18x32xf32> to vector<1x32xf32>
      %c0_124 = arith.constant 0 : index
      %c32 = arith.constant 32 : index
      %141 = vector.load %arg16[%c0_124, %c32] : memref<2x288xf32, #tpu.memory_space<vmem>>, vector<1x32xf32>
      tpu.vector_store %arg16[%c0_124, %c32], %140 {strides = array<i32>} : memref<2x288xf32, #tpu.memory_space<vmem>>, vector<1x32xf32>,
      %142 = vector.extract_strided_slice %137 {offsets = [2, 0], sizes = [1, 32], strides = [1, 1]} : vector<18x32xf32> to vector<1x32xf32>
      %c0_125 = arith.constant 0 : index
      %c64_126 = arith.constant 64 : index
      %143 = vector.load %arg16[%c0_125, %c64_126] : memref<2x288xf32, #tpu.memory_space<vmem>>, vector<1x32xf32>
      tpu.vector_store %arg16[%c0_125, %c64_126], %142 {strides = array<i32>} : memref<2x288xf32, #tpu.memory_space<vmem>>, vector<1x32xf32>,
      %144 = vector.extract_strided_slice %137 {offsets = [3, 0], sizes = [1, 32], strides = [1, 1]} : vector<18x32xf32> to vector<1x32xf32>
      %c0_127 = arith.constant 0 : index
      %c96 = arith.constant 96 : index
      %145 = vector.load %arg16[%c0_127, %c96] : memref<2x288xf32, #tpu.memory_space<vmem>>, vector<1x32xf32>
      tpu.vector_store %arg16[%c0_127, %c96], %144 {strides = array<i32>} : memref<2x288xf32, #tpu.memory_space<vmem>>, vector<1x32xf32>,
      %146 = vector.extract_strided_slice %137 {offsets = [4, 0], sizes = [1, 32], strides = [1, 1]} : vector<18x32xf32> to vector<1x32xf32>
      %c0_128 = arith.constant 0 : index
      %c128_129 = arith.constant 128 : index
      %147 = vector.load %arg16[%c0_128, %c128_129] : memref<2x288xf32, #tpu.memory_space<vmem>>, vector<1x32xf32>
      tpu.vector_store %arg16[%c0_128, %c128_129], %146 {strides = array<i32>} : memref<2x288xf32, #tpu.memory_space<vmem>>, vector<1x32xf32>,
      %148 = vector.extract_strided_slice %137 {offsets = [5, 0], sizes = [1, 32], strides = [1, 1]} : vector<18x32xf32> to vector<1x32xf32>
      %c0_130 = arith.constant 0 : index
      %c160 = arith.constant 160 : index
      %149 = vector.load %arg16[%c0_130, %c160] : memref<2x288xf32, #tpu.memory_space<vmem>>, vector<1x32xf32>
      tpu.vector_store %arg16[%c0_130, %c160], %148 {strides = array<i32>} : memref<2x288xf32, #tpu.memory_space<vmem>>, vector<1x32xf32>,
      %150 = vector.extract_strided_slice %137 {offsets = [6, 0], sizes = [1, 32], strides = [1, 1]} : vector<18x32xf32> to vector<1x32xf32>
      %c0_131 = arith.constant 0 : index
      %c192_132 = arith.constant 192 : index
      %151 = vector.load %arg16[%c0_131, %c192_132] : memref<2x288xf32, #tpu.memory_space<vmem>>, vector<1x32xf32>
      tpu.vector_store %arg16[%c0_131, %c192_132], %150 {strides = array<i32>} : memref<2x288xf32, #tpu.memory_space<vmem>>, vector<1x32xf32>,
      %152 = vector.extract_strided_slice %137 {offsets = [7, 0], sizes = [1, 32], strides = [1, 1]} : vector<18x32xf32> to vector<1x32xf32>
      %c0_133 = arith.constant 0 : index
      %c224 = arith.constant 224 : index
      %153 = vector.load %arg16[%c0_133, %c224] : memref<2x288xf32, #tpu.memory_space<vmem>>, vector<1x32xf32>
      tpu.vector_store %arg16[%c0_133, %c224], %152 {strides = array<i32>} : memref<2x288xf32, #tpu.memory_space<vmem>>, vector<1x32xf32>,
      %154 = vector.extract_strided_slice %137 {offsets = [8, 0], sizes = [1, 32], strides = [1, 1]} : vector<18x32xf32> to vector<1x32xf32>
      %c0_134 = arith.constant 0 : index
      %c256_135 = arith.constant 256 : index
      %155 = vector.load %arg16[%c0_134, %c256_135] : memref<2x288xf32, #tpu.memory_space<vmem>>, vector<1x32xf32>
      tpu.vector_store %arg16[%c0_134, %c256_135], %154 {strides = array<i32>} : memref<2x288xf32, #tpu.memory_space<vmem>>, vector<1x32xf32>,
      %156 = vector.extract_strided_slice %137 {offsets = [9, 0], sizes = [1, 32], strides = [1, 1]} : vector<18x32xf32> to vector<1x32xf32>
      %c1 = arith.constant 1 : index
      %c0_136 = arith.constant 0 : index
      %157 = vector.load %arg16[%c1, %c0_136] : memref<2x288xf32, #tpu.memory_space<vmem>>, vector<1x32xf32>
      tpu.vector_store %arg16[%c1, %c0_136], %156 {strides = array<i32>} : memref<2x288xf32, #tpu.memory_space<vmem>>, vector<1x32xf32>,
      %158 = vector.extract_strided_slice %137 {offsets = [10, 0], sizes = [1, 32], strides = [1, 1]} : vector<18x32xf32> to vector<1x32xf32>
      %c1_137 = arith.constant 1 : index
      %c32_138 = arith.constant 32 : index
      %159 = vector.load %arg16[%c1_137, %c32_138] : memref<2x288xf32, #tpu.memory_space<vmem>>, vector<1x32xf32>
      tpu.vector_store %arg16[%c1_137, %c32_138], %158 {strides = array<i32>} : memref<2x288xf32, #tpu.memory_space<vmem>>, vector<1x32xf32>,
      %160 = vector.extract_strided_slice %137 {offsets = [11, 0], sizes = [1, 32], strides = [1, 1]} : vector<18x32xf32> to vector<1x32xf32>
      %c1_139 = arith.constant 1 : index
      %c64_140 = arith.constant 64 : index
      %161 = vector.load %arg16[%c1_139, %c64_140] : memref<2x288xf32, #tpu.memory_space<vmem>>, vector<1x32xf32>
      tpu.vector_store %arg16[%c1_139, %c64_140], %160 {strides = array<i32>} : memref<2x288xf32, #tpu.memory_space<vmem>>, vector<1x32xf32>,
      %162 = vector.extract_strided_slice %137 {offsets = [12, 0], sizes = [1, 32], strides = [1, 1]} : vector<18x32xf32> to vector<1x32xf32>
      %c1_141 = arith.constant 1 : index
      %c96_142 = arith.constant 96 : index
      %163 = vector.load %arg16[%c1_141, %c96_142] : memref<2x288xf32, #tpu.memory_space<vmem>>, vector<1x32xf32>
      tpu.vector_store %arg16[%c1_141, %c96_142], %162 {strides = array<i32>} : memref<2x288xf32, #tpu.memory_space<vmem>>, vector<1x32xf32>,
      %164 = vector.extract_strided_slice %137 {offsets = [13, 0], sizes = [1, 32], strides = [1, 1]} : vector<18x32xf32> to vector<1x32xf32>
      %c1_143 = arith.constant 1 : index
      %c128_144 = arith.constant 128 : index
      %165 = vector.load %arg16[%c1_143, %c128_144] : memref<2x288xf32, #tpu.memory_space<vmem>>, vector<1x32xf32>
      tpu.vector_store %arg16[%c1_143, %c128_144], %164 {strides = array<i32>} : memref<2x288xf32, #tpu.memory_space<vmem>>, vector<1x32xf32>,
      %166 = vector.extract_strided_slice %137 {offsets = [14, 0], sizes = [1, 32], strides = [1, 1]} : vector<18x32xf32> to vector<1x32xf32>
      %c1_145 = arith.constant 1 : index
      %c160_146 = arith.constant 160 : index
      %167 = vector.load %arg16[%c1_145, %c160_146] : memref<2x288xf32, #tpu.memory_space<vmem>>, vector<1x32xf32>
      tpu.vector_store %arg16[%c1_145, %c160_146], %166 {strides = array<i32>} : memref<2x288xf32, #tpu.memory_space<vmem>>, vector<1x32xf32>,
      %168 = vector.extract_strided_slice %137 {offsets = [15, 0], sizes = [1, 32], strides = [1, 1]} : vector<18x32xf32> to vector<1x32xf32>
      %c1_147 = arith.constant 1 : index
      %c192_148 = arith.constant 192 : index
      %169 = vector.load %arg16[%c1_147, %c192_148] : memref<2x288xf32, #tpu.memory_space<vmem>>, vector<1x32xf32>
      tpu.vector_store %arg16[%c1_147, %c192_148], %168 {strides = array<i32>} : memref<2x288xf32, #tpu.memory_space<vmem>>, vector<1x32xf32>,
      %170 = vector.extract_strided_slice %137 {offsets = [16, 0], sizes = [1, 32], strides = [1, 1]} : vector<18x32xf32> to vector<1x32xf32>
      %c1_149 = arith.constant 1 : index
      %c224_150 = arith.constant 224 : index
      %171 = vector.load %arg16[%c1_149, %c224_150] : memref<2x288xf32, #tpu.memory_space<vmem>>, vector<1x32xf32>
      tpu.vector_store %arg16[%c1_149, %c224_150], %170 {strides = array<i32>} : memref<2x288xf32, #tpu.memory_space<vmem>>, vector<1x32xf32>,
      %172 = vector.extract_strided_slice %137 {offsets = [17, 0], sizes = [1, 32], strides = [1, 1]} : vector<18x32xf32> to vector<1x32xf32>
      %c1_151 = arith.constant 1 : index
      %c256_152 = arith.constant 256 : index
      %173 = vector.load %arg16[%c1_151, %c256_152] : memref<2x288xf32, #tpu.memory_space<vmem>>, vector<1x32xf32>
      tpu.vector_store %arg16[%c1_151, %c256_152], %172 {strides = array<i32>} : memref<2x288xf32, #tpu.memory_space<vmem>>, vector<1x32xf32>,
    } else {
    }
    %c0 = arith.constant 0 : index
    %c0_1 = arith.constant 0 : index
    %3 = vector.load %arg15[%c0, %c0_1] : memref<2x512xf32, #tpu.memory_space<vmem>>, vector<2x512xf32>
    %c0_2 = arith.constant 0 : index
    %c0_3 = arith.constant 0 : index
    %4 = vector.load %arg1[%c0_2, %c0_3] : memref<2x896xf32, #tpu.memory_space<vmem>>, vector<2x896xf32>
    %5 = arith.truncf %4 : vector<2x896xf32> to vector<2x896xbf16>
    %c0_4 = arith.constant 0 : index
    %c0_5 = arith.constant 0 : index
    %6 = vector.load %arg2[%c0_4, %c0_5] : memref<896x512xbf16, #tpu.memory_space<vmem>>, vector<896x512xbf16>
    %cst = arith.constant dense<0.000000e+00> : vector<2x512xf32>
    %7 = tpu.matmul %5, %6, %cst {dimension_numbers = #tpu.dot_dimension_numbers<[1], [0], [0], [1], [0, 0, 1, 1], [], []>} : vector<2x896xbf16>, vector<896x512xbf16>, vector<2x512xf32> -> vector<2x512xf32>
    %8 = arith.addf %3, %7 : vector<2x512xf32>
    %c0_6 = arith.constant 0 : index
    %c0_7 = arith.constant 0 : index
    %9 = vector.load %arg15[%c0_6, %c0_7] : memref<2x512xf32, #tpu.memory_space<vmem>>, vector<2x512xf32>
    tpu.vector_store %arg15[%c0_6, %c0_7], %8 {strides = array<i32>} : memref<2x512xf32, #tpu.memory_space<vmem>>, vector<2x512xf32>,
    %c3_i32 = arith.constant 3 : i32
    %10 = arith.cmpi eq, %arg0, %c3_i32 : i32
    %11 = arith.extui %10 : i1 to i32
    %c0_i32_8 = arith.constant 0 : i32
    %12 = arith.cmpi ne, %11, %c0_i32_8 : i32
    scf.if %12 {
      %c0_9 = arith.constant 0 : index
      %c0_10 = arith.constant 0 : index
      %13 = vector.load %arg15[%c0_9, %c0_10] : memref<2x512xf32, #tpu.memory_space<vmem>>, vector<2x512xf32>
      %c0_11 = arith.constant 0 : index
      %c0_12 = arith.constant 0 : index
      %14 = vector.load %arg16[%c0_11, %c0_12] : memref<2x288xf32, #tpu.memory_space<vmem>>, vector<2x288xf32>
      %15 = arith.truncf %14 : vector<2x288xf32> to vector<2x288xbf16>
      %c0_13 = arith.constant 0 : index
      %c0_14 = arith.constant 0 : index
      %16 = vector.load %arg8[%c0_13, %c0_14] : memref<288x512xbf16, #tpu.memory_space<vmem>>, vector<288x512xbf16>
      %cst_15 = arith.constant dense<0.000000e+00> : vector<2x512xf32>
      %17 = tpu.matmul %15, %16, %cst_15 {dimension_numbers = #tpu.dot_dimension_numbers<[1], [0], [0], [1], [0, 0, 1, 1], [], []>} : vector<2x288xbf16>, vector<288x512xbf16>, vector<2x512xf32> -> vector<2x512xf32>
      %18 = arith.addf %13, %17 : vector<2x512xf32>
      %c0_16 = arith.constant 0 : index
      %c0_17 = arith.constant 0 : index
      %19 = vector.load %arg9[%c0_16, %c0_17] : memref<1x512xf32, #tpu.memory_space<vmem>>, vector<1x512xf32>
      %20 = vector.broadcast %19 : vector<1x512xf32> to vector<2x512xf32>
      %21 = arith.addf %18, %20 : vector<2x512xf32>
      %cst_18 = arith.constant 0.000000e+00 : f32
      %22 = vector.broadcast %cst_18 : f32 to vector<2x512xf32>
      %23 = arith.maximumf %21, %22 : vector<2x512xf32>
      %24 = arith.truncf %23 : vector<2x512xf32> to vector<2x512xbf16>
      %c0_19 = arith.constant 0 : index
      %c0_20 = arith.constant 0 : index
      %25 = vector.load %arg10[%c0_19, %c0_20] : memref<512x512xbf16, #tpu.memory_space<vmem>>, vector<512x512xbf16>
      %cst_21 = arith.constant dense<0.000000e+00> : vector<2x512xf32>
      %26 = tpu.matmul %24, %25, %cst_21 {dimension_numbers = #tpu.dot_dimension_numbers<[1], [0], [0], [1], [0, 0, 1, 1], [], []>} : vector<2x512xbf16>, vector<512x512xbf16>, vector<2x512xf32> -> vector<2x512xf32>
      %c0_22 = arith.constant 0 : index
      %c0_23 = arith.constant 0 : index
      %27 = vector.load %arg11[%c0_22, %c0_23] : memref<1x512xf32, #tpu.memory_space<vmem>>, vector<1x512xf32>
      %28 = vector.broadcast %27 : vector<1x512xf32> to vector<2x512xf32>
      %29 = arith.addf %26, %28 : vector<2x512xf32>
      %cst_24 = arith.constant 0.000000e+00 : f32
      %30 = vector.broadcast %cst_24 : f32 to vector<2x512xf32>
      %31 = arith.maximumf %29, %30 : vector<2x512xf32>
      %c0_25 = arith.constant 0 : index
      %c0_26 = arith.constant 0 : index
      %32 = vector.load %arg12[%c0_25, %c0_26] : memref<512x1xf32, #tpu.memory_space<vmem>>, vector<512x1xf32>
      %cst_27 = arith.constant dense<0.000000e+00> : vector<2x1xf32>
      %33 = tpu.matmul %31, %32, %cst_27 {dimension_numbers = #tpu.dot_dimension_numbers<[1], [0], [0], [1], [0, 0, 1, 1], [], []>} : vector<2x512xf32>, vector<512x1xf32>, vector<2x1xf32> -> vector<2x1xf32>
      %c0_28 = arith.constant 0 : index
      %c0_29 = arith.constant 0 : index
      %34 = vector.load %arg13[%c0_28, %c0_29] : memref<1x1xf32, #tpu.memory_space<vmem>>, vector<1x1xf32>
      %35 = vector.broadcast %34 : vector<1x1xf32> to vector<2x1xf32>
      %36 = arith.addf %33, %35 : vector<2x1xf32>
      %c0_30 = arith.constant 0 : index
      %c0_31 = arith.constant 0 : index
      %37 = vector.load %arg14[%c0_30, %c0_31] : memref<2x1xf32, #tpu.memory_space<vmem>>, vector<2x1xf32>
      tpu.vector_store %arg14[%c0_30, %c0_31], %36 {strides = array<i32>} : memref<2x1xf32, #tpu.memory_space<vmem>>, vector<2x1xf32>,
    } else {
    }
    return
  }
  func.func @transform_0(%arg0: i32) -> (i32, i32) {
    %c0_i32 = arith.constant 0 : i32
    %c0_i32_0 = arith.constant 0 : i32
    return %c0_i32, %arg0 : i32, i32
  }
  func.func @transform_1(%arg0: i32) -> (i32, i32) {
    %c0_i32 = arith.constant 0 : i32
    %c0_i32_0 = arith.constant 0 : i32
    return %arg0, %c0_i32 : i32, i32
  }
  func.func @transform_2(%arg0: i32) -> (i32, i32) {
    %c0_i32 = arith.constant 0 : i32
    %c0_i32_0 = arith.constant 0 : i32
    %c0_i32_1 = arith.constant 0 : i32
    return %c0_i32, %c0_i32_0 : i32, i32
  }
  func.func @transform_3(%arg0: i32) -> (i32, i32) {
    %c0_i32 = arith.constant 0 : i32
    %c0_i32_0 = arith.constant 0 : i32
    %c0_i32_1 = arith.constant 0 : i32
    return %c0_i32, %c0_i32_0 : i32, i32
  }
  func.func @transform_4(%arg0: i32) -> (i32, i32) {
    %c0_i32 = arith.constant 0 : i32
    %c0_i32_0 = arith.constant 0 : i32
    %c0_i32_1 = arith.constant 0 : i32
    return %c0_i32, %c0_i32_0 : i32, i32
  }
  func.func @transform_5(%arg0: i32) -> (i32, i32) {
    %c0_i32 = arith.constant 0 : i32
    %c0_i32_0 = arith.constant 0 : i32
    %c0_i32_1 = arith.constant 0 : i32
    return %c0_i32, %c0_i32_0 : i32, i32
  }
  func.func @transform_6(%arg0: i32) -> (i32, i32) {
    %c0_i32 = arith.constant 0 : i32
    %c0_i32_0 = arith.constant 0 : i32
    %c0_i32_1 = arith.constant 0 : i32
    return %c0_i32, %c0_i32_0 : i32, i32
  }
  func.func @transform_7(%arg0: i32) -> (i32, i32) {
    %c0_i32 = arith.constant 0 : i32
    %c0_i32_0 = arith.constant 0 : i32
    %c0_i32_1 = arith.constant 0 : i32
    return %c0_i32, %c0_i32_0 : i32, i32
  }
  func.func @transform_8(%arg0: i32) -> (i32, i32) {
    %c0_i32 = arith.constant 0 : i32
    %c0_i32_0 = arith.constant 0 : i32
    %c0_i32_1 = arith.constant 0 : i32
    return %c0_i32, %c0_i32_0 : i32, i32
  }
  func.func @transform_9(%arg0: i32) -> (i32, i32) {
    %c0_i32 = arith.constant 0 : i32
    %c0_i32_0 = arith.constant 0 : i32
    %c0_i32_1 = arith.constant 0 : i32
    return %c0_i32, %c0_i32_0 : i32, i32
  }
  func.func @transform_10(%arg0: i32) -> (i32, i32) {
    %c0_i32 = arith.constant 0 : i32
    %c0_i32_0 = arith.constant 0 : i32
    %c0_i32_1 = arith.constant 0 : i32
    return %c0_i32, %c0_i32_0 : i32, i32
  }
  func.func @transform_11(%arg0: i32) -> (i32, i32) {
    %c0_i32 = arith.constant 0 : i32
    %c0_i32_0 = arith.constant 0 : i32
    %c0_i32_1 = arith.constant 0 : i32
    return %c0_i32, %c0_i32_0 : i32, i32
  }
  func.func @transform_12(%arg0: i32) -> (i32, i32) {
    %c0_i32 = arith.constant 0 : i32
    %c0_i32_0 = arith.constant 0 : i32
    %c0_i32_1 = arith.constant 0 : i32
    return %c0_i32, %c0_i32_0 : i32, i32
  }
  func.func @transform_13(%arg0: i32) -> (i32, i32) {
    %c0_i32 = arith.constant 0 : i32
    %c0_i32_0 = arith.constant 0 : i32
    %c0_i32_1 = arith.constant 0 : i32
    return %c0_i32, %c0_i32_0 : i32, i32
  }
}

</mosaic_0001>

<llo_original>
// kernel: global_discriminator_forward.1
$region0: #{global_discriminator_forward.1}
  #allocation0 [shape = 'u32[]', space=smem, size = 0x4, offset = 0x4, fixed_abs, tag = 'smem constant byte address 0x4 - core index']
  #allocation1 [shape = 'u32[144,128]{1,0:T(1,128)}', space=vmem, size = 0x12000, scoped, tag = 'internal scratch']
  #allocation2 [shape = 'f32[2,512]{1,0:T(2,128)}', space=vmem, size = 0x1000, scoped, tag = 'scratch operand']
  #allocation3 [shape = 'f32[2,288]{1,0:T(2,128)}', space=vmem, size = 0xc00, scoped, tag = 'scratch operand']
  #allocation4 [shape = 'f32[18,576]{1,0:T(8,128)}', space=vmem, size = 0xf000, scoped, tag = 'scratch operand']
  #allocation5 [shape = 'f32[1,1]{1,0:T(1,128)S(1)}', space=vmem, size = 0x200, scoped, tag = 'scoped memory for global_discriminator_forward.1']
  %s0 = inlined_call_operand.vmem [shape: f32[2,3584], index: 0, kind: input, shape index: {}]
  %s1 = inlined_call_operand.hbm [shape: bf16[3584,512], index: 1, kind: input, shape index: {}]
  %s2 = inlined_call_operand.vmem [shape: bf16[50,1728], index: 2, kind: input, shape index: {}]
  %s3 = inlined_call_operand.vmem [shape: bf16[1728,64], index: 3, kind: input, shape index: {}]
  %s4 = inlined_call_operand.hbm [shape: f32[1,64], index: 4, kind: input, shape index: {}]
  %s5 = inlined_call_operand.vmem [shape: bf16[576,32], index: 5, kind: input, shape index: {}]
  %s6 = inlined_call_operand.hbm [shape: f32[1,32], index: 6, kind: input, shape index: {}]
  %s7 = inlined_call_operand.vmem [shape: bf16[288,512], index: 7, kind: input, shape index: {}]
  %s8 = inlined_call_operand.hbm [shape: f32[1,512], index: 8, kind: input, shape index: {}]
  %s9 = inlined_call_operand.vmem [shape: bf16[512,512], index: 9, kind: input, shape index: {}]
  %s10 = inlined_call_operand.hbm [shape: f32[1,512], index: 10, kind: input, shape index: {}]
  %s11 = inlined_call_operand.vmem [shape: f32[512,1], index: 11, kind: input, shape index: {}]
  %s12 = inlined_call_operand.<no memory space> [shape: f32[1,1], index: 12, kind: input, shape index: {}]
  %s13 = inlined_call_operand.vmem [shape: f32[2,1], index: 13, kind: output, shape index: {}]
  %s14 = sld [smem:[#allocation0]]
  $region113: #{global_discriminator_forward.1} parent=0
    _
  %s16 = ssub.s32 1, %s14
  %s17 = scalar_select 0, %s16, %s14
  %v18 = vstv %s12
  %19 = vst [vmem:[#allocation5] sm:$0x1] %v18
  $region1: #{global_discriminator_forward.1} parent=0
    #allocation6 [shape = 'u8[1835008]{0}', space=vmem, size = 0x1c0000, scoped, tag = 'input window, operand 1']
    #allocation7 [shape = 's32[2]{0}', space=sflag, size = 0x8, scoped, tag = 'scoped memory for global_discriminator_forward.1']
    #allocation8 [shape = 'u8[512]{0}', space=vmem, size = 0x400, scoped, tag = 'input window, operand 4, single buffered']
    #allocation9 [shape = 's32[1]{0}', space=sflag, size = 0x4, scoped, tag = 'scoped memory for global_discriminator_forward.1']
    #allocation10 [shape = 'u8[512]{0}', space=vmem, size = 0x400, scoped, tag = 'input window, operand 6, single buffered']
    #allocation11 [shape = 'u8[2048]{0}', space=vmem, size = 0x800, scoped, tag = 'input window, operand 8, single buffered']
    #allocation12 [shape = 's32[1]{0}', space=sflag, size = 0x4, scoped, tag = 'scoped memory for global_discriminator_forward.1']
    #allocation13 [shape = 'u8[2048]{0}', space=vmem, size = 0x800, scoped, tag = 'input window, operand 10, single buffered']
    %20 = vsyncpa [#allocation7], 0
    %s21 = scalar_lea.sflag [#allocation7], 1
    %22 = vsyncpa %s21, 0
    %23 = vsyncpa [#allocation9], 0
    %24 = vsyncpa [#allocation12], 0
    loop: start=0, step=1, limit=6
    $region2: #{global_discriminator_forward.1} parent=1 // loop_pre_header
      _
    $region3: #{global_discriminator_forward.1} parent=1 // loop_header
      %s26 = sphi 0, %s30
      %p27 = scmp.ge.s32.totalorder %s26, 6
      %s36 = sphi 0, %s38
      %s39 = sphi 0, %s36
      %s40 = sphi 0, %s39
      %s56 = sphi 0, %s40
      %s62 = sphi 0, %s64
      %s65 = sphi 0, %s62
      %s66 = sphi 0, %s65
      %s82 = sphi 0, %s66
      %s86 = sphi 0, %s86
      %s88 = sphi 0, %s86
      %s89 = sphi 0, %s88
      %s103 = sphi 0, %s89
      %s107 = sphi 0, %s107
      %s109 = sphi 0, %s107
      %s110 = sphi 0, %s109
      %s124 = sphi 0, %s110
      %s128 = sphi 0, %s128
      %s130 = sphi 0, %s128
      %s131 = sphi 0, %s130
      %s145 = sphi 0, %s131
      %s149 = sphi 0, %s149
      %s151 = sphi 0, %s149
      %s152 = sphi 0, %s151
      %s166 = sphi 0, %s152
      %s170 = sphi 0, %s170
      %s172 = sphi 0, %s170
      %s173 = sphi 0, %s172
      %s187 = sphi 0, %s173
      %s191 = sphi 0, %s191
      %s193 = sphi 0, %s191
      %s194 = sphi 0, %s193
      %s208 = sphi 0, %s194
      %s212 = sphi 0, %s212
      %s214 = sphi 0, %s212
      %s215 = sphi 0, %s214
      %s229 = sphi 0, %s215
      %s233 = sphi 0, %s233
      %s235 = sphi 0, %s233
      %s236 = sphi 0, %s235
      %s250 = sphi 0, %s236
      %s254 = sphi 0, %s254
      %s256 = sphi 0, %s254
      %s257 = sphi 0, %s256
      %s271 = sphi 0, %s257
      %s275 = sphi 0, %s275
      %s277 = sphi 0, %s275
      %s278 = sphi 0, %s277
      %s292 = sphi 0, %s278
      %s296 = sphi 0, %s296
      %s298 = sphi 0, %s296
      %s299 = sphi 0, %s298
      %s313 = sphi 0, %s299
      %s317 = sphi 0, %s317
      %s319 = sphi 0, %s317
      %s320 = sphi 0, %s319
      %s334 = sphi 0, %s320
    $region4: #{global_discriminator_forward.1} parent=1 // loop_header_branch
      %29 = sbr.rel (%p27) target = $region8
    $region5: #{global_discriminator_forward.1} parent=1 // loop_body
      %s31 = ssub.s32 %s26, 1
      %s32 = ssub.s32 %s26, 2
      %s33 = sadd.s32 %s26, 1
      %s34 = ssub.s32 %s26, %s33
      %p35 = scmp.eq.s32.totalorder %s34, 0
      %s37 = sadd.s32 %s36, 1
      %s38 = scalar_select %p35, %s36, %s37
      %p41 = pneg %p35
      %p42 = scmp.eq.s32.totalorder %s26, 3
      %p43 = por %p41, %p42
      %p44 = scmp.ne.s32.totalorder %s36, %s39
      %p45 = scmp.eq.s32.totalorder %s26, 0
      %p46 = por %p44, %p45
      %p47 = scmp.ne.s32.totalorder %s36, %s39
      %p48 = scmp.eq.s32.totalorder %s31, 3
      %p49 = por %p47, %p48
      %p50 = scmp.ne.s32.totalorder %s39, %s40
      %p51 = scmp.eq.s32.totalorder %s31, 0
      %p52 = por %p50, %p51
      %p53 = scmp.ne.s32.totalorder %s39, %s40
      %p54 = scmp.eq.s32.totalorder %s32, 3
      %p55 = por %p53, %p54
      %p57 = scmp.ne.s32.totalorder %s40, %s56
      %p58 = scmp.eq.s32.totalorder %s32, 0
      %p59 = por %p57, %p58
      %s60 = ssub.s32 %s26, %s33
      %p61 = scmp.eq.s32.totalorder %s60, 0
      %s63 = sadd.s32 %s62, 1
      %s64 = scalar_select %p61, %s62, %s63
      %p67 = pneg %p61
      %p68 = scmp.eq.s32.totalorder %s26, 3
      %p69 = por %p67, %p68
      %p70 = scmp.ne.s32.totalorder %s62, %s65
      %p71 = scmp.eq.s32.totalorder %s26, 0
      %p72 = por %p70, %p71
      %p73 = scmp.ne.s32.totalorder %s62, %s65
      %p74 = scmp.eq.s32.totalorder %s31, 3
      %p75 = por %p73, %p74
      %p76 = scmp.ne.s32.totalorder %s65, %s66
      %p77 = scmp.eq.s32.totalorder %s31, 0
      %p78 = por %p76, %p77
      %p79 = scmp.ne.s32.totalorder %s65, %s66
      %p80 = scmp.eq.s32.totalorder %s32, 3
      %p81 = por %p79, %p80
      %p83 = scmp.ne.s32.totalorder %s66, %s82
      %p84 = scmp.eq.s32.totalorder %s32, 0
      %p85 = por %p83, %p84
      %s87 = sadd.s32 %s86, 1
      %p90 = scmp.eq.s32.totalorder %s26, 3
      %p91 = scmp.ne.s32.totalorder %s86, %s88
      %p92 = scmp.eq.s32.totalorder %s26, 0
      %p93 = por %p91, %p92
      %p94 = scmp.ne.s32.totalorder %s86, %s88
      %p95 = scmp.eq.s32.totalorder %s31, 3
      %p96 = por %p94, %p95
      %p97 = scmp.ne.s32.totalorder %s88, %s89
      %p98 = scmp.eq.s32.totalorder %s31, 0
      %p99 = por %p97, %p98
      %p100 = scmp.ne.s32.totalorder %s88, %s89
      %p101 = scmp.eq.s32.totalorder %s32, 3
      %p102 = por %p100, %p101
      %p104 = scmp.ne.s32.totalorder %s89, %s103
      %p105 = scmp.eq.s32.totalorder %s32, 0
      %p106 = por %p104, %p105
      %s108 = sadd.s32 %s107, 1
      %p111 = scmp.eq.s32.totalorder %s26, 3
      %p112 = scmp.ne.s32.totalorder %s107, %s109
      %p113 = scmp.eq.s32.totalorder %s26, 0
      %p114 = por %p112, %p113
      %p115 = scmp.ne.s32.totalorder %s107, %s109
      %p116 = scmp.eq.s32.totalorder %s31, 3
      %p117 = por %p115, %p116
      %p118 = scmp.ne.s32.totalorder %s109, %s110
      %p119 = scmp.eq.s32.totalorder %s31, 0
      %p120 = por %p118, %p119
      %p121 = scmp.ne.s32.totalorder %s109, %s110
      %p122 = scmp.eq.s32.totalorder %s32, 3
      %p123 = por %p121, %p122
      %p125 = scmp.ne.s32.totalorder %s110, %s124
      %p126 = scmp.eq.s32.totalorder %s32, 0
      %p127 = por %p125, %p126
      %s129 = sadd.s32 %s128, 1
      %p132 = scmp.eq.s32.totalorder %s26, 3
      %p133 = scmp.ne.s32.totalorder %s128, %s130
      %p134 = scmp.eq.s32.totalorder %s26, 0
      %p135 = por %p133, %p134
      %p136 = scmp.ne.s32.totalorder %s128, %s130
      %p137 = scmp.eq.s32.totalorder %s31, 3
      %p138 = por %p136, %p137
      %p139 = scmp.ne.s32.totalorder %s130, %s131
      %p140 = scmp.eq.s32.totalorder %s31, 0
      %p141 = por %p139, %p140
      %p142 = scmp.ne.s32.totalorder %s130, %s131
      %p143 = scmp.eq.s32.totalorder %s32, 3
      %p144 = por %p142, %p143
      %p146 = scmp.ne.s32.totalorder %s131, %s145
      %p147 = scmp.eq.s32.totalorder %s32, 0
      %p148 = por %p146, %p147
      %s150 = sadd.s32 %s149, 1
      %p153 = scmp.eq.s32.totalorder %s26, 3
      %p154 = scmp.ne.s32.totalorder %s149, %s151
      %p155 = scmp.eq.s32.totalorder %s26, 0
      %p156 = por %p154, %p155
      %p157 = scmp.ne.s32.totalorder %s149, %s151
      %p158 = scmp.eq.s32.totalorder %s31, 3
      %p159 = por %p157, %p158
      %p160 = scmp.ne.s32.totalorder %s151, %s152
      %p161 = scmp.eq.s32.totalorder %s31, 0
      %p162 = por %p160, %p161
      %p163 = scmp.ne.s32.totalorder %s151, %s152
      %p164 = scmp.eq.s32.totalorder %s32, 3
      %p165 = por %p163, %p164
      %p167 = scmp.ne.s32.totalorder %s152, %s166
      %p168 = scmp.eq.s32.totalorder %s32, 0
      %p169 = por %p167, %p168
      %s171 = sadd.s32 %s170, 1
      %p174 = scmp.eq.s32.totalorder %s26, 3
      %p175 = scmp.ne.s32.totalorder %s170, %s172
      %p176 = scmp.eq.s32.totalorder %s26, 0
      %p177 = por %p175, %p176
      %p178 = scmp.ne.s32.totalorder %s170, %s172
      %p179 = scmp.eq.s32.totalorder %s31, 3
      %p180 = por %p178, %p179
      %p181 = scmp.ne.s32.totalorder %s172, %s173
      %p182 = scmp.eq.s32.totalorder %s31, 0
      %p183 = por %p181, %p182
      %p184 = scmp.ne.s32.totalorder %s172, %s173
      %p185 = scmp.eq.s32.totalorder %s32, 3
      %p186 = por %p184, %p185
      %p188 = scmp.ne.s32.totalorder %s173, %s187
      %p189 = scmp.eq.s32.totalorder %s32, 0
      %p190 = por %p188, %p189
      %s192 = sadd.s32 %s191, 1
      %p195 = scmp.eq.s32.totalorder %s26, 3
      %p196 = scmp.ne.s32.totalorder %s191, %s193
      %p197 = scmp.eq.s32.totalorder %s26, 0
      %p198 = por %p196, %p197
      %p199 = scmp.ne.s32.totalorder %s191, %s193
      %p200 = scmp.eq.s32.totalorder %s31, 3
      %p201 = por %p199, %p200
      %p202 = scmp.ne.s32.totalorder %s193, %s194
      %p203 = scmp.eq.s32.totalorder %s31, 0
      %p204 = por %p202, %p203
      %p205 = scmp.ne.s32.totalorder %s193, %s194
      %p206 = scmp.eq.s32.totalorder %s32, 3
      %p207 = por %p205, %p206
      %p209 = scmp.ne.s32.totalorder %s194, %s208
      %p210 = scmp.eq.s32.totalorder %s32, 0
      %p211 = por %p209, %p210
      %s213 = sadd.s32 %s212, 1
      %p216 = scmp.eq.s32.totalorder %s26, 3
      %p217 = scmp.ne.s32.totalorder %s212, %s214
      %p218 = scmp.eq.s32.totalorder %s26, 0
      %p219 = por %p217, %p218
      %p220 = scmp.ne.s32.totalorder %s212, %s214
      %p221 = scmp.eq.s32.totalorder %s31, 3
      %p222 = por %p220, %p221
      %p223 = scmp.ne.s32.totalorder %s214, %s215
      %p224 = scmp.eq.s32.totalorder %s31, 0
      %p225 = por %p223, %p224
      %p226 = scmp.ne.s32.totalorder %s214, %s215
      %p227 = scmp.eq.s32.totalorder %s32, 3
      %p228 = por %p226, %p227
      %p230 = scmp.ne.s32.totalorder %s215, %s229
      %p231 = scmp.eq.s32.totalorder %s32, 0
      %p232 = por %p230, %p231
      %s234 = sadd.s32 %s233, 1
      %p237 = scmp.eq.s32.totalorder %s26, 3
      %p238 = scmp.ne.s32.totalorder %s233, %s235
      %p239 = scmp.eq.s32.totalorder %s26, 0
      %p240 = por %p238, %p239
      %p241 = scmp.ne.s32.totalorder %s233, %s235
      %p242 = scmp.eq.s32.totalorder %s31, 3
      %p243 = por %p241, %p242
      %p244 = scmp.ne.s32.totalorder %s235, %s236
      %p245 = scmp.eq.s32.totalorder %s31, 0
      %p246 = por %p244, %p245
      %p247 = scmp.ne.s32.totalorder %s235, %s236
      %p248 = scmp.eq.s32.totalorder %s32, 3
      %p249 = por %p247, %p248
      %p251 = scmp.ne.s32.totalorder %s236, %s250
      %p252 = scmp.eq.s32.totalorder %s32, 0
      %p253 = por %p251, %p252
      %s255 = sadd.s32 %s254, 1
      %p258 = scmp.eq.s32.totalorder %s26, 3
      %p259 = scmp.ne.s32.totalorder %s254, %s256
      %p260 = scmp.eq.s32.totalorder %s26, 0
      %p261 = por %p259, %p260
      %p262 = scmp.ne.s32.totalorder %s254, %s256
      %p263 = scmp.eq.s32.totalorder %s31, 3
      %p264 = por %p262, %p263
      %p265 = scmp.ne.s32.totalorder %s256, %s257
      %p266 = scmp.eq.s32.totalorder %s31, 0
      %p267 = por %p265, %p266
      %p268 = scmp.ne.s32.totalorder %s256, %s257
      %p269 = scmp.eq.s32.totalorder %s32, 3
      %p270 = por %p268, %p269
      %p272 = scmp.ne.s32.totalorder %s257, %s271
      %p273 = scmp.eq.s32.totalorder %s32, 0
      %p274 = por %p272, %p273
      %s276 = sadd.s32 %s275, 1
      %p279 = scmp.eq.s32.totalorder %s26, 3
      %p280 = scmp.ne.s32.totalorder %s275, %s277
      %p281 = scmp.eq.s32.totalorder %s26, 0
      %p282 = por %p280, %p281
      %p283 = scmp.ne.s32.totalorder %s275, %s277
      %p284 = scmp.eq.s32.totalorder %s31, 3
      %p285 = por %p283, %p284
      %p286 = scmp.ne.s32.totalorder %s277, %s278
      %p287 = scmp.eq.s32.totalorder %s31, 0
      %p288 = por %p286, %p287
      %p289 = scmp.ne.s32.totalorder %s277, %s278
      %p290 = scmp.eq.s32.totalorder %s32, 3
      %p291 = por %p289, %p290
      %p293 = scmp.ne.s32.totalorder %s278, %s292
      %p294 = scmp.eq.s32.totalorder %s32, 0
      %p295 = por %p293, %p294
      %s297 = sadd.s32 %s296, 1
      %p300 = scmp.eq.s32.totalorder %s26, 3
      %p301 = scmp.ne.s32.totalorder %s296, %s298
      %p302 = scmp.eq.s32.totalorder %s26, 0
      %p303 = por %p301, %p302
      %p304 = scmp.ne.s32.totalorder %s296, %s298
      %p305 = scmp.eq.s32.totalorder %s31, 3
      %p306 = por %p304, %p305
      %p307 = scmp.ne.s32.totalorder %s298, %s299
      %p308 = scmp.eq.s32.totalorder %s31, 0
      %p309 = por %p307, %p308
      %p310 = scmp.ne.s32.totalorder %s298, %s299
      %p311 = scmp.eq.s32.totalorder %s32, 3
      %p312 = por %p310, %p311
      %p314 = scmp.ne.s32.totalorder %s299, %s313
      %p315 = scmp.eq.s32.totalorder %s32, 0
      %p316 = por %p314, %p315
      %s318 = sadd.s32 %s317, 1
      %p321 = scmp.eq.s32.totalorder %s26, 3
      %p322 = scmp.ne.s32.totalorder %s317, %s319
      %p323 = scmp.eq.s32.totalorder %s26, 0
      %p324 = por %p322, %p323
      %p325 = scmp.ne.s32.totalorder %s317, %s319
      %p326 = scmp.eq.s32.totalorder %s31, 3
      %p327 = por %p325, %p326
      %p328 = scmp.ne.s32.totalorder %s319, %s320
      %p329 = scmp.eq.s32.totalorder %s31, 0
      %p330 = por %p328, %p329
      %p331 = scmp.ne.s32.totalorder %s319, %s320
      %p332 = scmp.eq.s32.totalorder %s32, 3
      %p333 = por %p331, %p332
      %p335 = scmp.ne.s32.totalorder %s320, %s334
      %p336 = scmp.eq.s32.totalorder %s32, 0
      %p337 = por %p335, %p336
      %p338 = scmp.le.s32.totalorder 1, %s26
      %p339 = scmp.lt.s32.totalorder %s26, 5
      %p340 = pnand %p338, %p339
      %p341 = pneg %p340
      // Predicated region
      $region9: #{global_discriminator_forward.1} parent=5 // pred_check
        _
      $region10: #{global_discriminator_forward.1} parent=5 // pred_check_branch
        %343 = sbr.rel (%p340) target = $region12
      $region11: #{global_discriminator_forward.1} parent=5 // pred_region
        %s344 = ssub.s32 %s26, 1
        // Predicated region
        $region13: #{global_discriminator_forward.1} parent=11 // pred_check
          %p345 = pneg %p99
        $region14: #{global_discriminator_forward.1} parent=11 // pred_check_branch
          %347 = sbr.rel (%p345) target = $region16
        $region15: #{global_discriminator_forward.1} parent=11 // pred_region
          _
        $region16: #{global_discriminator_forward.1} parent=11 // pred_fallthru
          _
        // Predicated region
        $region17: #{global_discriminator_forward.1} parent=11 // pred_check
          %p348 = pneg %p120
        $region18: #{global_discriminator_forward.1} parent=11 // pred_check_branch
          %350 = sbr.rel (%p348) target = $region20
        $region19: #{global_discriminator_forward.1} parent=11 // pred_region
          _
        $region20: #{global_discriminator_forward.1} parent=11 // pred_fallthru
          _
        // Predicated region
        $region21: #{global_discriminator_forward.1} parent=11 // pred_check
          %p351 = pneg %p141
        $region22: #{global_discriminator_forward.1} parent=11 // pred_check_branch
          %353 = sbr.rel (%p351) target = $region24
        $region23: #{global_discriminator_forward.1} parent=11 // pred_region
          %s355 = ssub.s32 16, 16
          %356 = vsyncadd [#allocation9], %s355
          %s358 = sshll.u32 [#allocation8], 4
          %s359 = int_to_ptr.vmem [resolvable:$true] %s358
          %361 = dma.hbm_to_vmem [thread:$0]  %s4, 16, %s359, [#allocation9]
        $region24: #{global_discriminator_forward.1} parent=11 // pred_fallthru
          _
        // Predicated region
        $region25: #{global_discriminator_forward.1} parent=11 // pred_check
          %p362 = pneg %p162
        $region26: #{global_discriminator_forward.1} parent=11 // pred_check_branch
          %364 = sbr.rel (%p362) target = $region28
        $region27: #{global_discriminator_forward.1} parent=11 // pred_region
          _
        $region28: #{global_discriminator_forward.1} parent=11 // pred_fallthru
          _
        // Predicated region
        $region29: #{global_discriminator_forward.1} parent=11 // pred_check
          %p365 = pneg %p183
        $region30: #{global_discriminator_forward.1} parent=11 // pred_check_branch
          %367 = sbr.rel (%p365) target = $region32
        $region31: #{global_discriminator_forward.1} parent=11 // pred_region
          %s369 = ssub.s32 16, 16
          %370 = vsyncadd [#allocation9], %s369
          %s372 = sshll.u32 [#allocation10], 4
          %s373 = int_to_ptr.vmem [resolvable:$true] %s372
          %375 = dma.hbm_to_vmem [thread:$0]  %s6, 16, %s373, [#allocation9]
        $region32: #{global_discriminator_forward.1} parent=11 // pred_fallthru
          _
        // Predicated region
        $region33: #{global_discriminator_forward.1} parent=11 // pred_check
          %p376 = pneg %p204
        $region34: #{global_discriminator_forward.1} parent=11 // pred_check_branch
          %378 = sbr.rel (%p376) target = $region36
        $region35: #{global_discriminator_forward.1} parent=11 // pred_region
          _
        $region36: #{global_discriminator_forward.1} parent=11 // pred_fallthru
          _
        // Predicated region
        $region37: #{global_discriminator_forward.1} parent=11 // pred_check
          %p379 = pneg %p225
        $region38: #{global_discriminator_forward.1} parent=11 // pred_check_branch
          %381 = sbr.rel (%p379) target = $region40
        $region39: #{global_discriminator_forward.1} parent=11 // pred_region
          %s383 = ssub.s32 64, 64
          %384 = vsyncadd [#allocation12], %s383
          %s386 = sshll.u32 [#allocation11], 4
          %s387 = int_to_ptr.vmem [resolvable:$true] %s386
          %389 = dma.hbm_to_vmem [thread:$0]  %s8, 64, %s387, [#allocation12]
        $region40: #{global_discriminator_forward.1} parent=11 // pred_fallthru
          _
        // Predicated region
        $region41: #{global_discriminator_forward.1} parent=11 // pred_check
          %p390 = pneg %p246
        $region42: #{global_discriminator_forward.1} parent=11 // pred_check_branch
          %392 = sbr.rel (%p390) target = $region44
        $region43: #{global_discriminator_forward.1} parent=11 // pred_region
          _
        $region44: #{global_discriminator_forward.1} parent=11 // pred_fallthru
          _
        // Predicated region
        $region45: #{global_discriminator_forward.1} parent=11 // pred_check
          %p393 = pneg %p267
        $region46: #{global_discriminator_forward.1} parent=11 // pred_check_branch
          %395 = sbr.rel (%p393) target = $region48
        $region47: #{global_discriminator_forward.1} parent=11 // pred_region
          %s397 = ssub.s32 64, 64
          %398 = vsyncadd [#allocation12], %s397
          %s400 = sshll.u32 [#allocation13], 4
          %s401 = int_to_ptr.vmem [resolvable:$true] %s400
          %403 = dma.hbm_to_vmem [thread:$0]  %s10, 64, %s401, [#allocation12]
        $region48: #{global_discriminator_forward.1} parent=11 // pred_fallthru
          _
        // Predicated region
        $region49: #{global_discriminator_forward.1} parent=11 // pred_check
          %p404 = pneg %p288
        $region50: #{global_discriminator_forward.1} parent=11 // pred_check_branch
          %406 = sbr.rel (%p404) target = $region52
        $region51: #{global_discriminator_forward.1} parent=11 // pred_region
          _
        $region52: #{global_discriminator_forward.1} parent=11 // pred_fallthru
          _
        // Predicated region
        $region53: #{global_discriminator_forward.1} parent=11 // pred_check
          %p407 = pneg %p309
        $region54: #{global_discriminator_forward.1} parent=11 // pred_check_branch
          %409 = sbr.rel (%p407) target = $region56
        $region55: #{global_discriminator_forward.1} parent=11 // pred_region
          _
        $region56: #{global_discriminator_forward.1} parent=11 // pred_fallthru
          _
      $region12: #{global_discriminator_forward.1} parent=5 // pred_fallthru
        _
      %p410 = scmp.lt.s32.totalorder %s26, 4
      // Predicated region
      $region57: #{global_discriminator_forward.1} parent=5 // pred_check
        %p411 = pneg %p410
      $region58: #{global_discriminator_forward.1} parent=5 // pred_check_branch
        %413 = sbr.rel (%p411) target = $region60
      $region59: #{global_discriminator_forward.1} parent=5 // pred_region
        // Predicated region
        $region61: #{global_discriminator_forward.1} parent=59 // pred_check
          %p414 = pneg %p46
        $region62: #{global_discriminator_forward.1} parent=59 // pred_check_branch
          %416 = sbr.rel (%p414) target = $region64
        $region63: #{global_discriminator_forward.1} parent=59 // pred_region
          %s417 = smul.u32 7, %s26
          %p418 = scmp.lt.s32.totalorder %s417, 27
          %s419 = scalar_select %p418, %s417, 27
          %s420 = smul.addr %s419, 2
          %s421 = scalar_lea.vmem %s0, %s420
          %s422 = smul.u32 7, %s26
        $region64: #{global_discriminator_forward.1} parent=59 // pred_fallthru
          _
        // Predicated region
        $region65: #{global_discriminator_forward.1} parent=59 // pred_check
          %p423 = pneg %p72
        $region66: #{global_discriminator_forward.1} parent=59 // pred_check_branch
          %425 = sbr.rel (%p423) target = $region68
        $region67: #{global_discriminator_forward.1} parent=59 // pred_region
          %s426 = sand.u32 %s62, 1
          %s427 = scalar_lea.sflag [#allocation7], %s426
          %s428 = sand.u32 %s62, 1
          %s429 = smul.addr %s428, 1792
          %s430 = scalar_lea.vmem [#allocation6], %s429
          %s431 = smul.u32 112, %s26
          %s433 = ssub.s32 28672, 28672
          %434 = vsyncadd %s427, %s433
          %s435 = smul.addr %s431, 4
          %s436 = smul.addr %s435, 64
          %s437 = scalar_lea.hbm %s1, %s436
          %s438 = sshll.u32 %s430, 4
          %s439 = int_to_ptr.vmem [resolvable:$true] %s438
          %444 = dma.hbm_to_vmem [thread:$0]  %s437, 28672, %s439, %s427, 256, 256, 16
        $region68: #{global_discriminator_forward.1} parent=59 // pred_fallthru
          _
      $region60: #{global_discriminator_forward.1} parent=5 // pred_fallthru
        _
      %p445 = scmp.le.s32.totalorder 1, %s26
      %p446 = scmp.lt.s32.totalorder %s26, 5
      %p447 = pnand %p445, %p446
      %p448 = pneg %p447
      // Predicated region
      $region69: #{global_discriminator_forward.1} parent=5 // pred_check
        _
      $region70: #{global_discriminator_forward.1} parent=5 // pred_check_branch
        %450 = sbr.rel (%p447) target = $region72
      $region71: #{global_discriminator_forward.1} parent=5 // pred_region
        %s451 = ssub.s32 %s26, 1
        %s452 = sand.u32 %s65, 1
        %s453 = scalar_lea.sflag [#allocation7], %s452
        %s454 = sand.u32 %s65, 1
        %s455 = smul.addr %s454, 1792
        %s456 = scalar_lea.vmem [#allocation6], %s455
        // Predicated region
        $region73: #{global_discriminator_forward.1} parent=71 // pred_check
          %p457 = pneg %p78
        $region74: #{global_discriminator_forward.1} parent=71 // pred_check_branch
          %459 = sbr.rel (%p457) target = $region76
        $region75: #{global_discriminator_forward.1} parent=71 // pred_region
          %460 = dma.done %s453, 28672
        $region76: #{global_discriminator_forward.1} parent=71 // pred_fallthru
          _
        // Predicated region
        $region77: #{global_discriminator_forward.1} parent=71 // pred_check
          %p461 = pneg %p141
        $region78: #{global_discriminator_forward.1} parent=71 // pred_check_branch
          %463 = sbr.rel (%p461) target = $region80
        $region79: #{global_discriminator_forward.1} parent=71 // pred_region
          %464 = dma.done [#allocation9], 16
        $region80: #{global_discriminator_forward.1} parent=71 // pred_fallthru
          _
        // Predicated region
        $region81: #{global_discriminator_forward.1} parent=71 // pred_check
          %p465 = pneg %p183
        $region82: #{global_discriminator_forward.1} parent=71 // pred_check_branch
          %467 = sbr.rel (%p465) target = $region84
        $region83: #{global_discriminator_forward.1} parent=71 // pred_region
          %468 = dma.done [#allocation9], 16
        $region84: #{global_discriminator_forward.1} parent=71 // pred_fallthru
          _
        // Predicated region
        $region85: #{global_discriminator_forward.1} parent=71 // pred_check
          %p469 = pneg %p225
        $region86: #{global_discriminator_forward.1} parent=71 // pred_check_branch
          %471 = sbr.rel (%p469) target = $region88
        $region87: #{global_discriminator_forward.1} parent=71 // pred_region
          %472 = dma.done [#allocation12], 64
        $region88: #{global_discriminator_forward.1} parent=71 // pred_fallthru
          _
        // Predicated region
        $region89: #{global_discriminator_forward.1} parent=71 // pred_check
          %p473 = pneg %p267
        $region90: #{global_discriminator_forward.1} parent=71 // pred_check_branch
          %475 = sbr.rel (%p473) target = $region92
        $region91: #{global_discriminator_forward.1} parent=71 // pred_region
          %476 = dma.done [#allocation12], 64
        $region92: #{global_discriminator_forward.1} parent=71 // pred_fallthru
          _
        %s477 = smul.u32 7, %s31
        %p478 = scmp.lt.s32.totalorder %s477, 27
        %s479 = scalar_select %p478, %s477, 27
        %s480 = smul.addr %s479, 2
        %s481 = scalar_lea.vmem %s0, %s480
        %p482 = pneg %p52
        %p483 = pneg %p49
        %s484 = sand.u32 %s65, 1
        %s485 = scalar_lea.sflag [#allocation7], %s484
        %s486 = sand.u32 %s65, 1
        %s487 = smul.addr %s486, 1792
        %s488 = scalar_lea.vmem [#allocation6], %s487
        %p489 = pneg %p78
        %p490 = pneg %p75
        %p491 = pneg %p99
        %p492 = pneg %p96
        %p493 = pneg %p120
        %p494 = pneg %p117
        %p495 = pneg %p141
        %p496 = pneg %p138
        %p497 = pneg %p162
        %p498 = pneg %p159
        %p499 = pneg %p183
        %p500 = pneg %p180
        %p501 = pneg %p204
        %p502 = pneg %p201
        %p503 = pneg %p225
        %p504 = pneg %p222
        %p505 = pneg %p246
        %p506 = pneg %p243
        %p507 = pneg %p267
        %p508 = pneg %p264
        %p509 = pneg %p288
        %p510 = pneg %p285
        %p511 = pneg %p309
        %p512 = pneg %p306
        %p513 = pneg %p330
        %p514 = pneg %p327
        %s515 = smul.u32 7, %s31
        %p516 = scmp.lt.s32.totalorder %s515, 27
        %s517 = scalar_select %p516, %s515, 27
        %s518 = smul.addr %s517, 2
        %s519 = scalar_lea.vmem %s0, %s518
        %s520 = smul.u32 7, %s31
        %s521 = smul.u32 112, %s31
        %p523 = scmp.eq.s32.totalorder %s31, 0
        // Predicated region
        $region93: #{global_discriminator_forward.1} parent=71 // pred_check
          %p524 = pneg %p523
        $region94: #{global_discriminator_forward.1} parent=71 // pred_check_branch
          %526 = sbr.rel (%p524) target = $region96
        $region95: #{global_discriminator_forward.1} parent=71 // pred_region
          %527 = vst [vmem:[#allocation2] sm:$0xff] 0.0
          %v528 = vld [vmem:[%s2] sm:$0xff]
          %v529 = vld [vmem:[%s2 + $0x8] sm:$0xff]
          %v530 = vld [vmem:[%s2 + $0x10] sm:$0xff]
          %v531 = vld [vmem:[%s2 + $0x18] sm:$0xff]
          %v532 = vld [vmem:[%s2 + $0x20] sm:$0xff]
          %v533 = vld [vmem:[%s2 + $0x28] sm:$0xff]
          %v534 = vld [vmem:[%s2 + $0x30] sm:$0xff]
          %v535 = vld [vmem:[%s2 + $0x38] sm:$0xff]
          %v536 = vld [vmem:[%s2 + $0x40] sm:$0xff]
          %v537 = vld [vmem:[%s2 + $0x48] sm:$0xff]
          %v538 = vld [vmem:[%s2 + $0x50] sm:$0xff]
          %v539 = vld [vmem:[%s2 + $0x58] sm:$0xff]
          %v540 = vld [vmem:[%s2 + $0x60] sm:$0xff]
          %v541 = vld [vmem:[%s2 + $0x68] sm:$0xff]
          %v542 = vld [vmem:[%s2 + $0x70] sm:$0xff]
          %v543 = vld [vmem:[%s2 + $0x78] sm:$0xff]
          %v544 = vld [vmem:[%s2 + $0x80] sm:$0xff]
          %v545 = vld [vmem:[%s2 + $0x88] sm:$0xff]
          %v546 = vld [vmem:[%s2 + $0x90] sm:$0xff]
          %v547 = vld [vmem:[%s2 + $0x98] sm:$0xff]
          %v548 = vld [vmem:[%s2 + $0xa0] sm:$0xff]
          %v549 = vld [vmem:[%s2 + $0xa8] sm:$0xff]
          %v550 = vld [vmem:[%s2 + $0xb0] sm:$0xff]
          %v551 = vld [vmem:[%s2 + $0xb8] sm:$0xff]
          %v552 = vld [vmem:[%s2 + $0xc0] sm:$0xff]
          %v553 = vld [vmem:[%s2 + $0xc8] sm:$0xff]
          %v554 = vld [vmem:[%s2 + $0xd0] sm:$0xff]
          %v555 = vld [vmem:[%s2 + $0xd8] sm:$0xff]
          %v556 = vld [vmem:[%s2 + $0xe0] sm:$0xff]
          %v557 = vld [vmem:[%s2 + $0xe8] sm:$0xff]
          %v558 = vld [vmem:[%s2 + $0xf0] sm:$0xff]
          %v559 = vld [vmem:[%s2 + $0xf8] sm:$0xff]
          %v560 = vld [vmem:[%s2 + $0x100] sm:$0xff]
          %v561 = vld [vmem:[%s2 + $0x108] sm:$0xff]
          %v562 = vld [vmem:[%s2 + $0x110] sm:$0xff]
          %v563 = vld [vmem:[%s2 + $0x118] sm:$0xff]
          %v564 = vld [vmem:[%s2 + $0x120] sm:$0xff]
          %v565 = vld [vmem:[%s2 + $0x128] sm:$0xff]
          %v566 = vld [vmem:[%s2 + $0x130] sm:$0xff]
          %v567 = vld [vmem:[%s2 + $0x138] sm:$0xff]
          %v568 = vld [vmem:[%s2 + $0x140] sm:$0xff]
          %v569 = vld [vmem:[%s2 + $0x148] sm:$0xff]
          %v570 = vld [vmem:[%s2 + $0x150] sm:$0x11]
          %v571 = vld [vmem:[%s2 + $0x158] sm:$0x11]
          %v572 = vld [vmem:[%s2 + $0x160] sm:$0x11]
          %v573 = vld [vmem:[%s2 + $0x168] sm:$0x11]
          %v574 = vld [vmem:[%s2 + $0x170] sm:$0x11]
          %v575 = vld [vmem:[%s2 + $0x178] sm:$0x11]
          %v576 = vld [vmem:[%s2 + $0x180] sm:$0x11]
          %v577 = vld [vmem:[%s3] sm:$0xf]
          %v578 = vld [vmem:[%s3 + $0x4] sm:$0xf]
          %v579 = vld [vmem:[%s3 + $0x8] sm:$0xf]
          %v580 = vld [vmem:[%s3 + $0xc] sm:$0xf]
          %v581 = vld [vmem:[%s3 + $0x10] sm:$0xf]
          %v582 = vld [vmem:[%s3 + $0x14] sm:$0xf]
          %v583 = vld [vmem:[%s3 + $0x18] sm:$0xf]
          %v584 = vld [vmem:[%s3 + $0x1c] sm:$0xf]
          %v585 = vld [vmem:[%s3 + $0x20] sm:$0xf]
          %v586 = vld [vmem:[%s3 + $0x24] sm:$0xf]
          %v587 = vld [vmem:[%s3 + $0x28] sm:$0xf]
          %v588 = vld [vmem:[%s3 + $0x2c] sm:$0xf]
          %v589 = vld [vmem:[%s3 + $0x30] sm:$0xf]
          %v590 = vld [vmem:[%s3 + $0x34] sm:$0xf]
          %v591 = vld [vmem:[%s3 + $0x38] sm:$0xf]
          %v592 = vld [vmem:[%s3 + $0x3c] sm:$0xf]
          %v593 = vld [vmem:[%s3 + $0x40] sm:$0xf]
          %v594 = vld [vmem:[%s3 + $0x44] sm:$0xf]
          %v595 = vld [vmem:[%s3 + $0x48] sm:$0xf]
          %v596 = vld [vmem:[%s3 + $0x4c] sm:$0xf]
          %v597 = vld [vmem:[%s3 + $0x50] sm:$0xf]
          %v598 = vld [vmem:[%s3 + $0x54] sm:$0xf]
          %v599 = vld [vmem:[%s3 + $0x58] sm:$0xf]
          %v600 = vld [vmem:[%s3 + $0x5c] sm:$0xf]
          %v601 = vld [vmem:[%s3 + $0x60] sm:$0xf]
          %v602 = vld [vmem:[%s3 + $0x64] sm:$0xf]
          %v603 = vld [vmem:[%s3 + $0x68] sm:$0xf]
          %v604 = vld [vmem:[%s3 + $0x6c] sm:$0xf]
          %v605 = vld [vmem:[%s3 + $0x70] sm:$0xf]
          %v606 = vld [vmem:[%s3 + $0x74] sm:$0xf]
          %v607 = vld [vmem:[%s3 + $0x78] sm:$0xf]
          %v608 = vld [vmem:[%s3 + $0x7c] sm:$0xf]
          %v609 = vld [vmem:[%s3 + $0x80] sm:$0xf]
          %v610 = vld [vmem:[%s3 + $0x84] sm:$0xf]
          %v611 = vld [vmem:[%s3 + $0x88] sm:$0xf]
          %v612 = vld [vmem:[%s3 + $0x8c] sm:$0xf]
          %v613 = vld [vmem:[%s3 + $0x90] sm:$0xf]
          %v614 = vld [vmem:[%s3 + $0x94] sm:$0xf]
          %v615 = vld [vmem:[%s3 + $0x98] sm:$0xf]
          %v616 = vld [vmem:[%s3 + $0x9c] sm:$0xf]
          %v617 = vld [vmem:[%s3 + $0xa0] sm:$0xf]
          %v618 = vld [vmem:[%s3 + $0xa4] sm:$0xf]
          %v619 = vld [vmem:[%s3 + $0xa8] sm:$0xf]
          %v620 = vld [vmem:[%s3 + $0xac] sm:$0xf]
          %v621 = vld [vmem:[%s3 + $0xb0] sm:$0xf]
          %v622 = vld [vmem:[%s3 + $0xb4] sm:$0xf]
          %v623 = vld [vmem:[%s3 + $0xb8] sm:$0xf]
          %v624 = vld [vmem:[%s3 + $0xbc] sm:$0xf]
          %v625 = vld [vmem:[%s3 + $0xc0] sm:$0xf]
          %v626 = vld [vmem:[%s3 + $0xc4] sm:$0xf]
          %v627 = vld [vmem:[%s3 + $0xc8] sm:$0xf]
          %v628 = vld [vmem:[%s3 + $0xcc] sm:$0xf]
          %v629 = vld [vmem:[%s3 + $0xd0] sm:$0xf]
          %v630 = vld [vmem:[%s3 + $0xd4] sm:$0xf]
          %v631 = vld [vmem:[%s3 + $0xd8] sm:$0xf]
          %v632 = vld [vmem:[%s3 + $0xdc] sm:$0xf]
          %v633 = vld [vmem:[%s3 + $0xe0] sm:$0xf]
          %v634 = vld [vmem:[%s3 + $0xe4] sm:$0xf]
          %v635 = vld [vmem:[%s3 + $0xe8] sm:$0xf]
          %v636 = vld [vmem:[%s3 + $0xec] sm:$0xf]
          %v637 = vld [vmem:[%s3 + $0xf0] sm:$0xf]
          %v638 = vld [vmem:[%s3 + $0xf4] sm:$0xf]
          %v639 = vld [vmem:[%s3 + $0xf8] sm:$0xf]
          %v640 = vld [vmem:[%s3 + $0xfc] sm:$0xf]
          %v641 = vld [vmem:[%s3 + $0x100] sm:$0xf]
          %v642 = vld [vmem:[%s3 + $0x104] sm:$0xf]
          %v643 = vld [vmem:[%s3 + $0x108] sm:$0xf]
          %v644 = vld [vmem:[%s3 + $0x10c] sm:$0xf]
          %v645 = vld [vmem:[%s3 + $0x110] sm:$0xf]
          %v646 = vld [vmem:[%s3 + $0x114] sm:$0xf]
          %v647 = vld [vmem:[%s3 + $0x118] sm:$0xf]
          %v648 = vld [vmem:[%s3 + $0x11c] sm:$0xf]
          %v649 = vld [vmem:[%s3 + $0x120] sm:$0xf]
          %v650 = vld [vmem:[%s3 + $0x124] sm:$0xf]
          %v651 = vld [vmem:[%s3 + $0x128] sm:$0xf]
          %v652 = vld [vmem:[%s3 + $0x12c] sm:$0xf]
          %v653 = vld [vmem:[%s3 + $0x130] sm:$0xf]
          %v654 = vld [vmem:[%s3 + $0x134] sm:$0xf]
          %v655 = vld [vmem:[%s3 + $0x138] sm:$0xf]
          %v656 = vld [vmem:[%s3 + $0x13c] sm:$0xf]
          %v657 = vld [vmem:[%s3 + $0x140] sm:$0xf]
          %v658 = vld [vmem:[%s3 + $0x144] sm:$0xf]
          %v659 = vld [vmem:[%s3 + $0x148] sm:$0xf]
          %v660 = vld [vmem:[%s3 + $0x14c] sm:$0xf]
          %v661 = vld [vmem:[%s3 + $0x150] sm:$0xf]
          %v662 = vld [vmem:[%s3 + $0x154] sm:$0xf]
          %v663 = vld [vmem:[%s3 + $0x158] sm:$0xf]
          %v664 = vld [vmem:[%s3 + $0x15c] sm:$0xf]
          %v665 = vld [vmem:[%s3 + $0x160] sm:$0xf]
          %v666 = vld [vmem:[%s3 + $0x164] sm:$0xf]
          %v667 = vld [vmem:[%s3 + $0x168] sm:$0xf]
          %v668 = vld [vmem:[%s3 + $0x16c] sm:$0xf]
          %v669 = vld [vmem:[%s3 + $0x170] sm:$0xf]
          %v670 = vld [vmem:[%s3 + $0x174] sm:$0xf]
          %v671 = vld [vmem:[%s3 + $0x178] sm:$0xf]
          %v672 = vld [vmem:[%s3 + $0x17c] sm:$0xf]
          %v673 = vld [vmem:[%s3 + $0x180] sm:$0xf]
          %v674 = vld [vmem:[%s3 + $0x184] sm:$0xf]
          %v675 = vld [vmem:[%s3 + $0x188] sm:$0xf]
          %v676 = vld [vmem:[%s3 + $0x18c] sm:$0xf]
          %v677 = vld [vmem:[%s3 + $0x190] sm:$0xf]
          %v678 = vld [vmem:[%s3 + $0x194] sm:$0xf]
          %v679 = vld [vmem:[%s3 + $0x198] sm:$0xf]
          %v680 = vld [vmem:[%s3 + $0x19c] sm:$0xf]
          %v681 = vld [vmem:[%s3 + $0x1a0] sm:$0xf]
          %v682 = vld [vmem:[%s3 + $0x1a4] sm:$0xf]
          %v683 = vld [vmem:[%s3 + $0x1a8] sm:$0xf]
          %v684 = vld [vmem:[%s3 + $0x1ac] sm:$0xf]
          %v685 = vld [vmem:[%s3 + $0x1b0] sm:$0xf]
          %v686 = vld [vmem:[%s3 + $0x1b4] sm:$0xf]
          %v687 = vld [vmem:[%s3 + $0x1b8] sm:$0xf]
          %v688 = vld [vmem:[%s3 + $0x1bc] sm:$0xf]
          %v689 = vld [vmem:[%s3 + $0x1c0] sm:$0xf]
          %v690 = vld [vmem:[%s3 + $0x1c4] sm:$0xf]
          %v691 = vld [vmem:[%s3 + $0x1c8] sm:$0xf]
          %v692 = vld [vmem:[%s3 + $0x1cc] sm:$0xf]
          %v693 = vld [vmem:[%s3 + $0x1d0] sm:$0xf]
          %v694 = vld [vmem:[%s3 + $0x1d4] sm:$0xf]
          %v695 = vld [vmem:[%s3 + $0x1d8] sm:$0xf]
          %v696 = vld [vmem:[%s3 + $0x1dc] sm:$0xf]
          %v697 = vld [vmem:[%s3 + $0x1e0] sm:$0xf]
          %v698 = vld [vmem:[%s3 + $0x1e4] sm:$0xf]
          %v699 = vld [vmem:[%s3 + $0x1e8] sm:$0xf]
          %v700 = vld [vmem:[%s3 + $0x1ec] sm:$0xf]
          %v701 = vld [vmem:[%s3 + $0x1f0] sm:$0xf]
          %v702 = vld [vmem:[%s3 + $0x1f4] sm:$0xf]
          %v703 = vld [vmem:[%s3 + $0x1f8] sm:$0xf]
          %v704 = vld [vmem:[%s3 + $0x1fc] sm:$0xf]
          %v705 = vld [vmem:[%s3 + $0x200] sm:$0xf]
          %v706 = vld [vmem:[%s3 + $0x204] sm:$0xf]
          %v707 = vld [vmem:[%s3 + $0x208] sm:$0xf]
          %v708 = vld [vmem:[%s3 + $0x20c] sm:$0xf]
          %v709 = vld [vmem:[%s3 + $0x210] sm:$0xf]
          %v710 = vld [vmem:[%s3 + $0x214] sm:$0xf]
          %v711 = vld [vmem:[%s3 + $0x218] sm:$0xf]
          %v712 = vld [vmem:[%s3 + $0x21c] sm:$0xf]
          %v713 = vld [vmem:[%s3 + $0x220] sm:$0xf]
          %v714 = vld [vmem:[%s3 + $0x224] sm:$0xf]
          %v715 = vld [vmem:[%s3 + $0x228] sm:$0xf]
          %v716 = vld [vmem:[%s3 + $0x22c] sm:$0xf]
          %v717 = vld [vmem:[%s3 + $0x230] sm:$0xf]
          %v718 = vld [vmem:[%s3 + $0x234] sm:$0xf]
          %v719 = vld [vmem:[%s3 + $0x238] sm:$0xf]
          %v720 = vld [vmem:[%s3 + $0x23c] sm:$0xf]
          %v721 = vld [vmem:[%s3 + $0x240] sm:$0xf]
          %v722 = vld [vmem:[%s3 + $0x244] sm:$0xf]
          %v723 = vld [vmem:[%s3 + $0x248] sm:$0xf]
          %v724 = vld [vmem:[%s3 + $0x24c] sm:$0xf]
          %v725 = vld [vmem:[%s3 + $0x250] sm:$0xf]
          %v726 = vld [vmem:[%s3 + $0x254] sm:$0xf]
          %v727 = vld [vmem:[%s3 + $0x258] sm:$0xf]
          %v728 = vld [vmem:[%s3 + $0x25c] sm:$0xf]
          %v729 = vld [vmem:[%s3 + $0x260] sm:$0xf]
          %v730 = vld [vmem:[%s3 + $0x264] sm:$0xf]
          %v731 = vld [vmem:[%s3 + $0x268] sm:$0xf]
          %v732 = vld [vmem:[%s3 + $0x26c] sm:$0xf]
          %v733 = vld [vmem:[%s3 + $0x270] sm:$0xf]
          %v734 = vld [vmem:[%s3 + $0x274] sm:$0xf]
          %v735 = vld [vmem:[%s3 + $0x278] sm:$0xf]
          %v736 = vld [vmem:[%s3 + $0x27c] sm:$0xf]
          %v737 = vld [vmem:[%s3 + $0x280] sm:$0xf]
          %v738 = vld [vmem:[%s3 + $0x284] sm:$0xf]
          %v739 = vld [vmem:[%s3 + $0x288] sm:$0xf]
          %v740 = vld [vmem:[%s3 + $0x28c] sm:$0xf]
          %v741 = vld [vmem:[%s3 + $0x290] sm:$0xf]
          %v742 = vld [vmem:[%s3 + $0x294] sm:$0xf]
          %v743 = vld [vmem:[%s3 + $0x298] sm:$0xf]
          %v744 = vld [vmem:[%s3 + $0x29c] sm:$0xf]
          %v745 = vld [vmem:[%s3 + $0x2a0] sm:$0xf]
          %v746 = vld [vmem:[%s3 + $0x2a4] sm:$0xf]
          %v747 = vld [vmem:[%s3 + $0x2a8] sm:$0xf]
          %v748 = vld [vmem:[%s3 + $0x2ac] sm:$0xf]
          %v749 = vld [vmem:[%s3 + $0x2b0] sm:$0xf]
          %v750 = vld [vmem:[%s3 + $0x2b4] sm:$0xf]
          %v751 = vld [vmem:[%s3 + $0x2b8] sm:$0xf]
          %v752 = vld [vmem:[%s3 + $0x2bc] sm:$0xf]
          %v753 = vld [vmem:[%s3 + $0x2c0] sm:$0xf]
          %v754 = vld [vmem:[%s3 + $0x2c4] sm:$0xf]
          %v755 = vld [vmem:[%s3 + $0x2c8] sm:$0xf]
          %v756 = vld [vmem:[%s3 + $0x2cc] sm:$0xf]
          %v757 = vld [vmem:[%s3 + $0x2d0] sm:$0xf]
          %v758 = vld [vmem:[%s3 + $0x2d4] sm:$0xf]
          %v759 = vld [vmem:[%s3 + $0x2d8] sm:$0xf]
          %v760 = vld [vmem:[%s3 + $0x2dc] sm:$0xf]
          %v761 = vld [vmem:[%s3 + $0x2e0] sm:$0xf]
          %v762 = vld [vmem:[%s3 + $0x2e4] sm:$0xf]
          %v763 = vld [vmem:[%s3 + $0x2e8] sm:$0xf]
          %v764 = vld [vmem:[%s3 + $0x2ec] sm:$0xf]
          %v765 = vld [vmem:[%s3 + $0x2f0] sm:$0xf]
          %v766 = vld [vmem:[%s3 + $0x2f4] sm:$0xf]
          %v767 = vld [vmem:[%s3 + $0x2f8] sm:$0xf]
          %v768 = vld [vmem:[%s3 + $0x2fc] sm:$0xf]
          %v769 = vld [vmem:[%s3 + $0x300] sm:$0xf]
          %v770 = vld [vmem:[%s3 + $0x304] sm:$0xf]
          %v771 = vld [vmem:[%s3 + $0x308] sm:$0xf]
          %v772 = vld [vmem:[%s3 + $0x30c] sm:$0xf]
          %v773 = vld [vmem:[%s3 + $0x310] sm:$0xf]
          %v774 = vld [vmem:[%s3 + $0x314] sm:$0xf]
          %v775 = vld [vmem:[%s3 + $0x318] sm:$0xf]
          %v776 = vld [vmem:[%s3 + $0x31c] sm:$0xf]
          %v777 = vld [vmem:[%s3 + $0x320] sm:$0xf]
          %v778 = vld [vmem:[%s3 + $0x324] sm:$0xf]
          %v779 = vld [vmem:[%s3 + $0x328] sm:$0xf]
          %v780 = vld [vmem:[%s3 + $0x32c] sm:$0xf]
          %v781 = vld [vmem:[%s3 + $0x330] sm:$0xf]
          %v782 = vld [vmem:[%s3 + $0x334] sm:$0xf]
          %v783 = vld [vmem:[%s3 + $0x338] sm:$0xf]
          %v784 = vld [vmem:[%s3 + $0x33c] sm:$0xf]
          %v785 = vld [vmem:[%s3 + $0x340] sm:$0xf]
          %v786 = vld [vmem:[%s3 + $0x344] sm:$0xf]
          %v787 = vld [vmem:[%s3 + $0x348] sm:$0xf]
          %v788 = vld [vmem:[%s3 + $0x34c] sm:$0xf]
          %v789 = vld [vmem:[%s3 + $0x350] sm:$0xf]
          %v790 = vld [vmem:[%s3 + $0x354] sm:$0xf]
          %v791 = vld [vmem:[%s3 + $0x358] sm:$0xf]
          %v792 = vld [vmem:[%s3 + $0x35c] sm:$0xf]
          %v793 = vld [vmem:[#allocation8] sm:$0x1]
          %v795 = vlaneseq
          %v796 = vshrl.u32 %v795, 7
          %v797 = vsub.s32 0, %v796
          %v798 = vrot.slane %v793, %v797
          %v849 = vunpack.c.l.b16 %v528
          %v850 = vunpack.c.h.b16 %v528
          %v851 = vunpack.c.l.b16 %v529
          %v852 = vunpack.c.h.b16 %v529
          %v853 = vunpack.c.l.b16 %v530
          %v854 = vunpack.c.h.b16 %v530
          %v855 = vunpack.c.l.b16 %v531
          %v856 = vunpack.c.h.b16 %v531
          %v857 = vunpack.c.l.b16 %v532
          %v858 = vunpack.c.h.b16 %v532
          %v859 = vunpack.c.l.b16 %v533
          %v860 = vunpack.c.h.b16 %v533
          %v861 = vunpack.c.l.b16 %v534
          %v862 = vunpack.c.h.b16 %v534
          %v863 = vunpack.c.l.b16 %v535
          %v864 = vunpack.c.h.b16 %v535
          %v865 = vunpack.c.l.b16 %v536
          %v866 = vunpack.c.h.b16 %v536
          %v867 = vunpack.c.l.b16 %v537
          %v868 = vunpack.c.h.b16 %v537
          %v869 = vunpack.c.l.b16 %v538
          %v870 = vunpack.c.h.b16 %v538
          %v871 = vunpack.c.l.b16 %v539
          %v872 = vunpack.c.h.b16 %v539
          %v873 = vunpack.c.l.b16 %v540
          %v874 = vunpack.c.h.b16 %v540
          %v875 = vunpack.c.l.b16 %v541
          %v876 = vunpack.c.h.b16 %v541
          %v877 = vunpack.c.l.b16 %v542
          %v878 = vunpack.c.h.b16 %v542
          %v879 = vunpack.c.l.b16 %v543
          %v880 = vunpack.c.h.b16 %v543
          %v881 = vunpack.c.l.b16 %v544
          %v882 = vunpack.c.h.b16 %v544
          %v883 = vunpack.c.l.b16 %v545
          %v884 = vunpack.c.h.b16 %v545
          %v885 = vunpack.c.l.b16 %v546
          %v886 = vunpack.c.h.b16 %v546
          %v887 = vunpack.c.l.b16 %v547
          %v888 = vunpack.c.h.b16 %v547
          %v889 = vunpack.c.l.b16 %v548
          %v890 = vunpack.c.h.b16 %v548
          %v891 = vunpack.c.l.b16 %v549
          %v892 = vunpack.c.h.b16 %v549
          %v893 = vunpack.c.l.b16 %v550
          %v894 = vunpack.c.h.b16 %v550
          %v895 = vunpack.c.l.b16 %v551
          %v896 = vunpack.c.h.b16 %v551
          %v897 = vunpack.c.l.b16 %v552
          %v898 = vunpack.c.h.b16 %v552
          %v899 = vunpack.c.l.b16 %v553
          %v900 = vunpack.c.h.b16 %v553
          %v901 = vunpack.c.l.b16 %v554
          %v902 = vunpack.c.h.b16 %v554
          %v903 = vunpack.c.l.b16 %v555
          %v904 = vunpack.c.h.b16 %v555
          %v905 = vunpack.c.l.b16 %v556
          %v906 = vunpack.c.h.b16 %v556
          %v907 = vunpack.c.l.b16 %v557
          %v908 = vunpack.c.h.b16 %v557
          %v909 = vunpack.c.l.b16 %v558
          %v910 = vunpack.c.h.b16 %v558
          %v911 = vunpack.c.l.b16 %v559
          %v912 = vunpack.c.h.b16 %v559
          %v913 = vunpack.c.l.b16 %v560
          %v914 = vunpack.c.h.b16 %v560
          %v915 = vunpack.c.l.b16 %v561
          %v916 = vunpack.c.h.b16 %v561
          %v917 = vunpack.c.l.b16 %v562
          %v918 = vunpack.c.h.b16 %v562
          %v919 = vunpack.c.l.b16 %v563
          %v920 = vunpack.c.h.b16 %v563
          %v921 = vunpack.c.l.b16 %v564
          %v922 = vunpack.c.h.b16 %v564
          %v923 = vunpack.c.l.b16 %v565
          %v924 = vunpack.c.h.b16 %v565
          %v925 = vunpack.c.l.b16 %v566
          %v926 = vunpack.c.h.b16 %v566
          %v927 = vunpack.c.l.b16 %v567
          %v928 = vunpack.c.h.b16 %v567
          %v929 = vunpack.c.l.b16 %v568
          %v930 = vunpack.c.h.b16 %v568
          %v931 = vunpack.c.l.b16 %v569
          %v932 = vunpack.c.h.b16 %v569
          %v933 = vunpack.c.l.b16 %v570
          %v934 = vunpack.c.h.b16 %v570
          %v935 = vunpack.c.l.b16 %v571
          %v936 = vunpack.c.h.b16 %v571
          %v937 = vunpack.c.l.b16 %v572
          %v938 = vunpack.c.h.b16 %v572
          %v939 = vunpack.c.l.b16 %v573
          %v940 = vunpack.c.h.b16 %v573
          %v941 = vunpack.c.l.b16 %v574
          %v942 = vunpack.c.h.b16 %v574
          %v943 = vunpack.c.l.b16 %v575
          %v944 = vunpack.c.h.b16 %v575
          %v945 = vunpack.c.l.b16 %v576
          %v946 = vunpack.c.h.b16 %v576
          %v947 = vpack.c.b16 %v863, %v849
          %v948 = vpack.c.b16 %v864, %v850
          %v949 = vpack.c.b16 %v865, %v851
          %v950 = vpack.c.b16 %v866, %v852
          %v951 = vpack.c.b16 %v867, %v853
          %v952 = vpack.c.b16 %v868, %v854
          %v953 = vpack.c.b16 %v869, %v855
          %v954 = vpack.c.b16 %v870, %v856
          %v955 = vpack.c.b16 %v871, %v857
          %v956 = vpack.c.b16 %v872, %v858
          %v957 = vpack.c.b16 %v873, %v859
          %v958 = vpack.c.b16 %v874, %v860
          %v959 = vpack.c.b16 %v875, %v861
          %v960 = vpack.c.b16 %v876, %v862
          %v961 = vpack.c.b16 %v891, %v877
          %v962 = vpack.c.b16 %v892, %v878
          %v963 = vpack.c.b16 %v893, %v879
          %v964 = vpack.c.b16 %v894, %v880
          %v965 = vpack.c.b16 %v895, %v881
          %v966 = vpack.c.b16 %v896, %v882
          %v967 = vpack.c.b16 %v897, %v883
          %v968 = vpack.c.b16 %v898, %v884
          %v969 = vpack.c.b16 %v899, %v885
          %v970 = vpack.c.b16 %v900, %v886
          %v971 = vpack.c.b16 %v901, %v887
          %v972 = vpack.c.b16 %v902, %v888
          %v973 = vpack.c.b16 %v903, %v889
          %v974 = vpack.c.b16 %v904, %v890
          %v975 = vpack.c.b16 %v919, %v905
          %v976 = vpack.c.b16 %v920, %v906
          %v977 = vpack.c.b16 %v921, %v907
          %v978 = vpack.c.b16 %v922, %v908
          %v979 = vpack.c.b16 %v923, %v909
          %v980 = vpack.c.b16 %v924, %v910
          %v981 = vpack.c.b16 %v925, %v911
          %v982 = vpack.c.b16 %v926, %v912
          %v983 = vpack.c.b16 %v927, %v913
          %v984 = vpack.c.b16 %v928, %v914
          %v985 = vpack.c.b16 %v929, %v915
          %v986 = vpack.c.b16 %v930, %v916
          %v987 = vpack.c.b16 %v931, %v917
          %v988 = vpack.c.b16 %v932, %v918
          %v989 = vpack.c.b16 %v933, %v933
          %v990 = vpack.c.b16 %v934, %v934
          %v991 = vpack.c.b16 %v935, %v935
          %v992 = vpack.c.b16 %v936, %v936
          %v993 = vpack.c.b16 %v937, %v937
          %v994 = vpack.c.b16 %v938, %v938
          %v995 = vpack.c.b16 %v939, %v939
          %v996 = vpack.c.b16 %v940, %v940
          %v997 = vpack.c.b16 %v941, %v941
          %v998 = vpack.c.b16 %v942, %v942
          %v999 = vpack.c.b16 %v943, %v943
          %v1000 = vpack.c.b16 %v944, %v944
          %v1001 = vpack.c.b16 %v945, %v945
          %v1002 = vpack.c.b16 %v946, %v946
          %v1271 = vunpack.c.l.b16 %v577
          %v1272 = vunpack.c.l.b16 %v578
          %v1273 = vunpack.c.l.b16 %v579
          %v1274 = vunpack.c.l.b16 %v580
          %v1275 = vunpack.c.l.b16 %v581
          %v1276 = vunpack.c.l.b16 %v582
          %v1277 = vunpack.c.l.b16 %v583
          %v1278 = vunpack.c.l.b16 %v584
          %v1279 = vunpack.c.l.b16 %v585
          %v1280 = vunpack.c.l.b16 %v586
          %v1281 = vunpack.c.l.b16 %v587
          %v1282 = vunpack.c.l.b16 %v588
          %v1283 = vunpack.c.l.b16 %v589
          %v1284 = vunpack.c.l.b16 %v590
          %v1285 = vunpack.c.l.b16 %v591
          %v1286 = vunpack.c.l.b16 %v592
          %v1287 = vunpack.c.l.b16 %v593
          %v1288 = vunpack.c.l.b16 %v594
          %v1289 = vunpack.c.l.b16 %v595
          %v1290 = vunpack.c.l.b16 %v596
          %v1291 = vunpack.c.l.b16 %v597
          %v1292 = vunpack.c.l.b16 %v598
          %v1293 = vunpack.c.l.b16 %v599
          %v1294 = vunpack.c.l.b16 %v600
          %v1295 = vunpack.c.l.b16 %v601
          %v1296 = vunpack.c.l.b16 %v602
          %v1297 = vunpack.c.l.b16 %v603
          %v1298 = vunpack.c.l.b16 %v604
          %v1299 = vunpack.c.l.b16 %v605
          %v1300 = vunpack.c.l.b16 %v606
          %v1301 = vunpack.c.l.b16 %v607
          %v1302 = vunpack.c.l.b16 %v608
          %v1303 = vunpack.c.l.b16 %v609
          %v1304 = vunpack.c.l.b16 %v610
          %v1305 = vunpack.c.l.b16 %v611
          %v1306 = vunpack.c.l.b16 %v612
          %v1307 = vunpack.c.l.b16 %v613
          %v1308 = vunpack.c.l.b16 %v614
          %v1309 = vunpack.c.l.b16 %v615
          %v1310 = vunpack.c.l.b16 %v616
          %v1311 = vunpack.c.l.b16 %v617
          %v1312 = vunpack.c.l.b16 %v618
          %v1313 = vunpack.c.l.b16 %v619
          %v1314 = vunpack.c.l.b16 %v620
          %v1315 = vunpack.c.l.b16 %v621
          %v1316 = vunpack.c.l.b16 %v622
          %v1317 = vunpack.c.l.b16 %v623
          %v1318 = vunpack.c.l.b16 %v624
          %v1319 = vunpack.c.l.b16 %v625
          %v1320 = vunpack.c.l.b16 %v626
          %v1321 = vunpack.c.l.b16 %v627
          %v1322 = vunpack.c.l.b16 %v628
          %v1323 = vunpack.c.l.b16 %v629
          %v1324 = vunpack.c.l.b16 %v630
          %v1325 = vunpack.c.l.b16 %v631
          %v1326 = vunpack.c.l.b16 %v632
          %v1327 = vunpack.c.l.b16 %v633
          %v1328 = vunpack.c.l.b16 %v634
          %v1329 = vunpack.c.l.b16 %v635
          %v1330 = vunpack.c.l.b16 %v636
          %v1331 = vunpack.c.l.b16 %v637
          %v1332 = vunpack.c.l.b16 %v638
          %v1333 = vunpack.c.l.b16 %v639
          %v1334 = vunpack.c.l.b16 %v640
          %v1335 = vunpack.c.l.b16 %v641
          %v1336 = vunpack.c.l.b16 %v642
          %v1337 = vunpack.c.l.b16 %v643
          %v1338 = vunpack.c.l.b16 %v644
          %v1339 = vunpack.c.l.b16 %v645
          %v1340 = vunpack.c.l.b16 %v646
          %v1341 = vunpack.c.l.b16 %v647
          %v1342 = vunpack.c.l.b16 %v648
          %v1343 = vunpack.c.l.b16 %v649
          %v1344 = vunpack.c.l.b16 %v650
          %v1345 = vunpack.c.l.b16 %v651
          %v1346 = vunpack.c.l.b16 %v652
          %v1347 = vunpack.c.l.b16 %v653
          %v1348 = vunpack.c.l.b16 %v654
          %v1349 = vunpack.c.l.b16 %v655
          %v1350 = vunpack.c.l.b16 %v656
          %v1351 = vunpack.c.l.b16 %v657
          %v1352 = vunpack.c.l.b16 %v658
          %v1353 = vunpack.c.l.b16 %v659
          %v1354 = vunpack.c.l.b16 %v660
          %v1355 = vunpack.c.l.b16 %v661
          %v1356 = vunpack.c.l.b16 %v662
          %v1357 = vunpack.c.l.b16 %v663
          %v1358 = vunpack.c.l.b16 %v664
          %v1359 = vunpack.c.l.b16 %v665
          %v1360 = vunpack.c.l.b16 %v666
          %v1361 = vunpack.c.l.b16 %v667
          %v1362 = vunpack.c.l.b16 %v668
          %v1363 = vunpack.c.l.b16 %v669
          %v1364 = vunpack.c.l.b16 %v670
          %v1365 = vunpack.c.l.b16 %v671
          %v1366 = vunpack.c.l.b16 %v672
          %v1367 = vunpack.c.l.b16 %v673
          %v1368 = vunpack.c.l.b16 %v674
          %v1369 = vunpack.c.l.b16 %v675
          %v1370 = vunpack.c.l.b16 %v676
          %v1371 = vunpack.c.l.b16 %v677
          %v1372 = vunpack.c.l.b16 %v678
          %v1373 = vunpack.c.l.b16 %v679
          %v1374 = vunpack.c.l.b16 %v680
          %v1375 = vunpack.c.l.b16 %v681
          %v1376 = vunpack.c.l.b16 %v682
          %v1377 = vunpack.c.l.b16 %v683
          %v1378 = vunpack.c.l.b16 %v684
          %v1379 = vunpack.c.l.b16 %v685
          %v1380 = vunpack.c.l.b16 %v686
          %v1381 = vunpack.c.l.b16 %v687
          %v1382 = vunpack.c.l.b16 %v688
          %v1383 = vunpack.c.l.b16 %v689
          %v1384 = vunpack.c.l.b16 %v690
          %v1385 = vunpack.c.l.b16 %v691
          %v1386 = vunpack.c.l.b16 %v692
          %v1387 = vunpack.c.l.b16 %v693
          %v1388 = vunpack.c.l.b16 %v694
          %v1389 = vunpack.c.l.b16 %v695
          %v1390 = vunpack.c.l.b16 %v696
          %v1391 = vunpack.c.l.b16 %v697
          %v1392 = vunpack.c.l.b16 %v698
          %v1393 = vunpack.c.l.b16 %v699
          %v1394 = vunpack.c.l.b16 %v700
          %v1395 = vunpack.c.l.b16 %v701
          %v1396 = vunpack.c.l.b16 %v702
          %v1397 = vunpack.c.l.b16 %v703
          %v1398 = vunpack.c.l.b16 %v704
          %v1399 = vunpack.c.l.b16 %v705
          %v1400 = vunpack.c.l.b16 %v706
          %v1401 = vunpack.c.l.b16 %v707
          %v1402 = vunpack.c.l.b16 %v708
          %v1403 = vunpack.c.l.b16 %v709
          %v1404 = vunpack.c.l.b16 %v710
          %v1405 = vunpack.c.l.b16 %v711
          %v1406 = vunpack.c.l.b16 %v712
          %v1407 = vunpack.c.l.b16 %v713
          %v1408 = vunpack.c.l.b16 %v714
          %v1409 = vunpack.c.l.b16 %v715
          %v1410 = vunpack.c.l.b16 %v716
          %v1411 = vunpack.c.l.b16 %v717
          %v1412 = vunpack.c.l.b16 %v718
          %v1413 = vunpack.c.l.b16 %v719
          %v1414 = vunpack.c.l.b16 %v720
          %v1415 = vunpack.c.l.b16 %v721
          %v1416 = vunpack.c.l.b16 %v722
          %v1417 = vunpack.c.l.b16 %v723
          %v1418 = vunpack.c.l.b16 %v724
          %v1419 = vunpack.c.l.b16 %v725
          %v1420 = vunpack.c.l.b16 %v726
          %v1421 = vunpack.c.l.b16 %v727
          %v1422 = vunpack.c.l.b16 %v728
          %v1423 = vunpack.c.l.b16 %v729
          %v1424 = vunpack.c.l.b16 %v730
          %v1425 = vunpack.c.l.b16 %v731
          %v1426 = vunpack.c.l.b16 %v732
          %v1427 = vunpack.c.l.b16 %v733
          %v1428 = vunpack.c.l.b16 %v734
          %v1429 = vunpack.c.l.b16 %v735
          %v1430 = vunpack.c.l.b16 %v736
          %v1431 = vunpack.c.l.b16 %v737
          %v1432 = vunpack.c.l.b16 %v738
          %v1433 = vunpack.c.l.b16 %v739
          %v1434 = vunpack.c.l.b16 %v740
          %v1435 = vunpack.c.l.b16 %v741
          %v1436 = vunpack.c.l.b16 %v742
          %v1437 = vunpack.c.l.b16 %v743
          %v1438 = vunpack.c.l.b16 %v744
          %v1439 = vunpack.c.l.b16 %v745
          %v1440 = vunpack.c.l.b16 %v746
          %v1441 = vunpack.c.l.b16 %v747
          %v1442 = vunpack.c.l.b16 %v748
          %v1443 = vunpack.c.l.b16 %v749
          %v1444 = vunpack.c.l.b16 %v750
          %v1445 = vunpack.c.l.b16 %v751
          %v1446 = vunpack.c.l.b16 %v752
          %v1447 = vunpack.c.l.b16 %v753
          %v1448 = vunpack.c.l.b16 %v754
          %v1449 = vunpack.c.l.b16 %v755
          %v1450 = vunpack.c.l.b16 %v756
          %v1451 = vunpack.c.l.b16 %v757
          %v1452 = vunpack.c.l.b16 %v758
          %v1453 = vunpack.c.l.b16 %v759
          %v1454 = vunpack.c.l.b16 %v760
          %v1455 = vunpack.c.l.b16 %v761
          %v1456 = vunpack.c.l.b16 %v762
          %v1457 = vunpack.c.l.b16 %v763
          %v1458 = vunpack.c.l.b16 %v764
          %v1459 = vunpack.c.l.b16 %v765
          %v1460 = vunpack.c.l.b16 %v766
          %v1461 = vunpack.c.l.b16 %v767
          %v1462 = vunpack.c.l.b16 %v768
          %v1463 = vunpack.c.l.b16 %v769
          %v1464 = vunpack.c.l.b16 %v770
          %v1465 = vunpack.c.l.b16 %v771
          %v1466 = vunpack.c.l.b16 %v772
          %v1467 = vunpack.c.l.b16 %v773
          %v1468 = vunpack.c.l.b16 %v774
          %v1469 = vunpack.c.l.b16 %v775
          %v1470 = vunpack.c.l.b16 %v776
          %v1471 = vunpack.c.l.b16 %v777
          %v1472 = vunpack.c.l.b16 %v778
          %v1473 = vunpack.c.l.b16 %v779
          %v1474 = vunpack.c.l.b16 %v780
          %v1475 = vunpack.c.l.b16 %v781
          %v1476 = vunpack.c.l.b16 %v782
          %v1477 = vunpack.c.l.b16 %v783
          %v1478 = vunpack.c.l.b16 %v784
          %v1479 = vunpack.c.l.b16 %v785
          %v1480 = vunpack.c.l.b16 %v786
          %v1481 = vunpack.c.l.b16 %v787
          %v1482 = vunpack.c.l.b16 %v788
          %v1483 = vunpack.c.l.b16 %v789
          %v1484 = vunpack.c.l.b16 %v790
          %v1485 = vunpack.c.l.b16 %v791
          %v1486 = vunpack.c.l.b16 %v792
          %v1487 = vpack.c.b16 %v1272, %v1271
          %v1488 = vpack.c.b16 %v1274, %v1273
          %v1489 = vpack.c.b16 %v1276, %v1275
          %v1490 = vpack.c.b16 %v1278, %v1277
          %v1491 = vpack.c.b16 %v1280, %v1279
          %v1492 = vpack.c.b16 %v1282, %v1281
          %v1493 = vpack.c.b16 %v1284, %v1283
          %v1494 = vpack.c.b16 %v1286, %v1285
          %v1495 = vpack.c.b16 %v1288, %v1287
          %v1496 = vpack.c.b16 %v1290, %v1289
          %v1497 = vpack.c.b16 %v1292, %v1291
          %v1498 = vpack.c.b16 %v1294, %v1293
          %v1499 = vpack.c.b16 %v1296, %v1295
          %v1500 = vpack.c.b16 %v1298, %v1297
          %v1501 = vpack.c.b16 %v1300, %v1299
          %v1502 = vpack.c.b16 %v1302, %v1301
          %v1503 = vpack.c.b16 %v1304, %v1303
          %v1504 = vpack.c.b16 %v1306, %v1305
          %v1505 = vpack.c.b16 %v1308, %v1307
          %v1506 = vpack.c.b16 %v1310, %v1309
          %v1507 = vpack.c.b16 %v1312, %v1311
          %v1508 = vpack.c.b16 %v1314, %v1313
          %v1509 = vpack.c.b16 %v1316, %v1315
          %v1510 = vpack.c.b16 %v1318, %v1317
          %v1511 = vpack.c.b16 %v1320, %v1319
          %v1512 = vpack.c.b16 %v1322, %v1321
          %v1513 = vpack.c.b16 %v1324, %v1323
          %v1514 = vpack.c.b16 %v1326, %v1325
          %v1515 = vpack.c.b16 %v1328, %v1327
          %v1516 = vpack.c.b16 %v1330, %v1329
          %v1517 = vpack.c.b16 %v1332, %v1331
          %v1518 = vpack.c.b16 %v1334, %v1333
          %v1519 = vpack.c.b16 %v1336, %v1335
          %v1520 = vpack.c.b16 %v1338, %v1337
          %v1521 = vpack.c.b16 %v1340, %v1339
          %v1522 = vpack.c.b16 %v1342, %v1341
          %v1523 = vpack.c.b16 %v1344, %v1343
          %v1524 = vpack.c.b16 %v1346, %v1345
          %v1525 = vpack.c.b16 %v1348, %v1347
          %v1526 = vpack.c.b16 %v1350, %v1349
          %v1527 = vpack.c.b16 %v1352, %v1351
          %v1528 = vpack.c.b16 %v1354, %v1353
          %v1529 = vpack.c.b16 %v1356, %v1355
          %v1530 = vpack.c.b16 %v1358, %v1357
          %v1531 = vpack.c.b16 %v1360, %v1359
          %v1532 = vpack.c.b16 %v1362, %v1361
          %v1533 = vpack.c.b16 %v1364, %v1363
          %v1534 = vpack.c.b16 %v1366, %v1365
          %v1535 = vpack.c.b16 %v1368, %v1367
          %v1536 = vpack.c.b16 %v1370, %v1369
          %v1537 = vpack.c.b16 %v1372, %v1371
          %v1538 = vpack.c.b16 %v1374, %v1373
          %v1539 = vpack.c.b16 %v1376, %v1375
          %v1540 = vpack.c.b16 %v1378, %v1377
          %v1541 = vpack.c.b16 %v1380, %v1379
          %v1542 = vpack.c.b16 %v1382, %v1381
          %v1543 = vpack.c.b16 %v1384, %v1383
          %v1544 = vpack.c.b16 %v1386, %v1385
          %v1545 = vpack.c.b16 %v1388, %v1387
          %v1546 = vpack.c.b16 %v1390, %v1389
          %v1547 = vpack.c.b16 %v1392, %v1391
          %v1548 = vpack.c.b16 %v1394, %v1393
          %v1549 = vpack.c.b16 %v1396, %v1395
          %v1550 = vpack.c.b16 %v1398, %v1397
          %v1551 = vpack.c.b16 %v1400, %v1399
          %v1552 = vpack.c.b16 %v1402, %v1401
          %v1553 = vpack.c.b16 %v1404, %v1403
          %v1554 = vpack.c.b16 %v1406, %v1405
          %v1555 = vpack.c.b16 %v1408, %v1407
          %v1556 = vpack.c.b16 %v1410, %v1409
          %v1557 = vpack.c.b16 %v1412, %v1411
          %v1558 = vpack.c.b16 %v1414, %v1413
          %v1559 = vpack.c.b16 %v1416, %v1415
          %v1560 = vpack.c.b16 %v1418, %v1417
          %v1561 = vpack.c.b16 %v1420, %v1419
          %v1562 = vpack.c.b16 %v1422, %v1421
          %v1563 = vpack.c.b16 %v1424, %v1423
          %v1564 = vpack.c.b16 %v1426, %v1425
          %v1565 = vpack.c.b16 %v1428, %v1427
          %v1566 = vpack.c.b16 %v1430, %v1429
          %v1567 = vpack.c.b16 %v1432, %v1431
          %v1568 = vpack.c.b16 %v1434, %v1433
          %v1569 = vpack.c.b16 %v1436, %v1435
          %v1570 = vpack.c.b16 %v1438, %v1437
          %v1571 = vpack.c.b16 %v1440, %v1439
          %v1572 = vpack.c.b16 %v1442, %v1441
          %v1573 = vpack.c.b16 %v1444, %v1443
          %v1574 = vpack.c.b16 %v1446, %v1445
          %v1575 = vpack.c.b16 %v1448, %v1447
          %v1576 = vpack.c.b16 %v1450, %v1449
          %v1577 = vpack.c.b16 %v1452, %v1451
          %v1578 = vpack.c.b16 %v1454, %v1453
          %v1579 = vpack.c.b16 %v1456, %v1455
          %v1580 = vpack.c.b16 %v1458, %v1457
          %v1581 = vpack.c.b16 %v1460, %v1459
          %v1582 = vpack.c.b16 %v1462, %v1461
          %v1583 = vpack.c.b16 %v1464, %v1463
          %v1584 = vpack.c.b16 %v1466, %v1465
          %v1585 = vpack.c.b16 %v1468, %v1467
          %v1586 = vpack.c.b16 %v1470, %v1469
          %v1587 = vpack.c.b16 %v1472, %v1471
          %v1588 = vpack.c.b16 %v1474, %v1473
          %v1589 = vpack.c.b16 %v1476, %v1475
          %v1590 = vpack.c.b16 %v1478, %v1477
          %v1591 = vpack.c.b16 %v1480, %v1479
          %v1592 = vpack.c.b16 %v1482, %v1481
          %v1593 = vpack.c.b16 %v1484, %v1483
          %v1594 = vpack.c.b16 %v1486, %v1485
          %vm1703 = vcmask 523264
          %v1705 = vsel %vm1703, %v960, 0
          %v1708 = vsel %vm1703, %v974, 0
          %v1711 = vsel %vm1703, %v988, 0
          %v1714 = vsel %vm1703, %v1002, 0
          %1716 = vmatprep.subr.bf16.mxu0 0
          %1717 = vmatpush1.bf16.msra.mxu0 %v1487
          %1718 = vmatprep.subr.bf16.mxu0 0
          %1719 = vmatpush1.bf16.msra.mxu0 %v1488
          %1720 = vmatprep.subr.bf16.mxu0 0
          %1721 = vmatpush1.bf16.msra.mxu0 %v1489
          %1722 = vmatprep.subr.bf16.mxu0 0
          %1723 = vmatpush1.bf16.msra.mxu0 %v1490
          %1724 = vmatprep.subr.bf16.mxu0 0
          %1725 = vmatpush1.bf16.msra.mxu0 %v1491
          %1726 = vmatprep.subr.bf16.mxu0 0
          %1727 = vmatpush1.bf16.msra.mxu0 %v1492
          %1728 = vmatprep.subr.bf16.mxu0 0
          %1729 = vmatpush1.bf16.msra.mxu0 %v1493
          %1730 = vmatprep.subr.bf16.mxu0 0
          %1731 = vmatpush1.bf16.msra.mxu0 %v1494
          %1732 = vmatprep.subr.bf16.mxu0 0
          %1733 = vmatpush1.bf16.msra.mxu0 %v1495
          %1734 = vmatprep.subr.bf16.mxu0 0
          %1735 = vmatpush1.bf16.msra.mxu0 %v1496
          %1736 = vmatprep.subr.bf16.mxu0 0
          %1737 = vmatpush1.bf16.msra.mxu0 %v1497
          %1738 = vmatprep.subr.bf16.mxu0 0
          %1739 = vmatpush1.bf16.msra.mxu0 %v1498
          %1740 = vmatprep.subr.bf16.mxu0 0
          %1741 = vmatpush1.bf16.msra.mxu0 %v1499
          %1742 = vmatprep.subr.bf16.mxu0 0
          %1743 = vmatpush1.bf16.msra.mxu0 %v1500
          %1744 = vmatprep.subr.bf16.mxu0 0
          %1745 = vmatpush1.bf16.msra.mxu0 %v1501
          %1746 = vmatprep.subr.bf16.mxu0 0
          %1747 = vmatpush1.bf16.msra.mxu0 %v1502
          %1748 = vmatprep.mubr.bf16.mxu0 %v948
          %1749 = vmatmul.mubr.bf16.gmra.mrb[0].mxu0 %v947
          %v1750 = vpop.f32.mrb[0].mxu0
          %v1751 = vadd.f32 %v798, %v1750
          %v1752 = vpop.f32.mrb[0].mxu0
          %v1753 = vpop.f32.mrb[0].mxu0
          %v1754 = vadd.f32 %v798, %v1753
          %v1755 = vpop.f32.mrb[0].mxu0
          %1756 = vmatprep.mubr.bf16.mxu0 %v962
          %1757 = vmatmul.mubr.bf16.gmra.mrb[0].mxu0 %v961
          %v1758 = vpop.f32.mrb[0].mxu0
          %v1759 = vadd.f32 %v798, %v1758
          %v1760 = vpop.f32.mrb[0].mxu0
          %v1761 = vpop.f32.mrb[0].mxu0
          %v1762 = vadd.f32 %v798, %v1761
          %v1763 = vpop.f32.mrb[0].mxu0
          %1764 = vmatprep.mubr.bf16.mxu0 %v976
          %1765 = vmatmul.mubr.bf16.gmra.mrb[0].mxu0 %v975
          %v1766 = vpop.f32.mrb[0].mxu0
          %v1767 = vadd.f32 %v798, %v1766
          %v1768 = vpop.f32.mrb[0].mxu0
          %v1769 = vpop.f32.mrb[0].mxu0
          %v1770 = vadd.f32 %v798, %v1769
          %v1771 = vpop.f32.mrb[0].mxu0
          %1772 = vmatprep.mubr.bf16.mxu0 %v990
          %1773 = vmatmul.mubr.bf16.gmra.mrb[0].mxu0 %v989
          %v1774 = vpop.f32.mrb[0].mxu0
          %v1775 = vadd.f32 %v798, %v1774
          %v1776 = vpop.f32.mrb[0].mxu0
          %v1777 = vpop.f32.mrb[0].mxu0
          %v1778 = vpop.f32.mrb[0].mxu0
          %1779 = vdwg.mxu0
          %1780 = vmatprep.subr.bf16.mxu0 0
          %1781 = vmatpush1.bf16.msra.mxu0 %v1503
          %1782 = vmatprep.subr.bf16.mxu0 0
          %1783 = vmatpush1.bf16.msra.mxu0 %v1504
          %1784 = vmatprep.subr.bf16.mxu0 0
          %1785 = vmatpush1.bf16.msra.mxu0 %v1505
          %1786 = vmatprep.subr.bf16.mxu0 0
          %1787 = vmatpush1.bf16.msra.mxu0 %v1506
          %1788 = vmatprep.subr.bf16.mxu0 0
          %1789 = vmatpush1.bf16.msra.mxu0 %v1507
          %1790 = vmatprep.subr.bf16.mxu0 0
          %1791 = vmatpush1.bf16.msra.mxu0 %v1508
          %1792 = vmatprep.subr.bf16.mxu0 0
          %1793 = vmatpush1.bf16.msra.mxu0 %v1509
          %1794 = vmatprep.subr.bf16.mxu0 0
          %1795 = vmatpush1.bf16.msra.mxu0 %v1510
          %1796 = vmatprep.subr.bf16.mxu0 0
          %1797 = vmatpush1.bf16.msra.mxu0 %v1511
          %1798 = vmatprep.subr.bf16.mxu0 0
          %1799 = vmatpush1.bf16.msra.mxu0 %v1512
          %1800 = vmatprep.subr.bf16.mxu0 0
          %1801 = vmatpush1.bf16.msra.mxu0 %v1513
          %1802 = vmatprep.subr.bf16.mxu0 0
          %1803 = vmatpush1.bf16.msra.mxu0 %v1514
          %1804 = vmatprep.subr.bf16.mxu0 0
          %1805 = vmatpush1.bf16.msra.mxu0 %v1515
          %1806 = vmatprep.subr.bf16.mxu0 0
          %1807 = vmatpush1.bf16.msra.mxu0 %v1516
          %1808 = vmatprep.subr.bf16.mxu0 0
          %1809 = vmatpush1.bf16.msra.mxu0 %v1517
          %1810 = vmatprep.subr.bf16.mxu0 0
          %1811 = vmatpush1.bf16.msra.mxu0 %v1518
          %1812 = vmatprep.mubr.bf16.mxu0 %v950
          %1813 = vmatmul.mubr.bf16.gmra.mrb[0].mxu0 %v949
          %v1814 = vpop.f32.mrb[0].mxu0
          %v1815 = vadd.f32 %v1751, %v1814
          %v1816 = vpop.f32.mrb[0].mxu0
          %v1817 = vpop.f32.mrb[0].mxu0
          %v1818 = vadd.f32 %v1754, %v1817
          %v1819 = vpop.f32.mrb[0].mxu0
          %1820 = vmatprep.mubr.bf16.mxu0 %v964
          %1821 = vmatmul.mubr.bf16.gmra.mrb[0].mxu0 %v963
          %v1822 = vpop.f32.mrb[0].mxu0
          %v1823 = vadd.f32 %v1759, %v1822
          %v1824 = vpop.f32.mrb[0].mxu0
          %v1825 = vpop.f32.mrb[0].mxu0
          %v1826 = vadd.f32 %v1762, %v1825
          %v1827 = vpop.f32.mrb[0].mxu0
          %1828 = vmatprep.mubr.bf16.mxu0 %v978
          %1829 = vmatmul.mubr.bf16.gmra.mrb[0].mxu0 %v977
          %v1830 = vpop.f32.mrb[0].mxu0
          %v1831 = vadd.f32 %v1767, %v1830
          %v1832 = vpop.f32.mrb[0].mxu0
          %v1833 = vpop.f32.mrb[0].mxu0
          %v1834 = vadd.f32 %v1770, %v1833
          %v1835 = vpop.f32.mrb[0].mxu0
          %1836 = vmatprep.mubr.bf16.mxu0 %v992
          %1837 = vmatmul.mubr.bf16.gmra.mrb[0].mxu0 %v991
          %v1838 = vpop.f32.mrb[0].mxu0
          %v1839 = vadd.f32 %v1775, %v1838
          %v1840 = vpop.f32.mrb[0].mxu0
          %v1841 = vpop.f32.mrb[0].mxu0
          %v1842 = vpop.f32.mrb[0].mxu0
          %1843 = vdwg.mxu0
          %1844 = vmatprep.subr.bf16.mxu0 0
          %1845 = vmatpush1.bf16.msra.mxu0 %v1519
          %1846 = vmatprep.subr.bf16.mxu0 0
          %1847 = vmatpush1.bf16.msra.mxu0 %v1520
          %1848 = vmatprep.subr.bf16.mxu0 0
          %1849 = vmatpush1.bf16.msra.mxu0 %v1521
          %1850 = vmatprep.subr.bf16.mxu0 0
          %1851 = vmatpush1.bf16.msra.mxu0 %v1522
          %1852 = vmatprep.subr.bf16.mxu0 0
          %1853 = vmatpush1.bf16.msra.mxu0 %v1523
          %1854 = vmatprep.subr.bf16.mxu0 0
          %1855 = vmatpush1.bf16.msra.mxu0 %v1524
          %1856 = vmatprep.subr.bf16.mxu0 0
          %1857 = vmatpush1.bf16.msra.mxu0 %v1525
          %1858 = vmatprep.subr.bf16.mxu0 0
          %1859 = vmatpush1.bf16.msra.mxu0 %v1526
          %1860 = vmatprep.subr.bf16.mxu0 0
          %1861 = vmatpush1.bf16.msra.mxu0 %v1527
          %1862 = vmatprep.subr.bf16.mxu0 0
          %1863 = vmatpush1.bf16.msra.mxu0 %v1528
          %1864 = vmatprep.subr.bf16.mxu0 0
          %1865 = vmatpush1.bf16.msra.mxu0 %v1529
          %1866 = vmatprep.subr.bf16.mxu0 0
          %1867 = vmatpush1.bf16.msra.mxu0 %v1530
          %1868 = vmatprep.subr.bf16.mxu0 0
          %1869 = vmatpush1.bf16.msra.mxu0 %v1531
          %1870 = vmatprep.subr.bf16.mxu0 0
          %1871 = vmatpush1.bf16.msra.mxu0 %v1532
          %1872 = vmatprep.subr.bf16.mxu0 0
          %1873 = vmatpush1.bf16.msra.mxu0 %v1533
          %1874 = vmatprep.subr.bf16.mxu0 0
          %1875 = vmatpush1.bf16.msra.mxu0 %v1534
          %1876 = vmatprep.mubr.bf16.mxu0 %v952
          %1877 = vmatmul.mubr.bf16.gmra.mrb[0].mxu0 %v951
          %v1878 = vpop.f32.mrb[0].mxu0
          %v1879 = vadd.f32 %v1815, %v1878
          %v1880 = vpop.f32.mrb[0].mxu0
          %v1881 = vpop.f32.mrb[0].mxu0
          %v1882 = vadd.f32 %v1818, %v1881
          %v1883 = vpop.f32.mrb[0].mxu0
          %1884 = vmatprep.mubr.bf16.mxu0 %v966
          %1885 = vmatmul.mubr.bf16.gmra.mrb[0].mxu0 %v965
          %v1886 = vpop.f32.mrb[0].mxu0
          %v1887 = vadd.f32 %v1823, %v1886
          %v1888 = vpop.f32.mrb[0].mxu0
          %v1889 = vpop.f32.mrb[0].mxu0
          %v1890 = vadd.f32 %v1826, %v1889
          %v1891 = vpop.f32.mrb[0].mxu0
          %1892 = vmatprep.mubr.bf16.mxu0 %v980
          %1893 = vmatmul.mubr.bf16.gmra.mrb[0].mxu0 %v979
          %v1894 = vpop.f32.mrb[0].mxu0
          %v1895 = vadd.f32 %v1831, %v1894
          %v1896 = vpop.f32.mrb[0].mxu0
          %v1897 = vpop.f32.mrb[0].mxu0
          %v1898 = vadd.f32 %v1834, %v1897
          %v1899 = vpop.f32.mrb[0].mxu0
          %1900 = vmatprep.mubr.bf16.mxu0 %v994
          %1901 = vmatmul.mubr.bf16.gmra.mrb[0].mxu0 %v993
          %v1902 = vpop.f32.mrb[0].mxu0
          %v1903 = vadd.f32 %v1839, %v1902
          %v1904 = vpop.f32.mrb[0].mxu0
          %v1905 = vpop.f32.mrb[0].mxu0
          %v1906 = vpop.f32.mrb[0].mxu0
          %1907 = vdwg.mxu0
          %1908 = vmatprep.subr.bf16.mxu0 0
          %1909 = vmatpush1.bf16.msra.mxu0 %v1535
          %1910 = vmatprep.subr.bf16.mxu0 0
          %1911 = vmatpush1.bf16.msra.mxu0 %v1536
          %1912 = vmatprep.subr.bf16.mxu0 0
          %1913 = vmatpush1.bf16.msra.mxu0 %v1537
          %1914 = vmatprep.subr.bf16.mxu0 0
          %1915 = vmatpush1.bf16.msra.mxu0 %v1538
          %1916 = vmatprep.subr.bf16.mxu0 0
          %1917 = vmatpush1.bf16.msra.mxu0 %v1539
          %1918 = vmatprep.subr.bf16.mxu0 0
          %1919 = vmatpush1.bf16.msra.mxu0 %v1540
          %1920 = vmatprep.subr.bf16.mxu0 0
          %1921 = vmatpush1.bf16.msra.mxu0 %v1541
          %1922 = vmatprep.subr.bf16.mxu0 0
          %1923 = vmatpush1.bf16.msra.mxu0 %v1542
          %1924 = vmatprep.subr.bf16.mxu0 0
          %1925 = vmatpush1.bf16.msra.mxu0 %v1543
          %1926 = vmatprep.subr.bf16.mxu0 0
          %1927 = vmatpush1.bf16.msra.mxu0 %v1544
          %1928 = vmatprep.subr.bf16.mxu0 0
          %1929 = vmatpush1.bf16.msra.mxu0 %v1545
          %1930 = vmatprep.subr.bf16.mxu0 0
          %1931 = vmatpush1.bf16.msra.mxu0 %v1546
          %1932 = vmatprep.subr.bf16.mxu0 0
          %1933 = vmatpush1.bf16.msra.mxu0 %v1547
          %1934 = vmatprep.subr.bf16.mxu0 0
          %1935 = vmatpush1.bf16.msra.mxu0 %v1548
          %1936 = vmatprep.subr.bf16.mxu0 0
          %1937 = vmatpush1.bf16.msra.mxu0 %v1549
          %1938 = vmatprep.subr.bf16.mxu0 0
          %1939 = vmatpush1.bf16.msra.mxu0 %v1550
          %1940 = vmatprep.mubr.bf16.mxu0 %v954
          %1941 = vmatmul.mubr.bf16.gmra.mrb[0].mxu0 %v953
          %v1942 = vpop.f32.mrb[0].mxu0
          %v1943 = vadd.f32 %v1879, %v1942
          %v1944 = vpop.f32.mrb[0].mxu0
          %v1945 = vpop.f32.mrb[0].mxu0
          %v1946 = vadd.f32 %v1882, %v1945
          %v1947 = vpop.f32.mrb[0].mxu0
          %1948 = vmatprep.mubr.bf16.mxu0 %v968
          %1949 = vmatmul.mubr.bf16.gmra.mrb[0].mxu0 %v967
          %v1950 = vpop.f32.mrb[0].mxu0
          %v1951 = vadd.f32 %v1887, %v1950
          %v1952 = vpop.f32.mrb[0].mxu0
          %v1953 = vpop.f32.mrb[0].mxu0
          %v1954 = vadd.f32 %v1890, %v1953
          %v1955 = vpop.f32.mrb[0].mxu0
          %1956 = vmatprep.mubr.bf16.mxu0 %v982
          %1957 = vmatmul.mubr.bf16.gmra.mrb[0].mxu0 %v981
          %v1958 = vpop.f32.mrb[0].mxu0
          %v1959 = vadd.f32 %v1895, %v1958
          %v1960 = vpop.f32.mrb[0].mxu0
          %v1961 = vpop.f32.mrb[0].mxu0
          %v1962 = vadd.f32 %v1898, %v1961
          %v1963 = vpop.f32.mrb[0].mxu0
          %1964 = vmatprep.mubr.bf16.mxu0 %v996
          %1965 = vmatmul.mubr.bf16.gmra.mrb[0].mxu0 %v995
          %v1966 = vpop.f32.mrb[0].mxu0
          %v1967 = vadd.f32 %v1903, %v1966
          %v1968 = vpop.f32.mrb[0].mxu0
          %v1969 = vpop.f32.mrb[0].mxu0
          %v1970 = vpop.f32.mrb[0].mxu0
          %1971 = vdwg.mxu0
          %1972 = vmatprep.subr.bf16.mxu0 0
          %1973 = vmatpush1.bf16.msra.mxu0 %v1551
          %1974 = vmatprep.subr.bf16.mxu0 0
          %1975 = vmatpush1.bf16.msra.mxu0 %v1552
          %1976 = vmatprep.subr.bf16.mxu0 0
          %1977 = vmatpush1.bf16.msra.mxu0 %v1553
          %1978 = vmatprep.subr.bf16.mxu0 0
          %1979 = vmatpush1.bf16.msra.mxu0 %v1554
          %1980 = vmatprep.subr.bf16.mxu0 0
          %1981 = vmatpush1.bf16.msra.mxu0 %v1555
          %1982 = vmatprep.subr.bf16.mxu0 0
          %1983 = vmatpush1.bf16.msra.mxu0 %v1556
          %1984 = vmatprep.subr.bf16.mxu0 0
          %1985 = vmatpush1.bf16.msra.mxu0 %v1557
          %1986 = vmatprep.subr.bf16.mxu0 0
          %1987 = vmatpush1.bf16.msra.mxu0 %v1558
          %1988 = vmatprep.subr.bf16.mxu0 0
          %1989 = vmatpush1.bf16.msra.mxu0 %v1559
          %1990 = vmatprep.subr.bf16.mxu0 0
          %1991 = vmatpush1.bf16.msra.mxu0 %v1560
          %1992 = vmatprep.subr.bf16.mxu0 0
          %1993 = vmatpush1.bf16.msra.mxu0 %v1561
          %1994 = vmatprep.subr.bf16.mxu0 0
          %1995 = vmatpush1.bf16.msra.mxu0 %v1562
          %1996 = vmatprep.subr.bf16.mxu0 0
          %1997 = vmatpush1.bf16.msra.mxu0 %v1563
          %1998 = vmatprep.subr.bf16.mxu0 0
          %1999 = vmatpush1.bf16.msra.mxu0 %v1564
          %2000 = vmatprep.subr.bf16.mxu0 0
          %2001 = vmatpush1.bf16.msra.mxu0 %v1565
          %2002 = vmatprep.subr.bf16.mxu0 0
          %2003 = vmatpush1.bf16.msra.mxu0 %v1566
          %2004 = vmatprep.mubr.bf16.mxu0 %v956
          %2005 = vmatmul.mubr.bf16.gmra.mrb[0].mxu0 %v955
          %v2006 = vpop.f32.mrb[0].mxu0
          %v2007 = vadd.f32 %v1943, %v2006
          %v2008 = vpop.f32.mrb[0].mxu0
          %v2009 = vpop.f32.mrb[0].mxu0
          %v2010 = vadd.f32 %v1946, %v2009
          %v2011 = vpop.f32.mrb[0].mxu0
          %2012 = vmatprep.mubr.bf16.mxu0 %v970
          %2013 = vmatmul.mubr.bf16.gmra.mrb[0].mxu0 %v969
          %v2014 = vpop.f32.mrb[0].mxu0
          %v2015 = vadd.f32 %v1951, %v2014
          %v2016 = vpop.f32.mrb[0].mxu0
          %v2017 = vpop.f32.mrb[0].mxu0
          %v2018 = vadd.f32 %v1954, %v2017
          %v2019 = vpop.f32.mrb[0].mxu0
          %2020 = vmatprep.mubr.bf16.mxu0 %v984
          %2021 = vmatmul.mubr.bf16.gmra.mrb[0].mxu0 %v983
          %v2022 = vpop.f32.mrb[0].mxu0
          %v2023 = vadd.f32 %v1959, %v2022
          %v2024 = vpop.f32.mrb[0].mxu0
          %v2025 = vpop.f32.mrb[0].mxu0
          %v2026 = vadd.f32 %v1962, %v2025
          %v2027 = vpop.f32.mrb[0].mxu0
          %2028 = vmatprep.mubr.bf16.mxu0 %v998
          %2029 = vmatmul.mubr.bf16.gmra.mrb[0].mxu0 %v997
          %v2030 = vpop.f32.mrb[0].mxu0
          %v2031 = vadd.f32 %v1967, %v2030
          %v2032 = vpop.f32.mrb[0].mxu0
          %v2033 = vpop.f32.mrb[0].mxu0
          %v2034 = vpop.f32.mrb[0].mxu0
          %2035 = vdwg.mxu0
          %2036 = vmatprep.subr.bf16.mxu0 0
          %2037 = vmatpush1.bf16.msra.mxu0 %v1567
          %2038 = vmatprep.subr.bf16.mxu0 0
          %2039 = vmatpush1.bf16.msra.mxu0 %v1568
          %2040 = vmatprep.subr.bf16.mxu0 0
          %2041 = vmatpush1.bf16.msra.mxu0 %v1569
          %2042 = vmatprep.subr.bf16.mxu0 0
          %2043 = vmatpush1.bf16.msra.mxu0 %v1570
          %2044 = vmatprep.subr.bf16.mxu0 0
          %2045 = vmatpush1.bf16.msra.mxu0 %v1571
          %2046 = vmatprep.subr.bf16.mxu0 0
          %2047 = vmatpush1.bf16.msra.mxu0 %v1572
          %2048 = vmatprep.subr.bf16.mxu0 0
          %2049 = vmatpush1.bf16.msra.mxu0 %v1573
          %2050 = vmatprep.subr.bf16.mxu0 0
          %2051 = vmatpush1.bf16.msra.mxu0 %v1574
          %2052 = vmatprep.subr.bf16.mxu0 0
          %2053 = vmatpush1.bf16.msra.mxu0 %v1575
          %2054 = vmatprep.subr.bf16.mxu0 0
          %2055 = vmatpush1.bf16.msra.mxu0 %v1576
          %2056 = vmatprep.subr.bf16.mxu0 0
          %2057 = vmatpush1.bf16.msra.mxu0 %v1577
          %2058 = vmatprep.subr.bf16.mxu0 0
          %2059 = vmatpush1.bf16.msra.mxu0 %v1578
          %2060 = vmatprep.subr.bf16.mxu0 0
          %2061 = vmatpush1.bf16.msra.mxu0 %v1579
          %2062 = vmatprep.subr.bf16.mxu0 0
          %2063 = vmatpush1.bf16.msra.mxu0 %v1580
          %2064 = vmatprep.subr.bf16.mxu0 0
          %2065 = vmatpush1.bf16.msra.mxu0 %v1581
          %2066 = vmatprep.subr.bf16.mxu0 0
          %2067 = vmatpush1.bf16.msra.mxu0 %v1582
          %2068 = vmatprep.mubr.bf16.mxu0 %v958
          %2069 = vmatmul.mubr.bf16.gmra.mrb[0].mxu0 %v957
          %v2070 = vpop.f32.mrb[0].mxu0
          %v2071 = vadd.f32 %v2007, %v2070
          %v2072 = vpop.f32.mrb[0].mxu0
          %v2073 = vpop.f32.mrb[0].mxu0
          %v2074 = vadd.f32 %v2010, %v2073
          %v2075 = vpop.f32.mrb[0].mxu0
          %2076 = vmatprep.mubr.bf16.mxu0 %v972
          %2077 = vmatmul.mubr.bf16.gmra.mrb[0].mxu0 %v971
          %v2078 = vpop.f32.mrb[0].mxu0
          %v2079 = vadd.f32 %v2015, %v2078
          %v2080 = vpop.f32.mrb[0].mxu0
          %v2081 = vpop.f32.mrb[0].mxu0
          %v2082 = vadd.f32 %v2018, %v2081
          %v2083 = vpop.f32.mrb[0].mxu0
          %2084 = vmatprep.mubr.bf16.mxu0 %v986
          %2085 = vmatmul.mubr.bf16.gmra.mrb[0].mxu0 %v985
          %v2086 = vpop.f32.mrb[0].mxu0
          %v2087 = vadd.f32 %v2023, %v2086
          %v2088 = vpop.f32.mrb[0].mxu0
          %v2089 = vpop.f32.mrb[0].mxu0
          %v2090 = vadd.f32 %v2026, %v2089
          %v2091 = vpop.f32.mrb[0].mxu0
          %2092 = vmatprep.mubr.bf16.mxu0 %v1000
          %2093 = vmatmul.mubr.bf16.gmra.mrb[0].mxu0 %v999
          %v2094 = vpop.f32.mrb[0].mxu0
          %v2095 = vadd.f32 %v2031, %v2094
          %v2096 = vpop.f32.mrb[0].mxu0
          %v2097 = vpop.f32.mrb[0].mxu0
          %v2098 = vpop.f32.mrb[0].mxu0
          %2099 = vdwg.mxu0
          %2100 = vmatprep.subr.bf16.mxu0 0
          %2101 = vmatpush1.bf16.msra.mxu0 %v1583
          %2102 = vmatprep.subr.bf16.mxu0 0
          %2103 = vmatpush1.bf16.msra.mxu0 %v1584
          %2104 = vmatprep.subr.bf16.mxu0 0
          %2105 = vmatpush1.bf16.msra.mxu0 %v1585
          %2106 = vmatprep.subr.bf16.mxu0 0
          %2107 = vmatpush1.bf16.msra.mxu0 %v1586
          %2108 = vmatprep.subr.bf16.mxu0 0
          %2109 = vmatpush1.bf16.msra.mxu0 %v1587
          %2110 = vmatprep.subr.bf16.mxu0 0
          %2111 = vmatpush1.bf16.msra.mxu0 %v1588
          %2112 = vmatprep.subr.bf16.mxu0 0
          %2113 = vmatpush1.bf16.msra.mxu0 %v1589
          %2114 = vmatprep.subr.bf16.mxu0 0
          %2115 = vmatpush1.bf16.msra.mxu0 %v1590
          %2116 = vmatprep.subr.bf16.mxu0 0
          %2117 = vmatpush1.bf16.msra.mxu0 %v1591
          %2118 = vmatprep.subr.bf16.mxu0 0
          %2119 = vmatpush1.bf16.msra.mxu0 %v1592
          %2120 = vmatprep.subr.bf16.mxu0 0
          %2121 = vmatpush1.bf16.msra.mxu0 %v1593
          %2122 = vmatprep.subr.bf16.mxu0 0
          %2123 = vmatpush1.bf16.msra.mxu0 %v1594
          %2124 = vmatprep.subr.bf16.mxu0 0
          %2125 = vmatpush1.bf16.msra.mxu0 0
          %2126 = vmatprep.subr.bf16.mxu0 0
          %2127 = vmatpush1.bf16.msra.mxu0 0
          %2128 = vmatprep.subr.bf16.mxu0 0
          %2129 = vmatpush1.bf16.msra.mxu0 0
          %2130 = vmatprep.subr.bf16.mxu0 0
          %2131 = vmatpush1.bf16.msra.mxu0 0
          %2132 = vmatprep.mubr.bf16.mxu0 %v1705
          %2133 = vmatmul.mubr.bf16.gmra.mrb[0].mxu0 %v959
          %v2134 = vpop.f32.mrb[0].mxu0
          %v2135 = vadd.f32 %v2071, %v2134
          %v2136 = vpop.f32.mrb[0].mxu0
          %v2137 = vpop.f32.mrb[0].mxu0
          %v2138 = vadd.f32 %v2074, %v2137
          %v2139 = vpop.f32.mrb[0].mxu0
          %2140 = vmatprep.mubr.bf16.mxu0 %v1708
          %2141 = vmatmul.mubr.bf16.gmra.mrb[0].mxu0 %v973
          %v2142 = vpop.f32.mrb[0].mxu0
          %v2143 = vadd.f32 %v2079, %v2142
          %v2144 = vpop.f32.mrb[0].mxu0
          %v2145 = vpop.f32.mrb[0].mxu0
          %v2146 = vadd.f32 %v2082, %v2145
          %v2147 = vpop.f32.mrb[0].mxu0
          %2148 = vmatprep.mubr.bf16.mxu0 %v1711
          %2149 = vmatmul.mubr.bf16.gmra.mrb[0].mxu0 %v987
          %v2150 = vpop.f32.mrb[0].mxu0
          %v2151 = vadd.f32 %v2087, %v2150
          %v2152 = vpop.f32.mrb[0].mxu0
          %v2153 = vpop.f32.mrb[0].mxu0
          %v2154 = vadd.f32 %v2090, %v2153
          %v2155 = vpop.f32.mrb[0].mxu0
          %2156 = vmatprep.mubr.bf16.mxu0 %v1714
          %2157 = vmatmul.mubr.bf16.gmra.mrb[0].mxu0 %v1001
          %v2158 = vpop.f32.mrb[0].mxu0
          %v2159 = vadd.f32 %v2095, %v2158
          %v2160 = vpop.f32.mrb[0].mxu0
          %v2161 = vpop.f32.mrb[0].mxu0
          %v2162 = vpop.f32.mrb[0].mxu0
          %2163 = vdwg.mxu0
          %v2164 = vmax.f32 %v2135, 0.0
          %v2165 = vmax.f32 %v2138, 0.0
          %v2166 = vmax.f32 %v2143, 0.0
          %v2167 = vmax.f32 %v2146, 0.0
          %v2168 = vmax.f32 %v2151, 0.0
          %v2169 = vmax.f32 %v2154, 0.0
          %v2170 = vmax.f32 %v2159, 0.0
          %vm2171 = vcmask 518144
          %2172 = vst.msk [vmem:[#allocation4] sm:$0x7] %vm2171, %v2164
          %v2174 = vrot.slane %v2164, 1
          %2175 = vrot.lane.b32.xlu0 %v2174, 64
          %v2176 = vpop.permute.xlu0 %2175
          %vm2178 = vcmask 1042944
          %2179 = vst.msk [vmem:[#allocation4] sm:$0x7] %vm2178, %v2176
          %v2180 = vrot.slane %v2164, 2
          %2182 = vst.msk [vmem:[#allocation4 + $0x8] sm:$0x7] %vm2171, %v2180
          %v2183 = vrot.slane %v2164, 5
          %2184 = vrot.lane.b32.xlu0 %v2183, 64
          %v2185 = vpop.permute.xlu0 %2184
          %2187 = vst.msk [vmem:[#allocation4 + $0x8] sm:$0x7] %vm2178, %v2185
          %vm2189 = vcmask 1041408
          %v2190 = vrot.slane %v2164, 6
          %v2191 = vrot.slane %v2165, 6
          %v2192 = vsel %vm2189, %v2190, %v2191
          %2194 = vst.msk [vmem:[#allocation4 + $0x10] sm:$0x7] %vm2171, %v2192
          %vm2195 = vcmask 1040384
          %v2196 = vrot.slane %v2164, 7
          %v2197 = vrot.slane %v2165, 7
          %v2198 = vsel %vm2195, %v2196, %v2197
          %2199 = vrot.lane.b32.xlu0 %v2198, 64
          %v2200 = vpop.permute.xlu0 %2199
          %2202 = vst.msk [vmem:[#allocation4 + $0x10] sm:$0x7] %vm2178, %v2200
          %v2203 = vrot.slane %v2165, 2
          %2205 = vst.msk [vmem:[#allocation4 + $0x18] sm:$0x7] %vm2171, %v2203
          %v2206 = vrot.slane %v2165, 3
          %2207 = vrot.lane.b32.xlu0 %v2206, 64
          %v2208 = vpop.permute.xlu0 %2207
          %2210 = vst.msk [vmem:[#allocation4 + $0x18] sm:$0x7] %vm2178, %v2208
          %v2211 = vrot.slane %v2165, 4
          %2213 = vst.msk [vmem:[#allocation4 + $0x20] sm:$0x7] %vm2171, %v2211
          %vm2214 = vcmask 521219
          %2215 = vst.msk [vmem:[#allocation4] sm:$0x38] %vm2214, %v2180
          %vm2216 = vcmask 1044480
          %v2217 = vrot.slane %v2164, 3
          %v2218 = vsel %vm2216, %v2217, %v2206
          %2219 = vrot.lane.b32.xlu0 %v2218, 64
          %v2220 = vpop.permute.xlu0 %2219
          %vm2222 = vcmask 1046019
          %2223 = vst.msk [vmem:[#allocation4] sm:$0x38] %vm2222, %v2220
          %vm2224 = vcmask 1043456
          %v2225 = vrot.slane %v2164, 4
          %v2226 = vsel %vm2224, %v2225, %v2211
          %2228 = vst.msk [vmem:[#allocation4 + $0x8] sm:$0x38] %vm2214, %v2226
          %2229 = vrot.lane.b32.xlu0 %v2197, 64
          %v2230 = vpop.permute.xlu0 %2229
          %2232 = vst.msk [vmem:[#allocation4 + $0x8] sm:$0x38] %vm2222, %v2230
          %2233 = vst.msk [vmem:[#allocation4 + $0x10] sm:$0x38] %vm2214, %v2165
          %v2234 = vrot.slane %v2165, 1
          %2235 = vrot.lane.b32.xlu0 %v2234, 64
          %v2236 = vpop.permute.xlu0 %2235
          %2238 = vst.msk [vmem:[#allocation4 + $0x10] sm:$0x38] %vm2222, %v2236
          %v2240 = vrot.slane %v2166, 4
          %v2241 = vsel %vm2224, %v2211, %v2240
          %2243 = vst.msk [vmem:[#allocation4 + $0x18] sm:$0x38] %vm2214, %v2241
          %v2244 = vrot.slane %v2166, 5
          %2245 = vrot.lane.b32.xlu0 %v2244, 64
          %v2246 = vpop.permute.xlu0 %2245
          %2248 = vst.msk [vmem:[#allocation4 + $0x18] sm:$0x38] %vm2222, %v2246
          %v2249 = vrot.slane %v2166, 6
          %2251 = vst.msk [vmem:[#allocation4 + $0x20] sm:$0x38] %vm2214, %v2249
          %vm2252 = vcmask 523270
          %2253 = vst.msk [vmem:[#allocation4] sm:$0xc0] %vm2252, %v2211
          %vm2254 = vcmask 516096
          %2255 = vst.msk [vmem:[#allocation4 + $0x28] sm:$0x1] %vm2254, %v2211
          %v2256 = vrot.slane %v2165, 5
          %2257 = vrot.lane.b32.xlu0 %v2256, 64
          %v2258 = vpop.permute.xlu0 %2257
          %vm2260 = vcmask 1048070
          %2261 = vst.msk [vmem:[#allocation4] sm:$0xc0] %vm2260, %v2258
          %vm2262 = vcmask 1040896
          %2263 = vst.msk [vmem:[#allocation4 + $0x28] sm:$0x1] %vm2262, %v2258
          %2265 = vst.msk [vmem:[#allocation4 + $0x8] sm:$0xc0] %vm2252, %v2191
          %2266 = vst.msk [vmem:[#allocation4 + $0x30] sm:$0x1] %vm2254, %v2191
          %vm2267 = vcmask 1046528
          %v2268 = vrot.slane %v2166, 1
          %v2269 = vsel %vm2267, %v2234, %v2268
          %2270 = vrot.lane.b32.xlu0 %v2269, 64
          %v2271 = vpop.permute.xlu0 %2270
          %2272 = vrot.lane.b32.xlu0 %v2268, 64
          %v2273 = vpop.permute.xlu0 %2272
          %2276 = vst.msk [vmem:[#allocation4 + $0x8] sm:$0xc0] %vm2260, %v2271
          %2277 = vst.msk [vmem:[#allocation4 + $0x30] sm:$0x1] %vm2262, %v2273
          %v2278 = vrot.slane %v2166, 2
          %2280 = vst.msk [vmem:[#allocation4 + $0x10] sm:$0xc0] %vm2252, %v2278
          %2281 = vst.msk [vmem:[#allocation4 + $0x38] sm:$0x1] %vm2254, %v2278
          %v2282 = vrot.slane %v2166, 3
          %2283 = vrot.lane.b32.xlu0 %v2282, 64
          %v2284 = vpop.permute.xlu0 %2283
          %2286 = vst.msk [vmem:[#allocation4 + $0x10] sm:$0xc0] %vm2260, %v2284
          %2287 = vst.msk [vmem:[#allocation4 + $0x38] sm:$0x1] %vm2262, %v2284
          %2288 = vst.msk [vmem:[#allocation4 + $0x18] sm:$0xc0] %vm2252, %v2249
          %2289 = vst.msk [vmem:[#allocation4 + $0x40] sm:$0x1] %vm2254, %v2249
          %v2290 = vrot.slane %v2166, 7
          %2291 = vrot.lane.b32.xlu0 %v2290, 64
          %v2292 = vpop.permute.xlu0 %2291
          %2294 = vst.msk [vmem:[#allocation4 + $0x18] sm:$0xc0] %vm2260, %v2292
          %2295 = vst.msk [vmem:[#allocation4 + $0x40] sm:$0x1] %vm2262, %v2292
          %2296 = vst.msk [vmem:[#allocation4 + $0x20] sm:$0xc0] %vm2252, %v2166
          %2297 = vst.msk [vmem:[#allocation4 + $0x48] sm:$0x1] %vm2254, %v2167
          %vm2298 = vcmask 519169
          %2299 = vst.msk [vmem:[#allocation4 + $0x28] sm:$0xe] %vm2298, %v2167
          %v2301 = vrot.slane %v2167, 1
          %2302 = vrot.lane.b32.xlu0 %v2301, 64
          %v2303 = vpop.permute.xlu0 %2302
          %vm2305 = vcmask 1043969
          %2306 = vst.msk [vmem:[#allocation4 + $0x28] sm:$0xe] %vm2305, %v2303
          %v2307 = vrot.slane %v2167, 2
          %2309 = vst.msk [vmem:[#allocation4 + $0x30] sm:$0xe] %vm2298, %v2307
          %vm2311 = vcmask 1042432
          %v2312 = vrot.slane %v2167, 5
          %v2313 = vrot.slane %v2168, 5
          %v2314 = vsel %vm2311, %v2312, %v2313
          %2315 = vrot.lane.b32.xlu0 %v2314, 64
          %v2316 = vpop.permute.xlu0 %2315
          %2318 = vst.msk [vmem:[#allocation4 + $0x30] sm:$0xe] %vm2305, %v2316
          %v2319 = vrot.slane %v2167, 6
          %v2320 = vrot.slane %v2168, 6
          %v2321 = vsel %vm2189, %v2319, %v2320
          %2323 = vst.msk [vmem:[#allocation4 + $0x38] sm:$0xe] %vm2298, %v2321
          %v2324 = vrot.slane %v2168, 7
          %2325 = vrot.lane.b32.xlu0 %v2324, 64
          %v2326 = vpop.permute.xlu0 %2325
          %2328 = vst.msk [vmem:[#allocation4 + $0x38] sm:$0xe] %vm2305, %v2326
          %v2329 = vrot.slane %v2168, 2
          %2331 = vst.msk [vmem:[#allocation4 + $0x40] sm:$0xe] %vm2298, %v2329
          %v2332 = vrot.slane %v2168, 3
          %2333 = vrot.lane.b32.xlu0 %v2332, 64
          %v2334 = vpop.permute.xlu0 %2333
          %2336 = vst.msk [vmem:[#allocation4 + $0x40] sm:$0xe] %vm2305, %v2334
          %v2337 = vrot.slane %v2168, 4
          %2339 = vst.msk [vmem:[#allocation4 + $0x48] sm:$0xe] %vm2298, %v2337
          %vm2340 = vcmask 1045504
          %v2341 = vsel %vm2340, %v2307, %v2329
          %vm2343 = vcmask 522244
          %2344 = vst.msk [vmem:[#allocation4 + $0x28] sm:$0x70] %vm2343, %v2341
          %v2345 = vrot.slane %v2167, 3
          %v2346 = vsel %vm2216, %v2345, %v2332
          %2347 = vrot.lane.b32.xlu0 %v2346, 64
          %v2348 = vpop.permute.xlu0 %2347
          %vm2350 = vcmask 1047044
          %2351 = vst.msk [vmem:[#allocation4 + $0x28] sm:$0x70] %vm2350, %v2348
          %2352 = vst.msk [vmem:[#allocation4 + $0x30] sm:$0x70] %vm2343, %v2337
          %2353 = vst.msk [vmem:[#allocation4 + $0x30] sm:$0x70] %vm2350, %v2326
          %2354 = vst.msk [vmem:[#allocation4 + $0x38] sm:$0x70] %vm2343, %v2168
          %v2355 = vrot.slane %v2168, 1
          %2356 = vrot.lane.b32.xlu0 %v2355, 64
          %v2357 = vpop.permute.xlu0 %2356
          %2359 = vst.msk [vmem:[#allocation4 + $0x38] sm:$0x70] %vm2350, %v2357
          %v2361 = vrot.slane %v2169, 4
          %2363 = vst.msk [vmem:[#allocation4 + $0x40] sm:$0x70] %vm2343, %v2361
          %v2364 = vrot.slane %v2169, 5
          %2365 = vrot.lane.b32.xlu0 %v2364, 64
          %v2366 = vpop.permute.xlu0 %2365
          %2368 = vst.msk [vmem:[#allocation4 + $0x40] sm:$0x70] %vm2350, %v2366
          %v2369 = vrot.slane %v2169, 6
          %2371 = vst.msk [vmem:[#allocation4 + $0x48] sm:$0x70] %vm2343, %v2369
          %vm2372 = vcmask 523271
          %2373 = vst.msk [vmem:[#allocation4 + $0x28] sm:$0x80] %vm2372, %v2337
          %vm2374 = vcmask 517120
          %2375 = vst.msk [vmem:[#allocation4 + $0x50] sm:$0x3] %vm2374, %v2337
          %2376 = vrot.lane.b32.xlu0 %v2313, 64
          %v2377 = vpop.permute.xlu0 %2376
          %vm2379 = vcmask 1048071
          %2380 = vst.msk [vmem:[#allocation4 + $0x28] sm:$0x80] %vm2379, %v2377
          %vm2381 = vcmask 1041920
          %2382 = vst.msk [vmem:[#allocation4 + $0x50] sm:$0x3] %vm2381, %v2377
          %2384 = vst.msk [vmem:[#allocation4 + $0x30] sm:$0x80] %vm2372, %v2320
          %2385 = vst.msk [vmem:[#allocation4 + $0x58] sm:$0x3] %vm2374, %v2320
          %v2386 = vrot.slane %v2169, 1
          %2387 = vrot.lane.b32.xlu0 %v2386, 64
          %v2388 = vpop.permute.xlu0 %2387
          %2390 = vst.msk [vmem:[#allocation4 + $0x30] sm:$0x80] %vm2379, %v2388
          %2391 = vst.msk [vmem:[#allocation4 + $0x58] sm:$0x3] %vm2381, %v2388
          %v2392 = vrot.slane %v2169, 2
          %2394 = vst.msk [vmem:[#allocation4 + $0x38] sm:$0x80] %vm2372, %v2392
          %2395 = vst.msk [vmem:[#allocation4 + $0x60] sm:$0x3] %vm2374, %v2392
          %v2396 = vrot.slane %v2169, 3
          %2397 = vrot.lane.b32.xlu0 %v2396, 64
          %v2398 = vpop.permute.xlu0 %2397
          %2400 = vst.msk [vmem:[#allocation4 + $0x38] sm:$0x80] %vm2379, %v2398
          %2401 = vst.msk [vmem:[#allocation4 + $0x60] sm:$0x3] %vm2381, %v2398
          %2402 = vst.msk [vmem:[#allocation4 + $0x40] sm:$0x80] %vm2372, %v2369
          %2403 = vst.msk [vmem:[#allocation4 + $0x68] sm:$0x3] %vm2374, %v2369
          %v2405 = vrot.slane %v2169, 7
          %v2406 = vrot.slane %v2170, 7
          %v2407 = vsel %vm2195, %v2405, %v2406
          %2408 = vrot.lane.b32.xlu0 %v2405, 64
          %v2409 = vpop.permute.xlu0 %2408
          %2410 = vrot.lane.b32.xlu0 %v2407, 64
          %v2411 = vpop.permute.xlu0 %2410
          %2414 = vst.msk [vmem:[#allocation4 + $0x40] sm:$0x80] %vm2379, %v2409
          %2415 = vst.msk [vmem:[#allocation4 + $0x68] sm:$0x3] %vm2381, %v2411
          %2416 = vst.msk [vmem:[#allocation4 + $0x48] sm:$0x80] %vm2372, %v2169
          %2417 = vst.msk [vmem:[#allocation4 + $0x70] sm:$0x3] %vm2374, %v2170
          %v2418 = vld [vmem:[#allocation4] sm:$0xff]
          %v2419 = vld [vmem:[#allocation4 + $0x8] sm:$0xff]
          %v2420 = vld [vmem:[#allocation4 + $0x10] sm:$0xff]
          %v2421 = vld [vmem:[#allocation4 + $0x18] sm:$0xff]
          %v2422 = vld [vmem:[#allocation4 + $0x20] sm:$0xff]
          %v2423 = vld [vmem:[#allocation4 + $0x28] sm:$0xff]
          %v2424 = vld [vmem:[#allocation4 + $0x30] sm:$0xff]
          %v2425 = vld [vmem:[#allocation4 + $0x38] sm:$0xff]
          %v2426 = vld [vmem:[#allocation4 + $0x40] sm:$0xff]
          %v2427 = vld [vmem:[#allocation4 + $0x48] sm:$0xff]
          %v2428 = vld [vmem:[#allocation4 + $0x50] sm:$0x3]
          %v2429 = vld [vmem:[#allocation4 + $0x58] sm:$0x3]
          %v2430 = vld [vmem:[#allocation4 + $0x60] sm:$0x3]
          %v2431 = vld [vmem:[#allocation4 + $0x68] sm:$0x3]
          %v2432 = vld [vmem:[#allocation4 + $0x70] sm:$0x3]
          %v2433 = vpack.c.bf16 %v2423, %v2418
          %v2434 = vpack.c.bf16 %v2424, %v2419
          %v2435 = vpack.c.bf16 %v2425, %v2420
          %v2436 = vpack.c.bf16 %v2426, %v2421
          %v2437 = vpack.c.bf16 %v2427, %v2422
          %v2438 = vpack.c.bf16 %v2428, %v2428
          %v2439 = vpack.c.bf16 %v2429, %v2429
          %v2440 = vpack.c.bf16 %v2430, %v2430
          %v2441 = vpack.c.bf16 %v2431, %v2431
          %v2442 = vpack.c.bf16 %v2432, %v2432
          %v2443 = vld [vmem:[%s5] sm:$0xf]
          %v2444 = vld [vmem:[%s5 + $0x4] sm:$0xf]
          %v2445 = vld [vmem:[%s5 + $0x8] sm:$0xf]
          %v2446 = vld [vmem:[%s5 + $0xc] sm:$0xf]
          %v2447 = vld [vmem:[%s5 + $0x10] sm:$0xf]
          %v2448 = vld [vmem:[%s5 + $0x14] sm:$0xf]
          %v2449 = vld [vmem:[%s5 + $0x18] sm:$0xf]
          %v2450 = vld [vmem:[%s5 + $0x1c] sm:$0xf]
          %v2451 = vld [vmem:[%s5 + $0x20] sm:$0xf]
          %v2452 = vld [vmem:[%s5 + $0x24] sm:$0xf]
          %v2453 = vld [vmem:[%s5 + $0x28] sm:$0xf]
          %v2454 = vld [vmem:[%s5 + $0x2c] sm:$0xf]
          %v2455 = vld [vmem:[%s5 + $0x30] sm:$0xf]
          %v2456 = vld [vmem:[%s5 + $0x34] sm:$0xf]
          %v2457 = vld [vmem:[%s5 + $0x38] sm:$0xf]
          %v2458 = vld [vmem:[%s5 + $0x3c] sm:$0xf]
          %v2459 = vld [vmem:[%s5 + $0x40] sm:$0xf]
          %v2460 = vld [vmem:[%s5 + $0x44] sm:$0xf]
          %v2461 = vld [vmem:[%s5 + $0x48] sm:$0xf]
          %v2462 = vld [vmem:[%s5 + $0x4c] sm:$0xf]
          %v2463 = vld [vmem:[%s5 + $0x50] sm:$0xf]
          %v2464 = vld [vmem:[%s5 + $0x54] sm:$0xf]
          %v2465 = vld [vmem:[%s5 + $0x58] sm:$0xf]
          %v2466 = vld [vmem:[%s5 + $0x5c] sm:$0xf]
          %v2467 = vld [vmem:[%s5 + $0x60] sm:$0xf]
          %v2468 = vld [vmem:[%s5 + $0x64] sm:$0xf]
          %v2469 = vld [vmem:[%s5 + $0x68] sm:$0xf]
          %v2470 = vld [vmem:[%s5 + $0x6c] sm:$0xf]
          %v2471 = vld [vmem:[%s5 + $0x70] sm:$0xf]
          %v2472 = vld [vmem:[%s5 + $0x74] sm:$0xf]
          %v2473 = vld [vmem:[%s5 + $0x78] sm:$0xf]
          %v2474 = vld [vmem:[%s5 + $0x7c] sm:$0xf]
          %v2475 = vld [vmem:[%s5 + $0x80] sm:$0xf]
          %v2476 = vld [vmem:[%s5 + $0x84] sm:$0xf]
          %v2477 = vld [vmem:[%s5 + $0x88] sm:$0xf]
          %v2478 = vld [vmem:[%s5 + $0x8c] sm:$0xf]
          %v2479 = vld [vmem:[%s5 + $0x90] sm:$0xf]
          %v2480 = vld [vmem:[%s5 + $0x94] sm:$0xf]
          %v2481 = vld [vmem:[%s5 + $0x98] sm:$0xf]
          %v2482 = vld [vmem:[%s5 + $0x9c] sm:$0xf]
          %v2483 = vld [vmem:[%s5 + $0xa0] sm:$0xf]
          %v2484 = vld [vmem:[%s5 + $0xa4] sm:$0xf]
          %v2485 = vld [vmem:[%s5 + $0xa8] sm:$0xf]
          %v2486 = vld [vmem:[%s5 + $0xac] sm:$0xf]
          %v2487 = vld [vmem:[%s5 + $0xb0] sm:$0xf]
          %v2488 = vld [vmem:[%s5 + $0xb4] sm:$0xf]
          %v2489 = vld [vmem:[%s5 + $0xb8] sm:$0xf]
          %v2490 = vld [vmem:[%s5 + $0xbc] sm:$0xf]
          %v2491 = vld [vmem:[%s5 + $0xc0] sm:$0xf]
          %v2492 = vld [vmem:[%s5 + $0xc4] sm:$0xf]
          %v2493 = vld [vmem:[%s5 + $0xc8] sm:$0xf]
          %v2494 = vld [vmem:[%s5 + $0xcc] sm:$0xf]
          %v2495 = vld [vmem:[%s5 + $0xd0] sm:$0xf]
          %v2496 = vld [vmem:[%s5 + $0xd4] sm:$0xf]
          %v2497 = vld [vmem:[%s5 + $0xd8] sm:$0xf]
          %v2498 = vld [vmem:[%s5 + $0xdc] sm:$0xf]
          %v2499 = vld [vmem:[%s5 + $0xe0] sm:$0xf]
          %v2500 = vld [vmem:[%s5 + $0xe4] sm:$0xf]
          %v2501 = vld [vmem:[%s5 + $0xe8] sm:$0xf]
          %v2502 = vld [vmem:[%s5 + $0xec] sm:$0xf]
          %v2503 = vld [vmem:[%s5 + $0xf0] sm:$0xf]
          %v2504 = vld [vmem:[%s5 + $0xf4] sm:$0xf]
          %v2505 = vld [vmem:[%s5 + $0xf8] sm:$0xf]
          %v2506 = vld [vmem:[%s5 + $0xfc] sm:$0xf]
          %v2507 = vld [vmem:[%s5 + $0x100] sm:$0xf]
          %v2508 = vld [vmem:[%s5 + $0x104] sm:$0xf]
          %v2509 = vld [vmem:[%s5 + $0x108] sm:$0xf]
          %v2510 = vld [vmem:[%s5 + $0x10c] sm:$0xf]
          %v2511 = vld [vmem:[%s5 + $0x110] sm:$0xf]
          %v2512 = vld [vmem:[%s5 + $0x114] sm:$0xf]
          %v2513 = vld [vmem:[%s5 + $0x118] sm:$0xf]
          %v2514 = vld [vmem:[%s5 + $0x11c] sm:$0xf]
          %v2515 = vld [vmem:[#allocation10] sm:$0x1]
          %v2517 = vlaneseq
          %v2518 = vshrl.u32 %v2517, 7
          %v2519 = vsub.s32 0, %v2518
          %v2520 = vrot.slane %v2515, %v2519
          %v2594 = vunpack.c.l.b16 %v2443
          %v2595 = vunpack.c.l.b16 %v2444
          %v2596 = vunpack.c.l.b16 %v2445
          %v2597 = vunpack.c.l.b16 %v2446
          %v2598 = vunpack.c.l.b16 %v2447
          %v2599 = vunpack.c.l.b16 %v2448
          %v2600 = vunpack.c.l.b16 %v2449
          %v2601 = vunpack.c.l.b16 %v2450
          %v2602 = vunpack.c.l.b16 %v2451
          %v2603 = vunpack.c.l.b16 %v2452
          %v2604 = vunpack.c.l.b16 %v2453
          %v2605 = vunpack.c.l.b16 %v2454
          %v2606 = vunpack.c.l.b16 %v2455
          %v2607 = vunpack.c.l.b16 %v2456
          %v2608 = vunpack.c.l.b16 %v2457
          %v2609 = vunpack.c.l.b16 %v2458
          %v2610 = vunpack.c.l.b16 %v2459
          %v2611 = vunpack.c.l.b16 %v2460
          %v2612 = vunpack.c.l.b16 %v2461
          %v2613 = vunpack.c.l.b16 %v2462
          %v2614 = vunpack.c.l.b16 %v2463
          %v2615 = vunpack.c.l.b16 %v2464
          %v2616 = vunpack.c.l.b16 %v2465
          %v2617 = vunpack.c.l.b16 %v2466
          %v2618 = vunpack.c.l.b16 %v2467
          %v2619 = vunpack.c.l.b16 %v2468
          %v2620 = vunpack.c.l.b16 %v2469
          %v2621 = vunpack.c.l.b16 %v2470
          %v2622 = vunpack.c.l.b16 %v2471
          %v2623 = vunpack.c.l.b16 %v2472
          %v2624 = vunpack.c.l.b16 %v2473
          %v2625 = vunpack.c.l.b16 %v2474
          %v2626 = vunpack.c.l.b16 %v2475
          %v2627 = vunpack.c.l.b16 %v2476
          %v2628 = vunpack.c.l.b16 %v2477
          %v2629 = vunpack.c.l.b16 %v2478
          %v2630 = vunpack.c.l.b16 %v2479
          %v2631 = vunpack.c.l.b16 %v2480
          %v2632 = vunpack.c.l.b16 %v2481
          %v2633 = vunpack.c.l.b16 %v2482
          %v2634 = vunpack.c.l.b16 %v2483
          %v2635 = vunpack.c.l.b16 %v2484
          %v2636 = vunpack.c.l.b16 %v2485
          %v2637 = vunpack.c.l.b16 %v2486
          %v2638 = vunpack.c.l.b16 %v2487
          %v2639 = vunpack.c.l.b16 %v2488
          %v2640 = vunpack.c.l.b16 %v2489
          %v2641 = vunpack.c.l.b16 %v2490
          %v2642 = vunpack.c.l.b16 %v2491
          %v2643 = vunpack.c.l.b16 %v2492
          %v2644 = vunpack.c.l.b16 %v2493
          %v2645 = vunpack.c.l.b16 %v2494
          %v2646 = vunpack.c.l.b16 %v2495
          %v2647 = vunpack.c.l.b16 %v2496
          %v2648 = vunpack.c.l.b16 %v2497
          %v2649 = vunpack.c.l.b16 %v2498
          %v2650 = vunpack.c.l.b16 %v2499
          %v2651 = vunpack.c.l.b16 %v2500
          %v2652 = vunpack.c.l.b16 %v2501
          %v2653 = vunpack.c.l.b16 %v2502
          %v2654 = vunpack.c.l.b16 %v2503
          %v2655 = vunpack.c.l.b16 %v2504
          %v2656 = vunpack.c.l.b16 %v2505
          %v2657 = vunpack.c.l.b16 %v2506
          %v2658 = vunpack.c.l.b16 %v2507
          %v2659 = vunpack.c.l.b16 %v2508
          %v2660 = vunpack.c.l.b16 %v2509
          %v2661 = vunpack.c.l.b16 %v2510
          %v2662 = vunpack.c.l.b16 %v2511
          %v2663 = vunpack.c.l.b16 %v2512
          %v2664 = vunpack.c.l.b16 %v2513
          %v2665 = vunpack.c.l.b16 %v2514
          %v2666 = vpack.c.b16 %v2595, %v2594
          %v2667 = vpack.c.b16 %v2597, %v2596
          %v2668 = vpack.c.b16 %v2599, %v2598
          %v2669 = vpack.c.b16 %v2601, %v2600
          %v2670 = vpack.c.b16 %v2603, %v2602
          %v2671 = vpack.c.b16 %v2605, %v2604
          %v2672 = vpack.c.b16 %v2607, %v2606
          %v2673 = vpack.c.b16 %v2609, %v2608
          %v2674 = vpack.c.b16 %v2611, %v2610
          %v2675 = vpack.c.b16 %v2613, %v2612
          %v2676 = vpack.c.b16 %v2615, %v2614
          %v2677 = vpack.c.b16 %v2617, %v2616
          %v2678 = vpack.c.b16 %v2619, %v2618
          %v2679 = vpack.c.b16 %v2621, %v2620
          %v2680 = vpack.c.b16 %v2623, %v2622
          %v2681 = vpack.c.b16 %v2625, %v2624
          %v2682 = vpack.c.b16 %v2627, %v2626
          %v2683 = vpack.c.b16 %v2629, %v2628
          %v2684 = vpack.c.b16 %v2631, %v2630
          %v2685 = vpack.c.b16 %v2633, %v2632
          %v2686 = vpack.c.b16 %v2635, %v2634
          %v2687 = vpack.c.b16 %v2637, %v2636
          %v2688 = vpack.c.b16 %v2639, %v2638
          %v2689 = vpack.c.b16 %v2641, %v2640
          %v2690 = vpack.c.b16 %v2643, %v2642
          %v2691 = vpack.c.b16 %v2645, %v2644
          %v2692 = vpack.c.b16 %v2647, %v2646
          %v2693 = vpack.c.b16 %v2649, %v2648
          %v2694 = vpack.c.b16 %v2651, %v2650
          %v2695 = vpack.c.b16 %v2653, %v2652
          %v2696 = vpack.c.b16 %v2655, %v2654
          %v2697 = vpack.c.b16 %v2657, %v2656
          %v2698 = vpack.c.b16 %v2659, %v2658
          %v2699 = vpack.c.b16 %v2661, %v2660
          %v2700 = vpack.c.b16 %v2663, %v2662
          %v2701 = vpack.c.b16 %v2665, %v2664
          %v2739 = vsel %vm1703, %v2437, 0
          %v2742 = vsel %vm1703, %v2442, 0
          %2744 = vmatprep.subr.bf16.mxu0 0
          %2745 = vmatpush1.bf16.msra.mxu0 %v2666
          %2746 = vmatprep.subr.bf16.mxu0 0
          %2747 = vmatpush1.bf16.msra.mxu0 %v2667
          %2748 = vmatprep.subr.bf16.mxu0 0
          %2749 = vmatpush1.bf16.msra.mxu0 %v2668
          %2750 = vmatprep.subr.bf16.mxu0 0
          %2751 = vmatpush1.bf16.msra.mxu0 %v2669
          %2752 = vmatprep.subr.bf16.mxu0 0
          %2753 = vmatpush1.bf16.msra.mxu0 %v2670
          %2754 = vmatprep.subr.bf16.mxu0 0
          %2755 = vmatpush1.bf16.msra.mxu0 %v2671
          %2756 = vmatprep.subr.bf16.mxu0 0
          %2757 = vmatpush1.bf16.msra.mxu0 %v2672
          %2758 = vmatprep.subr.bf16.mxu0 0
          %2759 = vmatpush1.bf16.msra.mxu0 %v2673
          %2760 = vmatprep.subr.bf16.mxu0 0
          %2761 = vmatpush1.bf16.msra.mxu0 %v2674
          %2762 = vmatprep.subr.bf16.mxu0 0
          %2763 = vmatpush1.bf16.msra.mxu0 %v2675
          %2764 = vmatprep.subr.bf16.mxu0 0
          %2765 = vmatpush1.bf16.msra.mxu0 %v2676
          %2766 = vmatprep.subr.bf16.mxu0 0
          %2767 = vmatpush1.bf16.msra.mxu0 %v2677
          %2768 = vmatprep.subr.bf16.mxu0 0
          %2769 = vmatpush1.bf16.msra.mxu0 %v2678
          %2770 = vmatprep.subr.bf16.mxu0 0
          %2771 = vmatpush1.bf16.msra.mxu0 %v2679
          %2772 = vmatprep.subr.bf16.mxu0 0
          %2773 = vmatpush1.bf16.msra.mxu0 %v2680
          %2774 = vmatprep.subr.bf16.mxu0 0
          %2775 = vmatpush1.bf16.msra.mxu0 %v2681
          %2776 = vmatprep.mubr.bf16.mxu0 %v2434
          %2777 = vmatmul.mubr.bf16.gmra.mrb[0].mxu0 %v2433
          %v2778 = vpop.f32.mrb[0].mxu0
          %v2779 = vadd.f32 %v2520, %v2778
          %v2780 = vpop.f32.mrb[0].mxu0
          %v2781 = vpop.f32.mrb[0].mxu0
          %v2782 = vadd.f32 %v2520, %v2781
          %v2783 = vpop.f32.mrb[0].mxu0
          %2784 = vmatprep.mubr.bf16.mxu0 %v2439
          %2785 = vmatmul.mubr.bf16.gmra.mrb[0].mxu0 %v2438
          %v2786 = vpop.f32.mrb[0].mxu0
          %v2787 = vadd.f32 %v2520, %v2786
          %v2788 = vpop.f32.mrb[0].mxu0
          %v2789 = vpop.f32.mrb[0].mxu0
          %v2790 = vpop.f32.mrb[0].mxu0
          %2791 = vdwg.mxu0
          %2792 = vmatprep.subr.bf16.mxu0 0
          %2793 = vmatpush1.bf16.msra.mxu0 %v2682
          %2794 = vmatprep.subr.bf16.mxu0 0
          %2795 = vmatpush1.bf16.msra.mxu0 %v2683
          %2796 = vmatprep.subr.bf16.mxu0 0
          %2797 = vmatpush1.bf16.msra.mxu0 %v2684
          %2798 = vmatprep.subr.bf16.mxu0 0
          %2799 = vmatpush1.bf16.msra.mxu0 %v2685
          %2800 = vmatprep.subr.bf16.mxu0 0
          %2801 = vmatpush1.bf16.msra.mxu0 %v2686
          %2802 = vmatprep.subr.bf16.mxu0 0
          %2803 = vmatpush1.bf16.msra.mxu0 %v2687
          %2804 = vmatprep.subr.bf16.mxu0 0
          %2805 = vmatpush1.bf16.msra.mxu0 %v2688
          %2806 = vmatprep.subr.bf16.mxu0 0
          %2807 = vmatpush1.bf16.msra.mxu0 %v2689
          %2808 = vmatprep.subr.bf16.mxu0 0
          %2809 = vmatpush1.bf16.msra.mxu0 %v2690
          %2810 = vmatprep.subr.bf16.mxu0 0
          %2811 = vmatpush1.bf16.msra.mxu0 %v2691
          %2812 = vmatprep.subr.bf16.mxu0 0
          %2813 = vmatpush1.bf16.msra.mxu0 %v2692
          %2814 = vmatprep.subr.bf16.mxu0 0
          %2815 = vmatpush1.bf16.msra.mxu0 %v2693
          %2816 = vmatprep.subr.bf16.mxu0 0
          %2817 = vmatpush1.bf16.msra.mxu0 %v2694
          %2818 = vmatprep.subr.bf16.mxu0 0
          %2819 = vmatpush1.bf16.msra.mxu0 %v2695
          %2820 = vmatprep.subr.bf16.mxu0 0
          %2821 = vmatpush1.bf16.msra.mxu0 %v2696
          %2822 = vmatprep.subr.bf16.mxu0 0
          %2823 = vmatpush1.bf16.msra.mxu0 %v2697
          %2824 = vmatprep.mubr.bf16.mxu0 %v2436
          %2825 = vmatmul.mubr.bf16.gmra.mrb[0].mxu0 %v2435
          %v2826 = vpop.f32.mrb[0].mxu0
          %v2827 = vadd.f32 %v2779, %v2826
          %v2828 = vpop.f32.mrb[0].mxu0
          %v2829 = vpop.f32.mrb[0].mxu0
          %v2830 = vadd.f32 %v2782, %v2829
          %v2831 = vpop.f32.mrb[0].mxu0
          %2832 = vmatprep.mubr.bf16.mxu0 %v2441
          %2833 = vmatmul.mubr.bf16.gmra.mrb[0].mxu0 %v2440
          %v2834 = vpop.f32.mrb[0].mxu0
          %v2835 = vadd.f32 %v2787, %v2834
          %v2836 = vpop.f32.mrb[0].mxu0
          %v2837 = vpop.f32.mrb[0].mxu0
          %v2838 = vpop.f32.mrb[0].mxu0
          %2839 = vdwg.mxu0
          %2840 = vmatprep.subr.bf16.mxu0 0
          %2841 = vmatpush1.bf16.msra.mxu0 %v2698
          %2842 = vmatprep.subr.bf16.mxu0 0
          %2843 = vmatpush1.bf16.msra.mxu0 %v2699
          %2844 = vmatprep.subr.bf16.mxu0 0
          %2845 = vmatpush1.bf16.msra.mxu0 %v2700
          %2846 = vmatprep.subr.bf16.mxu0 0
          %2847 = vmatpush1.bf16.msra.mxu0 %v2701
          %2848 = vmatprep.subr.bf16.mxu0 0
          %2849 = vmatpush1.bf16.msra.mxu0 0
          %2850 = vmatprep.subr.bf16.mxu0 0
          %2851 = vmatpush1.bf16.msra.mxu0 0
          %2852 = vmatprep.subr.bf16.mxu0 0
          %2853 = vmatpush1.bf16.msra.mxu0 0
          %2854 = vmatprep.subr.bf16.mxu0 0
          %2855 = vmatpush1.bf16.msra.mxu0 0
          %2856 = vmatprep.subr.bf16.mxu0 0
          %2857 = vmatpush1.bf16.msra.mxu0 0
          %2858 = vmatprep.subr.bf16.mxu0 0
          %2859 = vmatpush1.bf16.msra.mxu0 0
          %2860 = vmatprep.subr.bf16.mxu0 0
          %2861 = vmatpush1.bf16.msra.mxu0 0
          %2862 = vmatprep.subr.bf16.mxu0 0
          %2863 = vmatpush1.bf16.msra.mxu0 0
          %2864 = vmatprep.subr.bf16.mxu0 0
          %2865 = vmatpush1.bf16.msra.mxu0 0
          %2866 = vmatprep.subr.bf16.mxu0 0
          %2867 = vmatpush1.bf16.msra.mxu0 0
          %2868 = vmatprep.subr.bf16.mxu0 0
          %2869 = vmatpush1.bf16.msra.mxu0 0
          %2870 = vmatprep.subr.bf16.mxu0 0
          %2871 = vmatpush1.bf16.msra.mxu0 0
          %2872 = vmatprep.mubr.bf16.mxu0 0
          %2873 = vmatmul.mubr.bf16.gmra.mrb[0].mxu0 %v2739
          %v2874 = vpop.f32.mrb[0].mxu0
          %v2875 = vadd.f32 %v2827, %v2874
          %v2876 = vpop.f32.mrb[0].mxu0
          %v2877 = vpop.f32.mrb[0].mxu0
          %v2878 = vadd.f32 %v2830, %v2877
          %v2879 = vpop.f32.mrb[0].mxu0
          %2880 = vmatprep.mubr.bf16.mxu0 0
          %2881 = vmatmul.mubr.bf16.gmra.mrb[0].mxu0 %v2742
          %v2882 = vpop.f32.mrb[0].mxu0
          %v2883 = vadd.f32 %v2835, %v2882
          %v2884 = vpop.f32.mrb[0].mxu0
          %v2885 = vpop.f32.mrb[0].mxu0
          %v2886 = vpop.f32.mrb[0].mxu0
          %2887 = vdwg.mxu0
          %vm2888 = vcmask 253952
          %2889 = vst.msk [vmem:[#allocation3] sm:$0x1] %vm2888, %v2875
          %v2892 = vunpack.c.l.s4 1983009808
          %v2893 = vunpack.c.0.s8 %v2892
          %v2894 = vlaneseq
          %v2895 = vshrl.u32 %v2894, 7
          %v2896 = vsub.s32 %v2893, %v2895
          %v2897 = vrot.slane %v2875, %v2896
          %v2898 = vrot.slane %v2897, 7
          %v2899 = vrot.slane %v2898, 2
          %2900 = vrot.lane.b32.xlu0 %v2899, 32
          %v2901 = vpop.permute.xlu0 %2900
          %vm2903 = vcmask 516352
          %2904 = vst.msk [vmem:[#allocation3] sm:$0x1] %vm2903, %v2901
          %v2905 = vcombine.high %v2897, %v2897
          %2906 = vrot.lane.b32.xlu0 %v2905, 64
          %v2907 = vpop.permute.xlu0 %2906
          %vm2909 = vcmask 778752
          %2910 = vst.msk [vmem:[#allocation3] sm:$0x1] %vm2909, %v2907
          %v2911 = vrot.slane %v2905, 7
          %v2912 = vrot.slane %v2911, 2
          %2913 = vrot.lane.b32.xlu0 %v2912, 96
          %v2914 = vpop.permute.xlu0 %2913
          %vm2916 = vcmask 1041152
          %2917 = vst.msk [vmem:[#allocation3] sm:$0x1] %vm2916, %v2914
          %v2918 = vcombine.high %v2875, %v2875
          %v2920 = vunpack.c.l.s4 1983009808
          %v2921 = vunpack.c.0.s8 %v2920
          %v2922 = vlaneseq
          %v2923 = vshrl.u32 %v2922, 7
          %v2924 = vsub.s32 %v2921, %v2923
          %v2925 = vrot.slane %v2918, %v2924
          %2927 = vst.msk [vmem:[#allocation3 + $0x2] sm:$0x1] %vm2888, %v2925
          %v2928 = vrot.slane %v2925, 7
          %v2929 = vrot.slane %v2928, 2
          %2930 = vrot.lane.b32.xlu0 %v2929, 32
          %v2931 = vpop.permute.xlu0 %2930
          %2933 = vst.msk [vmem:[#allocation3 + $0x2] sm:$0x1] %vm2903, %v2931
          %v2934 = vcombine.high %v2925, %v2925
          %2935 = vrot.lane.b32.xlu0 %v2934, 64
          %v2936 = vpop.permute.xlu0 %2935
          %2938 = vst.msk [vmem:[#allocation3 + $0x2] sm:$0x1] %vm2909, %v2936
          %v2939 = vrot.slane %v2934, 7
          %v2940 = vrot.slane %v2939, 2
          %2941 = vrot.lane.b32.xlu0 %v2940, 96
          %v2942 = vpop.permute.xlu0 %2941
          %2944 = vst.msk [vmem:[#allocation3 + $0x2] sm:$0x1] %vm2916, %v2942
          %2945 = vst.msk [vmem:[#allocation3 + $0x4] sm:$0x1] %vm2888, %v2878
          %v2948 = vunpack.c.l.s4 1983009808
          %v2949 = vunpack.c.0.s8 %v2948
          %v2950 = vlaneseq
          %v2951 = vshrl.u32 %v2950, 7
          %v2952 = vsub.s32 %v2949, %v2951
          %v2953 = vrot.slane %v2878, %v2952
          %v2954 = vrot.slane %v2953, 7
          %v2955 = vrot.slane %v2954, 2
          %2957 = vst.msk [vmem:[#allocation3 + $0x1] sm:$0x1] %vm2888, %v2955
          %v2958 = vcombine.high %v2953, %v2953
          %2959 = vrot.lane.b32.xlu0 %v2958, 32
          %v2960 = vpop.permute.xlu0 %2959
          %2962 = vst.msk [vmem:[#allocation3 + $0x1] sm:$0x1] %vm2903, %v2960
          %v2963 = vrot.slane %v2958, 7
          %v2964 = vrot.slane %v2963, 2
          %2965 = vrot.lane.b32.xlu0 %v2964, 64
          %v2966 = vpop.permute.xlu0 %2965
          %2968 = vst.msk [vmem:[#allocation3 + $0x1] sm:$0x1] %vm2909, %v2966
          %v2969 = vcombine.high %v2878, %v2878
          %v2971 = vunpack.c.l.s4 1983009808
          %v2972 = vunpack.c.0.s8 %v2971
          %v2973 = vlaneseq
          %v2974 = vshrl.u32 %v2973, 7
          %v2975 = vsub.s32 %v2972, %v2974
          %v2976 = vrot.slane %v2969, %v2975
          %2977 = vrot.lane.b32.xlu0 %v2976, 96
          %v2978 = vpop.permute.xlu0 %2977
          %2980 = vst.msk [vmem:[#allocation3 + $0x1] sm:$0x1] %vm2916, %v2978
          %v2981 = vrot.slane %v2976, 7
          %v2982 = vrot.slane %v2981, 2
          %2984 = vst.msk [vmem:[#allocation3 + $0x3] sm:$0x1] %vm2888, %v2982
          %v2985 = vcombine.high %v2976, %v2976
          %2986 = vrot.lane.b32.xlu0 %v2985, 32
          %v2987 = vpop.permute.xlu0 %2986
          %2989 = vst.msk [vmem:[#allocation3 + $0x3] sm:$0x1] %vm2903, %v2987
          %v2990 = vrot.slane %v2985, 7
          %v2991 = vrot.slane %v2990, 2
          %2992 = vrot.lane.b32.xlu0 %v2991, 64
          %v2993 = vpop.permute.xlu0 %2992
          %2995 = vst.msk [vmem:[#allocation3 + $0x3] sm:$0x1] %vm2909, %v2993
          %v2998 = vunpack.c.l.s4 1983009808
          %v2999 = vunpack.c.0.s8 %v2998
          %v3000 = vlaneseq
          %v3001 = vshrl.u32 %v3000, 7
          %v3002 = vsub.s32 %v2999, %v3001
          %v3003 = vrot.slane %v2883, %v3002
          %3004 = vrot.lane.b32.xlu0 %v3003, 96
          %v3005 = vpop.permute.xlu0 %3004
          %3007 = vst.msk [vmem:[#allocation3 + $0x3] sm:$0x1] %vm2916, %v3005
          %v3008 = vrot.slane %v3003, 7
          %v3009 = vrot.slane %v3008, 2
          %3011 = vst.msk [vmem:[#allocation3 + $0x5] sm:$0x1] %vm2888, %v3009
        $region96: #{global_discriminator_forward.1} parent=71 // pred_fallthru
          _
        %v3012 = vld [vmem:[#allocation2] sm:$0xff]
        %v3013 = vld [vmem:[%s519] sm:$0xff]
        %v3014 = vld [vmem:[%s519 + $0x8] sm:$0x3f]
        %v3017 = vcombine.high %v3013, %v3013
        %v3019 = vunpack.c.l.s4 1983009808
        %v3020 = vunpack.c.0.s8 %v3019
        %v3021 = vlaneseq
        %v3022 = vshrl.u32 %v3021, 7
        %v3023 = vsub.s32 %v3020, %v3022
        %v3024 = vrot.slane %v3013, %v3023
        %v3026 = vunpack.c.l.s4 1983009808
        %v3027 = vunpack.c.0.s8 %v3026
        %v3028 = vlaneseq
        %v3029 = vshrl.u32 %v3028, 7
        %v3030 = vsub.s32 %v3027, %v3029
        %v3031 = vrot.slane %v3017, %v3030
        %v3032 = vcombine.high %v3024, %v3024
        %v3033 = vcombine.high %v3031, %v3031
        %v3034 = vcombine.high %v3014, %v3014
        %v3036 = vunpack.c.l.s4 1983009808
        %v3037 = vunpack.c.0.s8 %v3036
        %v3038 = vlaneseq
        %v3039 = vshrl.u32 %v3038, 7
        %v3040 = vsub.s32 %v3037, %v3039
        %v3041 = vrot.slane %v3014, %v3040
        %v3043 = vunpack.c.l.s4 1983009808
        %v3044 = vunpack.c.0.s8 %v3043
        %v3045 = vlaneseq
        %v3046 = vshrl.u32 %v3045, 7
        %v3047 = vsub.s32 %v3044, %v3046
        %v3048 = vrot.slane %v3034, %v3047
        %v3049 = vcombine.high %v3041, %v3041
        %v3057 = vpack.c.bf16 %v3024, %v3024
        %v3058 = vpack.c.bf16 %v3032, %v3032
        %v3059 = vpack.c.bf16 %v3031, %v3031
        %v3060 = vpack.c.bf16 %v3033, %v3033
        %v3061 = vpack.c.bf16 %v3041, %v3041
        %v3062 = vpack.c.bf16 %v3049, %v3049
        %v3063 = vpack.c.bf16 %v3048, %v3048
        %v3064 = vld [vmem:[%s456] sm:$0xff]
        %v3065 = vld [vmem:[%s456 + $0x8] sm:$0xff]
        %v3066 = vld [vmem:[%s456 + $0x10] sm:$0xff]
        %v3067 = vld [vmem:[%s456 + $0x18] sm:$0xff]
        %v3068 = vld [vmem:[%s456 + $0x20] sm:$0xff]
        %v3069 = vld [vmem:[%s456 + $0x28] sm:$0xff]
        %v3070 = vld [vmem:[%s456 + $0x30] sm:$0xff]
        %v3071 = vld [vmem:[%s456 + $0x38] sm:$0xff]
        %v3072 = vld [vmem:[%s456 + $0x40] sm:$0xff]
        %v3073 = vld [vmem:[%s456 + $0x48] sm:$0xff]
        %v3074 = vld [vmem:[%s456 + $0x50] sm:$0xff]
        %v3075 = vld [vmem:[%s456 + $0x58] sm:$0xff]
        %v3076 = vld [vmem:[%s456 + $0x60] sm:$0xff]
        %v3077 = vld [vmem:[%s456 + $0x68] sm:$0xff]
        %v3078 = vld [vmem:[%s456 + $0x70] sm:$0xff]
        %v3079 = vld [vmem:[%s456 + $0x78] sm:$0xff]
        %v3080 = vld [vmem:[%s456 + $0x80] sm:$0xff]
        %v3081 = vld [vmem:[%s456 + $0x88] sm:$0xff]
        %v3082 = vld [vmem:[%s456 + $0x90] sm:$0xff]
        %v3083 = vld [vmem:[%s456 + $0x98] sm:$0xff]
        %v3084 = vld [vmem:[%s456 + $0xa0] sm:$0xff]
        %v3085 = vld [vmem:[%s456 + $0xa8] sm:$0xff]
        %v3086 = vld [vmem:[%s456 + $0xb0] sm:$0xff]
        %v3087 = vld [vmem:[%s456 + $0xb8] sm:$0xff]
        %v3088 = vld [vmem:[%s456 + $0xc0] sm:$0xff]
        %v3089 = vld [vmem:[%s456 + $0xc8] sm:$0xff]
        %v3090 = vld [vmem:[%s456 + $0xd0] sm:$0xff]
        %v3091 = vld [vmem:[%s456 + $0xd8] sm:$0xff]
        %v3092 = vld [vmem:[%s456 + $0xe0] sm:$0xff]
        %v3093 = vld [vmem:[%s456 + $0xe8] sm:$0xff]
        %v3094 = vld [vmem:[%s456 + $0xf0] sm:$0xff]
        %v3095 = vld [vmem:[%s456 + $0xf8] sm:$0xff]
        %v3096 = vld [vmem:[%s456 + $0x100] sm:$0xff]
        %v3097 = vld [vmem:[%s456 + $0x108] sm:$0xff]
        %v3098 = vld [vmem:[%s456 + $0x110] sm:$0xff]
        %v3099 = vld [vmem:[%s456 + $0x118] sm:$0xff]
        %v3100 = vld [vmem:[%s456 + $0x120] sm:$0xff]
        %v3101 = vld [vmem:[%s456 + $0x128] sm:$0xff]
        %v3102 = vld [vmem:[%s456 + $0x130] sm:$0xff]
        %v3103 = vld [vmem:[%s456 + $0x138] sm:$0xff]
        %v3104 = vld [vmem:[%s456 + $0x140] sm:$0xff]
        %v3105 = vld [vmem:[%s456 + $0x148] sm:$0xff]
        %v3106 = vld [vmem:[%s456 + $0x150] sm:$0xff]
        %v3107 = vld [vmem:[%s456 + $0x158] sm:$0xff]
        %v3108 = vld [vmem:[%s456 + $0x160] sm:$0xff]
        %v3109 = vld [vmem:[%s456 + $0x168] sm:$0xff]
        %v3110 = vld [vmem:[%s456 + $0x170] sm:$0xff]
        %v3111 = vld [vmem:[%s456 + $0x178] sm:$0xff]
        %v3112 = vld [vmem:[%s456 + $0x180] sm:$0xff]
        %v3113 = vld [vmem:[%s456 + $0x188] sm:$0xff]
        %v3114 = vld [vmem:[%s456 + $0x190] sm:$0xff]
        %v3115 = vld [vmem:[%s456 + $0x198] sm:$0xff]
        %v3116 = vld [vmem:[%s456 + $0x1a0] sm:$0xff]
        %v3117 = vld [vmem:[%s456 + $0x1a8] sm:$0xff]
        %v3118 = vld [vmem:[%s456 + $0x1b0] sm:$0xff]
        %v3119 = vld [vmem:[%s456 + $0x1b8] sm:$0xff]
        %v3120 = vld [vmem:[%s456 + $0x1c0] sm:$0xff]
        %v3121 = vld [vmem:[%s456 + $0x1c8] sm:$0xff]
        %v3122 = vld [vmem:[%s456 + $0x1d0] sm:$0xff]
        %v3123 = vld [vmem:[%s456 + $0x1d8] sm:$0xff]
        %v3124 = vld [vmem:[%s456 + $0x1e0] sm:$0xff]
        %v3125 = vld [vmem:[%s456 + $0x1e8] sm:$0xff]
        %v3126 = vld [vmem:[%s456 + $0x1f0] sm:$0xff]
        %v3127 = vld [vmem:[%s456 + $0x1f8] sm:$0xff]
        %v3128 = vld [vmem:[%s456 + $0x200] sm:$0xff]
        %v3129 = vld [vmem:[%s456 + $0x208] sm:$0xff]
        %v3130 = vld [vmem:[%s456 + $0x210] sm:$0xff]
        %v3131 = vld [vmem:[%s456 + $0x218] sm:$0xff]
        %v3132 = vld [vmem:[%s456 + $0x220] sm:$0xff]
        %v3133 = vld [vmem:[%s456 + $0x228] sm:$0xff]
        %v3134 = vld [vmem:[%s456 + $0x230] sm:$0xff]
        %v3135 = vld [vmem:[%s456 + $0x238] sm:$0xff]
        %v3136 = vld [vmem:[%s456 + $0x240] sm:$0xff]
        %v3137 = vld [vmem:[%s456 + $0x248] sm:$0xff]
        %v3138 = vld [vmem:[%s456 + $0x250] sm:$0xff]
        %v3139 = vld [vmem:[%s456 + $0x258] sm:$0xff]
        %v3140 = vld [vmem:[%s456 + $0x260] sm:$0xff]
        %v3141 = vld [vmem:[%s456 + $0x268] sm:$0xff]
        %v3142 = vld [vmem:[%s456 + $0x270] sm:$0xff]
        %v3143 = vld [vmem:[%s456 + $0x278] sm:$0xff]
        %v3144 = vld [vmem:[%s456 + $0x280] sm:$0xff]
        %v3145 = vld [vmem:[%s456 + $0x288] sm:$0xff]
        %v3146 = vld [vmem:[%s456 + $0x290] sm:$0xff]
        %v3147 = vld [vmem:[%s456 + $0x298] sm:$0xff]
        %v3148 = vld [vmem:[%s456 + $0x2a0] sm:$0xff]
        %v3149 = vld [vmem:[%s456 + $0x2a8] sm:$0xff]
        %v3150 = vld [vmem:[%s456 + $0x2b0] sm:$0xff]
        %v3151 = vld [vmem:[%s456 + $0x2b8] sm:$0xff]
        %v3152 = vld [vmem:[%s456 + $0x2c0] sm:$0xff]
        %v3153 = vld [vmem:[%s456 + $0x2c8] sm:$0xff]
        %v3154 = vld [vmem:[%s456 + $0x2d0] sm:$0xff]
        %v3155 = vld [vmem:[%s456 + $0x2d8] sm:$0xff]
        %v3156 = vld [vmem:[%s456 + $0x2e0] sm:$0xff]
        %v3157 = vld [vmem:[%s456 + $0x2e8] sm:$0xff]
        %v3158 = vld [vmem:[%s456 + $0x2f0] sm:$0xff]
        %v3159 = vld [vmem:[%s456 + $0x2f8] sm:$0xff]
        %v3160 = vld [vmem:[%s456 + $0x300] sm:$0xff]
        %v3161 = vld [vmem:[%s456 + $0x308] sm:$0xff]
        %v3162 = vld [vmem:[%s456 + $0x310] sm:$0xff]
        %v3163 = vld [vmem:[%s456 + $0x318] sm:$0xff]
        %v3164 = vld [vmem:[%s456 + $0x320] sm:$0xff]
        %v3165 = vld [vmem:[%s456 + $0x328] sm:$0xff]
        %v3166 = vld [vmem:[%s456 + $0x330] sm:$0xff]
        %v3167 = vld [vmem:[%s456 + $0x338] sm:$0xff]
        %v3168 = vld [vmem:[%s456 + $0x340] sm:$0xff]
        %v3169 = vld [vmem:[%s456 + $0x348] sm:$0xff]
        %v3170 = vld [vmem:[%s456 + $0x350] sm:$0xff]
        %v3171 = vld [vmem:[%s456 + $0x358] sm:$0xff]
        %v3172 = vld [vmem:[%s456 + $0x360] sm:$0xff]
        %v3173 = vld [vmem:[%s456 + $0x368] sm:$0xff]
        %v3174 = vld [vmem:[%s456 + $0x370] sm:$0xff]
        %v3175 = vld [vmem:[%s456 + $0x378] sm:$0xff]
        %v3176 = vld [vmem:[%s456 + $0x380] sm:$0xff]
        %v3177 = vld [vmem:[%s456 + $0x388] sm:$0xff]
        %v3178 = vld [vmem:[%s456 + $0x390] sm:$0xff]
        %v3179 = vld [vmem:[%s456 + $0x398] sm:$0xff]
        %v3180 = vld [vmem:[%s456 + $0x3a0] sm:$0xff]
        %v3181 = vld [vmem:[%s456 + $0x3a8] sm:$0xff]
        %v3182 = vld [vmem:[%s456 + $0x3b0] sm:$0xff]
        %v3183 = vld [vmem:[%s456 + $0x3b8] sm:$0xff]
        %v3184 = vld [vmem:[%s456 + $0x3c0] sm:$0xff]
        %v3185 = vld [vmem:[%s456 + $0x3c8] sm:$0xff]
        %v3186 = vld [vmem:[%s456 + $0x3d0] sm:$0xff]
        %v3187 = vld [vmem:[%s456 + $0x3d8] sm:$0xff]
        %v3188 = vld [vmem:[%s456 + $0x3e0] sm:$0xff]
        %v3189 = vld [vmem:[%s456 + $0x3e8] sm:$0xff]
        %v3190 = vld [vmem:[%s456 + $0x3f0] sm:$0xff]
        %v3191 = vld [vmem:[%s456 + $0x3f8] sm:$0xff]
        %v3192 = vld [vmem:[%s456 + $0x400] sm:$0xff]
        %v3193 = vld [vmem:[%s456 + $0x408] sm:$0xff]
        %v3194 = vld [vmem:[%s456 + $0x410] sm:$0xff]
        %v3195 = vld [vmem:[%s456 + $0x418] sm:$0xff]
        %v3196 = vld [vmem:[%s456 + $0x420] sm:$0xff]
        %v3197 = vld [vmem:[%s456 + $0x428] sm:$0xff]
        %v3198 = vld [vmem:[%s456 + $0x430] sm:$0xff]
        %v3199 = vld [vmem:[%s456 + $0x438] sm:$0xff]
        %v3200 = vld [vmem:[%s456 + $0x440] sm:$0xff]
        %v3201 = vld [vmem:[%s456 + $0x448] sm:$0xff]
        %v3202 = vld [vmem:[%s456 + $0x450] sm:$0xff]
        %v3203 = vld [vmem:[%s456 + $0x458] sm:$0xff]
        %v3204 = vld [vmem:[%s456 + $0x460] sm:$0xff]
        %v3205 = vld [vmem:[%s456 + $0x468] sm:$0xff]
        %v3206 = vld [vmem:[%s456 + $0x470] sm:$0xff]
        %v3207 = vld [vmem:[%s456 + $0x478] sm:$0xff]
        %v3208 = vld [vmem:[%s456 + $0x480] sm:$0xff]
        %v3209 = vld [vmem:[%s456 + $0x488] sm:$0xff]
        %v3210 = vld [vmem:[%s456 + $0x490] sm:$0xff]
        %v3211 = vld [vmem:[%s456 + $0x498] sm:$0xff]
        %v3212 = vld [vmem:[%s456 + $0x4a0] sm:$0xff]
        %v3213 = vld [vmem:[%s456 + $0x4a8] sm:$0xff]
        %v3214 = vld [vmem:[%s456 + $0x4b0] sm:$0xff]
        %v3215 = vld [vmem:[%s456 + $0x4b8] sm:$0xff]
        %v3216 = vld [vmem:[%s456 + $0x4c0] sm:$0xff]
        %v3217 = vld [vmem:[%s456 + $0x4c8] sm:$0xff]
        %v3218 = vld [vmem:[%s456 + $0x4d0] sm:$0xff]
        %v3219 = vld [vmem:[%s456 + $0x4d8] sm:$0xff]
        %v3220 = vld [vmem:[%s456 + $0x4e0] sm:$0xff]
        %v3221 = vld [vmem:[%s456 + $0x4e8] sm:$0xff]
        %v3222 = vld [vmem:[%s456 + $0x4f0] sm:$0xff]
        %v3223 = vld [vmem:[%s456 + $0x4f8] sm:$0xff]
        %v3224 = vld [vmem:[%s456 + $0x500] sm:$0xff]
        %v3225 = vld [vmem:[%s456 + $0x508] sm:$0xff]
        %v3226 = vld [vmem:[%s456 + $0x510] sm:$0xff]
        %v3227 = vld [vmem:[%s456 + $0x518] sm:$0xff]
        %v3228 = vld [vmem:[%s456 + $0x520] sm:$0xff]
        %v3229 = vld [vmem:[%s456 + $0x528] sm:$0xff]
        %v3230 = vld [vmem:[%s456 + $0x530] sm:$0xff]
        %v3231 = vld [vmem:[%s456 + $0x538] sm:$0xff]
        %v3232 = vld [vmem:[%s456 + $0x540] sm:$0xff]
        %v3233 = vld [vmem:[%s456 + $0x548] sm:$0xff]
        %v3234 = vld [vmem:[%s456 + $0x550] sm:$0xff]
        %v3235 = vld [vmem:[%s456 + $0x558] sm:$0xff]
        %v3236 = vld [vmem:[%s456 + $0x560] sm:$0xff]
        %v3237 = vld [vmem:[%s456 + $0x568] sm:$0xff]
        %v3238 = vld [vmem:[%s456 + $0x570] sm:$0xff]
        %v3239 = vld [vmem:[%s456 + $0x578] sm:$0xff]
        %v3240 = vld [vmem:[%s456 + $0x580] sm:$0xff]
        %v3241 = vld [vmem:[%s456 + $0x588] sm:$0xff]
        %v3242 = vld [vmem:[%s456 + $0x590] sm:$0xff]
        %v3243 = vld [vmem:[%s456 + $0x598] sm:$0xff]
        %v3244 = vld [vmem:[%s456 + $0x5a0] sm:$0xff]
        %v3245 = vld [vmem:[%s456 + $0x5a8] sm:$0xff]
        %v3246 = vld [vmem:[%s456 + $0x5b0] sm:$0xff]
        %v3247 = vld [vmem:[%s456 + $0x5b8] sm:$0xff]
        %v3248 = vld [vmem:[%s456 + $0x5c0] sm:$0xff]
        %v3249 = vld [vmem:[%s456 + $0x5c8] sm:$0xff]
        %v3250 = vld [vmem:[%s456 + $0x5d0] sm:$0xff]
        %v3251 = vld [vmem:[%s456 + $0x5d8] sm:$0xff]
        %v3252 = vld [vmem:[%s456 + $0x5e0] sm:$0xff]
        %v3253 = vld [vmem:[%s456 + $0x5e8] sm:$0xff]
        %v3254 = vld [vmem:[%s456 + $0x5f0] sm:$0xff]
        %v3255 = vld [vmem:[%s456 + $0x5f8] sm:$0xff]
        %v3256 = vld [vmem:[%s456 + $0x600] sm:$0xff]
        %v3257 = vld [vmem:[%s456 + $0x608] sm:$0xff]
        %v3258 = vld [vmem:[%s456 + $0x610] sm:$0xff]
        %v3259 = vld [vmem:[%s456 + $0x618] sm:$0xff]
        %v3260 = vld [vmem:[%s456 + $0x620] sm:$0xff]
        %v3261 = vld [vmem:[%s456 + $0x628] sm:$0xff]
        %v3262 = vld [vmem:[%s456 + $0x630] sm:$0xff]
        %v3263 = vld [vmem:[%s456 + $0x638] sm:$0xff]
        %v3264 = vld [vmem:[%s456 + $0x640] sm:$0xff]
        %v3265 = vld [vmem:[%s456 + $0x648] sm:$0xff]
        %v3266 = vld [vmem:[%s456 + $0x650] sm:$0xff]
        %v3267 = vld [vmem:[%s456 + $0x658] sm:$0xff]
        %v3268 = vld [vmem:[%s456 + $0x660] sm:$0xff]
        %v3269 = vld [vmem:[%s456 + $0x668] sm:$0xff]
        %v3270 = vld [vmem:[%s456 + $0x670] sm:$0xff]
        %v3271 = vld [vmem:[%s456 + $0x678] sm:$0xff]
        %v3272 = vld [vmem:[%s456 + $0x680] sm:$0xff]
        %v3273 = vld [vmem:[%s456 + $0x688] sm:$0xff]
        %v3274 = vld [vmem:[%s456 + $0x690] sm:$0xff]
        %v3275 = vld [vmem:[%s456 + $0x698] sm:$0xff]
        %v3276 = vld [vmem:[%s456 + $0x6a0] sm:$0xff]
        %v3277 = vld [vmem:[%s456 + $0x6a8] sm:$0xff]
        %v3278 = vld [vmem:[%s456 + $0x6b0] sm:$0xff]
        %v3279 = vld [vmem:[%s456 + $0x6b8] sm:$0xff]
        %v3280 = vld [vmem:[%s456 + $0x6c0] sm:$0xff]
        %v3281 = vld [vmem:[%s456 + $0x6c8] sm:$0xff]
        %v3282 = vld [vmem:[%s456 + $0x6d0] sm:$0xff]
        %v3283 = vld [vmem:[%s456 + $0x6d8] sm:$0xff]
        %v3284 = vld [vmem:[%s456 + $0x6e0] sm:$0xff]
        %v3285 = vld [vmem:[%s456 + $0x6e8] sm:$0xff]
        %v3286 = vld [vmem:[%s456 + $0x6f0] sm:$0xff]
        %v3287 = vld [vmem:[%s456 + $0x6f8] sm:$0xff]
        %v3512 = vunpack.c.l.b16 %v3064
        %v3513 = vunpack.c.h.b16 %v3064
        %v3514 = vunpack.c.l.b16 %v3065
        %v3515 = vunpack.c.h.b16 %v3065
        %v3516 = vunpack.c.l.b16 %v3066
        %v3517 = vunpack.c.h.b16 %v3066
        %v3518 = vunpack.c.l.b16 %v3067
        %v3519 = vunpack.c.h.b16 %v3067
        %v3520 = vunpack.c.l.b16 %v3068
        %v3521 = vunpack.c.h.b16 %v3068
        %v3522 = vunpack.c.l.b16 %v3069
        %v3523 = vunpack.c.h.b16 %v3069
        %v3524 = vunpack.c.l.b16 %v3070
        %v3525 = vunpack.c.h.b16 %v3070
        %v3526 = vunpack.c.l.b16 %v3071
        %v3527 = vunpack.c.h.b16 %v3071
        %v3528 = vunpack.c.l.b16 %v3072
        %v3529 = vunpack.c.h.b16 %v3072
        %v3530 = vunpack.c.l.b16 %v3073
        %v3531 = vunpack.c.h.b16 %v3073
        %v3532 = vunpack.c.l.b16 %v3074
        %v3533 = vunpack.c.h.b16 %v3074
        %v3534 = vunpack.c.l.b16 %v3075
        %v3535 = vunpack.c.h.b16 %v3075
        %v3536 = vunpack.c.l.b16 %v3076
        %v3537 = vunpack.c.h.b16 %v3076
        %v3538 = vunpack.c.l.b16 %v3077
        %v3539 = vunpack.c.h.b16 %v3077
        %v3540 = vunpack.c.l.b16 %v3078
        %v3541 = vunpack.c.h.b16 %v3078
        %v3542 = vunpack.c.l.b16 %v3079
        %v3543 = vunpack.c.h.b16 %v3079
        %v3544 = vunpack.c.l.b16 %v3080
        %v3545 = vunpack.c.h.b16 %v3080
        %v3546 = vunpack.c.l.b16 %v3081
        %v3547 = vunpack.c.h.b16 %v3081
        %v3548 = vunpack.c.l.b16 %v3082
        %v3549 = vunpack.c.h.b16 %v3082
        %v3550 = vunpack.c.l.b16 %v3083
        %v3551 = vunpack.c.h.b16 %v3083
        %v3552 = vunpack.c.l.b16 %v3084
        %v3553 = vunpack.c.h.b16 %v3084
        %v3554 = vunpack.c.l.b16 %v3085
        %v3555 = vunpack.c.h.b16 %v3085
        %v3556 = vunpack.c.l.b16 %v3086
        %v3557 = vunpack.c.h.b16 %v3086
        %v3558 = vunpack.c.l.b16 %v3087
        %v3559 = vunpack.c.h.b16 %v3087
        %v3560 = vunpack.c.l.b16 %v3088
        %v3561 = vunpack.c.h.b16 %v3088
        %v3562 = vunpack.c.l.b16 %v3089
        %v3563 = vunpack.c.h.b16 %v3089
        %v3564 = vunpack.c.l.b16 %v3090
        %v3565 = vunpack.c.h.b16 %v3090
        %v3566 = vunpack.c.l.b16 %v3091
        %v3567 = vunpack.c.h.b16 %v3091
        %v3568 = vunpack.c.l.b16 %v3092
        %v3569 = vunpack.c.h.b16 %v3092
        %v3570 = vunpack.c.l.b16 %v3093
        %v3571 = vunpack.c.h.b16 %v3093
        %v3572 = vunpack.c.l.b16 %v3094
        %v3573 = vunpack.c.h.b16 %v3094
        %v3574 = vunpack.c.l.b16 %v3095
        %v3575 = vunpack.c.h.b16 %v3095
        %v3576 = vunpack.c.l.b16 %v3096
        %v3577 = vunpack.c.h.b16 %v3096
        %v3578 = vunpack.c.l.b16 %v3097
        %v3579 = vunpack.c.h.b16 %v3097
        %v3580 = vunpack.c.l.b16 %v3098
        %v3581 = vunpack.c.h.b16 %v3098
        %v3582 = vunpack.c.l.b16 %v3099
        %v3583 = vunpack.c.h.b16 %v3099
        %v3584 = vunpack.c.l.b16 %v3100
        %v3585 = vunpack.c.h.b16 %v3100
        %v3586 = vunpack.c.l.b16 %v3101
        %v3587 = vunpack.c.h.b16 %v3101
        %v3588 = vunpack.c.l.b16 %v3102
        %v3589 = vunpack.c.h.b16 %v3102
        %v3590 = vunpack.c.l.b16 %v3103
        %v3591 = vunpack.c.h.b16 %v3103
        %v3592 = vunpack.c.l.b16 %v3104
        %v3593 = vunpack.c.h.b16 %v3104
        %v3594 = vunpack.c.l.b16 %v3105
        %v3595 = vunpack.c.h.b16 %v3105
        %v3596 = vunpack.c.l.b16 %v3106
        %v3597 = vunpack.c.h.b16 %v3106
        %v3598 = vunpack.c.l.b16 %v3107
        %v3599 = vunpack.c.h.b16 %v3107
        %v3600 = vunpack.c.l.b16 %v3108
        %v3601 = vunpack.c.h.b16 %v3108
        %v3602 = vunpack.c.l.b16 %v3109
        %v3603 = vunpack.c.h.b16 %v3109
        %v3604 = vunpack.c.l.b16 %v3110
        %v3605 = vunpack.c.h.b16 %v3110
        %v3606 = vunpack.c.l.b16 %v3111
        %v3607 = vunpack.c.h.b16 %v3111
        %v3608 = vunpack.c.l.b16 %v3112
        %v3609 = vunpack.c.h.b16 %v3112
        %v3610 = vunpack.c.l.b16 %v3113
        %v3611 = vunpack.c.h.b16 %v3113
        %v3612 = vunpack.c.l.b16 %v3114
        %v3613 = vunpack.c.h.b16 %v3114
        %v3614 = vunpack.c.l.b16 %v3115
        %v3615 = vunpack.c.h.b16 %v3115
        %v3616 = vunpack.c.l.b16 %v3116
        %v3617 = vunpack.c.h.b16 %v3116
        %v3618 = vunpack.c.l.b16 %v3117
        %v3619 = vunpack.c.h.b16 %v3117
        %v3620 = vunpack.c.l.b16 %v3118
        %v3621 = vunpack.c.h.b16 %v3118
        %v3622 = vunpack.c.l.b16 %v3119
        %v3623 = vunpack.c.h.b16 %v3119
        %v3624 = vunpack.c.l.b16 %v3120
        %v3625 = vunpack.c.h.b16 %v3120
        %v3626 = vunpack.c.l.b16 %v3121
        %v3627 = vunpack.c.h.b16 %v3121
        %v3628 = vunpack.c.l.b16 %v3122
        %v3629 = vunpack.c.h.b16 %v3122
        %v3630 = vunpack.c.l.b16 %v3123
        %v3631 = vunpack.c.h.b16 %v3123
        %v3632 = vunpack.c.l.b16 %v3124
        %v3633 = vunpack.c.h.b16 %v3124
        %v3634 = vunpack.c.l.b16 %v3125
        %v3635 = vunpack.c.h.b16 %v3125
        %v3636 = vunpack.c.l.b16 %v3126
        %v3637 = vunpack.c.h.b16 %v3126
        %v3638 = vunpack.c.l.b16 %v3127
        %v3639 = vunpack.c.h.b16 %v3127
        %v3640 = vunpack.c.l.b16 %v3128
        %v3641 = vunpack.c.h.b16 %v3128
        %v3642 = vunpack.c.l.b16 %v3129
        %v3643 = vunpack.c.h.b16 %v3129
        %v3644 = vunpack.c.l.b16 %v3130
        %v3645 = vunpack.c.h.b16 %v3130
        %v3646 = vunpack.c.l.b16 %v3131
        %v3647 = vunpack.c.h.b16 %v3131
        %v3648 = vunpack.c.l.b16 %v3132
        %v3649 = vunpack.c.h.b16 %v3132
        %v3650 = vunpack.c.l.b16 %v3133
        %v3651 = vunpack.c.h.b16 %v3133
        %v3652 = vunpack.c.l.b16 %v3134
        %v3653 = vunpack.c.h.b16 %v3134
        %v3654 = vunpack.c.l.b16 %v3135
        %v3655 = vunpack.c.h.b16 %v3135
        %v3656 = vunpack.c.l.b16 %v3136
        %v3657 = vunpack.c.h.b16 %v3136
        %v3658 = vunpack.c.l.b16 %v3137
        %v3659 = vunpack.c.h.b16 %v3137
        %v3660 = vunpack.c.l.b16 %v3138
        %v3661 = vunpack.c.h.b16 %v3138
        %v3662 = vunpack.c.l.b16 %v3139
        %v3663 = vunpack.c.h.b16 %v3139
        %v3664 = vunpack.c.l.b16 %v3140
        %v3665 = vunpack.c.h.b16 %v3140
        %v3666 = vunpack.c.l.b16 %v3141
        %v3667 = vunpack.c.h.b16 %v3141
        %v3668 = vunpack.c.l.b16 %v3142
        %v3669 = vunpack.c.h.b16 %v3142
        %v3670 = vunpack.c.l.b16 %v3143
        %v3671 = vunpack.c.h.b16 %v3143
        %v3672 = vunpack.c.l.b16 %v3144
        %v3673 = vunpack.c.h.b16 %v3144
        %v3674 = vunpack.c.l.b16 %v3145
        %v3675 = vunpack.c.h.b16 %v3145
        %v3676 = vunpack.c.l.b16 %v3146
        %v3677 = vunpack.c.h.b16 %v3146
        %v3678 = vunpack.c.l.b16 %v3147
        %v3679 = vunpack.c.h.b16 %v3147
        %v3680 = vunpack.c.l.b16 %v3148
        %v3681 = vunpack.c.h.b16 %v3148
        %v3682 = vunpack.c.l.b16 %v3149
        %v3683 = vunpack.c.h.b16 %v3149
        %v3684 = vunpack.c.l.b16 %v3150
        %v3685 = vunpack.c.h.b16 %v3150
        %v3686 = vunpack.c.l.b16 %v3151
        %v3687 = vunpack.c.h.b16 %v3151
        %v3688 = vunpack.c.l.b16 %v3152
        %v3689 = vunpack.c.h.b16 %v3152
        %v3690 = vunpack.c.l.b16 %v3153
        %v3691 = vunpack.c.h.b16 %v3153
        %v3692 = vunpack.c.l.b16 %v3154
        %v3693 = vunpack.c.h.b16 %v3154
        %v3694 = vunpack.c.l.b16 %v3155
        %v3695 = vunpack.c.h.b16 %v3155
        %v3696 = vunpack.c.l.b16 %v3156
        %v3697 = vunpack.c.h.b16 %v3156
        %v3698 = vunpack.c.l.b16 %v3157
        %v3699 = vunpack.c.h.b16 %v3157
        %v3700 = vunpack.c.l.b16 %v3158
        %v3701 = vunpack.c.h.b16 %v3158
        %v3702 = vunpack.c.l.b16 %v3159
        %v3703 = vunpack.c.h.b16 %v3159
        %v3704 = vunpack.c.l.b16 %v3160
        %v3705 = vunpack.c.h.b16 %v3160
        %v3706 = vunpack.c.l.b16 %v3161
        %v3707 = vunpack.c.h.b16 %v3161
        %v3708 = vunpack.c.l.b16 %v3162
        %v3709 = vunpack.c.h.b16 %v3162
        %v3710 = vunpack.c.l.b16 %v3163
        %v3711 = vunpack.c.h.b16 %v3163
        %v3712 = vunpack.c.l.b16 %v3164
        %v3713 = vunpack.c.h.b16 %v3164
        %v3714 = vunpack.c.l.b16 %v3165
        %v3715 = vunpack.c.h.b16 %v3165
        %v3716 = vunpack.c.l.b16 %v3166
        %v3717 = vunpack.c.h.b16 %v3166
        %v3718 = vunpack.c.l.b16 %v3167
        %v3719 = vunpack.c.h.b16 %v3167
        %v3720 = vunpack.c.l.b16 %v3168
        %v3721 = vunpack.c.h.b16 %v3168
        %v3722 = vunpack.c.l.b16 %v3169
        %v3723 = vunpack.c.h.b16 %v3169
        %v3724 = vunpack.c.l.b16 %v3170
        %v3725 = vunpack.c.h.b16 %v3170
        %v3726 = vunpack.c.l.b16 %v3171
        %v3727 = vunpack.c.h.b16 %v3171
        %v3728 = vunpack.c.l.b16 %v3172
        %v3729 = vunpack.c.h.b16 %v3172
        %v3730 = vunpack.c.l.b16 %v3173
        %v3731 = vunpack.c.h.b16 %v3173
        %v3732 = vunpack.c.l.b16 %v3174
        %v3733 = vunpack.c.h.b16 %v3174
        %v3734 = vunpack.c.l.b16 %v3175
        %v3735 = vunpack.c.h.b16 %v3175
        %v3736 = vunpack.c.l.b16 %v3176
        %v3737 = vunpack.c.h.b16 %v3176
        %v3738 = vunpack.c.l.b16 %v3177
        %v3739 = vunpack.c.h.b16 %v3177
        %v3740 = vunpack.c.l.b16 %v3178
        %v3741 = vunpack.c.h.b16 %v3178
        %v3742 = vunpack.c.l.b16 %v3179
        %v3743 = vunpack.c.h.b16 %v3179
        %v3744 = vunpack.c.l.b16 %v3180
        %v3745 = vunpack.c.h.b16 %v3180
        %v3746 = vunpack.c.l.b16 %v3181
        %v3747 = vunpack.c.h.b16 %v3181
        %v3748 = vunpack.c.l.b16 %v3182
        %v3749 = vunpack.c.h.b16 %v3182
        %v3750 = vunpack.c.l.b16 %v3183
        %v3751 = vunpack.c.h.b16 %v3183
        %v3752 = vunpack.c.l.b16 %v3184
        %v3753 = vunpack.c.h.b16 %v3184
        %v3754 = vunpack.c.l.b16 %v3185
        %v3755 = vunpack.c.h.b16 %v3185
        %v3756 = vunpack.c.l.b16 %v3186
        %v3757 = vunpack.c.h.b16 %v3186
        %v3758 = vunpack.c.l.b16 %v3187
        %v3759 = vunpack.c.h.b16 %v3187
        %v3760 = vunpack.c.l.b16 %v3188
        %v3761 = vunpack.c.h.b16 %v3188
        %v3762 = vunpack.c.l.b16 %v3189
        %v3763 = vunpack.c.h.b16 %v3189
        %v3764 = vunpack.c.l.b16 %v3190
        %v3765 = vunpack.c.h.b16 %v3190
        %v3766 = vunpack.c.l.b16 %v3191
        %v3767 = vunpack.c.h.b16 %v3191
        %v3768 = vunpack.c.l.b16 %v3192
        %v3769 = vunpack.c.h.b16 %v3192
        %v3770 = vunpack.c.l.b16 %v3193
        %v3771 = vunpack.c.h.b16 %v3193
        %v3772 = vunpack.c.l.b16 %v3194
        %v3773 = vunpack.c.h.b16 %v3194
        %v3774 = vunpack.c.l.b16 %v3195
        %v3775 = vunpack.c.h.b16 %v3195
        %v3776 = vunpack.c.l.b16 %v3196
        %v3777 = vunpack.c.h.b16 %v3196
        %v3778 = vunpack.c.l.b16 %v3197
        %v3779 = vunpack.c.h.b16 %v3197
        %v3780 = vunpack.c.l.b16 %v3198
        %v3781 = vunpack.c.h.b16 %v3198
        %v3782 = vunpack.c.l.b16 %v3199
        %v3783 = vunpack.c.h.b16 %v3199
        %v3784 = vunpack.c.l.b16 %v3200
        %v3785 = vunpack.c.h.b16 %v3200
        %v3786 = vunpack.c.l.b16 %v3201
        %v3787 = vunpack.c.h.b16 %v3201
        %v3788 = vunpack.c.l.b16 %v3202
        %v3789 = vunpack.c.h.b16 %v3202
        %v3790 = vunpack.c.l.b16 %v3203
        %v3791 = vunpack.c.h.b16 %v3203
        %v3792 = vunpack.c.l.b16 %v3204
        %v3793 = vunpack.c.h.b16 %v3204
        %v3794 = vunpack.c.l.b16 %v3205
        %v3795 = vunpack.c.h.b16 %v3205
        %v3796 = vunpack.c.l.b16 %v3206
        %v3797 = vunpack.c.h.b16 %v3206
        %v3798 = vunpack.c.l.b16 %v3207
        %v3799 = vunpack.c.h.b16 %v3207
        %v3800 = vunpack.c.l.b16 %v3208
        %v3801 = vunpack.c.h.b16 %v3208
        %v3802 = vunpack.c.l.b16 %v3209
        %v3803 = vunpack.c.h.b16 %v3209
        %v3804 = vunpack.c.l.b16 %v3210
        %v3805 = vunpack.c.h.b16 %v3210
        %v3806 = vunpack.c.l.b16 %v3211
        %v3807 = vunpack.c.h.b16 %v3211
        %v3808 = vunpack.c.l.b16 %v3212
        %v3809 = vunpack.c.h.b16 %v3212
        %v3810 = vunpack.c.l.b16 %v3213
        %v3811 = vunpack.c.h.b16 %v3213
        %v3812 = vunpack.c.l.b16 %v3214
        %v3813 = vunpack.c.h.b16 %v3214
        %v3814 = vunpack.c.l.b16 %v3215
        %v3815 = vunpack.c.h.b16 %v3215
        %v3816 = vunpack.c.l.b16 %v3216
        %v3817 = vunpack.c.h.b16 %v3216
        %v3818 = vunpack.c.l.b16 %v3217
        %v3819 = vunpack.c.h.b16 %v3217
        %v3820 = vunpack.c.l.b16 %v3218
        %v3821 = vunpack.c.h.b16 %v3218
        %v3822 = vunpack.c.l.b16 %v3219
        %v3823 = vunpack.c.h.b16 %v3219
        %v3824 = vunpack.c.l.b16 %v3220
        %v3825 = vunpack.c.h.b16 %v3220
        %v3826 = vunpack.c.l.b16 %v3221
        %v3827 = vunpack.c.h.b16 %v3221
        %v3828 = vunpack.c.l.b16 %v3222
        %v3829 = vunpack.c.h.b16 %v3222
        %v3830 = vunpack.c.l.b16 %v3223
        %v3831 = vunpack.c.h.b16 %v3223
        %v3832 = vunpack.c.l.b16 %v3224
        %v3833 = vunpack.c.h.b16 %v3224
        %v3834 = vunpack.c.l.b16 %v3225
        %v3835 = vunpack.c.h.b16 %v3225
        %v3836 = vunpack.c.l.b16 %v3226
        %v3837 = vunpack.c.h.b16 %v3226
        %v3838 = vunpack.c.l.b16 %v3227
        %v3839 = vunpack.c.h.b16 %v3227
        %v3840 = vunpack.c.l.b16 %v3228
        %v3841 = vunpack.c.h.b16 %v3228
        %v3842 = vunpack.c.l.b16 %v3229
        %v3843 = vunpack.c.h.b16 %v3229
        %v3844 = vunpack.c.l.b16 %v3230
        %v3845 = vunpack.c.h.b16 %v3230
        %v3846 = vunpack.c.l.b16 %v3231
        %v3847 = vunpack.c.h.b16 %v3231
        %v3848 = vunpack.c.l.b16 %v3232
        %v3849 = vunpack.c.h.b16 %v3232
        %v3850 = vunpack.c.l.b16 %v3233
        %v3851 = vunpack.c.h.b16 %v3233
        %v3852 = vunpack.c.l.b16 %v3234
        %v3853 = vunpack.c.h.b16 %v3234
        %v3854 = vunpack.c.l.b16 %v3235
        %v3855 = vunpack.c.h.b16 %v3235
        %v3856 = vunpack.c.l.b16 %v3236
        %v3857 = vunpack.c.h.b16 %v3236
        %v3858 = vunpack.c.l.b16 %v3237
        %v3859 = vunpack.c.h.b16 %v3237
        %v3860 = vunpack.c.l.b16 %v3238
        %v3861 = vunpack.c.h.b16 %v3238
        %v3862 = vunpack.c.l.b16 %v3239
        %v3863 = vunpack.c.h.b16 %v3239
        %v3864 = vunpack.c.l.b16 %v3240
        %v3865 = vunpack.c.h.b16 %v3240
        %v3866 = vunpack.c.l.b16 %v3241
        %v3867 = vunpack.c.h.b16 %v3241
        %v3868 = vunpack.c.l.b16 %v3242
        %v3869 = vunpack.c.h.b16 %v3242
        %v3870 = vunpack.c.l.b16 %v3243
        %v3871 = vunpack.c.h.b16 %v3243
        %v3872 = vunpack.c.l.b16 %v3244
        %v3873 = vunpack.c.h.b16 %v3244
        %v3874 = vunpack.c.l.b16 %v3245
        %v3875 = vunpack.c.h.b16 %v3245
        %v3876 = vunpack.c.l.b16 %v3246
        %v3877 = vunpack.c.h.b16 %v3246
        %v3878 = vunpack.c.l.b16 %v3247
        %v3879 = vunpack.c.h.b16 %v3247
        %v3880 = vunpack.c.l.b16 %v3248
        %v3881 = vunpack.c.h.b16 %v3248
        %v3882 = vunpack.c.l.b16 %v3249
        %v3883 = vunpack.c.h.b16 %v3249
        %v3884 = vunpack.c.l.b16 %v3250
        %v3885 = vunpack.c.h.b16 %v3250
        %v3886 = vunpack.c.l.b16 %v3251
        %v3887 = vunpack.c.h.b16 %v3251
        %v3888 = vunpack.c.l.b16 %v3252
        %v3889 = vunpack.c.h.b16 %v3252
        %v3890 = vunpack.c.l.b16 %v3253
        %v3891 = vunpack.c.h.b16 %v3253
        %v3892 = vunpack.c.l.b16 %v3254
        %v3893 = vunpack.c.h.b16 %v3254
        %v3894 = vunpack.c.l.b16 %v3255
        %v3895 = vunpack.c.h.b16 %v3255
        %v3896 = vunpack.c.l.b16 %v3256
        %v3897 = vunpack.c.h.b16 %v3256
        %v3898 = vunpack.c.l.b16 %v3257
        %v3899 = vunpack.c.h.b16 %v3257
        %v3900 = vunpack.c.l.b16 %v3258
        %v3901 = vunpack.c.h.b16 %v3258
        %v3902 = vunpack.c.l.b16 %v3259
        %v3903 = vunpack.c.h.b16 %v3259
        %v3904 = vunpack.c.l.b16 %v3260
        %v3905 = vunpack.c.h.b16 %v3260
        %v3906 = vunpack.c.l.b16 %v3261
        %v3907 = vunpack.c.h.b16 %v3261
        %v3908 = vunpack.c.l.b16 %v3262
        %v3909 = vunpack.c.h.b16 %v3262
        %v3910 = vunpack.c.l.b16 %v3263
        %v3911 = vunpack.c.h.b16 %v3263
        %v3912 = vunpack.c.l.b16 %v3264
        %v3913 = vunpack.c.h.b16 %v3264
        %v3914 = vunpack.c.l.b16 %v3265
        %v3915 = vunpack.c.h.b16 %v3265
        %v3916 = vunpack.c.l.b16 %v3266
        %v3917 = vunpack.c.h.b16 %v3266
        %v3918 = vunpack.c.l.b16 %v3267
        %v3919 = vunpack.c.h.b16 %v3267
        %v3920 = vunpack.c.l.b16 %v3268
        %v3921 = vunpack.c.h.b16 %v3268
        %v3922 = vunpack.c.l.b16 %v3269
        %v3923 = vunpack.c.h.b16 %v3269
        %v3924 = vunpack.c.l.b16 %v3270
        %v3925 = vunpack.c.h.b16 %v3270
        %v3926 = vunpack.c.l.b16 %v3271
        %v3927 = vunpack.c.h.b16 %v3271
        %v3928 = vunpack.c.l.b16 %v3272
        %v3929 = vunpack.c.h.b16 %v3272
        %v3930 = vunpack.c.l.b16 %v3273
        %v3931 = vunpack.c.h.b16 %v3273
        %v3932 = vunpack.c.l.b16 %v3274
        %v3933 = vunpack.c.h.b16 %v3274
        %v3934 = vunpack.c.l.b16 %v3275
        %v3935 = vunpack.c.h.b16 %v3275
        %v3936 = vunpack.c.l.b16 %v3276
        %v3937 = vunpack.c.h.b16 %v3276
        %v3938 = vunpack.c.l.b16 %v3277
        %v3939 = vunpack.c.h.b16 %v3277
        %v3940 = vunpack.c.l.b16 %v3278
        %v3941 = vunpack.c.h.b16 %v3278
        %v3942 = vunpack.c.l.b16 %v3279
        %v3943 = vunpack.c.h.b16 %v3279
        %v3944 = vunpack.c.l.b16 %v3280
        %v3945 = vunpack.c.h.b16 %v3280
        %v3946 = vunpack.c.l.b16 %v3281
        %v3947 = vunpack.c.h.b16 %v3281
        %v3948 = vunpack.c.l.b16 %v3282
        %v3949 = vunpack.c.h.b16 %v3282
        %v3950 = vunpack.c.l.b16 %v3283
        %v3951 = vunpack.c.h.b16 %v3283
        %v3952 = vunpack.c.l.b16 %v3284
        %v3953 = vunpack.c.h.b16 %v3284
        %v3954 = vunpack.c.l.b16 %v3285
        %v3955 = vunpack.c.h.b16 %v3285
        %v3956 = vunpack.c.l.b16 %v3286
        %v3957 = vunpack.c.h.b16 %v3286
        %v3958 = vunpack.c.l.b16 %v3287
        %v3959 = vunpack.c.h.b16 %v3287
        %v3960 = vpack.c.b16 %v3516, %v3512
        %v3961 = vpack.c.b16 %v3517, %v3513
        %v3962 = vpack.c.b16 %v3518, %v3514
        %v3963 = vpack.c.b16 %v3519, %v3515
        %v3964 = vpack.c.b16 %v3524, %v3520
        %v3965 = vpack.c.b16 %v3525, %v3521
        %v3966 = vpack.c.b16 %v3526, %v3522
        %v3967 = vpack.c.b16 %v3527, %v3523
        %v3968 = vpack.c.b16 %v3532, %v3528
        %v3969 = vpack.c.b16 %v3533, %v3529
        %v3970 = vpack.c.b16 %v3534, %v3530
        %v3971 = vpack.c.b16 %v3535, %v3531
        %v3972 = vpack.c.b16 %v3540, %v3536
        %v3973 = vpack.c.b16 %v3541, %v3537
        %v3974 = vpack.c.b16 %v3542, %v3538
        %v3975 = vpack.c.b16 %v3543, %v3539
        %v3976 = vpack.c.b16 %v3548, %v3544
        %v3977 = vpack.c.b16 %v3549, %v3545
        %v3978 = vpack.c.b16 %v3550, %v3546
        %v3979 = vpack.c.b16 %v3551, %v3547
        %v3980 = vpack.c.b16 %v3556, %v3552
        %v3981 = vpack.c.b16 %v3557, %v3553
        %v3982 = vpack.c.b16 %v3558, %v3554
        %v3983 = vpack.c.b16 %v3559, %v3555
        %v3984 = vpack.c.b16 %v3564, %v3560
        %v3985 = vpack.c.b16 %v3565, %v3561
        %v3986 = vpack.c.b16 %v3566, %v3562
        %v3987 = vpack.c.b16 %v3567, %v3563
        %v3988 = vpack.c.b16 %v3572, %v3568
        %v3989 = vpack.c.b16 %v3573, %v3569
        %v3990 = vpack.c.b16 %v3574, %v3570
        %v3991 = vpack.c.b16 %v3575, %v3571
        %v3992 = vpack.c.b16 %v3580, %v3576
        %v3993 = vpack.c.b16 %v3581, %v3577
        %v3994 = vpack.c.b16 %v3582, %v3578
        %v3995 = vpack.c.b16 %v3583, %v3579
        %v3996 = vpack.c.b16 %v3588, %v3584
        %v3997 = vpack.c.b16 %v3589, %v3585
        %v3998 = vpack.c.b16 %v3590, %v3586
        %v3999 = vpack.c.b16 %v3591, %v3587
        %v4000 = vpack.c.b16 %v3596, %v3592
        %v4001 = vpack.c.b16 %v3597, %v3593
        %v4002 = vpack.c.b16 %v3598, %v3594
        %v4003 = vpack.c.b16 %v3599, %v3595
        %v4004 = vpack.c.b16 %v3604, %v3600
        %v4005 = vpack.c.b16 %v3605, %v3601
        %v4006 = vpack.c.b16 %v3606, %v3602
        %v4007 = vpack.c.b16 %v3607, %v3603
        %v4008 = vpack.c.b16 %v3612, %v3608
        %v4009 = vpack.c.b16 %v3613, %v3609
        %v4010 = vpack.c.b16 %v3614, %v3610
        %v4011 = vpack.c.b16 %v3615, %v3611
        %v4012 = vpack.c.b16 %v3620, %v3616
        %v4013 = vpack.c.b16 %v3621, %v3617
        %v4014 = vpack.c.b16 %v3622, %v3618
        %v4015 = vpack.c.b16 %v3623, %v3619
        %v4016 = vpack.c.b16 %v3628, %v3624
        %v4017 = vpack.c.b16 %v3629, %v3625
        %v4018 = vpack.c.b16 %v3630, %v3626
        %v4019 = vpack.c.b16 %v3631, %v3627
        %v4020 = vpack.c.b16 %v3636, %v3632
        %v4021 = vpack.c.b16 %v3637, %v3633
        %v4022 = vpack.c.b16 %v3638, %v3634
        %v4023 = vpack.c.b16 %v3639, %v3635
        %v4024 = vpack.c.b16 %v3644, %v3640
        %v4025 = vpack.c.b16 %v3645, %v3641
        %v4026 = vpack.c.b16 %v3646, %v3642
        %v4027 = vpack.c.b16 %v3647, %v3643
        %v4028 = vpack.c.b16 %v3652, %v3648
        %v4029 = vpack.c.b16 %v3653, %v3649
        %v4030 = vpack.c.b16 %v3654, %v3650
        %v4031 = vpack.c.b16 %v3655, %v3651
        %v4032 = vpack.c.b16 %v3660, %v3656
        %v4033 = vpack.c.b16 %v3661, %v3657
        %v4034 = vpack.c.b16 %v3662, %v3658
        %v4035 = vpack.c.b16 %v3663, %v3659
        %v4036 = vpack.c.b16 %v3668, %v3664
        %v4037 = vpack.c.b16 %v3669, %v3665
        %v4038 = vpack.c.b16 %v3670, %v3666
        %v4039 = vpack.c.b16 %v3671, %v3667
        %v4040 = vpack.c.b16 %v3676, %v3672
        %v4041 = vpack.c.b16 %v3677, %v3673
        %v4042 = vpack.c.b16 %v3678, %v3674
        %v4043 = vpack.c.b16 %v3679, %v3675
        %v4044 = vpack.c.b16 %v3684, %v3680
        %v4045 = vpack.c.b16 %v3685, %v3681
        %v4046 = vpack.c.b16 %v3686, %v3682
        %v4047 = vpack.c.b16 %v3687, %v3683
        %v4048 = vpack.c.b16 %v3692, %v3688
        %v4049 = vpack.c.b16 %v3693, %v3689
        %v4050 = vpack.c.b16 %v3694, %v3690
        %v4051 = vpack.c.b16 %v3695, %v3691
        %v4052 = vpack.c.b16 %v3700, %v3696
        %v4053 = vpack.c.b16 %v3701, %v3697
        %v4054 = vpack.c.b16 %v3702, %v3698
        %v4055 = vpack.c.b16 %v3703, %v3699
        %v4056 = vpack.c.b16 %v3708, %v3704
        %v4057 = vpack.c.b16 %v3709, %v3705
        %v4058 = vpack.c.b16 %v3710, %v3706
        %v4059 = vpack.c.b16 %v3711, %v3707
        %v4060 = vpack.c.b16 %v3716, %v3712
        %v4061 = vpack.c.b16 %v3717, %v3713
        %v4062 = vpack.c.b16 %v3718, %v3714
        %v4063 = vpack.c.b16 %v3719, %v3715
        %v4064 = vpack.c.b16 %v3724, %v3720
        %v4065 = vpack.c.b16 %v3725, %v3721
        %v4066 = vpack.c.b16 %v3726, %v3722
        %v4067 = vpack.c.b16 %v3727, %v3723
        %v4068 = vpack.c.b16 %v3732, %v3728
        %v4069 = vpack.c.b16 %v3733, %v3729
        %v4070 = vpack.c.b16 %v3734, %v3730
        %v4071 = vpack.c.b16 %v3735, %v3731
        %v4072 = vpack.c.b16 %v3740, %v3736
        %v4073 = vpack.c.b16 %v3741, %v3737
        %v4074 = vpack.c.b16 %v3742, %v3738
        %v4075 = vpack.c.b16 %v3743, %v3739
        %v4076 = vpack.c.b16 %v3748, %v3744
        %v4077 = vpack.c.b16 %v3749, %v3745
        %v4078 = vpack.c.b16 %v3750, %v3746
        %v4079 = vpack.c.b16 %v3751, %v3747
        %v4080 = vpack.c.b16 %v3756, %v3752
        %v4081 = vpack.c.b16 %v3757, %v3753
        %v4082 = vpack.c.b16 %v3758, %v3754
        %v4083 = vpack.c.b16 %v3759, %v3755
        %v4084 = vpack.c.b16 %v3764, %v3760
        %v4085 = vpack.c.b16 %v3765, %v3761
        %v4086 = vpack.c.b16 %v3766, %v3762
        %v4087 = vpack.c.b16 %v3767, %v3763
        %v4088 = vpack.c.b16 %v3772, %v3768
        %v4089 = vpack.c.b16 %v3773, %v3769
        %v4090 = vpack.c.b16 %v3774, %v3770
        %v4091 = vpack.c.b16 %v3775, %v3771
        %v4092 = vpack.c.b16 %v3780, %v3776
        %v4093 = vpack.c.b16 %v3781, %v3777
        %v4094 = vpack.c.b16 %v3782, %v3778
        %v4095 = vpack.c.b16 %v3783, %v3779
        %v4096 = vpack.c.b16 %v3788, %v3784
        %v4097 = vpack.c.b16 %v3789, %v3785
        %v4098 = vpack.c.b16 %v3790, %v3786
        %v4099 = vpack.c.b16 %v3791, %v3787
        %v4100 = vpack.c.b16 %v3796, %v3792
        %v4101 = vpack.c.b16 %v3797, %v3793
        %v4102 = vpack.c.b16 %v3798, %v3794
        %v4103 = vpack.c.b16 %v3799, %v3795
        %v4104 = vpack.c.b16 %v3804, %v3800
        %v4105 = vpack.c.b16 %v3805, %v3801
        %v4106 = vpack.c.b16 %v3806, %v3802
        %v4107 = vpack.c.b16 %v3807, %v3803
        %v4108 = vpack.c.b16 %v3812, %v3808
        %v4109 = vpack.c.b16 %v3813, %v3809
        %v4110 = vpack.c.b16 %v3814, %v3810
        %v4111 = vpack.c.b16 %v3815, %v3811
        %v4112 = vpack.c.b16 %v3820, %v3816
        %v4113 = vpack.c.b16 %v3821, %v3817
        %v4114 = vpack.c.b16 %v3822, %v3818
        %v4115 = vpack.c.b16 %v3823, %v3819
        %v4116 = vpack.c.b16 %v3828, %v3824
        %v4117 = vpack.c.b16 %v3829, %v3825
        %v4118 = vpack.c.b16 %v3830, %v3826
        %v4119 = vpack.c.b16 %v3831, %v3827
        %v4120 = vpack.c.b16 %v3836, %v3832
        %v4121 = vpack.c.b16 %v3837, %v3833
        %v4122 = vpack.c.b16 %v3838, %v3834
        %v4123 = vpack.c.b16 %v3839, %v3835
        %v4124 = vpack.c.b16 %v3844, %v3840
        %v4125 = vpack.c.b16 %v3845, %v3841
        %v4126 = vpack.c.b16 %v3846, %v3842
        %v4127 = vpack.c.b16 %v3847, %v3843
        %v4128 = vpack.c.b16 %v3852, %v3848
        %v4129 = vpack.c.b16 %v3853, %v3849
        %v4130 = vpack.c.b16 %v3854, %v3850
        %v4131 = vpack.c.b16 %v3855, %v3851
        %v4132 = vpack.c.b16 %v3860, %v3856
        %v4133 = vpack.c.b16 %v3861, %v3857
        %v4134 = vpack.c.b16 %v3862, %v3858
        %v4135 = vpack.c.b16 %v3863, %v3859
        %v4136 = vpack.c.b16 %v3868, %v3864
        %v4137 = vpack.c.b16 %v3869, %v3865
        %v4138 = vpack.c.b16 %v3870, %v3866
        %v4139 = vpack.c.b16 %v3871, %v3867
        %v4140 = vpack.c.b16 %v3876, %v3872
        %v4141 = vpack.c.b16 %v3877, %v3873
        %v4142 = vpack.c.b16 %v3878, %v3874
        %v4143 = vpack.c.b16 %v3879, %v3875
        %v4144 = vpack.c.b16 %v3884, %v3880
        %v4145 = vpack.c.b16 %v3885, %v3881
        %v4146 = vpack.c.b16 %v3886, %v3882
        %v4147 = vpack.c.b16 %v3887, %v3883
        %v4148 = vpack.c.b16 %v3892, %v3888
        %v4149 = vpack.c.b16 %v3893, %v3889
        %v4150 = vpack.c.b16 %v3894, %v3890
        %v4151 = vpack.c.b16 %v3895, %v3891
        %v4152 = vpack.c.b16 %v3900, %v3896
        %v4153 = vpack.c.b16 %v3901, %v3897
        %v4154 = vpack.c.b16 %v3902, %v3898
        %v4155 = vpack.c.b16 %v3903, %v3899
        %v4156 = vpack.c.b16 %v3908, %v3904
        %v4157 = vpack.c.b16 %v3909, %v3905
        %v4158 = vpack.c.b16 %v3910, %v3906
        %v4159 = vpack.c.b16 %v3911, %v3907
        %v4160 = vpack.c.b16 %v3916, %v3912
        %v4161 = vpack.c.b16 %v3917, %v3913
        %v4162 = vpack.c.b16 %v3918, %v3914
        %v4163 = vpack.c.b16 %v3919, %v3915
        %v4164 = vpack.c.b16 %v3924, %v3920
        %v4165 = vpack.c.b16 %v3925, %v3921
        %v4166 = vpack.c.b16 %v3926, %v3922
        %v4167 = vpack.c.b16 %v3927, %v3923
        %v4168 = vpack.c.b16 %v3932, %v3928
        %v4169 = vpack.c.b16 %v3933, %v3929
        %v4170 = vpack.c.b16 %v3934, %v3930
        %v4171 = vpack.c.b16 %v3935, %v3931
        %v4172 = vpack.c.b16 %v3940, %v3936
        %v4173 = vpack.c.b16 %v3941, %v3937
        %v4174 = vpack.c.b16 %v3942, %v3938
        %v4175 = vpack.c.b16 %v3943, %v3939
        %v4176 = vpack.c.b16 %v3948, %v3944
        %v4177 = vpack.c.b16 %v3949, %v3945
        %v4178 = vpack.c.b16 %v3950, %v3946
        %v4179 = vpack.c.b16 %v3951, %v3947
        %v4180 = vpack.c.b16 %v3956, %v3952
        %v4181 = vpack.c.b16 %v3957, %v3953
        %v4182 = vpack.c.b16 %v3958, %v3954
        %v4183 = vpack.c.b16 %v3959, %v3955
        %4408 = vmatprep.subr.bf16.mxu0 %v3961
        %4409 = vmatpush1.bf16.msra.mxu0 %v3960
        %4410 = vmatprep.subr.bf16.mxu0 %v3965
        %4411 = vmatpush1.bf16.msra.mxu0 %v3964
        %4412 = vmatprep.subr.bf16.mxu0 %v3969
        %4413 = vmatpush1.bf16.msra.mxu0 %v3968
        %4414 = vmatprep.subr.bf16.mxu0 %v3973
        %4415 = vmatpush1.bf16.msra.mxu0 %v3972
        %4416 = vmatprep.subr.bf16.mxu0 %v3977
        %4417 = vmatpush1.bf16.msra.mxu0 %v3976
        %4418 = vmatprep.subr.bf16.mxu0 %v3981
        %4419 = vmatpush1.bf16.msra.mxu0 %v3980
        %4420 = vmatprep.subr.bf16.mxu0 %v3985
        %4421 = vmatpush1.bf16.msra.mxu0 %v3984
        %4422 = vmatprep.subr.bf16.mxu0 %v3989
        %4423 = vmatpush1.bf16.msra.mxu0 %v3988
        %4424 = vmatprep.subr.bf16.mxu0 %v3993
        %4425 = vmatpush1.bf16.msra.mxu0 %v3992
        %4426 = vmatprep.subr.bf16.mxu0 %v3997
        %4427 = vmatpush1.bf16.msra.mxu0 %v3996
        %4428 = vmatprep.subr.bf16.mxu0 %v4001
        %4429 = vmatpush1.bf16.msra.mxu0 %v4000
        %4430 = vmatprep.subr.bf16.mxu0 %v4005
        %4431 = vmatpush1.bf16.msra.mxu0 %v4004
        %4432 = vmatprep.subr.bf16.mxu0 %v4009
        %4433 = vmatpush1.bf16.msra.mxu0 %v4008
        %4434 = vmatprep.subr.bf16.mxu0 %v4013
        %4435 = vmatpush1.bf16.msra.mxu0 %v4012
        %4436 = vmatprep.subr.bf16.mxu0 %v4017
        %4437 = vmatpush1.bf16.msra.mxu0 %v4016
        %4438 = vmatprep.subr.bf16.mxu0 %v4021
        %4439 = vmatpush1.bf16.msra.mxu0 %v4020
        %4440 = vmatprep.mubr.bf16.mxu0 %v3058
        %4441 = vmatmul.mubr.bf16.gmra.mrb[0].mxu0 %v3057
        %v4442 = vpop.f32.mrb[0].mxu0
        %v4443 = vadd.f32 0.0, %v4442
        %v4444 = vpop.f32.mrb[0].mxu0
        %v4445 = vadd.f32 0.0, %v4444
        %v4446 = vpop.f32.mrb[0].mxu0
        %v4447 = vpop.f32.mrb[0].mxu0
        %4448 = vdwg.mxu0
        %4449 = vmatprep.subr.bf16.mxu0 %v4025
        %4450 = vmatpush1.bf16.msra.mxu0 %v4024
        %4451 = vmatprep.subr.bf16.mxu0 %v4029
        %4452 = vmatpush1.bf16.msra.mxu0 %v4028
        %4453 = vmatprep.subr.bf16.mxu0 %v4033
        %4454 = vmatpush1.bf16.msra.mxu0 %v4032
        %4455 = vmatprep.subr.bf16.mxu0 %v4037
        %4456 = vmatpush1.bf16.msra.mxu0 %v4036
        %4457 = vmatprep.subr.bf16.mxu0 %v4041
        %4458 = vmatpush1.bf16.msra.mxu0 %v4040
        %4459 = vmatprep.subr.bf16.mxu0 %v4045
        %4460 = vmatpush1.bf16.msra.mxu0 %v4044
        %4461 = vmatprep.subr.bf16.mxu0 %v4049
        %4462 = vmatpush1.bf16.msra.mxu0 %v4048
        %4463 = vmatprep.subr.bf16.mxu0 %v4053
        %4464 = vmatpush1.bf16.msra.mxu0 %v4052
        %4465 = vmatprep.subr.bf16.mxu0 %v4057
        %4466 = vmatpush1.bf16.msra.mxu0 %v4056
        %4467 = vmatprep.subr.bf16.mxu0 %v4061
        %4468 = vmatpush1.bf16.msra.mxu0 %v4060
        %4469 = vmatprep.subr.bf16.mxu0 %v4065
        %4470 = vmatpush1.bf16.msra.mxu0 %v4064
        %4471 = vmatprep.subr.bf16.mxu0 %v4069
        %4472 = vmatpush1.bf16.msra.mxu0 %v4068
        %4473 = vmatprep.subr.bf16.mxu0 %v4073
        %4474 = vmatpush1.bf16.msra.mxu0 %v4072
        %4475 = vmatprep.subr.bf16.mxu0 %v4077
        %4476 = vmatpush1.bf16.msra.mxu0 %v4076
        %4477 = vmatprep.subr.bf16.mxu0 %v4081
        %4478 = vmatpush1.bf16.msra.mxu0 %v4080
        %4479 = vmatprep.subr.bf16.mxu0 %v4085
        %4480 = vmatpush1.bf16.msra.mxu0 %v4084
        %4481 = vmatprep.mubr.bf16.mxu0 %v3060
        %4482 = vmatmul.mubr.bf16.gmra.mrb[0].mxu0 %v3059
        %v4483 = vpop.f32.mrb[0].mxu0
        %v4484 = vadd.f32 %v4443, %v4483
        %v4485 = vpop.f32.mrb[0].mxu0
        %v4486 = vadd.f32 %v4445, %v4485
        %v4487 = vpop.f32.mrb[0].mxu0
        %v4488 = vpop.f32.mrb[0].mxu0
        %4489 = vdwg.mxu0
        %4490 = vmatprep.subr.bf16.mxu0 %v4089
        %4491 = vmatpush1.bf16.msra.mxu0 %v4088
        %4492 = vmatprep.subr.bf16.mxu0 %v4093
        %4493 = vmatpush1.bf16.msra.mxu0 %v4092
        %4494 = vmatprep.subr.bf16.mxu0 %v4097
        %4495 = vmatpush1.bf16.msra.mxu0 %v4096
        %4496 = vmatprep.subr.bf16.mxu0 %v4101
        %4497 = vmatpush1.bf16.msra.mxu0 %v4100
        %4498 = vmatprep.subr.bf16.mxu0 %v4105
        %4499 = vmatpush1.bf16.msra.mxu0 %v4104
        %4500 = vmatprep.subr.bf16.mxu0 %v4109
        %4501 = vmatpush1.bf16.msra.mxu0 %v4108
        %4502 = vmatprep.subr.bf16.mxu0 %v4113
        %4503 = vmatpush1.bf16.msra.mxu0 %v4112
        %4504 = vmatprep.subr.bf16.mxu0 %v4117
        %4505 = vmatpush1.bf16.msra.mxu0 %v4116
        %4506 = vmatprep.subr.bf16.mxu0 %v4121
        %4507 = vmatpush1.bf16.msra.mxu0 %v4120
        %4508 = vmatprep.subr.bf16.mxu0 %v4125
        %4509 = vmatpush1.bf16.msra.mxu0 %v4124
        %4510 = vmatprep.subr.bf16.mxu0 %v4129
        %4511 = vmatpush1.bf16.msra.mxu0 %v4128
        %4512 = vmatprep.subr.bf16.mxu0 %v4133
        %4513 = vmatpush1.bf16.msra.mxu0 %v4132
        %4514 = vmatprep.subr.bf16.mxu0 %v4137
        %4515 = vmatpush1.bf16.msra.mxu0 %v4136
        %4516 = vmatprep.subr.bf16.mxu0 %v4141
        %4517 = vmatpush1.bf16.msra.mxu0 %v4140
        %4518 = vmatprep.subr.bf16.mxu0 %v4145
        %4519 = vmatpush1.bf16.msra.mxu0 %v4144
        %4520 = vmatprep.subr.bf16.mxu0 %v4149
        %4521 = vmatpush1.bf16.msra.mxu0 %v4148
        %4522 = vmatprep.mubr.bf16.mxu0 %v3062
        %4523 = vmatmul.mubr.bf16.gmra.mrb[0].mxu0 %v3061
        %v4524 = vpop.f32.mrb[0].mxu0
        %v4525 = vadd.f32 %v4484, %v4524
        %v4526 = vpop.f32.mrb[0].mxu0
        %v4527 = vadd.f32 %v4486, %v4526
        %v4528 = vpop.f32.mrb[0].mxu0
        %v4529 = vpop.f32.mrb[0].mxu0
        %4530 = vdwg.mxu0
        %4531 = vmatprep.subr.bf16.mxu0 %v4153
        %4532 = vmatpush1.bf16.msra.mxu0 %v4152
        %4533 = vmatprep.subr.bf16.mxu0 %v4157
        %4534 = vmatpush1.bf16.msra.mxu0 %v4156
        %4535 = vmatprep.subr.bf16.mxu0 %v4161
        %4536 = vmatpush1.bf16.msra.mxu0 %v4160
        %4537 = vmatprep.subr.bf16.mxu0 %v4165
        %4538 = vmatpush1.bf16.msra.mxu0 %v4164
        %4539 = vmatprep.subr.bf16.mxu0 %v4169
        %4540 = vmatpush1.bf16.msra.mxu0 %v4168
        %4541 = vmatprep.subr.bf16.mxu0 %v4173
        %4542 = vmatpush1.bf16.msra.mxu0 %v4172
        %4543 = vmatprep.subr.bf16.mxu0 %v4177
        %4544 = vmatpush1.bf16.msra.mxu0 %v4176
        %4545 = vmatprep.subr.bf16.mxu0 %v4181
        %4546 = vmatpush1.bf16.msra.mxu0 %v4180
        %4547 = vmatprep.subr.bf16.mxu0 0
        %4548 = vmatpush1.bf16.msra.mxu0 0
        %4549 = vmatprep.subr.bf16.mxu0 0
        %4550 = vmatpush1.bf16.msra.mxu0 0
        %4551 = vmatprep.subr.bf16.mxu0 0
        %4552 = vmatpush1.bf16.msra.mxu0 0
        %4553 = vmatprep.subr.bf16.mxu0 0
        %4554 = vmatpush1.bf16.msra.mxu0 0
        %4555 = vmatprep.subr.bf16.mxu0 0
        %4556 = vmatpush1.bf16.msra.mxu0 0
        %4557 = vmatprep.subr.bf16.mxu0 0
        %4558 = vmatpush1.bf16.msra.mxu0 0
        %4559 = vmatprep.subr.bf16.mxu0 0
        %4560 = vmatpush1.bf16.msra.mxu0 0
        %4561 = vmatprep.subr.bf16.mxu0 0
        %4562 = vmatpush1.bf16.msra.mxu0 0
        %4563 = vmatprep.mubr.bf16.mxu0 0
        %4564 = vmatmul.mubr.bf16.gmra.mrb[0].mxu0 %v3063
        %v4565 = vpop.f32.mrb[0].mxu0
        %v4566 = vadd.f32 %v4525, %v4565
        %v4567 = vpop.f32.mrb[0].mxu0
        %v4568 = vadd.f32 %v4527, %v4567
        %v4569 = vpop.f32.mrb[0].mxu0
        %v4570 = vpop.f32.mrb[0].mxu0
        %4571 = vdwg.mxu0
        %4572 = vmatprep.subr.bf16.mxu0 %v3963
        %4573 = vmatpush1.bf16.msra.mxu0 %v3962
        %4574 = vmatprep.subr.bf16.mxu0 %v3967
        %4575 = vmatpush1.bf16.msra.mxu0 %v3966
        %4576 = vmatprep.subr.bf16.mxu0 %v3971
        %4577 = vmatpush1.bf16.msra.mxu0 %v3970
        %4578 = vmatprep.subr.bf16.mxu0 %v3975
        %4579 = vmatpush1.bf16.msra.mxu0 %v3974
        %4580 = vmatprep.subr.bf16.mxu0 %v3979
        %4581 = vmatpush1.bf16.msra.mxu0 %v3978
        %4582 = vmatprep.subr.bf16.mxu0 %v3983
        %4583 = vmatpush1.bf16.msra.mxu0 %v3982
        %4584 = vmatprep.subr.bf16.mxu0 %v3987
        %4585 = vmatpush1.bf16.msra.mxu0 %v3986
        %4586 = vmatprep.subr.bf16.mxu0 %v3991
        %4587 = vmatpush1.bf16.msra.mxu0 %v3990
        %4588 = vmatprep.subr.bf16.mxu0 %v3995
        %4589 = vmatpush1.bf16.msra.mxu0 %v3994
        %4590 = vmatprep.subr.bf16.mxu0 %v3999
        %4591 = vmatpush1.bf16.msra.mxu0 %v3998
        %4592 = vmatprep.subr.bf16.mxu0 %v4003
        %4593 = vmatpush1.bf16.msra.mxu0 %v4002
        %4594 = vmatprep.subr.bf16.mxu0 %v4007
        %4595 = vmatpush1.bf16.msra.mxu0 %v4006
        %4596 = vmatprep.subr.bf16.mxu0 %v4011
        %4597 = vmatpush1.bf16.msra.mxu0 %v4010
        %4598 = vmatprep.subr.bf16.mxu0 %v4015
        %4599 = vmatpush1.bf16.msra.mxu0 %v4014
        %4600 = vmatprep.subr.bf16.mxu0 %v4019
        %4601 = vmatpush1.bf16.msra.mxu0 %v4018
        %4602 = vmatprep.subr.bf16.mxu0 %v4023
        %4603 = vmatpush1.bf16.msra.mxu0 %v4022
        %4604 = vmatprep.mubr.bf16.mxu0 %v3058
        %4605 = vmatmul.mubr.bf16.gmra.mrb[0].mxu0 %v3057
        %v4606 = vpop.f32.mrb[0].mxu0
        %v4607 = vadd.f32 0.0, %v4606
        %v4608 = vpop.f32.mrb[0].mxu0
        %v4609 = vadd.f32 0.0, %v4608
        %v4610 = vpop.f32.mrb[0].mxu0
        %v4611 = vpop.f32.mrb[0].mxu0
        %4612 = vdwg.mxu0
        %4613 = vmatprep.subr.bf16.mxu0 %v4027
        %4614 = vmatpush1.bf16.msra.mxu0 %v4026
        %4615 = vmatprep.subr.bf16.mxu0 %v4031
        %4616 = vmatpush1.bf16.msra.mxu0 %v4030
        %4617 = vmatprep.subr.bf16.mxu0 %v4035
        %4618 = vmatpush1.bf16.msra.mxu0 %v4034
        %4619 = vmatprep.subr.bf16.mxu0 %v4039
        %4620 = vmatpush1.bf16.msra.mxu0 %v4038
        %4621 = vmatprep.subr.bf16.mxu0 %v4043
        %4622 = vmatpush1.bf16.msra.mxu0 %v4042
        %4623 = vmatprep.subr.bf16.mxu0 %v4047
        %4624 = vmatpush1.bf16.msra.mxu0 %v4046
        %4625 = vmatprep.subr.bf16.mxu0 %v4051
        %4626 = vmatpush1.bf16.msra.mxu0 %v4050
        %4627 = vmatprep.subr.bf16.mxu0 %v4055
        %4628 = vmatpush1.bf16.msra.mxu0 %v4054
        %4629 = vmatprep.subr.bf16.mxu0 %v4059
        %4630 = vmatpush1.bf16.msra.mxu0 %v4058
        %4631 = vmatprep.subr.bf16.mxu0 %v4063
        %4632 = vmatpush1.bf16.msra.mxu0 %v4062
        %4633 = vmatprep.subr.bf16.mxu0 %v4067
        %4634 = vmatpush1.bf16.msra.mxu0 %v4066
        %4635 = vmatprep.subr.bf16.mxu0 %v4071
        %4636 = vmatpush1.bf16.msra.mxu0 %v4070
        %4637 = vmatprep.subr.bf16.mxu0 %v4075
        %4638 = vmatpush1.bf16.msra.mxu0 %v4074
        %4639 = vmatprep.subr.bf16.mxu0 %v4079
        %4640 = vmatpush1.bf16.msra.mxu0 %v4078
        %4641 = vmatprep.subr.bf16.mxu0 %v4083
        %4642 = vmatpush1.bf16.msra.mxu0 %v4082
        %4643 = vmatprep.subr.bf16.mxu0 %v4087
        %4644 = vmatpush1.bf16.msra.mxu0 %v4086
        %4645 = vmatprep.mubr.bf16.mxu0 %v3060
        %4646 = vmatmul.mubr.bf16.gmra.mrb[0].mxu0 %v3059
        %v4647 = vpop.f32.mrb[0].mxu0
        %v4648 = vadd.f32 %v4607, %v4647
        %v4649 = vpop.f32.mrb[0].mxu0
        %v4650 = vadd.f32 %v4609, %v4649
        %v4651 = vpop.f32.mrb[0].mxu0
        %v4652 = vpop.f32.mrb[0].mxu0
        %4653 = vdwg.mxu0
        %4654 = vmatprep.subr.bf16.mxu0 %v4091
        %4655 = vmatpush1.bf16.msra.mxu0 %v4090
        %4656 = vmatprep.subr.bf16.mxu0 %v4095
        %4657 = vmatpush1.bf16.msra.mxu0 %v4094
        %4658 = vmatprep.subr.bf16.mxu0 %v4099
        %4659 = vmatpush1.bf16.msra.mxu0 %v4098
        %4660 = vmatprep.subr.bf16.mxu0 %v4103
        %4661 = vmatpush1.bf16.msra.mxu0 %v4102
        %4662 = vmatprep.subr.bf16.mxu0 %v4107
        %4663 = vmatpush1.bf16.msra.mxu0 %v4106
        %4664 = vmatprep.subr.bf16.mxu0 %v4111
        %4665 = vmatpush1.bf16.msra.mxu0 %v4110
        %4666 = vmatprep.subr.bf16.mxu0 %v4115
        %4667 = vmatpush1.bf16.msra.mxu0 %v4114
        %4668 = vmatprep.subr.bf16.mxu0 %v4119
        %4669 = vmatpush1.bf16.msra.mxu0 %v4118
        %4670 = vmatprep.subr.bf16.mxu0 %v4123
        %4671 = vmatpush1.bf16.msra.mxu0 %v4122
        %4672 = vmatprep.subr.bf16.mxu0 %v4127
        %4673 = vmatpush1.bf16.msra.mxu0 %v4126
        %4674 = vmatprep.subr.bf16.mxu0 %v4131
        %4675 = vmatpush1.bf16.msra.mxu0 %v4130
        %4676 = vmatprep.subr.bf16.mxu0 %v4135
        %4677 = vmatpush1.bf16.msra.mxu0 %v4134
        %4678 = vmatprep.subr.bf16.mxu0 %v4139
        %4679 = vmatpush1.bf16.msra.mxu0 %v4138
        %4680 = vmatprep.subr.bf16.mxu0 %v4143
        %4681 = vmatpush1.bf16.msra.mxu0 %v4142
        %4682 = vmatprep.subr.bf16.mxu0 %v4147
        %4683 = vmatpush1.bf16.msra.mxu0 %v4146
        %4684 = vmatprep.subr.bf16.mxu0 %v4151
        %4685 = vmatpush1.bf16.msra.mxu0 %v4150
        %4686 = vmatprep.mubr.bf16.mxu0 %v3062
        %4687 = vmatmul.mubr.bf16.gmra.mrb[0].mxu0 %v3061
        %v4688 = vpop.f32.mrb[0].mxu0
        %v4689 = vadd.f32 %v4648, %v4688
        %v4690 = vpop.f32.mrb[0].mxu0
        %v4691 = vadd.f32 %v4650, %v4690
        %v4692 = vpop.f32.mrb[0].mxu0
        %v4693 = vpop.f32.mrb[0].mxu0
        %4694 = vdwg.mxu0
        %4695 = vmatprep.subr.bf16.mxu0 %v4155
        %4696 = vmatpush1.bf16.msra.mxu0 %v4154
        %4697 = vmatprep.subr.bf16.mxu0 %v4159
        %4698 = vmatpush1.bf16.msra.mxu0 %v4158
        %4699 = vmatprep.subr.bf16.mxu0 %v4163
        %4700 = vmatpush1.bf16.msra.mxu0 %v4162
        %4701 = vmatprep.subr.bf16.mxu0 %v4167
        %4702 = vmatpush1.bf16.msra.mxu0 %v4166
        %4703 = vmatprep.subr.bf16.mxu0 %v4171
        %4704 = vmatpush1.bf16.msra.mxu0 %v4170
        %4705 = vmatprep.subr.bf16.mxu0 %v4175
        %4706 = vmatpush1.bf16.msra.mxu0 %v4174
        %4707 = vmatprep.subr.bf16.mxu0 %v4179
        %4708 = vmatpush1.bf16.msra.mxu0 %v4178
        %4709 = vmatprep.subr.bf16.mxu0 %v4183
        %4710 = vmatpush1.bf16.msra.mxu0 %v4182
        %4711 = vmatprep.subr.bf16.mxu0 0
        %4712 = vmatpush1.bf16.msra.mxu0 0
        %4713 = vmatprep.subr.bf16.mxu0 0
        %4714 = vmatpush1.bf16.msra.mxu0 0
        %4715 = vmatprep.subr.bf16.mxu0 0
        %4716 = vmatpush1.bf16.msra.mxu0 0
        %4717 = vmatprep.subr.bf16.mxu0 0
        %4718 = vmatpush1.bf16.msra.mxu0 0
        %4719 = vmatprep.subr.bf16.mxu0 0
        %4720 = vmatpush1.bf16.msra.mxu0 0
        %4721 = vmatprep.subr.bf16.mxu0 0
        %4722 = vmatpush1.bf16.msra.mxu0 0
        %4723 = vmatprep.subr.bf16.mxu0 0
        %4724 = vmatpush1.bf16.msra.mxu0 0
        %4725 = vmatprep.subr.bf16.mxu0 0
        %4726 = vmatpush1.bf16.msra.mxu0 0
        %4727 = vmatprep.mubr.bf16.mxu0 0
        %4728 = vmatmul.mubr.bf16.gmra.mrb[0].mxu0 %v3063
        %v4729 = vpop.f32.mrb[0].mxu0
        %v4730 = vadd.f32 %v4689, %v4729
        %v4731 = vpop.f32.mrb[0].mxu0
        %v4732 = vadd.f32 %v4691, %v4731
        %v4733 = vpop.f32.mrb[0].mxu0
        %v4734 = vpop.f32.mrb[0].mxu0
        %4735 = vdwg.mxu0
        %v4740 = vcombine.low %v4566, %v4568
        %v4741 = vcombine.low %v4730, %v4732
        %v4743 = vunpack.c.l.s4 1983009808
        %v4744 = vunpack.c.0.s8 %v4743
        %v4745 = vlaneseq
        %v4746 = vshrl.u32 %v4745, 7
        %v4747 = vsub.s32 %v4744, %v4746
        %v4748 = vrot.slane %v4740, %v4747
        %v4750 = vunpack.c.l.s4 1983009808
        %v4751 = vunpack.c.0.s8 %v4750
        %v4752 = vlaneseq
        %v4753 = vshrl.u32 %v4752, 7
        %v4754 = vsub.s32 %v4751, %v4753
        %v4755 = vrot.slane %v4741, %v4754
        %v4756 = vcombine.low %v4748, %v4755
        %v4758 = vadd.f32 %v3012, %v4756
        %4759 = vst [vmem:[#allocation2] sm:$0xff] %v4758
        %p4760 = scmp.eq.s32.totalorder %s31, 3
        // Predicated region
        $region97: #{global_discriminator_forward.1} parent=71 // pred_check
          %p4761 = pneg %p4760
        $region98: #{global_discriminator_forward.1} parent=71 // pred_check_branch
          %4763 = sbr.rel (%p4761) target = $region100
        $region99: #{global_discriminator_forward.1} parent=71 // pred_region
          %v4764 = vld [vmem:[#allocation2] sm:$0xff]
          %v4765 = vld [vmem:[#allocation3] sm:$0x3f]
          %v4767 = vcombine.high %v4765, %v4765
          %v4769 = vunpack.c.l.s4 1983009808
          %v4770 = vunpack.c.0.s8 %v4769
          %v4771 = vlaneseq
          %v4772 = vshrl.u32 %v4771, 7
          %v4773 = vsub.s32 %v4770, %v4772
          %v4774 = vrot.slane %v4765, %v4773
          %v4776 = vunpack.c.l.s4 1983009808
          %v4777 = vunpack.c.0.s8 %v4776
          %v4778 = vlaneseq
          %v4779 = vshrl.u32 %v4778, 7
          %v4780 = vsub.s32 %v4777, %v4779
          %v4781 = vrot.slane %v4767, %v4780
          %v4782 = vcombine.high %v4774, %v4774
          %v4786 = vpack.c.bf16 %v4774, %v4774
          %v4787 = vpack.c.bf16 %v4782, %v4782
          %v4788 = vpack.c.bf16 %v4781, %v4781
          %v4789 = vld [vmem:[%s7] sm:$0xff]
          %v4790 = vld [vmem:[%s7 + $0x8] sm:$0xff]
          %v4791 = vld [vmem:[%s7 + $0x10] sm:$0xff]
          %v4792 = vld [vmem:[%s7 + $0x18] sm:$0xff]
          %v4793 = vld [vmem:[%s7 + $0x20] sm:$0xff]
          %v4794 = vld [vmem:[%s7 + $0x28] sm:$0xff]
          %v4795 = vld [vmem:[%s7 + $0x30] sm:$0xff]
          %v4796 = vld [vmem:[%s7 + $0x38] sm:$0xff]
          %v4797 = vld [vmem:[%s7 + $0x40] sm:$0xff]
          %v4798 = vld [vmem:[%s7 + $0x48] sm:$0xff]
          %v4799 = vld [vmem:[%s7 + $0x50] sm:$0xff]
          %v4800 = vld [vmem:[%s7 + $0x58] sm:$0xff]
          %v4801 = vld [vmem:[%s7 + $0x60] sm:$0xff]
          %v4802 = vld [vmem:[%s7 + $0x68] sm:$0xff]
          %v4803 = vld [vmem:[%s7 + $0x70] sm:$0xff]
          %v4804 = vld [vmem:[%s7 + $0x78] sm:$0xff]
          %v4805 = vld [vmem:[%s7 + $0x80] sm:$0xff]
          %v4806 = vld [vmem:[%s7 + $0x88] sm:$0xff]
          %v4807 = vld [vmem:[%s7 + $0x90] sm:$0xff]
          %v4808 = vld [vmem:[%s7 + $0x98] sm:$0xff]
          %v4809 = vld [vmem:[%s7 + $0xa0] sm:$0xff]
          %v4810 = vld [vmem:[%s7 + $0xa8] sm:$0xff]
          %v4811 = vld [vmem:[%s7 + $0xb0] sm:$0xff]
          %v4812 = vld [vmem:[%s7 + $0xb8] sm:$0xff]
          %v4813 = vld [vmem:[%s7 + $0xc0] sm:$0xff]
          %v4814 = vld [vmem:[%s7 + $0xc8] sm:$0xff]
          %v4815 = vld [vmem:[%s7 + $0xd0] sm:$0xff]
          %v4816 = vld [vmem:[%s7 + $0xd8] sm:$0xff]
          %v4817 = vld [vmem:[%s7 + $0xe0] sm:$0xff]
          %v4818 = vld [vmem:[%s7 + $0xe8] sm:$0xff]
          %v4819 = vld [vmem:[%s7 + $0xf0] sm:$0xff]
          %v4820 = vld [vmem:[%s7 + $0xf8] sm:$0xff]
          %v4821 = vld [vmem:[%s7 + $0x100] sm:$0xff]
          %v4822 = vld [vmem:[%s7 + $0x108] sm:$0xff]
          %v4823 = vld [vmem:[%s7 + $0x110] sm:$0xff]
          %v4824 = vld [vmem:[%s7 + $0x118] sm:$0xff]
          %v4825 = vld [vmem:[%s7 + $0x120] sm:$0xff]
          %v4826 = vld [vmem:[%s7 + $0x128] sm:$0xff]
          %v4827 = vld [vmem:[%s7 + $0x130] sm:$0xff]
          %v4828 = vld [vmem:[%s7 + $0x138] sm:$0xff]
          %v4829 = vld [vmem:[%s7 + $0x140] sm:$0xff]
          %v4830 = vld [vmem:[%s7 + $0x148] sm:$0xff]
          %v4831 = vld [vmem:[%s7 + $0x150] sm:$0xff]
          %v4832 = vld [vmem:[%s7 + $0x158] sm:$0xff]
          %v4833 = vld [vmem:[%s7 + $0x160] sm:$0xff]
          %v4834 = vld [vmem:[%s7 + $0x168] sm:$0xff]
          %v4835 = vld [vmem:[%s7 + $0x170] sm:$0xff]
          %v4836 = vld [vmem:[%s7 + $0x178] sm:$0xff]
          %v4837 = vld [vmem:[%s7 + $0x180] sm:$0xff]
          %v4838 = vld [vmem:[%s7 + $0x188] sm:$0xff]
          %v4839 = vld [vmem:[%s7 + $0x190] sm:$0xff]
          %v4840 = vld [vmem:[%s7 + $0x198] sm:$0xff]
          %v4841 = vld [vmem:[%s7 + $0x1a0] sm:$0xff]
          %v4842 = vld [vmem:[%s7 + $0x1a8] sm:$0xff]
          %v4843 = vld [vmem:[%s7 + $0x1b0] sm:$0xff]
          %v4844 = vld [vmem:[%s7 + $0x1b8] sm:$0xff]
          %v4845 = vld [vmem:[%s7 + $0x1c0] sm:$0xff]
          %v4846 = vld [vmem:[%s7 + $0x1c8] sm:$0xff]
          %v4847 = vld [vmem:[%s7 + $0x1d0] sm:$0xff]
          %v4848 = vld [vmem:[%s7 + $0x1d8] sm:$0xff]
          %v4849 = vld [vmem:[%s7 + $0x1e0] sm:$0xff]
          %v4850 = vld [vmem:[%s7 + $0x1e8] sm:$0xff]
          %v4851 = vld [vmem:[%s7 + $0x1f0] sm:$0xff]
          %v4852 = vld [vmem:[%s7 + $0x1f8] sm:$0xff]
          %v4853 = vld [vmem:[%s7 + $0x200] sm:$0xff]
          %v4854 = vld [vmem:[%s7 + $0x208] sm:$0xff]
          %v4855 = vld [vmem:[%s7 + $0x210] sm:$0xff]
          %v4856 = vld [vmem:[%s7 + $0x218] sm:$0xff]
          %v4857 = vld [vmem:[%s7 + $0x220] sm:$0xff]
          %v4858 = vld [vmem:[%s7 + $0x228] sm:$0xff]
          %v4859 = vld [vmem:[%s7 + $0x230] sm:$0xff]
          %v4860 = vld [vmem:[%s7 + $0x238] sm:$0xff]
          %v4933 = vunpack.c.l.b16 %v4789
          %v4934 = vunpack.c.h.b16 %v4789
          %v4935 = vunpack.c.l.b16 %v4790
          %v4936 = vunpack.c.h.b16 %v4790
          %v4937 = vunpack.c.l.b16 %v4791
          %v4938 = vunpack.c.h.b16 %v4791
          %v4939 = vunpack.c.l.b16 %v4792
          %v4940 = vunpack.c.h.b16 %v4792
          %v4941 = vunpack.c.l.b16 %v4793
          %v4942 = vunpack.c.h.b16 %v4793
          %v4943 = vunpack.c.l.b16 %v4794
          %v4944 = vunpack.c.h.b16 %v4794
          %v4945 = vunpack.c.l.b16 %v4795
          %v4946 = vunpack.c.h.b16 %v4795
          %v4947 = vunpack.c.l.b16 %v4796
          %v4948 = vunpack.c.h.b16 %v4796
          %v4949 = vunpack.c.l.b16 %v4797
          %v4950 = vunpack.c.h.b16 %v4797
          %v4951 = vunpack.c.l.b16 %v4798
          %v4952 = vunpack.c.h.b16 %v4798
          %v4953 = vunpack.c.l.b16 %v4799
          %v4954 = vunpack.c.h.b16 %v4799
          %v4955 = vunpack.c.l.b16 %v4800
          %v4956 = vunpack.c.h.b16 %v4800
          %v4957 = vunpack.c.l.b16 %v4801
          %v4958 = vunpack.c.h.b16 %v4801
          %v4959 = vunpack.c.l.b16 %v4802
          %v4960 = vunpack.c.h.b16 %v4802
          %v4961 = vunpack.c.l.b16 %v4803
          %v4962 = vunpack.c.h.b16 %v4803
          %v4963 = vunpack.c.l.b16 %v4804
          %v4964 = vunpack.c.h.b16 %v4804
          %v4965 = vunpack.c.l.b16 %v4805
          %v4966 = vunpack.c.h.b16 %v4805
          %v4967 = vunpack.c.l.b16 %v4806
          %v4968 = vunpack.c.h.b16 %v4806
          %v4969 = vunpack.c.l.b16 %v4807
          %v4970 = vunpack.c.h.b16 %v4807
          %v4971 = vunpack.c.l.b16 %v4808
          %v4972 = vunpack.c.h.b16 %v4808
          %v4973 = vunpack.c.l.b16 %v4809
          %v4974 = vunpack.c.h.b16 %v4809
          %v4975 = vunpack.c.l.b16 %v4810
          %v4976 = vunpack.c.h.b16 %v4810
          %v4977 = vunpack.c.l.b16 %v4811
          %v4978 = vunpack.c.h.b16 %v4811
          %v4979 = vunpack.c.l.b16 %v4812
          %v4980 = vunpack.c.h.b16 %v4812
          %v4981 = vunpack.c.l.b16 %v4813
          %v4982 = vunpack.c.h.b16 %v4813
          %v4983 = vunpack.c.l.b16 %v4814
          %v4984 = vunpack.c.h.b16 %v4814
          %v4985 = vunpack.c.l.b16 %v4815
          %v4986 = vunpack.c.h.b16 %v4815
          %v4987 = vunpack.c.l.b16 %v4816
          %v4988 = vunpack.c.h.b16 %v4816
          %v4989 = vunpack.c.l.b16 %v4817
          %v4990 = vunpack.c.h.b16 %v4817
          %v4991 = vunpack.c.l.b16 %v4818
          %v4992 = vunpack.c.h.b16 %v4818
          %v4993 = vunpack.c.l.b16 %v4819
          %v4994 = vunpack.c.h.b16 %v4819
          %v4995 = vunpack.c.l.b16 %v4820
          %v4996 = vunpack.c.h.b16 %v4820
          %v4997 = vunpack.c.l.b16 %v4821
          %v4998 = vunpack.c.h.b16 %v4821
          %v4999 = vunpack.c.l.b16 %v4822
          %v5000 = vunpack.c.h.b16 %v4822
          %v5001 = vunpack.c.l.b16 %v4823
          %v5002 = vunpack.c.h.b16 %v4823
          %v5003 = vunpack.c.l.b16 %v4824
          %v5004 = vunpack.c.h.b16 %v4824
          %v5005 = vunpack.c.l.b16 %v4825
          %v5006 = vunpack.c.h.b16 %v4825
          %v5007 = vunpack.c.l.b16 %v4826
          %v5008 = vunpack.c.h.b16 %v4826
          %v5009 = vunpack.c.l.b16 %v4827
          %v5010 = vunpack.c.h.b16 %v4827
          %v5011 = vunpack.c.l.b16 %v4828
          %v5012 = vunpack.c.h.b16 %v4828
          %v5013 = vunpack.c.l.b16 %v4829
          %v5014 = vunpack.c.h.b16 %v4829
          %v5015 = vunpack.c.l.b16 %v4830
          %v5016 = vunpack.c.h.b16 %v4830
          %v5017 = vunpack.c.l.b16 %v4831
          %v5018 = vunpack.c.h.b16 %v4831
          %v5019 = vunpack.c.l.b16 %v4832
          %v5020 = vunpack.c.h.b16 %v4832
          %v5021 = vunpack.c.l.b16 %v4833
          %v5022 = vunpack.c.h.b16 %v4833
          %v5023 = vunpack.c.l.b16 %v4834
          %v5024 = vunpack.c.h.b16 %v4834
          %v5025 = vunpack.c.l.b16 %v4835
          %v5026 = vunpack.c.h.b16 %v4835
          %v5027 = vunpack.c.l.b16 %v4836
          %v5028 = vunpack.c.h.b16 %v4836
          %v5029 = vunpack.c.l.b16 %v4837
          %v5030 = vunpack.c.h.b16 %v4837
          %v5031 = vunpack.c.l.b16 %v4838
          %v5032 = vunpack.c.h.b16 %v4838
          %v5033 = vunpack.c.l.b16 %v4839
          %v5034 = vunpack.c.h.b16 %v4839
          %v5035 = vunpack.c.l.b16 %v4840
          %v5036 = vunpack.c.h.b16 %v4840
          %v5037 = vunpack.c.l.b16 %v4841
          %v5038 = vunpack.c.h.b16 %v4841
          %v5039 = vunpack.c.l.b16 %v4842
          %v5040 = vunpack.c.h.b16 %v4842
          %v5041 = vunpack.c.l.b16 %v4843
          %v5042 = vunpack.c.h.b16 %v4843
          %v5043 = vunpack.c.l.b16 %v4844
          %v5044 = vunpack.c.h.b16 %v4844
          %v5045 = vunpack.c.l.b16 %v4845
          %v5046 = vunpack.c.h.b16 %v4845
          %v5047 = vunpack.c.l.b16 %v4846
          %v5048 = vunpack.c.h.b16 %v4846
          %v5049 = vunpack.c.l.b16 %v4847
          %v5050 = vunpack.c.h.b16 %v4847
          %v5051 = vunpack.c.l.b16 %v4848
          %v5052 = vunpack.c.h.b16 %v4848
          %v5053 = vunpack.c.l.b16 %v4849
          %v5054 = vunpack.c.h.b16 %v4849
          %v5055 = vunpack.c.l.b16 %v4850
          %v5056 = vunpack.c.h.b16 %v4850
          %v5057 = vunpack.c.l.b16 %v4851
          %v5058 = vunpack.c.h.b16 %v4851
          %v5059 = vunpack.c.l.b16 %v4852
          %v5060 = vunpack.c.h.b16 %v4852
          %v5061 = vunpack.c.l.b16 %v4853
          %v5062 = vunpack.c.h.b16 %v4853
          %v5063 = vunpack.c.l.b16 %v4854
          %v5064 = vunpack.c.h.b16 %v4854
          %v5065 = vunpack.c.l.b16 %v4855
          %v5066 = vunpack.c.h.b16 %v4855
          %v5067 = vunpack.c.l.b16 %v4856
          %v5068 = vunpack.c.h.b16 %v4856
          %v5069 = vunpack.c.l.b16 %v4857
          %v5070 = vunpack.c.h.b16 %v4857
          %v5071 = vunpack.c.l.b16 %v4858
          %v5072 = vunpack.c.h.b16 %v4858
          %v5073 = vunpack.c.l.b16 %v4859
          %v5074 = vunpack.c.h.b16 %v4859
          %v5075 = vunpack.c.l.b16 %v4860
          %v5076 = vunpack.c.h.b16 %v4860
          %v5077 = vpack.c.b16 %v4937, %v4933
          %v5078 = vpack.c.b16 %v4938, %v4934
          %v5079 = vpack.c.b16 %v4939, %v4935
          %v5080 = vpack.c.b16 %v4940, %v4936
          %v5081 = vpack.c.b16 %v4945, %v4941
          %v5082 = vpack.c.b16 %v4946, %v4942
          %v5083 = vpack.c.b16 %v4947, %v4943
          %v5084 = vpack.c.b16 %v4948, %v4944
          %v5085 = vpack.c.b16 %v4953, %v4949
          %v5086 = vpack.c.b16 %v4954, %v4950
          %v5087 = vpack.c.b16 %v4955, %v4951
          %v5088 = vpack.c.b16 %v4956, %v4952
          %v5089 = vpack.c.b16 %v4961, %v4957
          %v5090 = vpack.c.b16 %v4962, %v4958
          %v5091 = vpack.c.b16 %v4963, %v4959
          %v5092 = vpack.c.b16 %v4964, %v4960
          %v5093 = vpack.c.b16 %v4969, %v4965
          %v5094 = vpack.c.b16 %v4970, %v4966
          %v5095 = vpack.c.b16 %v4971, %v4967
          %v5096 = vpack.c.b16 %v4972, %v4968
          %v5097 = vpack.c.b16 %v4977, %v4973
          %v5098 = vpack.c.b16 %v4978, %v4974
          %v5099 = vpack.c.b16 %v4979, %v4975
          %v5100 = vpack.c.b16 %v4980, %v4976
          %v5101 = vpack.c.b16 %v4985, %v4981
          %v5102 = vpack.c.b16 %v4986, %v4982
          %v5103 = vpack.c.b16 %v4987, %v4983
          %v5104 = vpack.c.b16 %v4988, %v4984
          %v5105 = vpack.c.b16 %v4993, %v4989
          %v5106 = vpack.c.b16 %v4994, %v4990
          %v5107 = vpack.c.b16 %v4995, %v4991
          %v5108 = vpack.c.b16 %v4996, %v4992
          %v5109 = vpack.c.b16 %v5001, %v4997
          %v5110 = vpack.c.b16 %v5002, %v4998
          %v5111 = vpack.c.b16 %v5003, %v4999
          %v5112 = vpack.c.b16 %v5004, %v5000
          %v5113 = vpack.c.b16 %v5009, %v5005
          %v5114 = vpack.c.b16 %v5010, %v5006
          %v5115 = vpack.c.b16 %v5011, %v5007
          %v5116 = vpack.c.b16 %v5012, %v5008
          %v5117 = vpack.c.b16 %v5017, %v5013
          %v5118 = vpack.c.b16 %v5018, %v5014
          %v5119 = vpack.c.b16 %v5019, %v5015
          %v5120 = vpack.c.b16 %v5020, %v5016
          %v5121 = vpack.c.b16 %v5025, %v5021
          %v5122 = vpack.c.b16 %v5026, %v5022
          %v5123 = vpack.c.b16 %v5027, %v5023
          %v5124 = vpack.c.b16 %v5028, %v5024
          %v5125 = vpack.c.b16 %v5033, %v5029
          %v5126 = vpack.c.b16 %v5034, %v5030
          %v5127 = vpack.c.b16 %v5035, %v5031
          %v5128 = vpack.c.b16 %v5036, %v5032
          %v5129 = vpack.c.b16 %v5041, %v5037
          %v5130 = vpack.c.b16 %v5042, %v5038
          %v5131 = vpack.c.b16 %v5043, %v5039
          %v5132 = vpack.c.b16 %v5044, %v5040
          %v5133 = vpack.c.b16 %v5049, %v5045
          %v5134 = vpack.c.b16 %v5050, %v5046
          %v5135 = vpack.c.b16 %v5051, %v5047
          %v5136 = vpack.c.b16 %v5052, %v5048
          %v5137 = vpack.c.b16 %v5057, %v5053
          %v5138 = vpack.c.b16 %v5058, %v5054
          %v5139 = vpack.c.b16 %v5059, %v5055
          %v5140 = vpack.c.b16 %v5060, %v5056
          %v5141 = vpack.c.b16 %v5065, %v5061
          %v5142 = vpack.c.b16 %v5066, %v5062
          %v5143 = vpack.c.b16 %v5067, %v5063
          %v5144 = vpack.c.b16 %v5068, %v5064
          %v5145 = vpack.c.b16 %v5073, %v5069
          %v5146 = vpack.c.b16 %v5074, %v5070
          %v5147 = vpack.c.b16 %v5075, %v5071
          %v5148 = vpack.c.b16 %v5076, %v5072
          %vm5221 = vcmask 261120
          %v5223 = vsel %vm5221, %v4788, 0
          %5225 = vmatprep.subr.bf16.mxu0 %v5078
          %5226 = vmatpush1.bf16.msra.mxu0 %v5077
          %5227 = vmatprep.subr.bf16.mxu0 %v5082
          %5228 = vmatpush1.bf16.msra.mxu0 %v5081
          %5229 = vmatprep.subr.bf16.mxu0 %v5086
          %5230 = vmatpush1.bf16.msra.mxu0 %v5085
          %5231 = vmatprep.subr.bf16.mxu0 %v5090
          %5232 = vmatpush1.bf16.msra.mxu0 %v5089
          %5233 = vmatprep.subr.bf16.mxu0 %v5094
          %5234 = vmatpush1.bf16.msra.mxu0 %v5093
          %5235 = vmatprep.subr.bf16.mxu0 %v5098
          %5236 = vmatpush1.bf16.msra.mxu0 %v5097
          %5237 = vmatprep.subr.bf16.mxu0 %v5102
          %5238 = vmatpush1.bf16.msra.mxu0 %v5101
          %5239 = vmatprep.subr.bf16.mxu0 %v5106
          %5240 = vmatpush1.bf16.msra.mxu0 %v5105
          %5241 = vmatprep.subr.bf16.mxu0 %v5110
          %5242 = vmatpush1.bf16.msra.mxu0 %v5109
          %5243 = vmatprep.subr.bf16.mxu0 %v5114
          %5244 = vmatpush1.bf16.msra.mxu0 %v5113
          %5245 = vmatprep.subr.bf16.mxu0 %v5118
          %5246 = vmatpush1.bf16.msra.mxu0 %v5117
          %5247 = vmatprep.subr.bf16.mxu0 %v5122
          %5248 = vmatpush1.bf16.msra.mxu0 %v5121
          %5249 = vmatprep.subr.bf16.mxu0 %v5126
          %5250 = vmatpush1.bf16.msra.mxu0 %v5125
          %5251 = vmatprep.subr.bf16.mxu0 %v5130
          %5252 = vmatpush1.bf16.msra.mxu0 %v5129
          %5253 = vmatprep.subr.bf16.mxu0 %v5134
          %5254 = vmatpush1.bf16.msra.mxu0 %v5133
          %5255 = vmatprep.subr.bf16.mxu0 %v5138
          %5256 = vmatpush1.bf16.msra.mxu0 %v5137
          %5257 = vmatprep.mubr.bf16.mxu0 %v4787
          %5258 = vmatmul.mubr.bf16.gmra.mrb[0].mxu0 %v4786
          %v5259 = vpop.f32.mrb[0].mxu0
          %v5260 = vadd.f32 0.0, %v5259
          %v5261 = vpop.f32.mrb[0].mxu0
          %v5262 = vadd.f32 0.0, %v5261
          %v5263 = vpop.f32.mrb[0].mxu0
          %v5264 = vpop.f32.mrb[0].mxu0
          %5265 = vdwg.mxu0
          %5266 = vmatprep.subr.bf16.mxu0 %v5142
          %5267 = vmatpush1.bf16.msra.mxu0 %v5141
          %5268 = vmatprep.subr.bf16.mxu0 %v5146
          %5269 = vmatpush1.bf16.msra.mxu0 %v5145
          %5270 = vmatprep.subr.bf16.mxu0 0
          %5271 = vmatpush1.bf16.msra.mxu0 0
          %5272 = vmatprep.subr.bf16.mxu0 0
          %5273 = vmatpush1.bf16.msra.mxu0 0
          %5274 = vmatprep.subr.bf16.mxu0 0
          %5275 = vmatpush1.bf16.msra.mxu0 0
          %5276 = vmatprep.subr.bf16.mxu0 0
          %5277 = vmatpush1.bf16.msra.mxu0 0
          %5278 = vmatprep.subr.bf16.mxu0 0
          %5279 = vmatpush1.bf16.msra.mxu0 0
          %5280 = vmatprep.subr.bf16.mxu0 0
          %5281 = vmatpush1.bf16.msra.mxu0 0
          %5282 = vmatprep.subr.bf16.mxu0 0
          %5283 = vmatpush1.bf16.msra.mxu0 0
          %5284 = vmatprep.subr.bf16.mxu0 0
          %5285 = vmatpush1.bf16.msra.mxu0 0
          %5286 = vmatprep.subr.bf16.mxu0 0
          %5287 = vmatpush1.bf16.msra.mxu0 0
          %5288 = vmatprep.subr.bf16.mxu0 0
          %5289 = vmatpush1.bf16.msra.mxu0 0
          %5290 = vmatprep.subr.bf16.mxu0 0
          %5291 = vmatpush1.bf16.msra.mxu0 0
          %5292 = vmatprep.subr.bf16.mxu0 0
          %5293 = vmatpush1.bf16.msra.mxu0 0
          %5294 = vmatprep.subr.bf16.mxu0 0
          %5295 = vmatpush1.bf16.msra.mxu0 0
          %5296 = vmatprep.subr.bf16.mxu0 0
          %5297 = vmatpush1.bf16.msra.mxu0 0
          %5298 = vmatprep.mubr.bf16.mxu0 0
          %5299 = vmatmul.mubr.bf16.gmra.mrb[0].mxu0 %v5223
          %v5300 = vpop.f32.mrb[0].mxu0
          %v5301 = vadd.f32 %v5260, %v5300
          %v5302 = vpop.f32.mrb[0].mxu0
          %v5303 = vadd.f32 %v5262, %v5302
          %v5304 = vpop.f32.mrb[0].mxu0
          %v5305 = vpop.f32.mrb[0].mxu0
          %5306 = vdwg.mxu0
          %5307 = vmatprep.subr.bf16.mxu0 %v5080
          %5308 = vmatpush1.bf16.msra.mxu0 %v5079
          %5309 = vmatprep.subr.bf16.mxu0 %v5084
          %5310 = vmatpush1.bf16.msra.mxu0 %v5083
          %5311 = vmatprep.subr.bf16.mxu0 %v5088
          %5312 = vmatpush1.bf16.msra.mxu0 %v5087
          %5313 = vmatprep.subr.bf16.mxu0 %v5092
          %5314 = vmatpush1.bf16.msra.mxu0 %v5091
          %5315 = vmatprep.subr.bf16.mxu0 %v5096
          %5316 = vmatpush1.bf16.msra.mxu0 %v5095
          %5317 = vmatprep.subr.bf16.mxu0 %v5100
          %5318 = vmatpush1.bf16.msra.mxu0 %v5099
          %5319 = vmatprep.subr.bf16.mxu0 %v5104
          %5320 = vmatpush1.bf16.msra.mxu0 %v5103
          %5321 = vmatprep.subr.bf16.mxu0 %v5108
          %5322 = vmatpush1.bf16.msra.mxu0 %v5107
          %5323 = vmatprep.subr.bf16.mxu0 %v5112
          %5324 = vmatpush1.bf16.msra.mxu0 %v5111
          %5325 = vmatprep.subr.bf16.mxu0 %v5116
          %5326 = vmatpush1.bf16.msra.mxu0 %v5115
          %5327 = vmatprep.subr.bf16.mxu0 %v5120
          %5328 = vmatpush1.bf16.msra.mxu0 %v5119
          %5329 = vmatprep.subr.bf16.mxu0 %v5124
          %5330 = vmatpush1.bf16.msra.mxu0 %v5123
          %5331 = vmatprep.subr.bf16.mxu0 %v5128
          %5332 = vmatpush1.bf16.msra.mxu0 %v5127
          %5333 = vmatprep.subr.bf16.mxu0 %v5132
          %5334 = vmatpush1.bf16.msra.mxu0 %v5131
          %5335 = vmatprep.subr.bf16.mxu0 %v5136
          %5336 = vmatpush1.bf16.msra.mxu0 %v5135
          %5337 = vmatprep.subr.bf16.mxu0 %v5140
          %5338 = vmatpush1.bf16.msra.mxu0 %v5139
          %5339 = vmatprep.mubr.bf16.mxu0 %v4787
          %5340 = vmatmul.mubr.bf16.gmra.mrb[0].mxu0 %v4786
          %v5341 = vpop.f32.mrb[0].mxu0
          %v5342 = vadd.f32 0.0, %v5341
          %v5343 = vpop.f32.mrb[0].mxu0
          %v5344 = vadd.f32 0.0, %v5343
          %v5345 = vpop.f32.mrb[0].mxu0
          %v5346 = vpop.f32.mrb[0].mxu0
          %5347 = vdwg.mxu0
          %5348 = vmatprep.subr.bf16.mxu0 %v5144
          %5349 = vmatpush1.bf16.msra.mxu0 %v5143
          %5350 = vmatprep.subr.bf16.mxu0 %v5148
          %5351 = vmatpush1.bf16.msra.mxu0 %v5147
          %5352 = vmatprep.subr.bf16.mxu0 0
          %5353 = vmatpush1.bf16.msra.mxu0 0
          %5354 = vmatprep.subr.bf16.mxu0 0
          %5355 = vmatpush1.bf16.msra.mxu0 0
          %5356 = vmatprep.subr.bf16.mxu0 0
          %5357 = vmatpush1.bf16.msra.mxu0 0
          %5358 = vmatprep.subr.bf16.mxu0 0
          %5359 = vmatpush1.bf16.msra.mxu0 0
          %5360 = vmatprep.subr.bf16.mxu0 0
          %5361 = vmatpush1.bf16.msra.mxu0 0
          %5362 = vmatprep.subr.bf16.mxu0 0
          %5363 = vmatpush1.bf16.msra.mxu0 0
          %5364 = vmatprep.subr.bf16.mxu0 0
          %5365 = vmatpush1.bf16.msra.mxu0 0
          %5366 = vmatprep.subr.bf16.mxu0 0
          %5367 = vmatpush1.bf16.msra.mxu0 0
          %5368 = vmatprep.subr.bf16.mxu0 0
          %5369 = vmatpush1.bf16.msra.mxu0 0
          %5370 = vmatprep.subr.bf16.mxu0 0
          %5371 = vmatpush1.bf16.msra.mxu0 0
          %5372 = vmatprep.subr.bf16.mxu0 0
          %5373 = vmatpush1.bf16.msra.mxu0 0
          %5374 = vmatprep.subr.bf16.mxu0 0
          %5375 = vmatpush1.bf16.msra.mxu0 0
          %5376 = vmatprep.subr.bf16.mxu0 0
          %5377 = vmatpush1.bf16.msra.mxu0 0
          %5378 = vmatprep.subr.bf16.mxu0 0
          %5379 = vmatpush1.bf16.msra.mxu0 0
          %5380 = vmatprep.mubr.bf16.mxu0 0
          %5381 = vmatmul.mubr.bf16.gmra.mrb[0].mxu0 %v5223
          %v5382 = vpop.f32.mrb[0].mxu0
          %v5383 = vadd.f32 %v5342, %v5382
          %v5384 = vpop.f32.mrb[0].mxu0
          %v5385 = vadd.f32 %v5344, %v5384
          %v5386 = vpop.f32.mrb[0].mxu0
          %v5387 = vpop.f32.mrb[0].mxu0
          %5388 = vdwg.mxu0
          %v5393 = vcombine.low %v5301, %v5303
          %v5394 = vcombine.low %v5383, %v5385
          %v5396 = vunpack.c.l.s4 1983009808
          %v5397 = vunpack.c.0.s8 %v5396
          %v5398 = vlaneseq
          %v5399 = vshrl.u32 %v5398, 7
          %v5400 = vsub.s32 %v5397, %v5399
          %v5401 = vrot.slane %v5393, %v5400
          %v5403 = vunpack.c.l.s4 1983009808
          %v5404 = vunpack.c.0.s8 %v5403
          %v5405 = vlaneseq
          %v5406 = vshrl.u32 %v5405, 7
          %v5407 = vsub.s32 %v5404, %v5406
          %v5408 = vrot.slane %v5394, %v5407
          %v5409 = vcombine.low %v5401, %v5408
          %v5411 = vadd.f32 %v4764, %v5409
          %v5412 = vld [vmem:[#allocation11] sm:$0xf]
          %v5414 = vlaneseq
          %v5415 = vshrl.u32 %v5414, 7
          %v5416 = vsub.s32 0, %v5415
          %v5417 = vrot.slane %v5412, %v5416
          %v5418 = vlaneseq
          %v5419 = vshrl.u32 %v5418, 7
          %v5420 = vsub.s32 1, %v5419
          %v5421 = vrot.slane %v5412, %v5420
          %v5422 = vlaneseq
          %v5423 = vshrl.u32 %v5422, 7
          %v5424 = vsub.s32 2, %v5423
          %v5425 = vrot.slane %v5412, %v5424
          %v5426 = vlaneseq
          %v5427 = vshrl.u32 %v5426, 7
          %v5428 = vsub.s32 3, %v5427
          %v5429 = vrot.slane %v5412, %v5428
          %v5430 = vcombine.low %v5417, %v5421
          %v5431 = vcombine.low %v5425, %v5429
          %v5433 = vunpack.c.l.s4 1983009808
          %v5434 = vunpack.c.0.s8 %v5433
          %v5435 = vlaneseq
          %v5436 = vshrl.u32 %v5435, 7
          %v5437 = vsub.s32 %v5434, %v5436
          %v5438 = vrot.slane %v5430, %v5437
          %v5440 = vunpack.c.l.s4 1983009808
          %v5441 = vunpack.c.0.s8 %v5440
          %v5442 = vlaneseq
          %v5443 = vshrl.u32 %v5442, 7
          %v5444 = vsub.s32 %v5441, %v5443
          %v5445 = vrot.slane %v5431, %v5444
          %v5446 = vcombine.low %v5438, %v5445
          %v5448 = vadd.f32 %v5411, %v5446
          %v5449 = vmax.f32 %v5448, 0.0
          %v5451 = vcombine.high %v5449, %v5449
          %v5453 = vunpack.c.l.s4 1983009808
          %v5454 = vunpack.c.0.s8 %v5453
          %v5455 = vlaneseq
          %v5456 = vshrl.u32 %v5455, 7
          %v5457 = vsub.s32 %v5454, %v5456
          %v5458 = vrot.slane %v5449, %v5457
          %v5460 = vunpack.c.l.s4 1983009808
          %v5461 = vunpack.c.0.s8 %v5460
          %v5462 = vlaneseq
          %v5463 = vshrl.u32 %v5462, 7
          %v5464 = vsub.s32 %v5461, %v5463
          %v5465 = vrot.slane %v5451, %v5464
          %v5466 = vcombine.high %v5458, %v5458
          %v5467 = vcombine.high %v5465, %v5465
          %v5472 = vpack.c.bf16 %v5458, %v5458
          %v5473 = vpack.c.bf16 %v5466, %v5466
          %v5474 = vpack.c.bf16 %v5465, %v5465
          %v5475 = vpack.c.bf16 %v5467, %v5467
          %v5476 = vld [vmem:[%s9] sm:$0xff]
          %v5477 = vld [vmem:[%s9 + $0x8] sm:$0xff]
          %v5478 = vld [vmem:[%s9 + $0x10] sm:$0xff]
          %v5479 = vld [vmem:[%s9 + $0x18] sm:$0xff]
          %v5480 = vld [vmem:[%s9 + $0x20] sm:$0xff]
          %v5481 = vld [vmem:[%s9 + $0x28] sm:$0xff]
          %v5482 = vld [vmem:[%s9 + $0x30] sm:$0xff]
          %v5483 = vld [vmem:[%s9 + $0x38] sm:$0xff]
          %v5484 = vld [vmem:[%s9 + $0x40] sm:$0xff]
          %v5485 = vld [vmem:[%s9 + $0x48] sm:$0xff]
          %v5486 = vld [vmem:[%s9 + $0x50] sm:$0xff]
          %v5487 = vld [vmem:[%s9 + $0x58] sm:$0xff]
          %v5488 = vld [vmem:[%s9 + $0x60] sm:$0xff]
          %v5489 = vld [vmem:[%s9 + $0x68] sm:$0xff]
          %v5490 = vld [vmem:[%s9 + $0x70] sm:$0xff]
          %v5491 = vld [vmem:[%s9 + $0x78] sm:$0xff]
          %v5492 = vld [vmem:[%s9 + $0x80] sm:$0xff]
          %v5493 = vld [vmem:[%s9 + $0x88] sm:$0xff]
          %v5494 = vld [vmem:[%s9 + $0x90] sm:$0xff]
          %v5495 = vld [vmem:[%s9 + $0x98] sm:$0xff]
          %v5496 = vld [vmem:[%s9 + $0xa0] sm:$0xff]
          %v5497 = vld [vmem:[%s9 + $0xa8] sm:$0xff]
          %v5498 = vld [vmem:[%s9 + $0xb0] sm:$0xff]
          %v5499 = vld [vmem:[%s9 + $0xb8] sm:$0xff]
          %v5500 = vld [vmem:[%s9 + $0xc0] sm:$0xff]
          %v5501 = vld [vmem:[%s9 + $0xc8] sm:$0xff]
          %v5502 = vld [vmem:[%s9 + $0xd0] sm:$0xff]
          %v5503 = vld [vmem:[%s9 + $0xd8] sm:$0xff]
          %v5504 = vld [vmem:[%s9 + $0xe0] sm:$0xff]
          %v5505 = vld [vmem:[%s9 + $0xe8] sm:$0xff]
          %v5506 = vld [vmem:[%s9 + $0xf0] sm:$0xff]
          %v5507 = vld [vmem:[%s9 + $0xf8] sm:$0xff]
          %v5508 = vld [vmem:[%s9 + $0x100] sm:$0xff]
          %v5509 = vld [vmem:[%s9 + $0x108] sm:$0xff]
          %v5510 = vld [vmem:[%s9 + $0x110] sm:$0xff]
          %v5511 = vld [vmem:[%s9 + $0x118] sm:$0xff]
          %v5512 = vld [vmem:[%s9 + $0x120] sm:$0xff]
          %v5513 = vld [vmem:[%s9 + $0x128] sm:$0xff]
          %v5514 = vld [vmem:[%s9 + $0x130] sm:$0xff]
          %v5515 = vld [vmem:[%s9 + $0x138] sm:$0xff]
          %v5516 = vld [vmem:[%s9 + $0x140] sm:$0xff]
          %v5517 = vld [vmem:[%s9 + $0x148] sm:$0xff]
          %v5518 = vld [vmem:[%s9 + $0x150] sm:$0xff]
          %v5519 = vld [vmem:[%s9 + $0x158] sm:$0xff]
          %v5520 = vld [vmem:[%s9 + $0x160] sm:$0xff]
          %v5521 = vld [vmem:[%s9 + $0x168] sm:$0xff]
          %v5522 = vld [vmem:[%s9 + $0x170] sm:$0xff]
          %v5523 = vld [vmem:[%s9 + $0x178] sm:$0xff]
          %v5524 = vld [vmem:[%s9 + $0x180] sm:$0xff]
          %v5525 = vld [vmem:[%s9 + $0x188] sm:$0xff]
          %v5526 = vld [vmem:[%s9 + $0x190] sm:$0xff]
          %v5527 = vld [vmem:[%s9 + $0x198] sm:$0xff]
          %v5528 = vld [vmem:[%s9 + $0x1a0] sm:$0xff]
          %v5529 = vld [vmem:[%s9 + $0x1a8] sm:$0xff]
          %v5530 = vld [vmem:[%s9 + $0x1b0] sm:$0xff]
          %v5531 = vld [vmem:[%s9 + $0x1b8] sm:$0xff]
          %v5532 = vld [vmem:[%s9 + $0x1c0] sm:$0xff]
          %v5533 = vld [vmem:[%s9 + $0x1c8] sm:$0xff]
          %v5534 = vld [vmem:[%s9 + $0x1d0] sm:$0xff]
          %v5535 = vld [vmem:[%s9 + $0x1d8] sm:$0xff]
          %v5536 = vld [vmem:[%s9 + $0x1e0] sm:$0xff]
          %v5537 = vld [vmem:[%s9 + $0x1e8] sm:$0xff]
          %v5538 = vld [vmem:[%s9 + $0x1f0] sm:$0xff]
          %v5539 = vld [vmem:[%s9 + $0x1f8] sm:$0xff]
          %v5540 = vld [vmem:[%s9 + $0x200] sm:$0xff]
          %v5541 = vld [vmem:[%s9 + $0x208] sm:$0xff]
          %v5542 = vld [vmem:[%s9 + $0x210] sm:$0xff]
          %v5543 = vld [vmem:[%s9 + $0x218] sm:$0xff]
          %v5544 = vld [vmem:[%s9 + $0x220] sm:$0xff]
          %v5545 = vld [vmem:[%s9 + $0x228] sm:$0xff]
          %v5546 = vld [vmem:[%s9 + $0x230] sm:$0xff]
          %v5547 = vld [vmem:[%s9 + $0x238] sm:$0xff]
          %v5548 = vld [vmem:[%s9 + $0x240] sm:$0xff]
          %v5549 = vld [vmem:[%s9 + $0x248] sm:$0xff]
          %v5550 = vld [vmem:[%s9 + $0x250] sm:$0xff]
          %v5551 = vld [vmem:[%s9 + $0x258] sm:$0xff]
          %v5552 = vld [vmem:[%s9 + $0x260] sm:$0xff]
          %v5553 = vld [vmem:[%s9 + $0x268] sm:$0xff]
          %v5554 = vld [vmem:[%s9 + $0x270] sm:$0xff]
          %v5555 = vld [vmem:[%s9 + $0x278] sm:$0xff]
          %v5556 = vld [vmem:[%s9 + $0x280] sm:$0xff]
          %v5557 = vld [vmem:[%s9 + $0x288] sm:$0xff]
          %v5558 = vld [vmem:[%s9 + $0x290] sm:$0xff]
          %v5559 = vld [vmem:[%s9 + $0x298] sm:$0xff]
          %v5560 = vld [vmem:[%s9 + $0x2a0] sm:$0xff]
          %v5561 = vld [vmem:[%s9 + $0x2a8] sm:$0xff]
          %v5562 = vld [vmem:[%s9 + $0x2b0] sm:$0xff]
          %v5563 = vld [vmem:[%s9 + $0x2b8] sm:$0xff]
          %v5564 = vld [vmem:[%s9 + $0x2c0] sm:$0xff]
          %v5565 = vld [vmem:[%s9 + $0x2c8] sm:$0xff]
          %v5566 = vld [vmem:[%s9 + $0x2d0] sm:$0xff]
          %v5567 = vld [vmem:[%s9 + $0x2d8] sm:$0xff]
          %v5568 = vld [vmem:[%s9 + $0x2e0] sm:$0xff]
          %v5569 = vld [vmem:[%s9 + $0x2e8] sm:$0xff]
          %v5570 = vld [vmem:[%s9 + $0x2f0] sm:$0xff]
          %v5571 = vld [vmem:[%s9 + $0x2f8] sm:$0xff]
          %v5572 = vld [vmem:[%s9 + $0x300] sm:$0xff]
          %v5573 = vld [vmem:[%s9 + $0x308] sm:$0xff]
          %v5574 = vld [vmem:[%s9 + $0x310] sm:$0xff]
          %v5575 = vld [vmem:[%s9 + $0x318] sm:$0xff]
          %v5576 = vld [vmem:[%s9 + $0x320] sm:$0xff]
          %v5577 = vld [vmem:[%s9 + $0x328] sm:$0xff]
          %v5578 = vld [vmem:[%s9 + $0x330] sm:$0xff]
          %v5579 = vld [vmem:[%s9 + $0x338] sm:$0xff]
          %v5580 = vld [vmem:[%s9 + $0x340] sm:$0xff]
          %v5581 = vld [vmem:[%s9 + $0x348] sm:$0xff]
          %v5582 = vld [vmem:[%s9 + $0x350] sm:$0xff]
          %v5583 = vld [vmem:[%s9 + $0x358] sm:$0xff]
          %v5584 = vld [vmem:[%s9 + $0x360] sm:$0xff]
          %v5585 = vld [vmem:[%s9 + $0x368] sm:$0xff]
          %v5586 = vld [vmem:[%s9 + $0x370] sm:$0xff]
          %v5587 = vld [vmem:[%s9 + $0x378] sm:$0xff]
          %v5588 = vld [vmem:[%s9 + $0x380] sm:$0xff]
          %v5589 = vld [vmem:[%s9 + $0x388] sm:$0xff]
          %v5590 = vld [vmem:[%s9 + $0x390] sm:$0xff]
          %v5591 = vld [vmem:[%s9 + $0x398] sm:$0xff]
          %v5592 = vld [vmem:[%s9 + $0x3a0] sm:$0xff]
          %v5593 = vld [vmem:[%s9 + $0x3a8] sm:$0xff]
          %v5594 = vld [vmem:[%s9 + $0x3b0] sm:$0xff]
          %v5595 = vld [vmem:[%s9 + $0x3b8] sm:$0xff]
          %v5596 = vld [vmem:[%s9 + $0x3c0] sm:$0xff]
          %v5597 = vld [vmem:[%s9 + $0x3c8] sm:$0xff]
          %v5598 = vld [vmem:[%s9 + $0x3d0] sm:$0xff]
          %v5599 = vld [vmem:[%s9 + $0x3d8] sm:$0xff]
          %v5600 = vld [vmem:[%s9 + $0x3e0] sm:$0xff]
          %v5601 = vld [vmem:[%s9 + $0x3e8] sm:$0xff]
          %v5602 = vld [vmem:[%s9 + $0x3f0] sm:$0xff]
          %v5603 = vld [vmem:[%s9 + $0x3f8] sm:$0xff]
          %v5604 = vld [vmem:[#allocation13] sm:$0xf]
          %v5606 = vlaneseq
          %v5607 = vshrl.u32 %v5606, 7
          %v5608 = vsub.s32 0, %v5607
          %v5609 = vrot.slane %v5604, %v5608
          %v5610 = vlaneseq
          %v5611 = vshrl.u32 %v5610, 7
          %v5612 = vsub.s32 1, %v5611
          %v5613 = vrot.slane %v5604, %v5612
          %v5614 = vlaneseq
          %v5615 = vshrl.u32 %v5614, 7
          %v5616 = vsub.s32 2, %v5615
          %v5617 = vrot.slane %v5604, %v5616
          %v5618 = vlaneseq
          %v5619 = vshrl.u32 %v5618, 7
          %v5620 = vsub.s32 3, %v5619
          %v5621 = vrot.slane %v5604, %v5620
          %v5754 = vunpack.c.l.b16 %v5476
          %v5755 = vunpack.c.h.b16 %v5476
          %v5756 = vunpack.c.l.b16 %v5477
          %v5757 = vunpack.c.h.b16 %v5477
          %v5758 = vunpack.c.l.b16 %v5478
          %v5759 = vunpack.c.h.b16 %v5478
          %v5760 = vunpack.c.l.b16 %v5479
          %v5761 = vunpack.c.h.b16 %v5479
          %v5762 = vunpack.c.l.b16 %v5480
          %v5763 = vunpack.c.h.b16 %v5480
          %v5764 = vunpack.c.l.b16 %v5481
          %v5765 = vunpack.c.h.b16 %v5481
          %v5766 = vunpack.c.l.b16 %v5482
          %v5767 = vunpack.c.h.b16 %v5482
          %v5768 = vunpack.c.l.b16 %v5483
          %v5769 = vunpack.c.h.b16 %v5483
          %v5770 = vunpack.c.l.b16 %v5484
          %v5771 = vunpack.c.h.b16 %v5484
          %v5772 = vunpack.c.l.b16 %v5485
          %v5773 = vunpack.c.h.b16 %v5485
          %v5774 = vunpack.c.l.b16 %v5486
          %v5775 = vunpack.c.h.b16 %v5486
          %v5776 = vunpack.c.l.b16 %v5487
          %v5777 = vunpack.c.h.b16 %v5487
          %v5778 = vunpack.c.l.b16 %v5488
          %v5779 = vunpack.c.h.b16 %v5488
          %v5780 = vunpack.c.l.b16 %v5489
          %v5781 = vunpack.c.h.b16 %v5489
          %v5782 = vunpack.c.l.b16 %v5490
          %v5783 = vunpack.c.h.b16 %v5490
          %v5784 = vunpack.c.l.b16 %v5491
          %v5785 = vunpack.c.h.b16 %v5491
          %v5786 = vunpack.c.l.b16 %v5492
          %v5787 = vunpack.c.h.b16 %v5492
          %v5788 = vunpack.c.l.b16 %v5493
          %v5789 = vunpack.c.h.b16 %v5493
          %v5790 = vunpack.c.l.b16 %v5494
          %v5791 = vunpack.c.h.b16 %v5494
          %v5792 = vunpack.c.l.b16 %v5495
          %v5793 = vunpack.c.h.b16 %v5495
          %v5794 = vunpack.c.l.b16 %v5496
          %v5795 = vunpack.c.h.b16 %v5496
          %v5796 = vunpack.c.l.b16 %v5497
          %v5797 = vunpack.c.h.b16 %v5497
          %v5798 = vunpack.c.l.b16 %v5498
          %v5799 = vunpack.c.h.b16 %v5498
          %v5800 = vunpack.c.l.b16 %v5499
          %v5801 = vunpack.c.h.b16 %v5499
          %v5802 = vunpack.c.l.b16 %v5500
          %v5803 = vunpack.c.h.b16 %v5500
          %v5804 = vunpack.c.l.b16 %v5501
          %v5805 = vunpack.c.h.b16 %v5501
          %v5806 = vunpack.c.l.b16 %v5502
          %v5807 = vunpack.c.h.b16 %v5502
          %v5808 = vunpack.c.l.b16 %v5503
          %v5809 = vunpack.c.h.b16 %v5503
          %v5810 = vunpack.c.l.b16 %v5504
          %v5811 = vunpack.c.h.b16 %v5504
          %v5812 = vunpack.c.l.b16 %v5505
          %v5813 = vunpack.c.h.b16 %v5505
          %v5814 = vunpack.c.l.b16 %v5506
          %v5815 = vunpack.c.h.b16 %v5506
          %v5816 = vunpack.c.l.b16 %v5507
          %v5817 = vunpack.c.h.b16 %v5507
          %v5818 = vunpack.c.l.b16 %v5508
          %v5819 = vunpack.c.h.b16 %v5508
          %v5820 = vunpack.c.l.b16 %v5509
          %v5821 = vunpack.c.h.b16 %v5509
          %v5822 = vunpack.c.l.b16 %v5510
          %v5823 = vunpack.c.h.b16 %v5510
          %v5824 = vunpack.c.l.b16 %v5511
          %v5825 = vunpack.c.h.b16 %v5511
          %v5826 = vunpack.c.l.b16 %v5512
          %v5827 = vunpack.c.h.b16 %v5512
          %v5828 = vunpack.c.l.b16 %v5513
          %v5829 = vunpack.c.h.b16 %v5513
          %v5830 = vunpack.c.l.b16 %v5514
          %v5831 = vunpack.c.h.b16 %v5514
          %v5832 = vunpack.c.l.b16 %v5515
          %v5833 = vunpack.c.h.b16 %v5515
          %v5834 = vunpack.c.l.b16 %v5516
          %v5835 = vunpack.c.h.b16 %v5516
          %v5836 = vunpack.c.l.b16 %v5517
          %v5837 = vunpack.c.h.b16 %v5517
          %v5838 = vunpack.c.l.b16 %v5518
          %v5839 = vunpack.c.h.b16 %v5518
          %v5840 = vunpack.c.l.b16 %v5519
          %v5841 = vunpack.c.h.b16 %v5519
          %v5842 = vunpack.c.l.b16 %v5520
          %v5843 = vunpack.c.h.b16 %v5520
          %v5844 = vunpack.c.l.b16 %v5521
          %v5845 = vunpack.c.h.b16 %v5521
          %v5846 = vunpack.c.l.b16 %v5522
          %v5847 = vunpack.c.h.b16 %v5522
          %v5848 = vunpack.c.l.b16 %v5523
          %v5849 = vunpack.c.h.b16 %v5523
          %v5850 = vunpack.c.l.b16 %v5524
          %v5851 = vunpack.c.h.b16 %v5524
          %v5852 = vunpack.c.l.b16 %v5525
          %v5853 = vunpack.c.h.b16 %v5525
          %v5854 = vunpack.c.l.b16 %v5526
          %v5855 = vunpack.c.h.b16 %v5526
          %v5856 = vunpack.c.l.b16 %v5527
          %v5857 = vunpack.c.h.b16 %v5527
          %v5858 = vunpack.c.l.b16 %v5528
          %v5859 = vunpack.c.h.b16 %v5528
          %v5860 = vunpack.c.l.b16 %v5529
          %v5861 = vunpack.c.h.b16 %v5529
          %v5862 = vunpack.c.l.b16 %v5530
          %v5863 = vunpack.c.h.b16 %v5530
          %v5864 = vunpack.c.l.b16 %v5531
          %v5865 = vunpack.c.h.b16 %v5531
          %v5866 = vunpack.c.l.b16 %v5532
          %v5867 = vunpack.c.h.b16 %v5532
          %v5868 = vunpack.c.l.b16 %v5533
          %v5869 = vunpack.c.h.b16 %v5533
          %v5870 = vunpack.c.l.b16 %v5534
          %v5871 = vunpack.c.h.b16 %v5534
          %v5872 = vunpack.c.l.b16 %v5535
          %v5873 = vunpack.c.h.b16 %v5535
          %v5874 = vunpack.c.l.b16 %v5536
          %v5875 = vunpack.c.h.b16 %v5536
          %v5876 = vunpack.c.l.b16 %v5537
          %v5877 = vunpack.c.h.b16 %v5537
          %v5878 = vunpack.c.l.b16 %v5538
          %v5879 = vunpack.c.h.b16 %v5538
          %v5880 = vunpack.c.l.b16 %v5539
          %v5881 = vunpack.c.h.b16 %v5539
          %v5882 = vunpack.c.l.b16 %v5540
          %v5883 = vunpack.c.h.b16 %v5540
          %v5884 = vunpack.c.l.b16 %v5541
          %v5885 = vunpack.c.h.b16 %v5541
          %v5886 = vunpack.c.l.b16 %v5542
          %v5887 = vunpack.c.h.b16 %v5542
          %v5888 = vunpack.c.l.b16 %v5543
          %v5889 = vunpack.c.h.b16 %v5543
          %v5890 = vunpack.c.l.b16 %v5544
          %v5891 = vunpack.c.h.b16 %v5544
          %v5892 = vunpack.c.l.b16 %v5545
          %v5893 = vunpack.c.h.b16 %v5545
          %v5894 = vunpack.c.l.b16 %v5546
          %v5895 = vunpack.c.h.b16 %v5546
          %v5896 = vunpack.c.l.b16 %v5547
          %v5897 = vunpack.c.h.b16 %v5547
          %v5898 = vunpack.c.l.b16 %v5548
          %v5899 = vunpack.c.h.b16 %v5548
          %v5900 = vunpack.c.l.b16 %v5549
          %v5901 = vunpack.c.h.b16 %v5549
          %v5902 = vunpack.c.l.b16 %v5550
          %v5903 = vunpack.c.h.b16 %v5550
          %v5904 = vunpack.c.l.b16 %v5551
          %v5905 = vunpack.c.h.b16 %v5551
          %v5906 = vunpack.c.l.b16 %v5552
          %v5907 = vunpack.c.h.b16 %v5552
          %v5908 = vunpack.c.l.b16 %v5553
          %v5909 = vunpack.c.h.b16 %v5553
          %v5910 = vunpack.c.l.b16 %v5554
          %v5911 = vunpack.c.h.b16 %v5554
          %v5912 = vunpack.c.l.b16 %v5555
          %v5913 = vunpack.c.h.b16 %v5555
          %v5914 = vunpack.c.l.b16 %v5556
          %v5915 = vunpack.c.h.b16 %v5556
          %v5916 = vunpack.c.l.b16 %v5557
          %v5917 = vunpack.c.h.b16 %v5557
          %v5918 = vunpack.c.l.b16 %v5558
          %v5919 = vunpack.c.h.b16 %v5558
          %v5920 = vunpack.c.l.b16 %v5559
          %v5921 = vunpack.c.h.b16 %v5559
          %v5922 = vunpack.c.l.b16 %v5560
          %v5923 = vunpack.c.h.b16 %v5560
          %v5924 = vunpack.c.l.b16 %v5561
          %v5925 = vunpack.c.h.b16 %v5561
          %v5926 = vunpack.c.l.b16 %v5562
          %v5927 = vunpack.c.h.b16 %v5562
          %v5928 = vunpack.c.l.b16 %v5563
          %v5929 = vunpack.c.h.b16 %v5563
          %v5930 = vunpack.c.l.b16 %v5564
          %v5931 = vunpack.c.h.b16 %v5564
          %v5932 = vunpack.c.l.b16 %v5565
          %v5933 = vunpack.c.h.b16 %v5565
          %v5934 = vunpack.c.l.b16 %v5566
          %v5935 = vunpack.c.h.b16 %v5566
          %v5936 = vunpack.c.l.b16 %v5567
          %v5937 = vunpack.c.h.b16 %v5567
          %v5938 = vunpack.c.l.b16 %v5568
          %v5939 = vunpack.c.h.b16 %v5568
          %v5940 = vunpack.c.l.b16 %v5569
          %v5941 = vunpack.c.h.b16 %v5569
          %v5942 = vunpack.c.l.b16 %v5570
          %v5943 = vunpack.c.h.b16 %v5570
          %v5944 = vunpack.c.l.b16 %v5571
          %v5945 = vunpack.c.h.b16 %v5571
          %v5946 = vunpack.c.l.b16 %v5572
          %v5947 = vunpack.c.h.b16 %v5572
          %v5948 = vunpack.c.l.b16 %v5573
          %v5949 = vunpack.c.h.b16 %v5573
          %v5950 = vunpack.c.l.b16 %v5574
          %v5951 = vunpack.c.h.b16 %v5574
          %v5952 = vunpack.c.l.b16 %v5575
          %v5953 = vunpack.c.h.b16 %v5575
          %v5954 = vunpack.c.l.b16 %v5576
          %v5955 = vunpack.c.h.b16 %v5576
          %v5956 = vunpack.c.l.b16 %v5577
          %v5957 = vunpack.c.h.b16 %v5577
          %v5958 = vunpack.c.l.b16 %v5578
          %v5959 = vunpack.c.h.b16 %v5578
          %v5960 = vunpack.c.l.b16 %v5579
          %v5961 = vunpack.c.h.b16 %v5579
          %v5962 = vunpack.c.l.b16 %v5580
          %v5963 = vunpack.c.h.b16 %v5580
          %v5964 = vunpack.c.l.b16 %v5581
          %v5965 = vunpack.c.h.b16 %v5581
          %v5966 = vunpack.c.l.b16 %v5582
          %v5967 = vunpack.c.h.b16 %v5582
          %v5968 = vunpack.c.l.b16 %v5583
          %v5969 = vunpack.c.h.b16 %v5583
          %v5970 = vunpack.c.l.b16 %v5584
          %v5971 = vunpack.c.h.b16 %v5584
          %v5972 = vunpack.c.l.b16 %v5585
          %v5973 = vunpack.c.h.b16 %v5585
          %v5974 = vunpack.c.l.b16 %v5586
          %v5975 = vunpack.c.h.b16 %v5586
          %v5976 = vunpack.c.l.b16 %v5587
          %v5977 = vunpack.c.h.b16 %v5587
          %v5978 = vunpack.c.l.b16 %v5588
          %v5979 = vunpack.c.h.b16 %v5588
          %v5980 = vunpack.c.l.b16 %v5589
          %v5981 = vunpack.c.h.b16 %v5589
          %v5982 = vunpack.c.l.b16 %v5590
          %v5983 = vunpack.c.h.b16 %v5590
          %v5984 = vunpack.c.l.b16 %v5591
          %v5985 = vunpack.c.h.b16 %v5591
          %v5986 = vunpack.c.l.b16 %v5592
          %v5987 = vunpack.c.h.b16 %v5592
          %v5988 = vunpack.c.l.b16 %v5593
          %v5989 = vunpack.c.h.b16 %v5593
          %v5990 = vunpack.c.l.b16 %v5594
          %v5991 = vunpack.c.h.b16 %v5594
          %v5992 = vunpack.c.l.b16 %v5595
          %v5993 = vunpack.c.h.b16 %v5595
          %v5994 = vunpack.c.l.b16 %v5596
          %v5995 = vunpack.c.h.b16 %v5596
          %v5996 = vunpack.c.l.b16 %v5597
          %v5997 = vunpack.c.h.b16 %v5597
          %v5998 = vunpack.c.l.b16 %v5598
          %v5999 = vunpack.c.h.b16 %v5598
          %v6000 = vunpack.c.l.b16 %v5599
          %v6001 = vunpack.c.h.b16 %v5599
          %v6002 = vunpack.c.l.b16 %v5600
          %v6003 = vunpack.c.h.b16 %v5600
          %v6004 = vunpack.c.l.b16 %v5601
          %v6005 = vunpack.c.h.b16 %v5601
          %v6006 = vunpack.c.l.b16 %v5602
          %v6007 = vunpack.c.h.b16 %v5602
          %v6008 = vunpack.c.l.b16 %v5603
          %v6009 = vunpack.c.h.b16 %v5603
          %v6010 = vpack.c.b16 %v5758, %v5754
          %v6011 = vpack.c.b16 %v5759, %v5755
          %v6012 = vpack.c.b16 %v5760, %v5756
          %v6013 = vpack.c.b16 %v5761, %v5757
          %v6014 = vpack.c.b16 %v5766, %v5762
          %v6015 = vpack.c.b16 %v5767, %v5763
          %v6016 = vpack.c.b16 %v5768, %v5764
          %v6017 = vpack.c.b16 %v5769, %v5765
          %v6018 = vpack.c.b16 %v5774, %v5770
          %v6019 = vpack.c.b16 %v5775, %v5771
          %v6020 = vpack.c.b16 %v5776, %v5772
          %v6021 = vpack.c.b16 %v5777, %v5773
          %v6022 = vpack.c.b16 %v5782, %v5778
          %v6023 = vpack.c.b16 %v5783, %v5779
          %v6024 = vpack.c.b16 %v5784, %v5780
          %v6025 = vpack.c.b16 %v5785, %v5781
          %v6026 = vpack.c.b16 %v5790, %v5786
          %v6027 = vpack.c.b16 %v5791, %v5787
          %v6028 = vpack.c.b16 %v5792, %v5788
          %v6029 = vpack.c.b16 %v5793, %v5789
          %v6030 = vpack.c.b16 %v5798, %v5794
          %v6031 = vpack.c.b16 %v5799, %v5795
          %v6032 = vpack.c.b16 %v5800, %v5796
          %v6033 = vpack.c.b16 %v5801, %v5797
          %v6034 = vpack.c.b16 %v5806, %v5802
          %v6035 = vpack.c.b16 %v5807, %v5803
          %v6036 = vpack.c.b16 %v5808, %v5804
          %v6037 = vpack.c.b16 %v5809, %v5805
          %v6038 = vpack.c.b16 %v5814, %v5810
          %v6039 = vpack.c.b16 %v5815, %v5811
          %v6040 = vpack.c.b16 %v5816, %v5812
          %v6041 = vpack.c.b16 %v5817, %v5813
          %v6042 = vpack.c.b16 %v5822, %v5818
          %v6043 = vpack.c.b16 %v5823, %v5819
          %v6044 = vpack.c.b16 %v5824, %v5820
          %v6045 = vpack.c.b16 %v5825, %v5821
          %v6046 = vpack.c.b16 %v5830, %v5826
          %v6047 = vpack.c.b16 %v5831, %v5827
          %v6048 = vpack.c.b16 %v5832, %v5828
          %v6049 = vpack.c.b16 %v5833, %v5829
          %v6050 = vpack.c.b16 %v5838, %v5834
          %v6051 = vpack.c.b16 %v5839, %v5835
          %v6052 = vpack.c.b16 %v5840, %v5836
          %v6053 = vpack.c.b16 %v5841, %v5837
          %v6054 = vpack.c.b16 %v5846, %v5842
          %v6055 = vpack.c.b16 %v5847, %v5843
          %v6056 = vpack.c.b16 %v5848, %v5844
          %v6057 = vpack.c.b16 %v5849, %v5845
          %v6058 = vpack.c.b16 %v5854, %v5850
          %v6059 = vpack.c.b16 %v5855, %v5851
          %v6060 = vpack.c.b16 %v5856, %v5852
          %v6061 = vpack.c.b16 %v5857, %v5853
          %v6062 = vpack.c.b16 %v5862, %v5858
          %v6063 = vpack.c.b16 %v5863, %v5859
          %v6064 = vpack.c.b16 %v5864, %v5860
          %v6065 = vpack.c.b16 %v5865, %v5861
          %v6066 = vpack.c.b16 %v5870, %v5866
          %v6067 = vpack.c.b16 %v5871, %v5867
          %v6068 = vpack.c.b16 %v5872, %v5868
          %v6069 = vpack.c.b16 %v5873, %v5869
          %v6070 = vpack.c.b16 %v5878, %v5874
          %v6071 = vpack.c.b16 %v5879, %v5875
          %v6072 = vpack.c.b16 %v5880, %v5876
          %v6073 = vpack.c.b16 %v5881, %v5877
          %v6074 = vpack.c.b16 %v5886, %v5882
          %v6075 = vpack.c.b16 %v5887, %v5883
          %v6076 = vpack.c.b16 %v5888, %v5884
          %v6077 = vpack.c.b16 %v5889, %v5885
          %v6078 = vpack.c.b16 %v5894, %v5890
          %v6079 = vpack.c.b16 %v5895, %v5891
          %v6080 = vpack.c.b16 %v5896, %v5892
          %v6081 = vpack.c.b16 %v5897, %v5893
          %v6082 = vpack.c.b16 %v5902, %v5898
          %v6083 = vpack.c.b16 %v5903, %v5899
          %v6084 = vpack.c.b16 %v5904, %v5900
          %v6085 = vpack.c.b16 %v5905, %v5901
          %v6086 = vpack.c.b16 %v5910, %v5906
          %v6087 = vpack.c.b16 %v5911, %v5907
          %v6088 = vpack.c.b16 %v5912, %v5908
          %v6089 = vpack.c.b16 %v5913, %v5909
          %v6090 = vpack.c.b16 %v5918, %v5914
          %v6091 = vpack.c.b16 %v5919, %v5915
          %v6092 = vpack.c.b16 %v5920, %v5916
          %v6093 = vpack.c.b16 %v5921, %v5917
          %v6094 = vpack.c.b16 %v5926, %v5922
          %v6095 = vpack.c.b16 %v5927, %v5923
          %v6096 = vpack.c.b16 %v5928, %v5924
          %v6097 = vpack.c.b16 %v5929, %v5925
          %v6098 = vpack.c.b16 %v5934, %v5930
          %v6099 = vpack.c.b16 %v5935, %v5931
          %v6100 = vpack.c.b16 %v5936, %v5932
          %v6101 = vpack.c.b16 %v5937, %v5933
          %v6102 = vpack.c.b16 %v5942, %v5938
          %v6103 = vpack.c.b16 %v5943, %v5939
          %v6104 = vpack.c.b16 %v5944, %v5940
          %v6105 = vpack.c.b16 %v5945, %v5941
          %v6106 = vpack.c.b16 %v5950, %v5946
          %v6107 = vpack.c.b16 %v5951, %v5947
          %v6108 = vpack.c.b16 %v5952, %v5948
          %v6109 = vpack.c.b16 %v5953, %v5949
          %v6110 = vpack.c.b16 %v5958, %v5954
          %v6111 = vpack.c.b16 %v5959, %v5955
          %v6112 = vpack.c.b16 %v5960, %v5956
          %v6113 = vpack.c.b16 %v5961, %v5957
          %v6114 = vpack.c.b16 %v5966, %v5962
          %v6115 = vpack.c.b16 %v5967, %v5963
          %v6116 = vpack.c.b16 %v5968, %v5964
          %v6117 = vpack.c.b16 %v5969, %v5965
          %v6118 = vpack.c.b16 %v5974, %v5970
          %v6119 = vpack.c.b16 %v5975, %v5971
          %v6120 = vpack.c.b16 %v5976, %v5972
          %v6121 = vpack.c.b16 %v5977, %v5973
          %v6122 = vpack.c.b16 %v5982, %v5978
          %v6123 = vpack.c.b16 %v5983, %v5979
          %v6124 = vpack.c.b16 %v5984, %v5980
          %v6125 = vpack.c.b16 %v5985, %v5981
          %v6126 = vpack.c.b16 %v5990, %v5986
          %v6127 = vpack.c.b16 %v5991, %v5987
          %v6128 = vpack.c.b16 %v5992, %v5988
          %v6129 = vpack.c.b16 %v5993, %v5989
          %v6130 = vpack.c.b16 %v5998, %v5994
          %v6131 = vpack.c.b16 %v5999, %v5995
          %v6132 = vpack.c.b16 %v6000, %v5996
          %v6133 = vpack.c.b16 %v6001, %v5997
          %v6134 = vpack.c.b16 %v6006, %v6002
          %v6135 = vpack.c.b16 %v6007, %v6003
          %v6136 = vpack.c.b16 %v6008, %v6004
          %v6137 = vpack.c.b16 %v6009, %v6005
          %6266 = vmatprep.subr.bf16.mxu0 %v6011
          %6267 = vmatpush1.bf16.msra.mxu0 %v6010
          %6268 = vmatprep.subr.bf16.mxu0 %v6015
          %6269 = vmatpush1.bf16.msra.mxu0 %v6014
          %6270 = vmatprep.subr.bf16.mxu0 %v6019
          %6271 = vmatpush1.bf16.msra.mxu0 %v6018
          %6272 = vmatprep.subr.bf16.mxu0 %v6023
          %6273 = vmatpush1.bf16.msra.mxu0 %v6022
          %6274 = vmatprep.subr.bf16.mxu0 %v6027
          %6275 = vmatpush1.bf16.msra.mxu0 %v6026
          %6276 = vmatprep.subr.bf16.mxu0 %v6031
          %6277 = vmatpush1.bf16.msra.mxu0 %v6030
          %6278 = vmatprep.subr.bf16.mxu0 %v6035
          %6279 = vmatpush1.bf16.msra.mxu0 %v6034
          %6280 = vmatprep.subr.bf16.mxu0 %v6039
          %6281 = vmatpush1.bf16.msra.mxu0 %v6038
          %6282 = vmatprep.subr.bf16.mxu0 %v6043
          %6283 = vmatpush1.bf16.msra.mxu0 %v6042
          %6284 = vmatprep.subr.bf16.mxu0 %v6047
          %6285 = vmatpush1.bf16.msra.mxu0 %v6046
          %6286 = vmatprep.subr.bf16.mxu0 %v6051
          %6287 = vmatpush1.bf16.msra.mxu0 %v6050
          %6288 = vmatprep.subr.bf16.mxu0 %v6055
          %6289 = vmatpush1.bf16.msra.mxu0 %v6054
          %6290 = vmatprep.subr.bf16.mxu0 %v6059
          %6291 = vmatpush1.bf16.msra.mxu0 %v6058
          %6292 = vmatprep.subr.bf16.mxu0 %v6063
          %6293 = vmatpush1.bf16.msra.mxu0 %v6062
          %6294 = vmatprep.subr.bf16.mxu0 %v6067
          %6295 = vmatpush1.bf16.msra.mxu0 %v6066
          %6296 = vmatprep.subr.bf16.mxu0 %v6071
          %6297 = vmatpush1.bf16.msra.mxu0 %v6070
          %6298 = vmatprep.mubr.bf16.mxu0 %v5473
          %6299 = vmatmul.mubr.bf16.gmra.mrb[0].mxu0 %v5472
          %v6300 = vpop.f32.mrb[0].mxu0
          %v6301 = vadd.f32 %v5609, %v6300
          %v6302 = vpop.f32.mrb[0].mxu0
          %v6303 = vadd.f32 %v5613, %v6302
          %v6304 = vpop.f32.mrb[0].mxu0
          %v6305 = vpop.f32.mrb[0].mxu0
          %6306 = vdwg.mxu0
          %6307 = vmatprep.subr.bf16.mxu0 %v6075
          %6308 = vmatpush1.bf16.msra.mxu0 %v6074
          %6309 = vmatprep.subr.bf16.mxu0 %v6079
          %6310 = vmatpush1.bf16.msra.mxu0 %v6078
          %6311 = vmatprep.subr.bf16.mxu0 %v6083
          %6312 = vmatpush1.bf16.msra.mxu0 %v6082
          %6313 = vmatprep.subr.bf16.mxu0 %v6087
          %6314 = vmatpush1.bf16.msra.mxu0 %v6086
          %6315 = vmatprep.subr.bf16.mxu0 %v6091
          %6316 = vmatpush1.bf16.msra.mxu0 %v6090
          %6317 = vmatprep.subr.bf16.mxu0 %v6095
          %6318 = vmatpush1.bf16.msra.mxu0 %v6094
          %6319 = vmatprep.subr.bf16.mxu0 %v6099
          %6320 = vmatpush1.bf16.msra.mxu0 %v6098
          %6321 = vmatprep.subr.bf16.mxu0 %v6103
          %6322 = vmatpush1.bf16.msra.mxu0 %v6102
          %6323 = vmatprep.subr.bf16.mxu0 %v6107
          %6324 = vmatpush1.bf16.msra.mxu0 %v6106
          %6325 = vmatprep.subr.bf16.mxu0 %v6111
          %6326 = vmatpush1.bf16.msra.mxu0 %v6110
          %6327 = vmatprep.subr.bf16.mxu0 %v6115
          %6328 = vmatpush1.bf16.msra.mxu0 %v6114
          %6329 = vmatprep.subr.bf16.mxu0 %v6119
          %6330 = vmatpush1.bf16.msra.mxu0 %v6118
          %6331 = vmatprep.subr.bf16.mxu0 %v6123
          %6332 = vmatpush1.bf16.msra.mxu0 %v6122
          %6333 = vmatprep.subr.bf16.mxu0 %v6127
          %6334 = vmatpush1.bf16.msra.mxu0 %v6126
          %6335 = vmatprep.subr.bf16.mxu0 %v6131
          %6336 = vmatpush1.bf16.msra.mxu0 %v6130
          %6337 = vmatprep.subr.bf16.mxu0 %v6135
          %6338 = vmatpush1.bf16.msra.mxu0 %v6134
          %6339 = vmatprep.mubr.bf16.mxu0 %v5475
          %6340 = vmatmul.mubr.bf16.gmra.mrb[0].mxu0 %v5474
          %v6341 = vpop.f32.mrb[0].mxu0
          %v6342 = vadd.f32 %v6301, %v6341
          %v6343 = vpop.f32.mrb[0].mxu0
          %v6344 = vadd.f32 %v6303, %v6343
          %v6345 = vpop.f32.mrb[0].mxu0
          %v6346 = vpop.f32.mrb[0].mxu0
          %6347 = vdwg.mxu0
          %6348 = vmatprep.subr.bf16.mxu0 %v6013
          %6349 = vmatpush1.bf16.msra.mxu0 %v6012
          %6350 = vmatprep.subr.bf16.mxu0 %v6017
          %6351 = vmatpush1.bf16.msra.mxu0 %v6016
          %6352 = vmatprep.subr.bf16.mxu0 %v6021
          %6353 = vmatpush1.bf16.msra.mxu0 %v6020
          %6354 = vmatprep.subr.bf16.mxu0 %v6025
          %6355 = vmatpush1.bf16.msra.mxu0 %v6024
          %6356 = vmatprep.subr.bf16.mxu0 %v6029
          %6357 = vmatpush1.bf16.msra.mxu0 %v6028
          %6358 = vmatprep.subr.bf16.mxu0 %v6033
          %6359 = vmatpush1.bf16.msra.mxu0 %v6032
          %6360 = vmatprep.subr.bf16.mxu0 %v6037
          %6361 = vmatpush1.bf16.msra.mxu0 %v6036
          %6362 = vmatprep.subr.bf16.mxu0 %v6041
          %6363 = vmatpush1.bf16.msra.mxu0 %v6040
          %6364 = vmatprep.subr.bf16.mxu0 %v6045
          %6365 = vmatpush1.bf16.msra.mxu0 %v6044
          %6366 = vmatprep.subr.bf16.mxu0 %v6049
          %6367 = vmatpush1.bf16.msra.mxu0 %v6048
          %6368 = vmatprep.subr.bf16.mxu0 %v6053
          %6369 = vmatpush1.bf16.msra.mxu0 %v6052
          %6370 = vmatprep.subr.bf16.mxu0 %v6057
          %6371 = vmatpush1.bf16.msra.mxu0 %v6056
          %6372 = vmatprep.subr.bf16.mxu0 %v6061
          %6373 = vmatpush1.bf16.msra.mxu0 %v6060
          %6374 = vmatprep.subr.bf16.mxu0 %v6065
          %6375 = vmatpush1.bf16.msra.mxu0 %v6064
          %6376 = vmatprep.subr.bf16.mxu0 %v6069
          %6377 = vmatpush1.bf16.msra.mxu0 %v6068
          %6378 = vmatprep.subr.bf16.mxu0 %v6073
          %6379 = vmatpush1.bf16.msra.mxu0 %v6072
          %6380 = vmatprep.mubr.bf16.mxu0 %v5473
          %6381 = vmatmul.mubr.bf16.gmra.mrb[0].mxu0 %v5472
          %v6382 = vpop.f32.mrb[0].mxu0
          %v6383 = vadd.f32 %v5617, %v6382
          %v6384 = vpop.f32.mrb[0].mxu0
          %v6385 = vadd.f32 %v5621, %v6384
          %v6386 = vpop.f32.mrb[0].mxu0
          %v6387 = vpop.f32.mrb[0].mxu0
          %6388 = vdwg.mxu0
          %6389 = vmatprep.subr.bf16.mxu0 %v6077
          %6390 = vmatpush1.bf16.msra.mxu0 %v6076
          %6391 = vmatprep.subr.bf16.mxu0 %v6081
          %6392 = vmatpush1.bf16.msra.mxu0 %v6080
          %6393 = vmatprep.subr.bf16.mxu0 %v6085
          %6394 = vmatpush1.bf16.msra.mxu0 %v6084
          %6395 = vmatprep.subr.bf16.mxu0 %v6089
          %6396 = vmatpush1.bf16.msra.mxu0 %v6088
          %6397 = vmatprep.subr.bf16.mxu0 %v6093
          %6398 = vmatpush1.bf16.msra.mxu0 %v6092
          %6399 = vmatprep.subr.bf16.mxu0 %v6097
          %6400 = vmatpush1.bf16.msra.mxu0 %v6096
          %6401 = vmatprep.subr.bf16.mxu0 %v6101
          %6402 = vmatpush1.bf16.msra.mxu0 %v6100
          %6403 = vmatprep.subr.bf16.mxu0 %v6105
          %6404 = vmatpush1.bf16.msra.mxu0 %v6104
          %6405 = vmatprep.subr.bf16.mxu0 %v6109
          %6406 = vmatpush1.bf16.msra.mxu0 %v6108
          %6407 = vmatprep.subr.bf16.mxu0 %v6113
          %6408 = vmatpush1.bf16.msra.mxu0 %v6112
          %6409 = vmatprep.subr.bf16.mxu0 %v6117
          %6410 = vmatpush1.bf16.msra.mxu0 %v6116
          %6411 = vmatprep.subr.bf16.mxu0 %v6121
          %6412 = vmatpush1.bf16.msra.mxu0 %v6120
          %6413 = vmatprep.subr.bf16.mxu0 %v6125
          %6414 = vmatpush1.bf16.msra.mxu0 %v6124
          %6415 = vmatprep.subr.bf16.mxu0 %v6129
          %6416 = vmatpush1.bf16.msra.mxu0 %v6128
          %6417 = vmatprep.subr.bf16.mxu0 %v6133
          %6418 = vmatpush1.bf16.msra.mxu0 %v6132
          %6419 = vmatprep.subr.bf16.mxu0 %v6137
          %6420 = vmatpush1.bf16.msra.mxu0 %v6136
          %6421 = vmatprep.mubr.bf16.mxu0 %v5475
          %6422 = vmatmul.mubr.bf16.gmra.mrb[0].mxu0 %v5474
          %v6423 = vpop.f32.mrb[0].mxu0
          %v6424 = vadd.f32 %v6383, %v6423
          %v6425 = vpop.f32.mrb[0].mxu0
          %v6426 = vadd.f32 %v6385, %v6425
          %v6427 = vpop.f32.mrb[0].mxu0
          %v6428 = vpop.f32.mrb[0].mxu0
          %6429 = vdwg.mxu0
          %v6430 = vmax.f32 %v6342, 0.0
          %v6431 = vmax.f32 %v6344, 0.0
          %v6432 = vmax.f32 %v6424, 0.0
          %v6433 = vmax.f32 %v6426, 0.0
          %v6434 = vld [vmem:[%s11] sm:$0xff]
          %v6435 = vld [vmem:[%s11 + $0x8] sm:$0xff]
          %v6436 = vld [vmem:[%s11 + $0x10] sm:$0xff]
          %v6437 = vld [vmem:[%s11 + $0x18] sm:$0xff]
          %v6438 = vld [vmem:[%s11 + $0x20] sm:$0xff]
          %v6439 = vld [vmem:[%s11 + $0x28] sm:$0xff]
          %v6440 = vld [vmem:[%s11 + $0x30] sm:$0xff]
          %v6441 = vld [vmem:[%s11 + $0x38] sm:$0xff]
          %v6442 = vld [vmem:[%s11 + $0x40] sm:$0xff]
          %v6443 = vld [vmem:[%s11 + $0x48] sm:$0xff]
          %v6444 = vld [vmem:[%s11 + $0x50] sm:$0xff]
          %v6445 = vld [vmem:[%s11 + $0x58] sm:$0xff]
          %v6446 = vld [vmem:[%s11 + $0x60] sm:$0xff]
          %v6447 = vld [vmem:[%s11 + $0x68] sm:$0xff]
          %v6448 = vld [vmem:[%s11 + $0x70] sm:$0xff]
          %v6449 = vld [vmem:[%s11 + $0x78] sm:$0xff]
          %v6450 = vld [vmem:[%s11 + $0x80] sm:$0xff]
          %v6451 = vld [vmem:[%s11 + $0x88] sm:$0xff]
          %v6452 = vld [vmem:[%s11 + $0x90] sm:$0xff]
          %v6453 = vld [vmem:[%s11 + $0x98] sm:$0xff]
          %v6454 = vld [vmem:[%s11 + $0xa0] sm:$0xff]
          %v6455 = vld [vmem:[%s11 + $0xa8] sm:$0xff]
          %v6456 = vld [vmem:[%s11 + $0xb0] sm:$0xff]
          %v6457 = vld [vmem:[%s11 + $0xb8] sm:$0xff]
          %v6458 = vld [vmem:[%s11 + $0xc0] sm:$0xff]
          %v6459 = vld [vmem:[%s11 + $0xc8] sm:$0xff]
          %v6460 = vld [vmem:[%s11 + $0xd0] sm:$0xff]
          %v6461 = vld [vmem:[%s11 + $0xd8] sm:$0xff]
          %v6462 = vld [vmem:[%s11 + $0xe0] sm:$0xff]
          %v6463 = vld [vmem:[%s11 + $0xe8] sm:$0xff]
          %v6464 = vld [vmem:[%s11 + $0xf0] sm:$0xff]
          %v6465 = vld [vmem:[%s11 + $0xf8] sm:$0xff]
          %v6466 = vld [vmem:[%s11 + $0x100] sm:$0xff]
          %v6467 = vld [vmem:[%s11 + $0x108] sm:$0xff]
          %v6468 = vld [vmem:[%s11 + $0x110] sm:$0xff]
          %v6469 = vld [vmem:[%s11 + $0x118] sm:$0xff]
          %v6470 = vld [vmem:[%s11 + $0x120] sm:$0xff]
          %v6471 = vld [vmem:[%s11 + $0x128] sm:$0xff]
          %v6472 = vld [vmem:[%s11 + $0x130] sm:$0xff]
          %v6473 = vld [vmem:[%s11 + $0x138] sm:$0xff]
          %v6474 = vld [vmem:[%s11 + $0x140] sm:$0xff]
          %v6475 = vld [vmem:[%s11 + $0x148] sm:$0xff]
          %v6476 = vld [vmem:[%s11 + $0x150] sm:$0xff]
          %v6477 = vld [vmem:[%s11 + $0x158] sm:$0xff]
          %v6478 = vld [vmem:[%s11 + $0x160] sm:$0xff]
          %v6479 = vld [vmem:[%s11 + $0x168] sm:$0xff]
          %v6480 = vld [vmem:[%s11 + $0x170] sm:$0xff]
          %v6481 = vld [vmem:[%s11 + $0x178] sm:$0xff]
          %v6482 = vld [vmem:[%s11 + $0x180] sm:$0xff]
          %v6483 = vld [vmem:[%s11 + $0x188] sm:$0xff]
          %v6484 = vld [vmem:[%s11 + $0x190] sm:$0xff]
          %v6485 = vld [vmem:[%s11 + $0x198] sm:$0xff]
          %v6486 = vld [vmem:[%s11 + $0x1a0] sm:$0xff]
          %v6487 = vld [vmem:[%s11 + $0x1a8] sm:$0xff]
          %v6488 = vld [vmem:[%s11 + $0x1b0] sm:$0xff]
          %v6489 = vld [vmem:[%s11 + $0x1b8] sm:$0xff]
          %v6490 = vld [vmem:[%s11 + $0x1c0] sm:$0xff]
          %v6491 = vld [vmem:[%s11 + $0x1c8] sm:$0xff]
          %v6492 = vld [vmem:[%s11 + $0x1d0] sm:$0xff]
          %v6493 = vld [vmem:[%s11 + $0x1d8] sm:$0xff]
          %v6494 = vld [vmem:[%s11 + $0x1e0] sm:$0xff]
          %v6495 = vld [vmem:[%s11 + $0x1e8] sm:$0xff]
          %v6496 = vld [vmem:[%s11 + $0x1f0] sm:$0xff]
          %v6497 = vld [vmem:[%s11 + $0x1f8] sm:$0xff]
          %v6498 = vld [vmem:[#allocation5] sm:$0x1]
          %v6500 = vlaneseq
          %v6501 = vshrl.u32 %v6500, 7
          %v6502 = vsub.s32 0, %v6501
          %v6503 = vrot.slane %v6498, %v6502
          %6505 = vmatprep.subr.mxu0 0.0
          %6506 = vmatpush1.msra.mxu0 %v6434
          %6507 = vmatprep.subr.mxu0 0.0
          %6508 = vmatpush1.msra.mxu0 %v6435
          %6509 = vmatprep.subr.mxu0 0.0
          %6510 = vmatpush1.msra.mxu0 %v6436
          %6511 = vmatprep.subr.mxu0 0.0
          %6512 = vmatpush1.msra.mxu0 %v6437
          %6513 = vmatprep.subr.mxu0 0.0
          %6514 = vmatpush1.msra.mxu0 %v6438
          %6515 = vmatprep.subr.mxu0 0.0
          %6516 = vmatpush1.msra.mxu0 %v6439
          %6517 = vmatprep.subr.mxu0 0.0
          %6518 = vmatpush1.msra.mxu0 %v6440
          %6519 = vmatprep.subr.mxu0 0.0
          %6520 = vmatpush1.msra.mxu0 %v6441
          %6521 = vmatprep.subr.mxu0 0.0
          %6522 = vmatpush1.msra.mxu0 %v6442
          %6523 = vmatprep.subr.mxu0 0.0
          %6524 = vmatpush1.msra.mxu0 %v6443
          %6525 = vmatprep.subr.mxu0 0.0
          %6526 = vmatpush1.msra.mxu0 %v6444
          %6527 = vmatprep.subr.mxu0 0.0
          %6528 = vmatpush1.msra.mxu0 %v6445
          %6529 = vmatprep.subr.mxu0 0.0
          %6530 = vmatpush1.msra.mxu0 %v6446
          %6531 = vmatprep.subr.mxu0 0.0
          %6532 = vmatpush1.msra.mxu0 %v6447
          %6533 = vmatprep.subr.mxu0 0.0
          %6534 = vmatpush1.msra.mxu0 %v6448
          %6535 = vmatprep.subr.mxu0 0.0
          %6536 = vmatpush1.msra.mxu0 %v6449
          %6537 = vmatprep.subr.mxu0 0.0
          %6538 = vmatpush1.msra.mxu0 %v6450
          %6539 = vmatprep.subr.mxu0 0.0
          %6540 = vmatpush1.msra.mxu0 %v6451
          %6541 = vmatprep.subr.mxu0 0.0
          %6542 = vmatpush1.msra.mxu0 %v6452
          %6543 = vmatprep.subr.mxu0 0.0
          %6544 = vmatpush1.msra.mxu0 %v6453
          %6545 = vmatprep.subr.mxu0 0.0
          %6546 = vmatpush1.msra.mxu0 %v6454
          %6547 = vmatprep.subr.mxu0 0.0
          %6548 = vmatpush1.msra.mxu0 %v6455
          %6549 = vmatprep.subr.mxu0 0.0
          %6550 = vmatpush1.msra.mxu0 %v6456
          %6551 = vmatprep.subr.mxu0 0.0
          %6552 = vmatpush1.msra.mxu0 %v6457
          %6553 = vmatprep.subr.mxu0 0.0
          %6554 = vmatpush1.msra.mxu0 %v6458
          %6555 = vmatprep.subr.mxu0 0.0
          %6556 = vmatpush1.msra.mxu0 %v6459
          %6557 = vmatprep.subr.mxu0 0.0
          %6558 = vmatpush1.msra.mxu0 %v6460
          %6559 = vmatprep.subr.mxu0 0.0
          %6560 = vmatpush1.msra.mxu0 %v6461
          %6561 = vmatprep.subr.mxu0 0.0
          %6562 = vmatpush1.msra.mxu0 %v6462
          %6563 = vmatprep.subr.mxu0 0.0
          %6564 = vmatpush1.msra.mxu0 %v6463
          %6565 = vmatprep.subr.mxu0 0.0
          %6566 = vmatpush1.msra.mxu0 %v6464
          %6567 = vmatprep.subr.mxu0 0.0
          %6568 = vmatpush1.msra.mxu0 %v6465
          %6569 = vmatprep.mubr.f32.mxu0 %v6431
          %6570 = vmatmul.mubr.f32.gmra.mrb[0].mxu0 %v6430
          %v6571 = vpop.f32.mrb[0].mxu0
          %v6572 = vadd.f32 %v6503, %v6571
          %v6573 = vpop.f32.mrb[0].mxu0
          %6574 = vdwg.mxu0
          %6575 = vmatprep.subr.mxu0 0.0
          %6576 = vmatpush1.msra.mxu0 %v6466
          %6577 = vmatprep.subr.mxu0 0.0
          %6578 = vmatpush1.msra.mxu0 %v6467
          %6579 = vmatprep.subr.mxu0 0.0
          %6580 = vmatpush1.msra.mxu0 %v6468
          %6581 = vmatprep.subr.mxu0 0.0
          %6582 = vmatpush1.msra.mxu0 %v6469
          %6583 = vmatprep.subr.mxu0 0.0
          %6584 = vmatpush1.msra.mxu0 %v6470
          %6585 = vmatprep.subr.mxu0 0.0
          %6586 = vmatpush1.msra.mxu0 %v6471
          %6587 = vmatprep.subr.mxu0 0.0
          %6588 = vmatpush1.msra.mxu0 %v6472
          %6589 = vmatprep.subr.mxu0 0.0
          %6590 = vmatpush1.msra.mxu0 %v6473
          %6591 = vmatprep.subr.mxu0 0.0
          %6592 = vmatpush1.msra.mxu0 %v6474
          %6593 = vmatprep.subr.mxu0 0.0
          %6594 = vmatpush1.msra.mxu0 %v6475
          %6595 = vmatprep.subr.mxu0 0.0
          %6596 = vmatpush1.msra.mxu0 %v6476
          %6597 = vmatprep.subr.mxu0 0.0
          %6598 = vmatpush1.msra.mxu0 %v6477
          %6599 = vmatprep.subr.mxu0 0.0
          %6600 = vmatpush1.msra.mxu0 %v6478
          %6601 = vmatprep.subr.mxu0 0.0
          %6602 = vmatpush1.msra.mxu0 %v6479
          %6603 = vmatprep.subr.mxu0 0.0
          %6604 = vmatpush1.msra.mxu0 %v6480
          %6605 = vmatprep.subr.mxu0 0.0
          %6606 = vmatpush1.msra.mxu0 %v6481
          %6607 = vmatprep.subr.mxu0 0.0
          %6608 = vmatpush1.msra.mxu0 %v6482
          %6609 = vmatprep.subr.mxu0 0.0
          %6610 = vmatpush1.msra.mxu0 %v6483
          %6611 = vmatprep.subr.mxu0 0.0
          %6612 = vmatpush1.msra.mxu0 %v6484
          %6613 = vmatprep.subr.mxu0 0.0
          %6614 = vmatpush1.msra.mxu0 %v6485
          %6615 = vmatprep.subr.mxu0 0.0
          %6616 = vmatpush1.msra.mxu0 %v6486
          %6617 = vmatprep.subr.mxu0 0.0
          %6618 = vmatpush1.msra.mxu0 %v6487
          %6619 = vmatprep.subr.mxu0 0.0
          %6620 = vmatpush1.msra.mxu0 %v6488
          %6621 = vmatprep.subr.mxu0 0.0
          %6622 = vmatpush1.msra.mxu0 %v6489
          %6623 = vmatprep.subr.mxu0 0.0
          %6624 = vmatpush1.msra.mxu0 %v6490
          %6625 = vmatprep.subr.mxu0 0.0
          %6626 = vmatpush1.msra.mxu0 %v6491
          %6627 = vmatprep.subr.mxu0 0.0
          %6628 = vmatpush1.msra.mxu0 %v6492
          %6629 = vmatprep.subr.mxu0 0.0
          %6630 = vmatpush1.msra.mxu0 %v6493
          %6631 = vmatprep.subr.mxu0 0.0
          %6632 = vmatpush1.msra.mxu0 %v6494
          %6633 = vmatprep.subr.mxu0 0.0
          %6634 = vmatpush1.msra.mxu0 %v6495
          %6635 = vmatprep.subr.mxu0 0.0
          %6636 = vmatpush1.msra.mxu0 %v6496
          %6637 = vmatprep.subr.mxu0 0.0
          %6638 = vmatpush1.msra.mxu0 %v6497
          %6639 = vmatprep.mubr.f32.mxu0 %v6433
          %6640 = vmatmul.mubr.f32.gmra.mrb[0].mxu0 %v6432
          %v6641 = vpop.f32.mrb[0].mxu0
          %v6642 = vadd.f32 %v6572, %v6641
          %v6643 = vpop.f32.mrb[0].mxu0
          %6644 = vdwg.mxu0
          %vm6645 = vcmask 1024
          %6646 = vst.msk [vmem:[%s13] sm:$0x3] %vm6645, %v6642
        $region100: #{global_discriminator_forward.1} parent=71 // pred_fallthru
          _
        // Predicated region
        $region101: #{global_discriminator_forward.1} parent=71 // pred_check
          %p6647 = pneg %p327
        $region102: #{global_discriminator_forward.1} parent=71 // pred_check_branch
          %6649 = sbr.rel (%p6647) target = $region104
        $region103: #{global_discriminator_forward.1} parent=71 // pred_region
          _
        $region104: #{global_discriminator_forward.1} parent=71 // pred_fallthru
          _
        // Predicated region
        $region105: #{global_discriminator_forward.1} parent=71 // pred_check
          %p6650 = pneg %p327
        $region106: #{global_discriminator_forward.1} parent=71 // pred_check_branch
          %6652 = sbr.rel (%p6650) target = $region108
        $region107: #{global_discriminator_forward.1} parent=71 // pred_region
          _
        $region108: #{global_discriminator_forward.1} parent=71 // pred_fallthru
          _
      $region72: #{global_discriminator_forward.1} parent=5 // pred_fallthru
        _
      %p6653 = scmp.le.s32.totalorder 2, %s26
      // Predicated region
      $region109: #{global_discriminator_forward.1} parent=5 // pred_check
        %p6654 = pneg %p6653
      $region110: #{global_discriminator_forward.1} parent=5 // pred_check_branch
        %6656 = sbr.rel (%p6654) target = $region112
      $region111: #{global_discriminator_forward.1} parent=5 // pred_region
        %s6657 = ssub.s32 %s26, 2
      $region112: #{global_discriminator_forward.1} parent=5 // pred_fallthru
        _
    $region6: #{global_discriminator_forward.1} parent=1 // loop_footer
      %s30 = sadd.s32 1, %s26
    $region7: #{global_discriminator_forward.1} parent=1 // loop_footer_branch
      %25 = sbr.rel target = $region3
    $region8: #{global_discriminator_forward.1} parent=1 // loop_exit
      _
    %6658 = vsyncpa [#allocation7], 1
    %s6659 = scalar_lea.sflag [#allocation7], 1
    %6660 = vsyncpa %s6659, 1
    %6661 = vsyncpa [#allocation9], 1
    %6662 = vsyncpa [#allocation12], 1

</llo_original>
